<compile_context>
chip_gen: v7x
topology: tpu7x:2x2x1
jax: 0.10.0
libtpu: 0.0.40
codegen_flags: <defaults>
</compile_context>

<pallas_src>
import functools

import jax
import jax.numpy as jnp
from jax.experimental import pallas as pl
from jax.experimental.pallas import tpu as pltpu

_SQRT1_2 = 0.7071067811865476
_GN_EPS = 1e-5


def _gelu(v):
    # exact (erf-based) GELU, matching torch.nn.GELU() / F.gelu default
    return 0.5 * v * (1.0 + jax.lax.erf(v * _SQRT1_2))


def _group_norm1(h, gw_ref, gb_ref):
    # GroupNorm(num_groups=1) over the whole sample.  h: (H*W, C) float32.
    # Two-pass moments (biased variance, torch semantics), affine folded in.
    n = h.shape[0] * h.shape[1]
    mu = jnp.sum(h) / n
    d = h - mu
    var = jnp.sum(d * d) / n
    scale = gw_ref[...].astype(jnp.float32) * jax.lax.rsqrt(var + _GN_EPS)  # (1, C)
    return d * scale + gb_ref[...].astype(jnp.float32)                       # one FMA/elem


def _conv3x3(h, w_ref, hh, ww, pad_ref):
    # 3x3 conv, padding=1, no bias.  h: (hh*ww, cin) f32 -> (hh*ww, cout) f32.
    # pad_ref's border is zero (zeroed once per sample); only the interior is
    # (re)written, so the border stays zero for all four convs.
    # w_ref: (9, cin, cout) with tap index dy*3+dx.
    cin = w_ref.shape[1]
    pad_ref[1:hh + 1, 1:ww + 1, 0:cin] = h.reshape(hh, ww, cin)
    acc = None
    for dy in range(3):
        for dx in range(3):
            win = pad_ref[dy:dy + hh, dx:dx + ww, 0:cin].reshape(hh * ww, cin)
            part = jnp.dot(win, w_ref[dy * 3 + dx].astype(jnp.float32),
                           preferred_element_type=jnp.float32)
            acc = part if acc is None else acc + part
    return acc


def _downscaler_kernel(x_ref, t_ref,
                       w1a_ref, g1aw_ref, g1ab_ref,
                       w1b_ref, g1bw_ref, g1bb_ref,
                       w2a_ref, g2aw_ref, g2ab_ref,
                       w2b_ref, g2bw_ref, g2bb_ref,
                       lw_ref, lb_ref,
                       o_ref,
                       pad_ref,
                       *, cin, hh, ww):
    # ---- MaxPool2d(2): pure VPU max over the 2x2 window ---------------------
    xv = x_ref[0].astype(jnp.float32)                         # (hh, 2, ww, 2*cin)
    hmax = jnp.maximum(xv[:, 0], xv[:, 1])                    # max over the H pair
    pooled = jnp.maximum(hmax[:, :, 0:cin], hmax[:, :, cin:2 * cin])  # W pair
    x0 = pooled.reshape(hh * ww, cin)                         # flattened spatial

    # Zero the padded-conv scratch once per sample; only the interior is ever
    # rewritten afterwards, so the border stays zero for all four convs.
    pad_ref[...] = jnp.zeros_like(pad_ref)

    # ---- DoubleConv #1 (in->in, residual=True) -------------------------------
    h = _conv3x3(x0, w1a_ref, hh, ww, pad_ref)
    h = _gelu(_group_norm1(h, g1aw_ref, g1ab_ref))
    h = _conv3x3(h, w1b_ref, hh, ww, pad_ref)
    x1 = _gelu(x0 + _group_norm1(h, g1bw_ref, g1bb_ref))

    # ---- DoubleConv #2 (in->out, mid=out, residual=False) --------------------
    h = _conv3x3(x1, w2a_ref, hh, ww, pad_ref)
    h = _gelu(_group_norm1(h, g2aw_ref, g2ab_ref))
    h = _conv3x3(h, w2b_ref, hh, ww, pad_ref)
    h = _group_norm1(h, g2bw_ref, g2bb_ref)

    # ---- time embedding: Linear(SiLU(t)), broadcast-added over H, W ----------
    tv = t_ref[0].astype(jnp.float32)                         # (1, E)
    sv = tv * jax.nn.sigmoid(tv)                              # SiLU
    emb = jnp.dot(sv, lw_ref[...].astype(jnp.float32),
                  preferred_element_type=jnp.float32) + lb_ref[...].astype(jnp.float32)
    o_ref[0] = (h + emb).astype(o_ref.dtype)                  # (hh*ww, cout)


def downscaler_forward(x_nchw, t, p):
    """x_nchw: (B, Cin, H, W), t: (B, E); p: parameter dict (see __main__)."""
    B, Cin, H, W = x_nchw.shape
    Cout = p["w2a"].shape[-1]
    E = t.shape[-1]
    assert H % 2 == 0 and W % 2 == 0
    hh, ww = H // 2, W // 2
    assert ww % 8 == 0, "pooled width must be a multiple of 8 (sublane tiling)"
    cmax = max(Cin, Cout)

    # glue: NCHW -> pooling-friendly NHWC view (row-major reshape after transpose),
    # per-tap conv weight matrices (9, Cin, Cout) and (1, C) affine rows
    x_view = jnp.transpose(x_nchw, (0, 2, 3, 1)).reshape(B, hh, 2, ww, 2 * Cin)
    t3 = t.reshape(B, 1, E)
    row = lambda v: v.reshape(1, -1).astype(jnp.float32)
    w1a = p["w1a"].reshape(9, Cin, Cin)
    w1b = p["w1b"].reshape(9, Cin, Cin)
    w2a = p["w2a"].reshape(9, Cin, Cout)
    w2b = p["w2b"].reshape(9, Cout, Cout)

    def const_spec(*shape):
        n = len(shape)
        return pl.BlockSpec(shape, lambda b: (0,) * n)

    kernel = functools.partial(_downscaler_kernel, cin=Cin, hh=hh, ww=ww)

    out_flat = pl.pallas_call(
        kernel,
        out_shape=jax.ShapeDtypeStruct((B, hh * ww, Cout), x_nchw.dtype),
        grid=(B,),
        in_specs=[
            pl.BlockSpec((1, hh, 2, ww, 2 * Cin), lambda b: (b, 0, 0, 0, 0)),
            pl.BlockSpec((1, 1, E), lambda b: (b, 0, 0)),
            const_spec(9, Cin, Cin), const_spec(1, Cin), const_spec(1, Cin),
            const_spec(9, Cin, Cin), const_spec(1, Cin), const_spec(1, Cin),
            const_spec(9, Cin, Cout), const_spec(1, Cout), const_spec(1, Cout),
            const_spec(9, Cout, Cout), const_spec(1, Cout), const_spec(1, Cout),
            const_spec(E, Cout), const_spec(1, Cout),
        ],
        out_specs=pl.BlockSpec((1, hh * ww, Cout), lambda b: (b, 0, 0)),
        scratch_shapes=[
            pltpu.VMEM((hh + 2, ww + 2, cmax), jnp.float32),   # zero-padded conv input
        ],
        compiler_params=pltpu.CompilerParams(
            dimension_semantics=("parallel",)),                 # batch across TCs (v7x)
    )(x_view, t3,
      w1a, row(p["g1a_w"]), row(p["g1a_b"]),
      w1b, row(p["g1b_w"]), row(p["g1b_b"]),
      w2a, row(p["g2a_w"]), row(p["g2a_b"]),
      w2b, row(p["g2b_w"]), row(p["g2b_b"]),
      p["lin_w"], p["lin_b"].reshape(1, Cout))

    out = out_flat.reshape(B, hh, ww, Cout)
    return jnp.transpose(out, (0, 3, 1, 2))                     # NHWC -> NCHW (glue)


def _reference_forward(x_nchw, t, p):
    # pure-JAX (XLA) reference with identical semantics, for a sanity check
    def conv(x, w):
        return jax.lax.conv_general_dilated(
            x, w, (1, 1), "SAME",
            dimension_numbers=("NCHW", "HWIO", "NCHW"),
            precision=jax.lax.Precision.HIGHEST)

    def gn(x, w, b):
        mu = jnp.mean(x, axis=(1, 2, 3), keepdims=True)
        var = jnp.mean((x - mu) ** 2, axis=(1, 2, 3), keepdims=True)
        y = (x - mu) * jax.lax.rsqrt(var + _GN_EPS)
        return y * w[None, :, None, None] + b[None, :, None, None]

    B, C, H, W = x_nchw.shape
    x = x_nchw.reshape(B, C, H // 2, 2, W // 2, 2).max(axis=(3, 5))   # MaxPool2d(2)
    h = _gelu(gn(conv(x, p["w1a"]), p["g1a_w"], p["g1a_b"]))
    x1 = _gelu(x + gn(conv(h, p["w1b"]), p["g1b_w"], p["g1b_b"]))
    h = _gelu(gn(conv(x1, p["w2a"]), p["g2a_w"], p["g2a_b"]))
    h = gn(conv(h, p["w2b"]), p["g2b_w"], p["g2b_b"])
    s = t * jax.nn.sigmoid(t)
    emb = jnp.dot(s, p["lin_w"], precision=jax.lax.Precision.HIGHEST) + p["lin_b"]
    return h + emb[:, :, None, None]


if __name__ == "__main__":
    B, Cin, Cout, H, W, E = 2, 4, 8, 16, 16, 32

    key = jax.random.PRNGKey(0)
    ks = jax.random.split(key, 8)

    x = jax.random.normal(ks[0], (B, Cin, H, W), jnp.float32)
    t = jax.random.normal(ks[1], (B, E), jnp.float32)

    # conv weights stored as (kh, kw, Cin, Cout) (torch's (Cout, Cin, kh, kw) transposed)
    params = {
        "w1a": jax.random.normal(ks[2], (3, 3, Cin, Cin), jnp.float32) * 0.2,
        "w1b": jax.random.normal(ks[3], (3, 3, Cin, Cin), jnp.float32) * 0.2,
        "w2a": jax.random.normal(ks[4], (3, 3, Cin, Cout), jnp.float32) * 0.2,
        "w2b": jax.random.normal(ks[5], (3, 3, Cout, Cout), jnp.float32) * 0.2,
        "g1a_w": jnp.ones((Cin,), jnp.float32),  "g1a_b": jnp.zeros((Cin,), jnp.float32),
        "g1b_w": jnp.ones((Cin,), jnp.float32),  "g1b_b": jnp.zeros((Cin,), jnp.float32),
        "g2a_w": jnp.ones((Cout,), jnp.float32), "g2a_b": jnp.zeros((Cout,), jnp.float32),
        "g2b_w": jnp.ones((Cout,), jnp.float32), "g2b_b": jnp.zeros((Cout,), jnp.float32),
        "lin_w": jax.random.normal(ks[6], (E, Cout), jnp.float32) * 0.1,
        "lin_b": jax.random.normal(ks[7], (Cout,), jnp.float32) * 0.1,
    }

    out = jax.jit(downscaler_forward)(x, t, params)
    jax.block_until_ready(out)
    assert out.shape == (B, Cout, H // 2, W // 2), out.shape

    ref = _reference_forward(x, t, params)
    err = float(jnp.max(jnp.abs(out - ref)))
    assert err < 2e-2, f"max abs err vs reference: {err}"

    print("KERNEL_OK")
</pallas_src>

<mosaic_0001>
module attributes {stable_mosaic.version = 11 : i64} {
  func.func @_downscaler_kernel(%arg0: i32, %arg1: memref<1x8x2x8x8xf32, #tpu.memory_space<vmem>>, %arg2: memref<1x1x32xf32, #tpu.memory_space<vmem>>, %arg3: memref<9x4x4xf32, #tpu.memory_space<vmem>>, %arg4: memref<1x4xf32, #tpu.memory_space<vmem>>, %arg5: memref<1x4xf32, #tpu.memory_space<vmem>>, %arg6: memref<9x4x4xf32, #tpu.memory_space<vmem>>, %arg7: memref<1x4xf32, #tpu.memory_space<vmem>>, %arg8: memref<1x4xf32, #tpu.memory_space<vmem>>, %arg9: memref<9x4x8xf32, #tpu.memory_space<vmem>>, %arg10: memref<1x8xf32, #tpu.memory_space<vmem>>, %arg11: memref<1x8xf32, #tpu.memory_space<vmem>>, %arg12: memref<9x8x8xf32, #tpu.memory_space<vmem>>, %arg13: memref<1x8xf32, #tpu.memory_space<vmem>>, %arg14: memref<1x8xf32, #tpu.memory_space<vmem>>, %arg15: memref<32x8xf32, #tpu.memory_space<vmem>>, %arg16: memref<1x8xf32, #tpu.memory_space<vmem>>, %arg17: memref<1x64x8xf32, #tpu.memory_space<vmem>>, %arg18: memref<10x10x8xf32, #tpu.memory_space<vmem>>) attributes {dimension_semantics = [#tpu.dimension_semantics<parallel>], iteration_bounds = array<i64: 2>, scalar_prefetch = 0 : i64, scratch_operands = 1 : i64, tpu.core_type = #tpu.core_type<tc>, window_params = [{transform_indices = @transform_0, window_bounds = array<i64: 1, 8, 2, 8, 8>}, {transform_indices = @transform_1, window_bounds = array<i64: 1, 1, 32>}, {pipeline_mode = #tpu.pipeline_mode<synchronous>, transform_indices = @transform_2, window_bounds = array<i64: 9, 4, 4>}, {pipeline_mode = #tpu.pipeline_mode<synchronous>, transform_indices = @transform_3, window_bounds = array<i64: 1, 4>}, {pipeline_mode = #tpu.pipeline_mode<synchronous>, transform_indices = @transform_4, window_bounds = array<i64: 1, 4>}, {pipeline_mode = #tpu.pipeline_mode<synchronous>, transform_indices = @transform_5, window_bounds = array<i64: 9, 4, 4>}, {pipeline_mode = #tpu.pipeline_mode<synchronous>, transform_indices = @transform_6, window_bounds = array<i64: 1, 4>}, {pipeline_mode = #tpu.pipeline_mode<synchronous>, transform_indices = @transform_7, window_bounds = array<i64: 1, 4>}, {pipeline_mode = #tpu.pipeline_mode<synchronous>, transform_indices = @transform_8, window_bounds = array<i64: 9, 4, 8>}, {pipeline_mode = #tpu.pipeline_mode<synchronous>, transform_indices = @transform_9, window_bounds = array<i64: 1, 8>}, {pipeline_mode = #tpu.pipeline_mode<synchronous>, transform_indices = @transform_10, window_bounds = array<i64: 1, 8>}, {pipeline_mode = #tpu.pipeline_mode<synchronous>, transform_indices = @transform_11, window_bounds = array<i64: 9, 8, 8>}, {pipeline_mode = #tpu.pipeline_mode<synchronous>, transform_indices = @transform_12, window_bounds = array<i64: 1, 8>}, {pipeline_mode = #tpu.pipeline_mode<synchronous>, transform_indices = @transform_13, window_bounds = array<i64: 1, 8>}, {pipeline_mode = #tpu.pipeline_mode<synchronous>, transform_indices = @transform_14, window_bounds = array<i64: 32, 8>}, {pipeline_mode = #tpu.pipeline_mode<synchronous>, transform_indices = @transform_15, window_bounds = array<i64: 1, 8>}, {transform_indices = @transform_16, window_bounds = array<i64: 1, 64, 8>}]} {
    %c0 = arith.constant 0 : index
    %c0_0 = arith.constant 0 : index
    %c0_1 = arith.constant 0 : index
    %c0_2 = arith.constant 0 : index
    %c0_3 = arith.constant 0 : index
    %0 = vector.load %arg1[%c0, %c0_0, %c0_1, %c0_2, %c0_3] : memref<1x8x2x8x8xf32, #tpu.memory_space<vmem>>, vector<1x8x2x8x8xf32>
    %1 = vector.shape_cast %0 : vector<1x8x2x8x8xf32> to vector<8x2x8x8xf32>
    %2 = vector.extract_strided_slice %1 {offsets = [0, 0, 0, 0], sizes = [8, 1, 8, 8], strides = [1, 1, 1, 1]} : vector<8x2x8x8xf32> to vector<8x1x8x8xf32>
    %3 = vector.shape_cast %2 : vector<8x1x8x8xf32> to vector<8x8x8xf32>
    %4 = vector.extract_strided_slice %1 {offsets = [0, 1, 0, 0], sizes = [8, 1, 8, 8], strides = [1, 1, 1, 1]} : vector<8x2x8x8xf32> to vector<8x1x8x8xf32>
    %5 = vector.shape_cast %4 : vector<8x1x8x8xf32> to vector<8x8x8xf32>
    %6 = arith.maximumf %3, %5 : vector<8x8x8xf32>
    %7 = vector.extract_strided_slice %6 {offsets = [0, 0, 0], sizes = [8, 8, 4], strides = [1, 1, 1]} : vector<8x8x8xf32> to vector<8x8x4xf32>
    %8 = vector.extract_strided_slice %6 {offsets = [0, 0, 4], sizes = [8, 8, 4], strides = [1, 1, 1]} : vector<8x8x8xf32> to vector<8x8x4xf32>
    %9 = arith.maximumf %7, %8 : vector<8x8x4xf32>
    %10 = vector.shape_cast %9 : vector<8x8x4xf32> to vector<64x4xf32>
    %cst = arith.constant 0.000000e+00 : f32
    %11 = vector.broadcast %cst : f32 to vector<10x10x8xf32>
    %c0_4 = arith.constant 0 : index
    %c0_5 = arith.constant 0 : index
    %c0_6 = arith.constant 0 : index
    %12 = vector.load %arg18[%c0_4, %c0_5, %c0_6] : memref<10x10x8xf32, #tpu.memory_space<vmem>>, vector<10x10x8xf32>
    tpu.vector_store %arg18[%c0_4, %c0_5, %c0_6], %11 {strides = array<i32>} : memref<10x10x8xf32, #tpu.memory_space<vmem>>, vector<10x10x8xf32>,
    %13 = vector.shape_cast %10 : vector<64x4xf32> to vector<8x8x4xf32>
    %c1 = arith.constant 1 : index
    %c1_7 = arith.constant 1 : index
    %c0_8 = arith.constant 0 : index
    %14 = vector.load %arg18[%c1, %c1_7, %c0_8] : memref<10x10x8xf32, #tpu.memory_space<vmem>>, vector<8x8x4xf32>
    tpu.vector_store %arg18[%c1, %c1_7, %c0_8], %13 {strides = array<i32>} : memref<10x10x8xf32, #tpu.memory_space<vmem>>, vector<8x8x4xf32>,
    %c0_9 = arith.constant 0 : index
    %c0_10 = arith.constant 0 : index
    %c0_11 = arith.constant 0 : index
    %15 = vector.load %arg18[%c0_9, %c0_10, %c0_11] : memref<10x10x8xf32, #tpu.memory_space<vmem>>, vector<8x8x4xf32>
    %16 = vector.shape_cast %15 : vector<8x8x4xf32> to vector<64x4xf32>
    %c0_12 = arith.constant 0 : index
    %c0_13 = arith.constant 0 : index
    %c0_14 = arith.constant 0 : index
    %17 = vector.load %arg3[%c0_12, %c0_13, %c0_14] : memref<9x4x4xf32, #tpu.memory_space<vmem>>, vector<1x4x4xf32>
    %18 = vector.shape_cast %17 : vector<1x4x4xf32> to vector<4x4xf32>
    %cst_15 = arith.constant dense<0.000000e+00> : vector<64x4xf32>
    %19 = tpu.matmul %16, %18, %cst_15 {dimension_numbers = #tpu.dot_dimension_numbers<[1], [0], [0], [1], [0, 0, 1, 1], [], []>} : vector<64x4xf32>, vector<4x4xf32>, vector<64x4xf32> -> vector<64x4xf32>
    %c0_16 = arith.constant 0 : index
    %c1_17 = arith.constant 1 : index
    %c0_18 = arith.constant 0 : index
    %20 = vector.load %arg18[%c0_16, %c1_17, %c0_18] : memref<10x10x8xf32, #tpu.memory_space<vmem>>, vector<8x8x4xf32>
    %21 = vector.shape_cast %20 : vector<8x8x4xf32> to vector<64x4xf32>
    %c1_19 = arith.constant 1 : index
    %c0_20 = arith.constant 0 : index
    %c0_21 = arith.constant 0 : index
    %22 = vector.load %arg3[%c1_19, %c0_20, %c0_21] : memref<9x4x4xf32, #tpu.memory_space<vmem>>, vector<1x4x4xf32>
    %23 = vector.shape_cast %22 : vector<1x4x4xf32> to vector<4x4xf32>
    %cst_22 = arith.constant dense<0.000000e+00> : vector<64x4xf32>
    %24 = tpu.matmul %21, %23, %cst_22 {dimension_numbers = #tpu.dot_dimension_numbers<[1], [0], [0], [1], [0, 0, 1, 1], [], []>} : vector<64x4xf32>, vector<4x4xf32>, vector<64x4xf32> -> vector<64x4xf32>
    %25 = arith.addf %19, %24 : vector<64x4xf32>
    %c0_23 = arith.constant 0 : index
    %c2 = arith.constant 2 : index
    %c0_24 = arith.constant 0 : index
    %26 = vector.load %arg18[%c0_23, %c2, %c0_24] : memref<10x10x8xf32, #tpu.memory_space<vmem>>, vector<8x8x4xf32>
    %27 = vector.shape_cast %26 : vector<8x8x4xf32> to vector<64x4xf32>
    %c2_25 = arith.constant 2 : index
    %c0_26 = arith.constant 0 : index
    %c0_27 = arith.constant 0 : index
    %28 = vector.load %arg3[%c2_25, %c0_26, %c0_27] : memref<9x4x4xf32, #tpu.memory_space<vmem>>, vector<1x4x4xf32>
    %29 = vector.shape_cast %28 : vector<1x4x4xf32> to vector<4x4xf32>
    %cst_28 = arith.constant dense<0.000000e+00> : vector<64x4xf32>
    %30 = tpu.matmul %27, %29, %cst_28 {dimension_numbers = #tpu.dot_dimension_numbers<[1], [0], [0], [1], [0, 0, 1, 1], [], []>} : vector<64x4xf32>, vector<4x4xf32>, vector<64x4xf32> -> vector<64x4xf32>
    %31 = arith.addf %25, %30 : vector<64x4xf32>
    %c1_29 = arith.constant 1 : index
    %c0_30 = arith.constant 0 : index
    %c0_31 = arith.constant 0 : index
    %32 = vector.load %arg18[%c1_29, %c0_30, %c0_31] : memref<10x10x8xf32, #tpu.memory_space<vmem>>, vector<8x8x4xf32>
    %33 = vector.shape_cast %32 : vector<8x8x4xf32> to vector<64x4xf32>
    %c3 = arith.constant 3 : index
    %c0_32 = arith.constant 0 : index
    %c0_33 = arith.constant 0 : index
    %34 = vector.load %arg3[%c3, %c0_32, %c0_33] : memref<9x4x4xf32, #tpu.memory_space<vmem>>, vector<1x4x4xf32>
    %35 = vector.shape_cast %34 : vector<1x4x4xf32> to vector<4x4xf32>
    %cst_34 = arith.constant dense<0.000000e+00> : vector<64x4xf32>
    %36 = tpu.matmul %33, %35, %cst_34 {dimension_numbers = #tpu.dot_dimension_numbers<[1], [0], [0], [1], [0, 0, 1, 1], [], []>} : vector<64x4xf32>, vector<4x4xf32>, vector<64x4xf32> -> vector<64x4xf32>
    %37 = arith.addf %31, %36 : vector<64x4xf32>
    %c1_35 = arith.constant 1 : index
    %c1_36 = arith.constant 1 : index
    %c0_37 = arith.constant 0 : index
    %38 = vector.load %arg18[%c1_35, %c1_36, %c0_37] : memref<10x10x8xf32, #tpu.memory_space<vmem>>, vector<8x8x4xf32>
    %39 = vector.shape_cast %38 : vector<8x8x4xf32> to vector<64x4xf32>
    %c4 = arith.constant 4 : index
    %c0_38 = arith.constant 0 : index
    %c0_39 = arith.constant 0 : index
    %40 = vector.load %arg3[%c4, %c0_38, %c0_39] : memref<9x4x4xf32, #tpu.memory_space<vmem>>, vector<1x4x4xf32>
    %41 = vector.shape_cast %40 : vector<1x4x4xf32> to vector<4x4xf32>
    %cst_40 = arith.constant dense<0.000000e+00> : vector<64x4xf32>
    %42 = tpu.matmul %39, %41, %cst_40 {dimension_numbers = #tpu.dot_dimension_numbers<[1], [0], [0], [1], [0, 0, 1, 1], [], []>} : vector<64x4xf32>, vector<4x4xf32>, vector<64x4xf32> -> vector<64x4xf32>
    %43 = arith.addf %37, %42 : vector<64x4xf32>
    %c1_41 = arith.constant 1 : index
    %c2_42 = arith.constant 2 : index
    %c0_43 = arith.constant 0 : index
    %44 = vector.load %arg18[%c1_41, %c2_42, %c0_43] : memref<10x10x8xf32, #tpu.memory_space<vmem>>, vector<8x8x4xf32>
    %45 = vector.shape_cast %44 : vector<8x8x4xf32> to vector<64x4xf32>
    %c5 = arith.constant 5 : index
    %c0_44 = arith.constant 0 : index
    %c0_45 = arith.constant 0 : index
    %46 = vector.load %arg3[%c5, %c0_44, %c0_45] : memref<9x4x4xf32, #tpu.memory_space<vmem>>, vector<1x4x4xf32>
    %47 = vector.shape_cast %46 : vector<1x4x4xf32> to vector<4x4xf32>
    %cst_46 = arith.constant dense<0.000000e+00> : vector<64x4xf32>
    %48 = tpu.matmul %45, %47, %cst_46 {dimension_numbers = #tpu.dot_dimension_numbers<[1], [0], [0], [1], [0, 0, 1, 1], [], []>} : vector<64x4xf32>, vector<4x4xf32>, vector<64x4xf32> -> vector<64x4xf32>
    %49 = arith.addf %43, %48 : vector<64x4xf32>
    %c2_47 = arith.constant 2 : index
    %c0_48 = arith.constant 0 : index
    %c0_49 = arith.constant 0 : index
    %50 = vector.load %arg18[%c2_47, %c0_48, %c0_49] : memref<10x10x8xf32, #tpu.memory_space<vmem>>, vector<8x8x4xf32>
    %51 = vector.shape_cast %50 : vector<8x8x4xf32> to vector<64x4xf32>
    %c6 = arith.constant 6 : index
    %c0_50 = arith.constant 0 : index
    %c0_51 = arith.constant 0 : index
    %52 = vector.load %arg3[%c6, %c0_50, %c0_51] : memref<9x4x4xf32, #tpu.memory_space<vmem>>, vector<1x4x4xf32>
    %53 = vector.shape_cast %52 : vector<1x4x4xf32> to vector<4x4xf32>
    %cst_52 = arith.constant dense<0.000000e+00> : vector<64x4xf32>
    %54 = tpu.matmul %51, %53, %cst_52 {dimension_numbers = #tpu.dot_dimension_numbers<[1], [0], [0], [1], [0, 0, 1, 1], [], []>} : vector<64x4xf32>, vector<4x4xf32>, vector<64x4xf32> -> vector<64x4xf32>
    %55 = arith.addf %49, %54 : vector<64x4xf32>
    %c2_53 = arith.constant 2 : index
    %c1_54 = arith.constant 1 : index
    %c0_55 = arith.constant 0 : index
    %56 = vector.load %arg18[%c2_53, %c1_54, %c0_55] : memref<10x10x8xf32, #tpu.memory_space<vmem>>, vector<8x8x4xf32>
    %57 = vector.shape_cast %56 : vector<8x8x4xf32> to vector<64x4xf32>
    %c7 = arith.constant 7 : index
    %c0_56 = arith.constant 0 : index
    %c0_57 = arith.constant 0 : index
    %58 = vector.load %arg3[%c7, %c0_56, %c0_57] : memref<9x4x4xf32, #tpu.memory_space<vmem>>, vector<1x4x4xf32>
    %59 = vector.shape_cast %58 : vector<1x4x4xf32> to vector<4x4xf32>
    %cst_58 = arith.constant dense<0.000000e+00> : vector<64x4xf32>
    %60 = tpu.matmul %57, %59, %cst_58 {dimension_numbers = #tpu.dot_dimension_numbers<[1], [0], [0], [1], [0, 0, 1, 1], [], []>} : vector<64x4xf32>, vector<4x4xf32>, vector<64x4xf32> -> vector<64x4xf32>
    %61 = arith.addf %55, %60 : vector<64x4xf32>
    %c2_59 = arith.constant 2 : index
    %c2_60 = arith.constant 2 : index
    %c0_61 = arith.constant 0 : index
    %62 = vector.load %arg18[%c2_59, %c2_60, %c0_61] : memref<10x10x8xf32, #tpu.memory_space<vmem>>, vector<8x8x4xf32>
    %63 = vector.shape_cast %62 : vector<8x8x4xf32> to vector<64x4xf32>
    %c8 = arith.constant 8 : index
    %c0_62 = arith.constant 0 : index
    %c0_63 = arith.constant 0 : index
    %64 = vector.load %arg3[%c8, %c0_62, %c0_63] : memref<9x4x4xf32, #tpu.memory_space<vmem>>, vector<1x4x4xf32>
    %65 = vector.shape_cast %64 : vector<1x4x4xf32> to vector<4x4xf32>
    %cst_64 = arith.constant dense<0.000000e+00> : vector<64x4xf32>
    %66 = tpu.matmul %63, %65, %cst_64 {dimension_numbers = #tpu.dot_dimension_numbers<[1], [0], [0], [1], [0, 0, 1, 1], [], []>} : vector<64x4xf32>, vector<4x4xf32>, vector<64x4xf32> -> vector<64x4xf32>
    %67 = arith.addf %61, %66 : vector<64x4xf32>
    %68 = vector.shape_cast %67 : vector<64x4xf32> to vector<1x64x4xf32>
    %cst_65 = arith.constant dense<0.000000e+00> : vector<1xf32>
    %69 = vector.multi_reduction <add>, %68, %cst_65 [1, 2] : vector<1x64x4xf32> to vector<1xf32>
    %70 = vector.shape_cast %69 : vector<1xf32> to vector<1x1x1xf32>
    %71 = vector.extract %70[0, 0, 0] : f32 from vector<1x1x1xf32>
    %cst_66 = arith.constant 2.560000e+02 : f32
    %72 = arith.divf %71, %cst_66 : f32
    %73 = vector.broadcast %72 : f32 to vector<64x4xf32>
    %74 = arith.subf %67, %73 : vector<64x4xf32>
    %75 = arith.mulf %74, %74 : vector<64x4xf32>
    %76 = vector.shape_cast %75 : vector<64x4xf32> to vector<1x64x4xf32>
    %cst_67 = arith.constant dense<0.000000e+00> : vector<1xf32>
    %77 = vector.multi_reduction <add>, %76, %cst_67 [1, 2] : vector<1x64x4xf32> to vector<1xf32>
    %78 = vector.shape_cast %77 : vector<1xf32> to vector<1x1x1xf32>
    %79 = vector.extract %78[0, 0, 0] : f32 from vector<1x1x1xf32>
    %cst_68 = arith.constant 2.560000e+02 : f32
    %80 = arith.divf %79, %cst_68 : f32
    %c0_69 = arith.constant 0 : index
    %c0_70 = arith.constant 0 : index
    %81 = vector.load %arg4[%c0_69, %c0_70] : memref<1x4xf32, #tpu.memory_space<vmem>>, vector<1x4xf32>
    %cst_71 = arith.constant 9.99999974E-6 : f32
    %82 = arith.addf %80, %cst_71 : f32
    %83 = math.rsqrt %82 : f32
    %84 = vector.broadcast %83 : f32 to vector<1x4xf32>
    %85 = arith.mulf %81, %84 : vector<1x4xf32>
    %86 = vector.broadcast %85 : vector<1x4xf32> to vector<64x4xf32>
    %87 = arith.mulf %74, %86 : vector<64x4xf32>
    %c0_72 = arith.constant 0 : index
    %c0_73 = arith.constant 0 : index
    %88 = vector.load %arg5[%c0_72, %c0_73] : memref<1x4xf32, #tpu.memory_space<vmem>>, vector<1x4xf32>
    %89 = vector.broadcast %88 : vector<1x4xf32> to vector<64x4xf32>
    %90 = arith.addf %87, %89 : vector<64x4xf32>
    %cst_74 = arith.constant 5.000000e-01 : f32
    %91 = vector.broadcast %cst_74 : f32 to vector<64x4xf32>
    %92 = arith.mulf %91, %90 : vector<64x4xf32>
    %cst_75 = arith.constant 0.707106769 : f32
    %93 = vector.broadcast %cst_75 : f32 to vector<64x4xf32>
    %94 = arith.mulf %90, %93 : vector<64x4xf32>
    %95 = math.erf %94 : vector<64x4xf32>
    %cst_76 = arith.constant 1.000000e+00 : f32
    %96 = vector.broadcast %cst_76 : f32 to vector<64x4xf32>
    %97 = arith.addf %96, %95 : vector<64x4xf32>
    %98 = arith.mulf %92, %97 : vector<64x4xf32>
    %99 = vector.shape_cast %98 : vector<64x4xf32> to vector<8x8x4xf32>
    %c1_77 = arith.constant 1 : index
    %c1_78 = arith.constant 1 : index
    %c0_79 = arith.constant 0 : index
    %100 = vector.load %arg18[%c1_77, %c1_78, %c0_79] : memref<10x10x8xf32, #tpu.memory_space<vmem>>, vector<8x8x4xf32>
    tpu.vector_store %arg18[%c1_77, %c1_78, %c0_79], %99 {strides = array<i32>} : memref<10x10x8xf32, #tpu.memory_space<vmem>>, vector<8x8x4xf32>,
    %c0_80 = arith.constant 0 : index
    %c0_81 = arith.constant 0 : index
    %c0_82 = arith.constant 0 : index
    %101 = vector.load %arg18[%c0_80, %c0_81, %c0_82] : memref<10x10x8xf32, #tpu.memory_space<vmem>>, vector<8x8x4xf32>
    %102 = vector.shape_cast %101 : vector<8x8x4xf32> to vector<64x4xf32>
    %c0_83 = arith.constant 0 : index
    %c0_84 = arith.constant 0 : index
    %c0_85 = arith.constant 0 : index
    %103 = vector.load %arg6[%c0_83, %c0_84, %c0_85] : memref<9x4x4xf32, #tpu.memory_space<vmem>>, vector<1x4x4xf32>
    %104 = vector.shape_cast %103 : vector<1x4x4xf32> to vector<4x4xf32>
    %cst_86 = arith.constant dense<0.000000e+00> : vector<64x4xf32>
    %105 = tpu.matmul %102, %104, %cst_86 {dimension_numbers = #tpu.dot_dimension_numbers<[1], [0], [0], [1], [0, 0, 1, 1], [], []>} : vector<64x4xf32>, vector<4x4xf32>, vector<64x4xf32> -> vector<64x4xf32>
    %c0_87 = arith.constant 0 : index
    %c1_88 = arith.constant 1 : index
    %c0_89 = arith.constant 0 : index
    %106 = vector.load %arg18[%c0_87, %c1_88, %c0_89] : memref<10x10x8xf32, #tpu.memory_space<vmem>>, vector<8x8x4xf32>
    %107 = vector.shape_cast %106 : vector<8x8x4xf32> to vector<64x4xf32>
    %c1_90 = arith.constant 1 : index
    %c0_91 = arith.constant 0 : index
    %c0_92 = arith.constant 0 : index
    %108 = vector.load %arg6[%c1_90, %c0_91, %c0_92] : memref<9x4x4xf32, #tpu.memory_space<vmem>>, vector<1x4x4xf32>
    %109 = vector.shape_cast %108 : vector<1x4x4xf32> to vector<4x4xf32>
    %cst_93 = arith.constant dense<0.000000e+00> : vector<64x4xf32>
    %110 = tpu.matmul %107, %109, %cst_93 {dimension_numbers = #tpu.dot_dimension_numbers<[1], [0], [0], [1], [0, 0, 1, 1], [], []>} : vector<64x4xf32>, vector<4x4xf32>, vector<64x4xf32> -> vector<64x4xf32>
    %111 = arith.addf %105, %110 : vector<64x4xf32>
    %c0_94 = arith.constant 0 : index
    %c2_95 = arith.constant 2 : index
    %c0_96 = arith.constant 0 : index
    %112 = vector.load %arg18[%c0_94, %c2_95, %c0_96] : memref<10x10x8xf32, #tpu.memory_space<vmem>>, vector<8x8x4xf32>
    %113 = vector.shape_cast %112 : vector<8x8x4xf32> to vector<64x4xf32>
    %c2_97 = arith.constant 2 : index
    %c0_98 = arith.constant 0 : index
    %c0_99 = arith.constant 0 : index
    %114 = vector.load %arg6[%c2_97, %c0_98, %c0_99] : memref<9x4x4xf32, #tpu.memory_space<vmem>>, vector<1x4x4xf32>
    %115 = vector.shape_cast %114 : vector<1x4x4xf32> to vector<4x4xf32>
    %cst_100 = arith.constant dense<0.000000e+00> : vector<64x4xf32>
    %116 = tpu.matmul %113, %115, %cst_100 {dimension_numbers = #tpu.dot_dimension_numbers<[1], [0], [0], [1], [0, 0, 1, 1], [], []>} : vector<64x4xf32>, vector<4x4xf32>, vector<64x4xf32> -> vector<64x4xf32>
    %117 = arith.addf %111, %116 : vector<64x4xf32>
    %c1_101 = arith.constant 1 : index
    %c0_102 = arith.constant 0 : index
    %c0_103 = arith.constant 0 : index
    %118 = vector.load %arg18[%c1_101, %c0_102, %c0_103] : memref<10x10x8xf32, #tpu.memory_space<vmem>>, vector<8x8x4xf32>
    %119 = vector.shape_cast %118 : vector<8x8x4xf32> to vector<64x4xf32>
    %c3_104 = arith.constant 3 : index
    %c0_105 = arith.constant 0 : index
    %c0_106 = arith.constant 0 : index
    %120 = vector.load %arg6[%c3_104, %c0_105, %c0_106] : memref<9x4x4xf32, #tpu.memory_space<vmem>>, vector<1x4x4xf32>
    %121 = vector.shape_cast %120 : vector<1x4x4xf32> to vector<4x4xf32>
    %cst_107 = arith.constant dense<0.000000e+00> : vector<64x4xf32>
    %122 = tpu.matmul %119, %121, %cst_107 {dimension_numbers = #tpu.dot_dimension_numbers<[1], [0], [0], [1], [0, 0, 1, 1], [], []>} : vector<64x4xf32>, vector<4x4xf32>, vector<64x4xf32> -> vector<64x4xf32>
    %123 = arith.addf %117, %122 : vector<64x4xf32>
    %c1_108 = arith.constant 1 : index
    %c1_109 = arith.constant 1 : index
    %c0_110 = arith.constant 0 : index
    %124 = vector.load %arg18[%c1_108, %c1_109, %c0_110] : memref<10x10x8xf32, #tpu.memory_space<vmem>>, vector<8x8x4xf32>
    %125 = vector.shape_cast %124 : vector<8x8x4xf32> to vector<64x4xf32>
    %c4_111 = arith.constant 4 : index
    %c0_112 = arith.constant 0 : index
    %c0_113 = arith.constant 0 : index
    %126 = vector.load %arg6[%c4_111, %c0_112, %c0_113] : memref<9x4x4xf32, #tpu.memory_space<vmem>>, vector<1x4x4xf32>
    %127 = vector.shape_cast %126 : vector<1x4x4xf32> to vector<4x4xf32>
    %cst_114 = arith.constant dense<0.000000e+00> : vector<64x4xf32>
    %128 = tpu.matmul %125, %127, %cst_114 {dimension_numbers = #tpu.dot_dimension_numbers<[1], [0], [0], [1], [0, 0, 1, 1], [], []>} : vector<64x4xf32>, vector<4x4xf32>, vector<64x4xf32> -> vector<64x4xf32>
    %129 = arith.addf %123, %128 : vector<64x4xf32>
    %c1_115 = arith.constant 1 : index
    %c2_116 = arith.constant 2 : index
    %c0_117 = arith.constant 0 : index
    %130 = vector.load %arg18[%c1_115, %c2_116, %c0_117] : memref<10x10x8xf32, #tpu.memory_space<vmem>>, vector<8x8x4xf32>
    %131 = vector.shape_cast %130 : vector<8x8x4xf32> to vector<64x4xf32>
    %c5_118 = arith.constant 5 : index
    %c0_119 = arith.constant 0 : index
    %c0_120 = arith.constant 0 : index
    %132 = vector.load %arg6[%c5_118, %c0_119, %c0_120] : memref<9x4x4xf32, #tpu.memory_space<vmem>>, vector<1x4x4xf32>
    %133 = vector.shape_cast %132 : vector<1x4x4xf32> to vector<4x4xf32>
    %cst_121 = arith.constant dense<0.000000e+00> : vector<64x4xf32>
    %134 = tpu.matmul %131, %133, %cst_121 {dimension_numbers = #tpu.dot_dimension_numbers<[1], [0], [0], [1], [0, 0, 1, 1], [], []>} : vector<64x4xf32>, vector<4x4xf32>, vector<64x4xf32> -> vector<64x4xf32>
    %135 = arith.addf %129, %134 : vector<64x4xf32>
    %c2_122 = arith.constant 2 : index
    %c0_123 = arith.constant 0 : index
    %c0_124 = arith.constant 0 : index
    %136 = vector.load %arg18[%c2_122, %c0_123, %c0_124] : memref<10x10x8xf32, #tpu.memory_space<vmem>>, vector<8x8x4xf32>
    %137 = vector.shape_cast %136 : vector<8x8x4xf32> to vector<64x4xf32>
    %c6_125 = arith.constant 6 : index
    %c0_126 = arith.constant 0 : index
    %c0_127 = arith.constant 0 : index
    %138 = vector.load %arg6[%c6_125, %c0_126, %c0_127] : memref<9x4x4xf32, #tpu.memory_space<vmem>>, vector<1x4x4xf32>
    %139 = vector.shape_cast %138 : vector<1x4x4xf32> to vector<4x4xf32>
    %cst_128 = arith.constant dense<0.000000e+00> : vector<64x4xf32>
    %140 = tpu.matmul %137, %139, %cst_128 {dimension_numbers = #tpu.dot_dimension_numbers<[1], [0], [0], [1], [0, 0, 1, 1], [], []>} : vector<64x4xf32>, vector<4x4xf32>, vector<64x4xf32> -> vector<64x4xf32>
    %141 = arith.addf %135, %140 : vector<64x4xf32>
    %c2_129 = arith.constant 2 : index
    %c1_130 = arith.constant 1 : index
    %c0_131 = arith.constant 0 : index
    %142 = vector.load %arg18[%c2_129, %c1_130, %c0_131] : memref<10x10x8xf32, #tpu.memory_space<vmem>>, vector<8x8x4xf32>
    %143 = vector.shape_cast %142 : vector<8x8x4xf32> to vector<64x4xf32>
    %c7_132 = arith.constant 7 : index
    %c0_133 = arith.constant 0 : index
    %c0_134 = arith.constant 0 : index
    %144 = vector.load %arg6[%c7_132, %c0_133, %c0_134] : memref<9x4x4xf32, #tpu.memory_space<vmem>>, vector<1x4x4xf32>
    %145 = vector.shape_cast %144 : vector<1x4x4xf32> to vector<4x4xf32>
    %cst_135 = arith.constant dense<0.000000e+00> : vector<64x4xf32>
    %146 = tpu.matmul %143, %145, %cst_135 {dimension_numbers = #tpu.dot_dimension_numbers<[1], [0], [0], [1], [0, 0, 1, 1], [], []>} : vector<64x4xf32>, vector<4x4xf32>, vector<64x4xf32> -> vector<64x4xf32>
    %147 = arith.addf %141, %146 : vector<64x4xf32>
    %c2_136 = arith.constant 2 : index
    %c2_137 = arith.constant 2 : index
    %c0_138 = arith.constant 0 : index
    %148 = vector.load %arg18[%c2_136, %c2_137, %c0_138] : memref<10x10x8xf32, #tpu.memory_space<vmem>>, vector<8x8x4xf32>
    %149 = vector.shape_cast %148 : vector<8x8x4xf32> to vector<64x4xf32>
    %c8_139 = arith.constant 8 : index
    %c0_140 = arith.constant 0 : index
    %c0_141 = arith.constant 0 : index
    %150 = vector.load %arg6[%c8_139, %c0_140, %c0_141] : memref<9x4x4xf32, #tpu.memory_space<vmem>>, vector<1x4x4xf32>
    %151 = vector.shape_cast %150 : vector<1x4x4xf32> to vector<4x4xf32>
    %cst_142 = arith.constant dense<0.000000e+00> : vector<64x4xf32>
    %152 = tpu.matmul %149, %151, %cst_142 {dimension_numbers = #tpu.dot_dimension_numbers<[1], [0], [0], [1], [0, 0, 1, 1], [], []>} : vector<64x4xf32>, vector<4x4xf32>, vector<64x4xf32> -> vector<64x4xf32>
    %153 = arith.addf %147, %152 : vector<64x4xf32>
    %154 = vector.shape_cast %153 : vector<64x4xf32> to vector<1x64x4xf32>
    %cst_143 = arith.constant dense<0.000000e+00> : vector<1xf32>
    %155 = vector.multi_reduction <add>, %154, %cst_143 [1, 2] : vector<1x64x4xf32> to vector<1xf32>
    %156 = vector.shape_cast %155 : vector<1xf32> to vector<1x1x1xf32>
    %157 = vector.extract %156[0, 0, 0] : f32 from vector<1x1x1xf32>
    %cst_144 = arith.constant 2.560000e+02 : f32
    %158 = arith.divf %157, %cst_144 : f32
    %159 = vector.broadcast %158 : f32 to vector<64x4xf32>
    %160 = arith.subf %153, %159 : vector<64x4xf32>
    %161 = arith.mulf %160, %160 : vector<64x4xf32>
    %162 = vector.shape_cast %161 : vector<64x4xf32> to vector<1x64x4xf32>
    %cst_145 = arith.constant dense<0.000000e+00> : vector<1xf32>
    %163 = vector.multi_reduction <add>, %162, %cst_145 [1, 2] : vector<1x64x4xf32> to vector<1xf32>
    %164 = vector.shape_cast %163 : vector<1xf32> to vector<1x1x1xf32>
    %165 = vector.extract %164[0, 0, 0] : f32 from vector<1x1x1xf32>
    %cst_146 = arith.constant 2.560000e+02 : f32
    %166 = arith.divf %165, %cst_146 : f32
    %c0_147 = arith.constant 0 : index
    %c0_148 = arith.constant 0 : index
    %167 = vector.load %arg7[%c0_147, %c0_148] : memref<1x4xf32, #tpu.memory_space<vmem>>, vector<1x4xf32>
    %cst_149 = arith.constant 9.99999974E-6 : f32
    %168 = arith.addf %166, %cst_149 : f32
    %169 = math.rsqrt %168 : f32
    %170 = vector.broadcast %169 : f32 to vector<1x4xf32>
    %171 = arith.mulf %167, %170 : vector<1x4xf32>
    %172 = vector.broadcast %171 : vector<1x4xf32> to vector<64x4xf32>
    %173 = arith.mulf %160, %172 : vector<64x4xf32>
    %c0_150 = arith.constant 0 : index
    %c0_151 = arith.constant 0 : index
    %174 = vector.load %arg8[%c0_150, %c0_151] : memref<1x4xf32, #tpu.memory_space<vmem>>, vector<1x4xf32>
    %175 = vector.broadcast %174 : vector<1x4xf32> to vector<64x4xf32>
    %176 = arith.addf %173, %175 : vector<64x4xf32>
    %177 = arith.addf %10, %176 : vector<64x4xf32>
    %cst_152 = arith.constant 5.000000e-01 : f32
    %178 = vector.broadcast %cst_152 : f32 to vector<64x4xf32>
    %179 = arith.mulf %178, %177 : vector<64x4xf32>
    %cst_153 = arith.constant 0.707106769 : f32
    %180 = vector.broadcast %cst_153 : f32 to vector<64x4xf32>
    %181 = arith.mulf %177, %180 : vector<64x4xf32>
    %182 = math.erf %181 : vector<64x4xf32>
    %cst_154 = arith.constant 1.000000e+00 : f32
    %183 = vector.broadcast %cst_154 : f32 to vector<64x4xf32>
    %184 = arith.addf %183, %182 : vector<64x4xf32>
    %185 = arith.mulf %179, %184 : vector<64x4xf32>
    %186 = vector.shape_cast %185 : vector<64x4xf32> to vector<8x8x4xf32>
    %c1_155 = arith.constant 1 : index
    %c1_156 = arith.constant 1 : index
    %c0_157 = arith.constant 0 : index
    %187 = vector.load %arg18[%c1_155, %c1_156, %c0_157] : memref<10x10x8xf32, #tpu.memory_space<vmem>>, vector<8x8x4xf32>
    tpu.vector_store %arg18[%c1_155, %c1_156, %c0_157], %186 {strides = array<i32>} : memref<10x10x8xf32, #tpu.memory_space<vmem>>, vector<8x8x4xf32>,
    %c0_158 = arith.constant 0 : index
    %c0_159 = arith.constant 0 : index
    %c0_160 = arith.constant 0 : index
    %188 = vector.load %arg18[%c0_158, %c0_159, %c0_160] : memref<10x10x8xf32, #tpu.memory_space<vmem>>, vector<8x8x4xf32>
    %189 = vector.shape_cast %188 : vector<8x8x4xf32> to vector<64x4xf32>
    %c0_161 = arith.constant 0 : index
    %c0_162 = arith.constant 0 : index
    %c0_163 = arith.constant 0 : index
    %190 = vector.load %arg9[%c0_161, %c0_162, %c0_163] : memref<9x4x8xf32, #tpu.memory_space<vmem>>, vector<1x4x8xf32>
    %191 = vector.shape_cast %190 : vector<1x4x8xf32> to vector<4x8xf32>
    %cst_164 = arith.constant dense<0.000000e+00> : vector<64x8xf32>
    %192 = tpu.matmul %189, %191, %cst_164 {dimension_numbers = #tpu.dot_dimension_numbers<[1], [0], [0], [1], [0, 0, 1, 1], [], []>} : vector<64x4xf32>, vector<4x8xf32>, vector<64x8xf32> -> vector<64x8xf32>
    %c0_165 = arith.constant 0 : index
    %c1_166 = arith.constant 1 : index
    %c0_167 = arith.constant 0 : index
    %193 = vector.load %arg18[%c0_165, %c1_166, %c0_167] : memref<10x10x8xf32, #tpu.memory_space<vmem>>, vector<8x8x4xf32>
    %194 = vector.shape_cast %193 : vector<8x8x4xf32> to vector<64x4xf32>
    %c1_168 = arith.constant 1 : index
    %c0_169 = arith.constant 0 : index
    %c0_170 = arith.constant 0 : index
    %195 = vector.load %arg9[%c1_168, %c0_169, %c0_170] : memref<9x4x8xf32, #tpu.memory_space<vmem>>, vector<1x4x8xf32>
    %196 = vector.shape_cast %195 : vector<1x4x8xf32> to vector<4x8xf32>
    %cst_171 = arith.constant dense<0.000000e+00> : vector<64x8xf32>
    %197 = tpu.matmul %194, %196, %cst_171 {dimension_numbers = #tpu.dot_dimension_numbers<[1], [0], [0], [1], [0, 0, 1, 1], [], []>} : vector<64x4xf32>, vector<4x8xf32>, vector<64x8xf32> -> vector<64x8xf32>
    %198 = arith.addf %192, %197 : vector<64x8xf32>
    %c0_172 = arith.constant 0 : index
    %c2_173 = arith.constant 2 : index
    %c0_174 = arith.constant 0 : index
    %199 = vector.load %arg18[%c0_172, %c2_173, %c0_174] : memref<10x10x8xf32, #tpu.memory_space<vmem>>, vector<8x8x4xf32>
    %200 = vector.shape_cast %199 : vector<8x8x4xf32> to vector<64x4xf32>
    %c2_175 = arith.constant 2 : index
    %c0_176 = arith.constant 0 : index
    %c0_177 = arith.constant 0 : index
    %201 = vector.load %arg9[%c2_175, %c0_176, %c0_177] : memref<9x4x8xf32, #tpu.memory_space<vmem>>, vector<1x4x8xf32>
    %202 = vector.shape_cast %201 : vector<1x4x8xf32> to vector<4x8xf32>
    %cst_178 = arith.constant dense<0.000000e+00> : vector<64x8xf32>
    %203 = tpu.matmul %200, %202, %cst_178 {dimension_numbers = #tpu.dot_dimension_numbers<[1], [0], [0], [1], [0, 0, 1, 1], [], []>} : vector<64x4xf32>, vector<4x8xf32>, vector<64x8xf32> -> vector<64x8xf32>
    %204 = arith.addf %198, %203 : vector<64x8xf32>
    %c1_179 = arith.constant 1 : index
    %c0_180 = arith.constant 0 : index
    %c0_181 = arith.constant 0 : index
    %205 = vector.load %arg18[%c1_179, %c0_180, %c0_181] : memref<10x10x8xf32, #tpu.memory_space<vmem>>, vector<8x8x4xf32>
    %206 = vector.shape_cast %205 : vector<8x8x4xf32> to vector<64x4xf32>
    %c3_182 = arith.constant 3 : index
    %c0_183 = arith.constant 0 : index
    %c0_184 = arith.constant 0 : index
    %207 = vector.load %arg9[%c3_182, %c0_183, %c0_184] : memref<9x4x8xf32, #tpu.memory_space<vmem>>, vector<1x4x8xf32>
    %208 = vector.shape_cast %207 : vector<1x4x8xf32> to vector<4x8xf32>
    %cst_185 = arith.constant dense<0.000000e+00> : vector<64x8xf32>
    %209 = tpu.matmul %206, %208, %cst_185 {dimension_numbers = #tpu.dot_dimension_numbers<[1], [0], [0], [1], [0, 0, 1, 1], [], []>} : vector<64x4xf32>, vector<4x8xf32>, vector<64x8xf32> -> vector<64x8xf32>
    %210 = arith.addf %204, %209 : vector<64x8xf32>
    %c1_186 = arith.constant 1 : index
    %c1_187 = arith.constant 1 : index
    %c0_188 = arith.constant 0 : index
    %211 = vector.load %arg18[%c1_186, %c1_187, %c0_188] : memref<10x10x8xf32, #tpu.memory_space<vmem>>, vector<8x8x4xf32>
    %212 = vector.shape_cast %211 : vector<8x8x4xf32> to vector<64x4xf32>
    %c4_189 = arith.constant 4 : index
    %c0_190 = arith.constant 0 : index
    %c0_191 = arith.constant 0 : index
    %213 = vector.load %arg9[%c4_189, %c0_190, %c0_191] : memref<9x4x8xf32, #tpu.memory_space<vmem>>, vector<1x4x8xf32>
    %214 = vector.shape_cast %213 : vector<1x4x8xf32> to vector<4x8xf32>
    %cst_192 = arith.constant dense<0.000000e+00> : vector<64x8xf32>
    %215 = tpu.matmul %212, %214, %cst_192 {dimension_numbers = #tpu.dot_dimension_numbers<[1], [0], [0], [1], [0, 0, 1, 1], [], []>} : vector<64x4xf32>, vector<4x8xf32>, vector<64x8xf32> -> vector<64x8xf32>
    %216 = arith.addf %210, %215 : vector<64x8xf32>
    %c1_193 = arith.constant 1 : index
    %c2_194 = arith.constant 2 : index
    %c0_195 = arith.constant 0 : index
    %217 = vector.load %arg18[%c1_193, %c2_194, %c0_195] : memref<10x10x8xf32, #tpu.memory_space<vmem>>, vector<8x8x4xf32>
    %218 = vector.shape_cast %217 : vector<8x8x4xf32> to vector<64x4xf32>
    %c5_196 = arith.constant 5 : index
    %c0_197 = arith.constant 0 : index
    %c0_198 = arith.constant 0 : index
    %219 = vector.load %arg9[%c5_196, %c0_197, %c0_198] : memref<9x4x8xf32, #tpu.memory_space<vmem>>, vector<1x4x8xf32>
    %220 = vector.shape_cast %219 : vector<1x4x8xf32> to vector<4x8xf32>
    %cst_199 = arith.constant dense<0.000000e+00> : vector<64x8xf32>
    %221 = tpu.matmul %218, %220, %cst_199 {dimension_numbers = #tpu.dot_dimension_numbers<[1], [0], [0], [1], [0, 0, 1, 1], [], []>} : vector<64x4xf32>, vector<4x8xf32>, vector<64x8xf32> -> vector<64x8xf32>
    %222 = arith.addf %216, %221 : vector<64x8xf32>
    %c2_200 = arith.constant 2 : index
    %c0_201 = arith.constant 0 : index
    %c0_202 = arith.constant 0 : index
    %223 = vector.load %arg18[%c2_200, %c0_201, %c0_202] : memref<10x10x8xf32, #tpu.memory_space<vmem>>, vector<8x8x4xf32>
    %224 = vector.shape_cast %223 : vector<8x8x4xf32> to vector<64x4xf32>
    %c6_203 = arith.constant 6 : index
    %c0_204 = arith.constant 0 : index
    %c0_205 = arith.constant 0 : index
    %225 = vector.load %arg9[%c6_203, %c0_204, %c0_205] : memref<9x4x8xf32, #tpu.memory_space<vmem>>, vector<1x4x8xf32>
    %226 = vector.shape_cast %225 : vector<1x4x8xf32> to vector<4x8xf32>
    %cst_206 = arith.constant dense<0.000000e+00> : vector<64x8xf32>
    %227 = tpu.matmul %224, %226, %cst_206 {dimension_numbers = #tpu.dot_dimension_numbers<[1], [0], [0], [1], [0, 0, 1, 1], [], []>} : vector<64x4xf32>, vector<4x8xf32>, vector<64x8xf32> -> vector<64x8xf32>
    %228 = arith.addf %222, %227 : vector<64x8xf32>
    %c2_207 = arith.constant 2 : index
    %c1_208 = arith.constant 1 : index
    %c0_209 = arith.constant 0 : index
    %229 = vector.load %arg18[%c2_207, %c1_208, %c0_209] : memref<10x10x8xf32, #tpu.memory_space<vmem>>, vector<8x8x4xf32>
    %230 = vector.shape_cast %229 : vector<8x8x4xf32> to vector<64x4xf32>
    %c7_210 = arith.constant 7 : index
    %c0_211 = arith.constant 0 : index
    %c0_212 = arith.constant 0 : index
    %231 = vector.load %arg9[%c7_210, %c0_211, %c0_212] : memref<9x4x8xf32, #tpu.memory_space<vmem>>, vector<1x4x8xf32>
    %232 = vector.shape_cast %231 : vector<1x4x8xf32> to vector<4x8xf32>
    %cst_213 = arith.constant dense<0.000000e+00> : vector<64x8xf32>
    %233 = tpu.matmul %230, %232, %cst_213 {dimension_numbers = #tpu.dot_dimension_numbers<[1], [0], [0], [1], [0, 0, 1, 1], [], []>} : vector<64x4xf32>, vector<4x8xf32>, vector<64x8xf32> -> vector<64x8xf32>
    %234 = arith.addf %228, %233 : vector<64x8xf32>
    %c2_214 = arith.constant 2 : index
    %c2_215 = arith.constant 2 : index
    %c0_216 = arith.constant 0 : index
    %235 = vector.load %arg18[%c2_214, %c2_215, %c0_216] : memref<10x10x8xf32, #tpu.memory_space<vmem>>, vector<8x8x4xf32>
    %236 = vector.shape_cast %235 : vector<8x8x4xf32> to vector<64x4xf32>
    %c8_217 = arith.constant 8 : index
    %c0_218 = arith.constant 0 : index
    %c0_219 = arith.constant 0 : index
    %237 = vector.load %arg9[%c8_217, %c0_218, %c0_219] : memref<9x4x8xf32, #tpu.memory_space<vmem>>, vector<1x4x8xf32>
    %238 = vector.shape_cast %237 : vector<1x4x8xf32> to vector<4x8xf32>
    %cst_220 = arith.constant dense<0.000000e+00> : vector<64x8xf32>
    %239 = tpu.matmul %236, %238, %cst_220 {dimension_numbers = #tpu.dot_dimension_numbers<[1], [0], [0], [1], [0, 0, 1, 1], [], []>} : vector<64x4xf32>, vector<4x8xf32>, vector<64x8xf32> -> vector<64x8xf32>
    %240 = arith.addf %234, %239 : vector<64x8xf32>
    %241 = vector.shape_cast %240 : vector<64x8xf32> to vector<1x64x8xf32>
    %cst_221 = arith.constant dense<0.000000e+00> : vector<1xf32>
    %242 = vector.multi_reduction <add>, %241, %cst_221 [1, 2] : vector<1x64x8xf32> to vector<1xf32>
    %243 = vector.shape_cast %242 : vector<1xf32> to vector<1x1x1xf32>
    %244 = vector.extract %243[0, 0, 0] : f32 from vector<1x1x1xf32>
    %cst_222 = arith.constant 5.120000e+02 : f32
    %245 = arith.divf %244, %cst_222 : f32
    %246 = vector.broadcast %245 : f32 to vector<64x8xf32>
    %247 = arith.subf %240, %246 : vector<64x8xf32>
    %248 = arith.mulf %247, %247 : vector<64x8xf32>
    %249 = vector.shape_cast %248 : vector<64x8xf32> to vector<1x64x8xf32>
    %cst_223 = arith.constant dense<0.000000e+00> : vector<1xf32>
    %250 = vector.multi_reduction <add>, %249, %cst_223 [1, 2] : vector<1x64x8xf32> to vector<1xf32>
    %251 = vector.shape_cast %250 : vector<1xf32> to vector<1x1x1xf32>
    %252 = vector.extract %251[0, 0, 0] : f32 from vector<1x1x1xf32>
    %cst_224 = arith.constant 5.120000e+02 : f32
    %253 = arith.divf %252, %cst_224 : f32
    %c0_225 = arith.constant 0 : index
    %c0_226 = arith.constant 0 : index
    %254 = vector.load %arg10[%c0_225, %c0_226] : memref<1x8xf32, #tpu.memory_space<vmem>>, vector<1x8xf32>
    %cst_227 = arith.constant 9.99999974E-6 : f32
    %255 = arith.addf %253, %cst_227 : f32
    %256 = math.rsqrt %255 : f32
    %257 = vector.broadcast %256 : f32 to vector<1x8xf32>
    %258 = arith.mulf %254, %257 : vector<1x8xf32>
    %259 = vector.broadcast %258 : vector<1x8xf32> to vector<64x8xf32>
    %260 = arith.mulf %247, %259 : vector<64x8xf32>
    %c0_228 = arith.constant 0 : index
    %c0_229 = arith.constant 0 : index
    %261 = vector.load %arg11[%c0_228, %c0_229] : memref<1x8xf32, #tpu.memory_space<vmem>>, vector<1x8xf32>
    %262 = vector.broadcast %261 : vector<1x8xf32> to vector<64x8xf32>
    %263 = arith.addf %260, %262 : vector<64x8xf32>
    %cst_230 = arith.constant 5.000000e-01 : f32
    %264 = vector.broadcast %cst_230 : f32 to vector<64x8xf32>
    %265 = arith.mulf %264, %263 : vector<64x8xf32>
    %cst_231 = arith.constant 0.707106769 : f32
    %266 = vector.broadcast %cst_231 : f32 to vector<64x8xf32>
    %267 = arith.mulf %263, %266 : vector<64x8xf32>
    %268 = math.erf %267 : vector<64x8xf32>
    %cst_232 = arith.constant 1.000000e+00 : f32
    %269 = vector.broadcast %cst_232 : f32 to vector<64x8xf32>
    %270 = arith.addf %269, %268 : vector<64x8xf32>
    %271 = arith.mulf %265, %270 : vector<64x8xf32>
    %272 = vector.shape_cast %271 : vector<64x8xf32> to vector<8x8x8xf32>
    %c1_233 = arith.constant 1 : index
    %c1_234 = arith.constant 1 : index
    %c0_235 = arith.constant 0 : index
    %273 = vector.load %arg18[%c1_233, %c1_234, %c0_235] : memref<10x10x8xf32, #tpu.memory_space<vmem>>, vector<8x8x8xf32>
    tpu.vector_store %arg18[%c1_233, %c1_234, %c0_235], %272 {strides = array<i32>} : memref<10x10x8xf32, #tpu.memory_space<vmem>>, vector<8x8x8xf32>,
    %c0_236 = arith.constant 0 : index
    %c0_237 = arith.constant 0 : index
    %c0_238 = arith.constant 0 : index
    %274 = vector.load %arg18[%c0_236, %c0_237, %c0_238] : memref<10x10x8xf32, #tpu.memory_space<vmem>>, vector<8x8x8xf32>
    %275 = vector.shape_cast %274 : vector<8x8x8xf32> to vector<64x8xf32>
    %c0_239 = arith.constant 0 : index
    %c0_240 = arith.constant 0 : index
    %c0_241 = arith.constant 0 : index
    %276 = vector.load %arg12[%c0_239, %c0_240, %c0_241] : memref<9x8x8xf32, #tpu.memory_space<vmem>>, vector<1x8x8xf32>
    %277 = vector.shape_cast %276 : vector<1x8x8xf32> to vector<8x8xf32>
    %cst_242 = arith.constant dense<0.000000e+00> : vector<64x8xf32>
    %278 = tpu.matmul %275, %277, %cst_242 {dimension_numbers = #tpu.dot_dimension_numbers<[1], [0], [0], [1], [0, 0, 1, 1], [], []>} : vector<64x8xf32>, vector<8x8xf32>, vector<64x8xf32> -> vector<64x8xf32>
    %c0_243 = arith.constant 0 : index
    %c1_244 = arith.constant 1 : index
    %c0_245 = arith.constant 0 : index
    %279 = vector.load %arg18[%c0_243, %c1_244, %c0_245] : memref<10x10x8xf32, #tpu.memory_space<vmem>>, vector<8x8x8xf32>
    %280 = vector.shape_cast %279 : vector<8x8x8xf32> to vector<64x8xf32>
    %c1_246 = arith.constant 1 : index
    %c0_247 = arith.constant 0 : index
    %c0_248 = arith.constant 0 : index
    %281 = vector.load %arg12[%c1_246, %c0_247, %c0_248] : memref<9x8x8xf32, #tpu.memory_space<vmem>>, vector<1x8x8xf32>
    %282 = vector.shape_cast %281 : vector<1x8x8xf32> to vector<8x8xf32>
    %cst_249 = arith.constant dense<0.000000e+00> : vector<64x8xf32>
    %283 = tpu.matmul %280, %282, %cst_249 {dimension_numbers = #tpu.dot_dimension_numbers<[1], [0], [0], [1], [0, 0, 1, 1], [], []>} : vector<64x8xf32>, vector<8x8xf32>, vector<64x8xf32> -> vector<64x8xf32>
    %284 = arith.addf %278, %283 : vector<64x8xf32>
    %c0_250 = arith.constant 0 : index
    %c2_251 = arith.constant 2 : index
    %c0_252 = arith.constant 0 : index
    %285 = vector.load %arg18[%c0_250, %c2_251, %c0_252] : memref<10x10x8xf32, #tpu.memory_space<vmem>>, vector<8x8x8xf32>
    %286 = vector.shape_cast %285 : vector<8x8x8xf32> to vector<64x8xf32>
    %c2_253 = arith.constant 2 : index
    %c0_254 = arith.constant 0 : index
    %c0_255 = arith.constant 0 : index
    %287 = vector.load %arg12[%c2_253, %c0_254, %c0_255] : memref<9x8x8xf32, #tpu.memory_space<vmem>>, vector<1x8x8xf32>
    %288 = vector.shape_cast %287 : vector<1x8x8xf32> to vector<8x8xf32>
    %cst_256 = arith.constant dense<0.000000e+00> : vector<64x8xf32>
    %289 = tpu.matmul %286, %288, %cst_256 {dimension_numbers = #tpu.dot_dimension_numbers<[1], [0], [0], [1], [0, 0, 1, 1], [], []>} : vector<64x8xf32>, vector<8x8xf32>, vector<64x8xf32> -> vector<64x8xf32>
    %290 = arith.addf %284, %289 : vector<64x8xf32>
    %c1_257 = arith.constant 1 : index
    %c0_258 = arith.constant 0 : index
    %c0_259 = arith.constant 0 : index
    %291 = vector.load %arg18[%c1_257, %c0_258, %c0_259] : memref<10x10x8xf32, #tpu.memory_space<vmem>>, vector<8x8x8xf32>
    %292 = vector.shape_cast %291 : vector<8x8x8xf32> to vector<64x8xf32>
    %c3_260 = arith.constant 3 : index
    %c0_261 = arith.constant 0 : index
    %c0_262 = arith.constant 0 : index
    %293 = vector.load %arg12[%c3_260, %c0_261, %c0_262] : memref<9x8x8xf32, #tpu.memory_space<vmem>>, vector<1x8x8xf32>
    %294 = vector.shape_cast %293 : vector<1x8x8xf32> to vector<8x8xf32>
    %cst_263 = arith.constant dense<0.000000e+00> : vector<64x8xf32>
    %295 = tpu.matmul %292, %294, %cst_263 {dimension_numbers = #tpu.dot_dimension_numbers<[1], [0], [0], [1], [0, 0, 1, 1], [], []>} : vector<64x8xf32>, vector<8x8xf32>, vector<64x8xf32> -> vector<64x8xf32>
    %296 = arith.addf %290, %295 : vector<64x8xf32>
    %c1_264 = arith.constant 1 : index
    %c1_265 = arith.constant 1 : index
    %c0_266 = arith.constant 0 : index
    %297 = vector.load %arg18[%c1_264, %c1_265, %c0_266] : memref<10x10x8xf32, #tpu.memory_space<vmem>>, vector<8x8x8xf32>
    %298 = vector.shape_cast %297 : vector<8x8x8xf32> to vector<64x8xf32>
    %c4_267 = arith.constant 4 : index
    %c0_268 = arith.constant 0 : index
    %c0_269 = arith.constant 0 : index
    %299 = vector.load %arg12[%c4_267, %c0_268, %c0_269] : memref<9x8x8xf32, #tpu.memory_space<vmem>>, vector<1x8x8xf32>
    %300 = vector.shape_cast %299 : vector<1x8x8xf32> to vector<8x8xf32>
    %cst_270 = arith.constant dense<0.000000e+00> : vector<64x8xf32>
    %301 = tpu.matmul %298, %300, %cst_270 {dimension_numbers = #tpu.dot_dimension_numbers<[1], [0], [0], [1], [0, 0, 1, 1], [], []>} : vector<64x8xf32>, vector<8x8xf32>, vector<64x8xf32> -> vector<64x8xf32>
    %302 = arith.addf %296, %301 : vector<64x8xf32>
    %c1_271 = arith.constant 1 : index
    %c2_272 = arith.constant 2 : index
    %c0_273 = arith.constant 0 : index
    %303 = vector.load %arg18[%c1_271, %c2_272, %c0_273] : memref<10x10x8xf32, #tpu.memory_space<vmem>>, vector<8x8x8xf32>
    %304 = vector.shape_cast %303 : vector<8x8x8xf32> to vector<64x8xf32>
    %c5_274 = arith.constant 5 : index
    %c0_275 = arith.constant 0 : index
    %c0_276 = arith.constant 0 : index
    %305 = vector.load %arg12[%c5_274, %c0_275, %c0_276] : memref<9x8x8xf32, #tpu.memory_space<vmem>>, vector<1x8x8xf32>
    %306 = vector.shape_cast %305 : vector<1x8x8xf32> to vector<8x8xf32>
    %cst_277 = arith.constant dense<0.000000e+00> : vector<64x8xf32>
    %307 = tpu.matmul %304, %306, %cst_277 {dimension_numbers = #tpu.dot_dimension_numbers<[1], [0], [0], [1], [0, 0, 1, 1], [], []>} : vector<64x8xf32>, vector<8x8xf32>, vector<64x8xf32> -> vector<64x8xf32>
    %308 = arith.addf %302, %307 : vector<64x8xf32>
    %c2_278 = arith.constant 2 : index
    %c0_279 = arith.constant 0 : index
    %c0_280 = arith.constant 0 : index
    %309 = vector.load %arg18[%c2_278, %c0_279, %c0_280] : memref<10x10x8xf32, #tpu.memory_space<vmem>>, vector<8x8x8xf32>
    %310 = vector.shape_cast %309 : vector<8x8x8xf32> to vector<64x8xf32>
    %c6_281 = arith.constant 6 : index
    %c0_282 = arith.constant 0 : index
    %c0_283 = arith.constant 0 : index
    %311 = vector.load %arg12[%c6_281, %c0_282, %c0_283] : memref<9x8x8xf32, #tpu.memory_space<vmem>>, vector<1x8x8xf32>
    %312 = vector.shape_cast %311 : vector<1x8x8xf32> to vector<8x8xf32>
    %cst_284 = arith.constant dense<0.000000e+00> : vector<64x8xf32>
    %313 = tpu.matmul %310, %312, %cst_284 {dimension_numbers = #tpu.dot_dimension_numbers<[1], [0], [0], [1], [0, 0, 1, 1], [], []>} : vector<64x8xf32>, vector<8x8xf32>, vector<64x8xf32> -> vector<64x8xf32>
    %314 = arith.addf %308, %313 : vector<64x8xf32>
    %c2_285 = arith.constant 2 : index
    %c1_286 = arith.constant 1 : index
    %c0_287 = arith.constant 0 : index
    %315 = vector.load %arg18[%c2_285, %c1_286, %c0_287] : memref<10x10x8xf32, #tpu.memory_space<vmem>>, vector<8x8x8xf32>
    %316 = vector.shape_cast %315 : vector<8x8x8xf32> to vector<64x8xf32>
    %c7_288 = arith.constant 7 : index
    %c0_289 = arith.constant 0 : index
    %c0_290 = arith.constant 0 : index
    %317 = vector.load %arg12[%c7_288, %c0_289, %c0_290] : memref<9x8x8xf32, #tpu.memory_space<vmem>>, vector<1x8x8xf32>
    %318 = vector.shape_cast %317 : vector<1x8x8xf32> to vector<8x8xf32>
    %cst_291 = arith.constant dense<0.000000e+00> : vector<64x8xf32>
    %319 = tpu.matmul %316, %318, %cst_291 {dimension_numbers = #tpu.dot_dimension_numbers<[1], [0], [0], [1], [0, 0, 1, 1], [], []>} : vector<64x8xf32>, vector<8x8xf32>, vector<64x8xf32> -> vector<64x8xf32>
    %320 = arith.addf %314, %319 : vector<64x8xf32>
    %c2_292 = arith.constant 2 : index
    %c2_293 = arith.constant 2 : index
    %c0_294 = arith.constant 0 : index
    %321 = vector.load %arg18[%c2_292, %c2_293, %c0_294] : memref<10x10x8xf32, #tpu.memory_space<vmem>>, vector<8x8x8xf32>
    %322 = vector.shape_cast %321 : vector<8x8x8xf32> to vector<64x8xf32>
    %c8_295 = arith.constant 8 : index
    %c0_296 = arith.constant 0 : index
    %c0_297 = arith.constant 0 : index
    %323 = vector.load %arg12[%c8_295, %c0_296, %c0_297] : memref<9x8x8xf32, #tpu.memory_space<vmem>>, vector<1x8x8xf32>
    %324 = vector.shape_cast %323 : vector<1x8x8xf32> to vector<8x8xf32>
    %cst_298 = arith.constant dense<0.000000e+00> : vector<64x8xf32>
    %325 = tpu.matmul %322, %324, %cst_298 {dimension_numbers = #tpu.dot_dimension_numbers<[1], [0], [0], [1], [0, 0, 1, 1], [], []>} : vector<64x8xf32>, vector<8x8xf32>, vector<64x8xf32> -> vector<64x8xf32>
    %326 = arith.addf %320, %325 : vector<64x8xf32>
    %327 = vector.shape_cast %326 : vector<64x8xf32> to vector<1x64x8xf32>
    %cst_299 = arith.constant dense<0.000000e+00> : vector<1xf32>
    %328 = vector.multi_reduction <add>, %327, %cst_299 [1, 2] : vector<1x64x8xf32> to vector<1xf32>
    %329 = vector.shape_cast %328 : vector<1xf32> to vector<1x1x1xf32>
    %330 = vector.extract %329[0, 0, 0] : f32 from vector<1x1x1xf32>
    %cst_300 = arith.constant 5.120000e+02 : f32
    %331 = arith.divf %330, %cst_300 : f32
    %332 = vector.broadcast %331 : f32 to vector<64x8xf32>
    %333 = arith.subf %326, %332 : vector<64x8xf32>
    %334 = arith.mulf %333, %333 : vector<64x8xf32>
    %335 = vector.shape_cast %334 : vector<64x8xf32> to vector<1x64x8xf32>
    %cst_301 = arith.constant dense<0.000000e+00> : vector<1xf32>
    %336 = vector.multi_reduction <add>, %335, %cst_301 [1, 2] : vector<1x64x8xf32> to vector<1xf32>
    %337 = vector.shape_cast %336 : vector<1xf32> to vector<1x1x1xf32>
    %338 = vector.extract %337[0, 0, 0] : f32 from vector<1x1x1xf32>
    %cst_302 = arith.constant 5.120000e+02 : f32
    %339 = arith.divf %338, %cst_302 : f32
    %c0_303 = arith.constant 0 : index
    %c0_304 = arith.constant 0 : index
    %340 = vector.load %arg13[%c0_303, %c0_304] : memref<1x8xf32, #tpu.memory_space<vmem>>, vector<1x8xf32>
    %cst_305 = arith.constant 9.99999974E-6 : f32
    %341 = arith.addf %339, %cst_305 : f32
    %342 = math.rsqrt %341 : f32
    %343 = vector.broadcast %342 : f32 to vector<1x8xf32>
    %344 = arith.mulf %340, %343 : vector<1x8xf32>
    %345 = vector.broadcast %344 : vector<1x8xf32> to vector<64x8xf32>
    %346 = arith.mulf %333, %345 : vector<64x8xf32>
    %c0_306 = arith.constant 0 : index
    %c0_307 = arith.constant 0 : index
    %347 = vector.load %arg14[%c0_306, %c0_307] : memref<1x8xf32, #tpu.memory_space<vmem>>, vector<1x8xf32>
    %348 = vector.broadcast %347 : vector<1x8xf32> to vector<64x8xf32>
    %349 = arith.addf %346, %348 : vector<64x8xf32>
    %c0_308 = arith.constant 0 : index
    %c0_309 = arith.constant 0 : index
    %c0_310 = arith.constant 0 : index
    %350 = vector.load %arg2[%c0_308, %c0_309, %c0_310] : memref<1x1x32xf32, #tpu.memory_space<vmem>>, vector<1x1x32xf32>
    %351 = vector.shape_cast %350 : vector<1x1x32xf32> to vector<1x32xf32>
    %352 = arith.negf %351 : vector<1x32xf32>
    %353 = math.exp %352 : vector<1x32xf32>
    %cst_311 = arith.constant 1.000000e+00 : f32
    %354 = vector.broadcast %cst_311 : f32 to vector<1x32xf32>
    %355 = arith.addf %354, %353 : vector<1x32xf32>
    %356 = arith.divf %354, %355 : vector<1x32xf32>
    %357 = arith.mulf %351, %356 : vector<1x32xf32>
    %c0_312 = arith.constant 0 : index
    %c0_313 = arith.constant 0 : index
    %358 = vector.load %arg15[%c0_312, %c0_313] : memref<32x8xf32, #tpu.memory_space<vmem>>, vector<32x8xf32>
    %cst_314 = arith.constant dense<0.000000e+00> : vector<1x8xf32>
    %359 = tpu.matmul %357, %358, %cst_314 {dimension_numbers = #tpu.dot_dimension_numbers<[1], [0], [0], [1], [0, 0, 1, 1], [], []>} : vector<1x32xf32>, vector<32x8xf32>, vector<1x8xf32> -> vector<1x8xf32>
    %c0_315 = arith.constant 0 : index
    %c0_316 = arith.constant 0 : index
    %360 = vector.load %arg16[%c0_315, %c0_316] : memref<1x8xf32, #tpu.memory_space<vmem>>, vector<1x8xf32>
    %361 = arith.addf %359, %360 : vector<1x8xf32>
    %362 = vector.broadcast %361 : vector<1x8xf32> to vector<64x8xf32>
    %363 = arith.addf %349, %362 : vector<64x8xf32>
    %c0_317 = arith.constant 0 : index
    %c0_318 = arith.constant 0 : index
    %c0_319 = arith.constant 0 : index
    %364 = vector.load %arg17[%c0_317, %c0_318, %c0_319] : memref<1x64x8xf32, #tpu.memory_space<vmem>>, vector<1x64x8xf32>
    %365 = vector.shape_cast %364 : vector<1x64x8xf32> to vector<64x8xf32>
    %366 = vector.shape_cast %363 : vector<64x8xf32> to vector<1x64x8xf32>
    tpu.vector_store %arg17[%c0_317, %c0_318, %c0_319], %366 {strides = array<i32>} : memref<1x64x8xf32, #tpu.memory_space<vmem>>, vector<1x64x8xf32>,
    return
  }
  func.func @transform_0(%arg0: i32) -> (i32, i32, i32, i32, i32) {
    %c0_i32 = arith.constant 0 : i32
    %c0_i32_0 = arith.constant 0 : i32
    %c0_i32_1 = arith.constant 0 : i32
    %c0_i32_2 = arith.constant 0 : i32
    %c0_i32_3 = arith.constant 0 : i32
    return %arg0, %c0_i32, %c0_i32_0, %c0_i32_1, %c0_i32_2 : i32, i32, i32, i32, i32
  }
  func.func @transform_1(%arg0: i32) -> (i32, i32, i32) {
    %c0_i32 = arith.constant 0 : i32
    %c0_i32_0 = arith.constant 0 : i32
    %c0_i32_1 = arith.constant 0 : i32
    return %arg0, %c0_i32, %c0_i32_0 : i32, i32, i32
  }
  func.func @transform_2(%arg0: i32) -> (i32, i32, i32) {
    %c0_i32 = arith.constant 0 : i32
    %c0_i32_0 = arith.constant 0 : i32
    %c0_i32_1 = arith.constant 0 : i32
    %c0_i32_2 = arith.constant 0 : i32
    return %c0_i32, %c0_i32_0, %c0_i32_1 : i32, i32, i32
  }
  func.func @transform_3(%arg0: i32) -> (i32, i32) {
    %c0_i32 = arith.constant 0 : i32
    %c0_i32_0 = arith.constant 0 : i32
    %c0_i32_1 = arith.constant 0 : i32
    return %c0_i32, %c0_i32_0 : i32, i32
  }
  func.func @transform_4(%arg0: i32) -> (i32, i32) {
    %c0_i32 = arith.constant 0 : i32
    %c0_i32_0 = arith.constant 0 : i32
    %c0_i32_1 = arith.constant 0 : i32
    return %c0_i32, %c0_i32_0 : i32, i32
  }
  func.func @transform_5(%arg0: i32) -> (i32, i32, i32) {
    %c0_i32 = arith.constant 0 : i32
    %c0_i32_0 = arith.constant 0 : i32
    %c0_i32_1 = arith.constant 0 : i32
    %c0_i32_2 = arith.constant 0 : i32
    return %c0_i32, %c0_i32_0, %c0_i32_1 : i32, i32, i32
  }
  func.func @transform_6(%arg0: i32) -> (i32, i32) {
    %c0_i32 = arith.constant 0 : i32
    %c0_i32_0 = arith.constant 0 : i32
    %c0_i32_1 = arith.constant 0 : i32
    return %c0_i32, %c0_i32_0 : i32, i32
  }
  func.func @transform_7(%arg0: i32) -> (i32, i32) {
    %c0_i32 = arith.constant 0 : i32
    %c0_i32_0 = arith.constant 0 : i32
    %c0_i32_1 = arith.constant 0 : i32
    return %c0_i32, %c0_i32_0 : i32, i32
  }
  func.func @transform_8(%arg0: i32) -> (i32, i32, i32) {
    %c0_i32 = arith.constant 0 : i32
    %c0_i32_0 = arith.constant 0 : i32
    %c0_i32_1 = arith.constant 0 : i32
    %c0_i32_2 = arith.constant 0 : i32
    return %c0_i32, %c0_i32_0, %c0_i32_1 : i32, i32, i32
  }
  func.func @transform_9(%arg0: i32) -> (i32, i32) {
    %c0_i32 = arith.constant 0 : i32
    %c0_i32_0 = arith.constant 0 : i32
    %c0_i32_1 = arith.constant 0 : i32
    return %c0_i32, %c0_i32_0 : i32, i32
  }
  func.func @transform_10(%arg0: i32) -> (i32, i32) {
    %c0_i32 = arith.constant 0 : i32
    %c0_i32_0 = arith.constant 0 : i32
    %c0_i32_1 = arith.constant 0 : i32
    return %c0_i32, %c0_i32_0 : i32, i32
  }
  func.func @transform_11(%arg0: i32) -> (i32, i32, i32) {
    %c0_i32 = arith.constant 0 : i32
    %c0_i32_0 = arith.constant 0 : i32
    %c0_i32_1 = arith.constant 0 : i32
    %c0_i32_2 = arith.constant 0 : i32
    return %c0_i32, %c0_i32_0, %c0_i32_1 : i32, i32, i32
  }
  func.func @transform_12(%arg0: i32) -> (i32, i32) {
    %c0_i32 = arith.constant 0 : i32
    %c0_i32_0 = arith.constant 0 : i32
    %c0_i32_1 = arith.constant 0 : i32
    return %c0_i32, %c0_i32_0 : i32, i32
  }
  func.func @transform_13(%arg0: i32) -> (i32, i32) {
    %c0_i32 = arith.constant 0 : i32
    %c0_i32_0 = arith.constant 0 : i32
    %c0_i32_1 = arith.constant 0 : i32
    return %c0_i32, %c0_i32_0 : i32, i32
  }
  func.func @transform_14(%arg0: i32) -> (i32, i32) {
    %c0_i32 = arith.constant 0 : i32
    %c0_i32_0 = arith.constant 0 : i32
    %c0_i32_1 = arith.constant 0 : i32
    return %c0_i32, %c0_i32_0 : i32, i32
  }
  func.func @transform_15(%arg0: i32) -> (i32, i32) {
    %c0_i32 = arith.constant 0 : i32
    %c0_i32_0 = arith.constant 0 : i32
    %c0_i32_1 = arith.constant 0 : i32
    return %c0_i32, %c0_i32_0 : i32, i32
  }
  func.func @transform_16(%arg0: i32) -> (i32, i32, i32) {
    %c0_i32 = arith.constant 0 : i32
    %c0_i32_0 = arith.constant 0 : i32
    %c0_i32_1 = arith.constant 0 : i32
    return %arg0, %c0_i32, %c0_i32_0 : i32, i32, i32
  }
}

</mosaic_0001>

<llo_original>
// kernel: downscaler_forward.1
$region0: #{downscaler_forward.1}
  #allocation0 [shape = 'u32[]', space=smem, size = 0x4, offset = 0x4, fixed_abs, tag = 'smem constant byte address 0x4 - core index']
  #allocation1 [shape = 'u32[144,128]{1,0:T(1,128)}', space=vmem, size = 0x12000, scoped, tag = 'internal scratch']
  #allocation2 [shape = 'f32[10,10,8]{2,1,0:T(8,128)}', space=vmem, size = 0x14000, scoped, tag = 'scratch operand']
  %s0 = inlined_call_operand.vmem [shape: f32[2,8,2,8,8], index: 0, kind: input, shape index: {}]
  %s1 = inlined_call_operand.vmem [shape: f32[2,1,32], index: 1, kind: input, shape index: {}]
  %s2 = inlined_call_operand.vmem [shape: f32[9,4,4], index: 2, kind: input, shape index: {}]
  %s3 = inlined_call_operand.vmem [shape: f32[1,4], index: 3, kind: input, shape index: {}]
  %s4 = inlined_call_operand.vmem [shape: f32[1,4], index: 4, kind: input, shape index: {}]
  %s5 = inlined_call_operand.vmem [shape: f32[9,4,4], index: 5, kind: input, shape index: {}]
  %s6 = inlined_call_operand.vmem [shape: f32[1,4], index: 6, kind: input, shape index: {}]
  %s7 = inlined_call_operand.vmem [shape: f32[1,4], index: 7, kind: input, shape index: {}]
  %s8 = inlined_call_operand.vmem [shape: f32[9,4,8], index: 8, kind: input, shape index: {}]
  %s9 = inlined_call_operand.vmem [shape: f32[1,8], index: 9, kind: input, shape index: {}]
  %s10 = inlined_call_operand.vmem [shape: f32[1,8], index: 10, kind: input, shape index: {}]
  %s11 = inlined_call_operand.vmem [shape: f32[9,8,8], index: 11, kind: input, shape index: {}]
  %s12 = inlined_call_operand.vmem [shape: f32[1,8], index: 12, kind: input, shape index: {}]
  %s13 = inlined_call_operand.vmem [shape: f32[1,8], index: 13, kind: input, shape index: {}]
  %s14 = inlined_call_operand.vmem [shape: f32[32,8], index: 14, kind: input, shape index: {}]
  %s15 = inlined_call_operand.vmem [shape: f32[1,8], index: 15, kind: input, shape index: {}]
  %s16 = inlined_call_operand.vmem [shape: f32[2,64,8], index: 16, kind: output, shape index: {}]
  %s17 = sld [smem:[#allocation0]]
  $region97: #{downscaler_forward.1} parent=0
    _
  %s19 = ssub.s32 1, %s17
  %s20 = scalar_select 0, %s19, %s17
  loop: start=0, step=1, limit=4
  $region2: #{downscaler_forward.1} parent=0 // loop_pre_header
    _
  $region3: #{downscaler_forward.1} parent=0 // loop_header
    %s22 = sphi 0, %s26
    %p23 = scmp.ge.s32.totalorder %s22, 4
    %s32 = sphi 0, %s34
    %s35 = sphi 0, %s32
    %s36 = sphi 0, %s35
    %s52 = sphi 0, %s36
    %s58 = sphi 0, %s60
    %s61 = sphi 0, %s58
    %s62 = sphi 0, %s61
    %s78 = sphi 0, %s62
    %s82 = sphi 0, %s82
    %s84 = sphi 0, %s82
    %s85 = sphi 0, %s84
    %s99 = sphi 0, %s85
    %s103 = sphi 0, %s103
    %s105 = sphi 0, %s103
    %s106 = sphi 0, %s105
    %s120 = sphi 0, %s106
    %s124 = sphi 0, %s124
    %s126 = sphi 0, %s124
    %s127 = sphi 0, %s126
    %s141 = sphi 0, %s127
    %s145 = sphi 0, %s145
    %s147 = sphi 0, %s145
    %s148 = sphi 0, %s147
    %s162 = sphi 0, %s148
    %s166 = sphi 0, %s166
    %s168 = sphi 0, %s166
    %s169 = sphi 0, %s168
    %s183 = sphi 0, %s169
    %s187 = sphi 0, %s187
    %s189 = sphi 0, %s187
    %s190 = sphi 0, %s189
    %s204 = sphi 0, %s190
    %s208 = sphi 0, %s208
    %s210 = sphi 0, %s208
    %s211 = sphi 0, %s210
    %s225 = sphi 0, %s211
    %s229 = sphi 0, %s229
    %s231 = sphi 0, %s229
    %s232 = sphi 0, %s231
    %s246 = sphi 0, %s232
    %s250 = sphi 0, %s250
    %s252 = sphi 0, %s250
    %s253 = sphi 0, %s252
    %s267 = sphi 0, %s253
    %s271 = sphi 0, %s271
    %s273 = sphi 0, %s271
    %s274 = sphi 0, %s273
    %s288 = sphi 0, %s274
    %s292 = sphi 0, %s292
    %s294 = sphi 0, %s292
    %s295 = sphi 0, %s294
    %s309 = sphi 0, %s295
    %s313 = sphi 0, %s313
    %s315 = sphi 0, %s313
    %s316 = sphi 0, %s315
    %s330 = sphi 0, %s316
    %s334 = sphi 0, %s334
    %s336 = sphi 0, %s334
    %s337 = sphi 0, %s336
    %s351 = sphi 0, %s337
    %s355 = sphi 0, %s355
    %s357 = sphi 0, %s355
    %s358 = sphi 0, %s357
    %s372 = sphi 0, %s358
    %s378 = sphi 0, %s380
    %s381 = sphi 0, %s378
    %s382 = sphi 0, %s381
    %s398 = sphi 0, %s382
  $region4: #{downscaler_forward.1} parent=0 // loop_header_branch
    %25 = sbr.rel (%p23) target = $region8
  $region5: #{downscaler_forward.1} parent=0 // loop_body
    %s27 = ssub.s32 %s22, 1
    %s28 = ssub.s32 %s22, 2
    %s29 = sadd.s32 %s22, 1
    %s30 = ssub.s32 %s22, %s29
    %p31 = scmp.eq.s32.totalorder %s30, 0
    %s33 = sadd.s32 %s32, 1
    %s34 = scalar_select %p31, %s32, %s33
    %p37 = pneg %p31
    %p38 = scmp.eq.s32.totalorder %s22, 1
    %p39 = por %p37, %p38
    %p40 = scmp.ne.s32.totalorder %s32, %s35
    %p41 = scmp.eq.s32.totalorder %s22, 0
    %p42 = por %p40, %p41
    %p43 = scmp.ne.s32.totalorder %s32, %s35
    %p44 = scmp.eq.s32.totalorder %s27, 1
    %p45 = por %p43, %p44
    %p46 = scmp.ne.s32.totalorder %s35, %s36
    %p47 = scmp.eq.s32.totalorder %s27, 0
    %p48 = por %p46, %p47
    %p49 = scmp.ne.s32.totalorder %s35, %s36
    %p50 = scmp.eq.s32.totalorder %s28, 1
    %p51 = por %p49, %p50
    %p53 = scmp.ne.s32.totalorder %s36, %s52
    %p54 = scmp.eq.s32.totalorder %s28, 0
    %p55 = por %p53, %p54
    %s56 = ssub.s32 %s22, %s29
    %p57 = scmp.eq.s32.totalorder %s56, 0
    %s59 = sadd.s32 %s58, 1
    %s60 = scalar_select %p57, %s58, %s59
    %p63 = pneg %p57
    %p64 = scmp.eq.s32.totalorder %s22, 1
    %p65 = por %p63, %p64
    %p66 = scmp.ne.s32.totalorder %s58, %s61
    %p67 = scmp.eq.s32.totalorder %s22, 0
    %p68 = por %p66, %p67
    %p69 = scmp.ne.s32.totalorder %s58, %s61
    %p70 = scmp.eq.s32.totalorder %s27, 1
    %p71 = por %p69, %p70
    %p72 = scmp.ne.s32.totalorder %s61, %s62
    %p73 = scmp.eq.s32.totalorder %s27, 0
    %p74 = por %p72, %p73
    %p75 = scmp.ne.s32.totalorder %s61, %s62
    %p76 = scmp.eq.s32.totalorder %s28, 1
    %p77 = por %p75, %p76
    %p79 = scmp.ne.s32.totalorder %s62, %s78
    %p80 = scmp.eq.s32.totalorder %s28, 0
    %p81 = por %p79, %p80
    %s83 = sadd.s32 %s82, 1
    %p86 = scmp.eq.s32.totalorder %s22, 1
    %p87 = scmp.ne.s32.totalorder %s82, %s84
    %p88 = scmp.eq.s32.totalorder %s22, 0
    %p89 = por %p87, %p88
    %p90 = scmp.ne.s32.totalorder %s82, %s84
    %p91 = scmp.eq.s32.totalorder %s27, 1
    %p92 = por %p90, %p91
    %p93 = scmp.ne.s32.totalorder %s84, %s85
    %p94 = scmp.eq.s32.totalorder %s27, 0
    %p95 = por %p93, %p94
    %p96 = scmp.ne.s32.totalorder %s84, %s85
    %p97 = scmp.eq.s32.totalorder %s28, 1
    %p98 = por %p96, %p97
    %p100 = scmp.ne.s32.totalorder %s85, %s99
    %p101 = scmp.eq.s32.totalorder %s28, 0
    %p102 = por %p100, %p101
    %s104 = sadd.s32 %s103, 1
    %p107 = scmp.eq.s32.totalorder %s22, 1
    %p108 = scmp.ne.s32.totalorder %s103, %s105
    %p109 = scmp.eq.s32.totalorder %s22, 0
    %p110 = por %p108, %p109
    %p111 = scmp.ne.s32.totalorder %s103, %s105
    %p112 = scmp.eq.s32.totalorder %s27, 1
    %p113 = por %p111, %p112
    %p114 = scmp.ne.s32.totalorder %s105, %s106
    %p115 = scmp.eq.s32.totalorder %s27, 0
    %p116 = por %p114, %p115
    %p117 = scmp.ne.s32.totalorder %s105, %s106
    %p118 = scmp.eq.s32.totalorder %s28, 1
    %p119 = por %p117, %p118
    %p121 = scmp.ne.s32.totalorder %s106, %s120
    %p122 = scmp.eq.s32.totalorder %s28, 0
    %p123 = por %p121, %p122
    %s125 = sadd.s32 %s124, 1
    %p128 = scmp.eq.s32.totalorder %s22, 1
    %p129 = scmp.ne.s32.totalorder %s124, %s126
    %p130 = scmp.eq.s32.totalorder %s22, 0
    %p131 = por %p129, %p130
    %p132 = scmp.ne.s32.totalorder %s124, %s126
    %p133 = scmp.eq.s32.totalorder %s27, 1
    %p134 = por %p132, %p133
    %p135 = scmp.ne.s32.totalorder %s126, %s127
    %p136 = scmp.eq.s32.totalorder %s27, 0
    %p137 = por %p135, %p136
    %p138 = scmp.ne.s32.totalorder %s126, %s127
    %p139 = scmp.eq.s32.totalorder %s28, 1
    %p140 = por %p138, %p139
    %p142 = scmp.ne.s32.totalorder %s127, %s141
    %p143 = scmp.eq.s32.totalorder %s28, 0
    %p144 = por %p142, %p143
    %s146 = sadd.s32 %s145, 1
    %p149 = scmp.eq.s32.totalorder %s22, 1
    %p150 = scmp.ne.s32.totalorder %s145, %s147
    %p151 = scmp.eq.s32.totalorder %s22, 0
    %p152 = por %p150, %p151
    %p153 = scmp.ne.s32.totalorder %s145, %s147
    %p154 = scmp.eq.s32.totalorder %s27, 1
    %p155 = por %p153, %p154
    %p156 = scmp.ne.s32.totalorder %s147, %s148
    %p157 = scmp.eq.s32.totalorder %s27, 0
    %p158 = por %p156, %p157
    %p159 = scmp.ne.s32.totalorder %s147, %s148
    %p160 = scmp.eq.s32.totalorder %s28, 1
    %p161 = por %p159, %p160
    %p163 = scmp.ne.s32.totalorder %s148, %s162
    %p164 = scmp.eq.s32.totalorder %s28, 0
    %p165 = por %p163, %p164
    %s167 = sadd.s32 %s166, 1
    %p170 = scmp.eq.s32.totalorder %s22, 1
    %p171 = scmp.ne.s32.totalorder %s166, %s168
    %p172 = scmp.eq.s32.totalorder %s22, 0
    %p173 = por %p171, %p172
    %p174 = scmp.ne.s32.totalorder %s166, %s168
    %p175 = scmp.eq.s32.totalorder %s27, 1
    %p176 = por %p174, %p175
    %p177 = scmp.ne.s32.totalorder %s168, %s169
    %p178 = scmp.eq.s32.totalorder %s27, 0
    %p179 = por %p177, %p178
    %p180 = scmp.ne.s32.totalorder %s168, %s169
    %p181 = scmp.eq.s32.totalorder %s28, 1
    %p182 = por %p180, %p181
    %p184 = scmp.ne.s32.totalorder %s169, %s183
    %p185 = scmp.eq.s32.totalorder %s28, 0
    %p186 = por %p184, %p185
    %s188 = sadd.s32 %s187, 1
    %p191 = scmp.eq.s32.totalorder %s22, 1
    %p192 = scmp.ne.s32.totalorder %s187, %s189
    %p193 = scmp.eq.s32.totalorder %s22, 0
    %p194 = por %p192, %p193
    %p195 = scmp.ne.s32.totalorder %s187, %s189
    %p196 = scmp.eq.s32.totalorder %s27, 1
    %p197 = por %p195, %p196
    %p198 = scmp.ne.s32.totalorder %s189, %s190
    %p199 = scmp.eq.s32.totalorder %s27, 0
    %p200 = por %p198, %p199
    %p201 = scmp.ne.s32.totalorder %s189, %s190
    %p202 = scmp.eq.s32.totalorder %s28, 1
    %p203 = por %p201, %p202
    %p205 = scmp.ne.s32.totalorder %s190, %s204
    %p206 = scmp.eq.s32.totalorder %s28, 0
    %p207 = por %p205, %p206
    %s209 = sadd.s32 %s208, 1
    %p212 = scmp.eq.s32.totalorder %s22, 1
    %p213 = scmp.ne.s32.totalorder %s208, %s210
    %p214 = scmp.eq.s32.totalorder %s22, 0
    %p215 = por %p213, %p214
    %p216 = scmp.ne.s32.totalorder %s208, %s210
    %p217 = scmp.eq.s32.totalorder %s27, 1
    %p218 = por %p216, %p217
    %p219 = scmp.ne.s32.totalorder %s210, %s211
    %p220 = scmp.eq.s32.totalorder %s27, 0
    %p221 = por %p219, %p220
    %p222 = scmp.ne.s32.totalorder %s210, %s211
    %p223 = scmp.eq.s32.totalorder %s28, 1
    %p224 = por %p222, %p223
    %p226 = scmp.ne.s32.totalorder %s211, %s225
    %p227 = scmp.eq.s32.totalorder %s28, 0
    %p228 = por %p226, %p227
    %s230 = sadd.s32 %s229, 1
    %p233 = scmp.eq.s32.totalorder %s22, 1
    %p234 = scmp.ne.s32.totalorder %s229, %s231
    %p235 = scmp.eq.s32.totalorder %s22, 0
    %p236 = por %p234, %p235
    %p237 = scmp.ne.s32.totalorder %s229, %s231
    %p238 = scmp.eq.s32.totalorder %s27, 1
    %p239 = por %p237, %p238
    %p240 = scmp.ne.s32.totalorder %s231, %s232
    %p241 = scmp.eq.s32.totalorder %s27, 0
    %p242 = por %p240, %p241
    %p243 = scmp.ne.s32.totalorder %s231, %s232
    %p244 = scmp.eq.s32.totalorder %s28, 1
    %p245 = por %p243, %p244
    %p247 = scmp.ne.s32.totalorder %s232, %s246
    %p248 = scmp.eq.s32.totalorder %s28, 0
    %p249 = por %p247, %p248
    %s251 = sadd.s32 %s250, 1
    %p254 = scmp.eq.s32.totalorder %s22, 1
    %p255 = scmp.ne.s32.totalorder %s250, %s252
    %p256 = scmp.eq.s32.totalorder %s22, 0
    %p257 = por %p255, %p256
    %p258 = scmp.ne.s32.totalorder %s250, %s252
    %p259 = scmp.eq.s32.totalorder %s27, 1
    %p260 = por %p258, %p259
    %p261 = scmp.ne.s32.totalorder %s252, %s253
    %p262 = scmp.eq.s32.totalorder %s27, 0
    %p263 = por %p261, %p262
    %p264 = scmp.ne.s32.totalorder %s252, %s253
    %p265 = scmp.eq.s32.totalorder %s28, 1
    %p266 = por %p264, %p265
    %p268 = scmp.ne.s32.totalorder %s253, %s267
    %p269 = scmp.eq.s32.totalorder %s28, 0
    %p270 = por %p268, %p269
    %s272 = sadd.s32 %s271, 1
    %p275 = scmp.eq.s32.totalorder %s22, 1
    %p276 = scmp.ne.s32.totalorder %s271, %s273
    %p277 = scmp.eq.s32.totalorder %s22, 0
    %p278 = por %p276, %p277
    %p279 = scmp.ne.s32.totalorder %s271, %s273
    %p280 = scmp.eq.s32.totalorder %s27, 1
    %p281 = por %p279, %p280
    %p282 = scmp.ne.s32.totalorder %s273, %s274
    %p283 = scmp.eq.s32.totalorder %s27, 0
    %p284 = por %p282, %p283
    %p285 = scmp.ne.s32.totalorder %s273, %s274
    %p286 = scmp.eq.s32.totalorder %s28, 1
    %p287 = por %p285, %p286
    %p289 = scmp.ne.s32.totalorder %s274, %s288
    %p290 = scmp.eq.s32.totalorder %s28, 0
    %p291 = por %p289, %p290
    %s293 = sadd.s32 %s292, 1
    %p296 = scmp.eq.s32.totalorder %s22, 1
    %p297 = scmp.ne.s32.totalorder %s292, %s294
    %p298 = scmp.eq.s32.totalorder %s22, 0
    %p299 = por %p297, %p298
    %p300 = scmp.ne.s32.totalorder %s292, %s294
    %p301 = scmp.eq.s32.totalorder %s27, 1
    %p302 = por %p300, %p301
    %p303 = scmp.ne.s32.totalorder %s294, %s295
    %p304 = scmp.eq.s32.totalorder %s27, 0
    %p305 = por %p303, %p304
    %p306 = scmp.ne.s32.totalorder %s294, %s295
    %p307 = scmp.eq.s32.totalorder %s28, 1
    %p308 = por %p306, %p307
    %p310 = scmp.ne.s32.totalorder %s295, %s309
    %p311 = scmp.eq.s32.totalorder %s28, 0
    %p312 = por %p310, %p311
    %s314 = sadd.s32 %s313, 1
    %p317 = scmp.eq.s32.totalorder %s22, 1
    %p318 = scmp.ne.s32.totalorder %s313, %s315
    %p319 = scmp.eq.s32.totalorder %s22, 0
    %p320 = por %p318, %p319
    %p321 = scmp.ne.s32.totalorder %s313, %s315
    %p322 = scmp.eq.s32.totalorder %s27, 1
    %p323 = por %p321, %p322
    %p324 = scmp.ne.s32.totalorder %s315, %s316
    %p325 = scmp.eq.s32.totalorder %s27, 0
    %p326 = por %p324, %p325
    %p327 = scmp.ne.s32.totalorder %s315, %s316
    %p328 = scmp.eq.s32.totalorder %s28, 1
    %p329 = por %p327, %p328
    %p331 = scmp.ne.s32.totalorder %s316, %s330
    %p332 = scmp.eq.s32.totalorder %s28, 0
    %p333 = por %p331, %p332
    %s335 = sadd.s32 %s334, 1
    %p338 = scmp.eq.s32.totalorder %s22, 1
    %p339 = scmp.ne.s32.totalorder %s334, %s336
    %p340 = scmp.eq.s32.totalorder %s22, 0
    %p341 = por %p339, %p340
    %p342 = scmp.ne.s32.totalorder %s334, %s336
    %p343 = scmp.eq.s32.totalorder %s27, 1
    %p344 = por %p342, %p343
    %p345 = scmp.ne.s32.totalorder %s336, %s337
    %p346 = scmp.eq.s32.totalorder %s27, 0
    %p347 = por %p345, %p346
    %p348 = scmp.ne.s32.totalorder %s336, %s337
    %p349 = scmp.eq.s32.totalorder %s28, 1
    %p350 = por %p348, %p349
    %p352 = scmp.ne.s32.totalorder %s337, %s351
    %p353 = scmp.eq.s32.totalorder %s28, 0
    %p354 = por %p352, %p353
    %s356 = sadd.s32 %s355, 1
    %p359 = scmp.eq.s32.totalorder %s22, 1
    %p360 = scmp.ne.s32.totalorder %s355, %s357
    %p361 = scmp.eq.s32.totalorder %s22, 0
    %p362 = por %p360, %p361
    %p363 = scmp.ne.s32.totalorder %s355, %s357
    %p364 = scmp.eq.s32.totalorder %s27, 1
    %p365 = por %p363, %p364
    %p366 = scmp.ne.s32.totalorder %s357, %s358
    %p367 = scmp.eq.s32.totalorder %s27, 0
    %p368 = por %p366, %p367
    %p369 = scmp.ne.s32.totalorder %s357, %s358
    %p370 = scmp.eq.s32.totalorder %s28, 1
    %p371 = por %p369, %p370
    %p373 = scmp.ne.s32.totalorder %s358, %s372
    %p374 = scmp.eq.s32.totalorder %s28, 0
    %p375 = por %p373, %p374
    %s376 = ssub.s32 %s22, %s29
    %p377 = scmp.eq.s32.totalorder %s376, 0
    %s379 = sadd.s32 %s378, 1
    %s380 = scalar_select %p377, %s378, %s379
    %p383 = pneg %p377
    %p384 = scmp.eq.s32.totalorder %s22, 1
    %p385 = por %p383, %p384
    %p386 = scmp.ne.s32.totalorder %s378, %s381
    %p387 = scmp.eq.s32.totalorder %s22, 0
    %p388 = por %p386, %p387
    %p389 = scmp.ne.s32.totalorder %s378, %s381
    %p390 = scmp.eq.s32.totalorder %s27, 1
    %p391 = por %p389, %p390
    %p392 = scmp.ne.s32.totalorder %s381, %s382
    %p393 = scmp.eq.s32.totalorder %s27, 0
    %p394 = por %p392, %p393
    %p395 = scmp.ne.s32.totalorder %s381, %s382
    %p396 = scmp.eq.s32.totalorder %s28, 1
    %p397 = por %p395, %p396
    %p399 = scmp.ne.s32.totalorder %s382, %s398
    %p400 = scmp.eq.s32.totalorder %s28, 0
    %p401 = por %p399, %p400
    %p402 = scmp.le.s32.totalorder 1, %s22
    %p403 = scmp.lt.s32.totalorder %s22, 3
    %p404 = pnand %p402, %p403
    %p405 = pneg %p404
    // Predicated region
    $region9: #{downscaler_forward.1} parent=5 // pred_check
      _
    $region10: #{downscaler_forward.1} parent=5 // pred_check_branch
      %407 = sbr.rel (%p404) target = $region12
    $region11: #{downscaler_forward.1} parent=5 // pred_region
      %s408 = ssub.s32 %s22, 1
      // Predicated region
      $region13: #{downscaler_forward.1} parent=11 // pred_check
        %p409 = pneg %p95
      $region14: #{downscaler_forward.1} parent=11 // pred_check_branch
        %411 = sbr.rel (%p409) target = $region16
      $region15: #{downscaler_forward.1} parent=11 // pred_region
        _
      $region16: #{downscaler_forward.1} parent=11 // pred_fallthru
        _
      // Predicated region
      $region17: #{downscaler_forward.1} parent=11 // pred_check
        %p412 = pneg %p116
      $region18: #{downscaler_forward.1} parent=11 // pred_check_branch
        %414 = sbr.rel (%p412) target = $region20
      $region19: #{downscaler_forward.1} parent=11 // pred_region
        _
      $region20: #{downscaler_forward.1} parent=11 // pred_fallthru
        _
      // Predicated region
      $region21: #{downscaler_forward.1} parent=11 // pred_check
        %p415 = pneg %p137
      $region22: #{downscaler_forward.1} parent=11 // pred_check_branch
        %417 = sbr.rel (%p415) target = $region24
      $region23: #{downscaler_forward.1} parent=11 // pred_region
        _
      $region24: #{downscaler_forward.1} parent=11 // pred_fallthru
        _
      // Predicated region
      $region25: #{downscaler_forward.1} parent=11 // pred_check
        %p418 = pneg %p158
      $region26: #{downscaler_forward.1} parent=11 // pred_check_branch
        %420 = sbr.rel (%p418) target = $region28
      $region27: #{downscaler_forward.1} parent=11 // pred_region
        _
      $region28: #{downscaler_forward.1} parent=11 // pred_fallthru
        _
      // Predicated region
      $region29: #{downscaler_forward.1} parent=11 // pred_check
        %p421 = pneg %p179
      $region30: #{downscaler_forward.1} parent=11 // pred_check_branch
        %423 = sbr.rel (%p421) target = $region32
      $region31: #{downscaler_forward.1} parent=11 // pred_region
        _
      $region32: #{downscaler_forward.1} parent=11 // pred_fallthru
        _
      // Predicated region
      $region33: #{downscaler_forward.1} parent=11 // pred_check
        %p424 = pneg %p200
      $region34: #{downscaler_forward.1} parent=11 // pred_check_branch
        %426 = sbr.rel (%p424) target = $region36
      $region35: #{downscaler_forward.1} parent=11 // pred_region
        _
      $region36: #{downscaler_forward.1} parent=11 // pred_fallthru
        _
      // Predicated region
      $region37: #{downscaler_forward.1} parent=11 // pred_check
        %p427 = pneg %p221
      $region38: #{downscaler_forward.1} parent=11 // pred_check_branch
        %429 = sbr.rel (%p427) target = $region40
      $region39: #{downscaler_forward.1} parent=11 // pred_region
        _
      $region40: #{downscaler_forward.1} parent=11 // pred_fallthru
        _
      // Predicated region
      $region41: #{downscaler_forward.1} parent=11 // pred_check
        %p430 = pneg %p242
      $region42: #{downscaler_forward.1} parent=11 // pred_check_branch
        %432 = sbr.rel (%p430) target = $region44
      $region43: #{downscaler_forward.1} parent=11 // pred_region
        _
      $region44: #{downscaler_forward.1} parent=11 // pred_fallthru
        _
      // Predicated region
      $region45: #{downscaler_forward.1} parent=11 // pred_check
        %p433 = pneg %p263
      $region46: #{downscaler_forward.1} parent=11 // pred_check_branch
        %435 = sbr.rel (%p433) target = $region48
      $region47: #{downscaler_forward.1} parent=11 // pred_region
        _
      $region48: #{downscaler_forward.1} parent=11 // pred_fallthru
        _
      // Predicated region
      $region49: #{downscaler_forward.1} parent=11 // pred_check
        %p436 = pneg %p284
      $region50: #{downscaler_forward.1} parent=11 // pred_check_branch
        %438 = sbr.rel (%p436) target = $region52
      $region51: #{downscaler_forward.1} parent=11 // pred_region
        _
      $region52: #{downscaler_forward.1} parent=11 // pred_fallthru
        _
      // Predicated region
      $region53: #{downscaler_forward.1} parent=11 // pred_check
        %p439 = pneg %p305
      $region54: #{downscaler_forward.1} parent=11 // pred_check_branch
        %441 = sbr.rel (%p439) target = $region56
      $region55: #{downscaler_forward.1} parent=11 // pred_region
        _
      $region56: #{downscaler_forward.1} parent=11 // pred_fallthru
        _
      // Predicated region
      $region57: #{downscaler_forward.1} parent=11 // pred_check
        %p442 = pneg %p326
      $region58: #{downscaler_forward.1} parent=11 // pred_check_branch
        %444 = sbr.rel (%p442) target = $region60
      $region59: #{downscaler_forward.1} parent=11 // pred_region
        _
      $region60: #{downscaler_forward.1} parent=11 // pred_fallthru
        _
      // Predicated region
      $region61: #{downscaler_forward.1} parent=11 // pred_check
        %p445 = pneg %p347
      $region62: #{downscaler_forward.1} parent=11 // pred_check_branch
        %447 = sbr.rel (%p445) target = $region64
      $region63: #{downscaler_forward.1} parent=11 // pred_region
        _
      $region64: #{downscaler_forward.1} parent=11 // pred_fallthru
        _
      // Predicated region
      $region65: #{downscaler_forward.1} parent=11 // pred_check
        %p448 = pneg %p368
      $region66: #{downscaler_forward.1} parent=11 // pred_check_branch
        %450 = sbr.rel (%p448) target = $region68
      $region67: #{downscaler_forward.1} parent=11 // pred_region
        _
      $region68: #{downscaler_forward.1} parent=11 // pred_fallthru
        _
    $region12: #{downscaler_forward.1} parent=5 // pred_fallthru
      _
    %p451 = scmp.lt.s32.totalorder %s22, 2
    // Predicated region
    $region69: #{downscaler_forward.1} parent=5 // pred_check
      %p452 = pneg %p451
    $region70: #{downscaler_forward.1} parent=5 // pred_check_branch
      %454 = sbr.rel (%p452) target = $region72
    $region71: #{downscaler_forward.1} parent=5 // pred_region
      // Predicated region
      $region73: #{downscaler_forward.1} parent=71 // pred_check
        %p455 = pneg %p42
      $region74: #{downscaler_forward.1} parent=71 // pred_check_branch
        %457 = sbr.rel (%p455) target = $region76
      $region75: #{downscaler_forward.1} parent=71 // pred_region
        %p458 = scmp.lt.s32.totalorder %s22, 1
        %s459 = scalar_select %p458, %s22, 1
        %s460 = smul.addr %s459, 16
        %s461 = smul.addr %s460, 8
        %s462 = scalar_lea.vmem %s0, %s461
      $region76: #{downscaler_forward.1} parent=71 // pred_fallthru
        _
      // Predicated region
      $region77: #{downscaler_forward.1} parent=71 // pred_check
        %p463 = pneg %p68
      $region78: #{downscaler_forward.1} parent=71 // pred_check_branch
        %465 = sbr.rel (%p463) target = $region80
      $region79: #{downscaler_forward.1} parent=71 // pred_region
        %p466 = scmp.lt.s32.totalorder %s22, 1
        %s467 = scalar_select %p466, %s22, 1
        %s468 = scalar_lea.vmem %s1, %s467
      $region80: #{downscaler_forward.1} parent=71 // pred_fallthru
        _
    $region72: #{downscaler_forward.1} parent=5 // pred_fallthru
      _
    %p469 = scmp.le.s32.totalorder 1, %s22
    %p470 = scmp.lt.s32.totalorder %s22, 3
    %p471 = pnand %p469, %p470
    %p472 = pneg %p471
    // Predicated region
    $region81: #{downscaler_forward.1} parent=5 // pred_check
      _
    $region82: #{downscaler_forward.1} parent=5 // pred_check_branch
      %474 = sbr.rel (%p471) target = $region84
    $region83: #{downscaler_forward.1} parent=5 // pred_region
      %s475 = ssub.s32 %s22, 1
      %p476 = scmp.lt.s32.totalorder %s27, 1
      %s477 = scalar_select %p476, %s27, 1
      %s478 = smul.addr %s477, 16
      %s479 = smul.addr %s478, 8
      %s480 = scalar_lea.vmem %s0, %s479
      %p481 = pneg %p48
      %p482 = pneg %p45
      %p483 = scmp.lt.s32.totalorder %s27, 1
      %s484 = scalar_select %p483, %s27, 1
      %s485 = scalar_lea.vmem %s1, %s484
      %p486 = pneg %p74
      %p487 = pneg %p71
      %p488 = pneg %p95
      %p489 = pneg %p92
      %p490 = pneg %p116
      %p491 = pneg %p113
      %p492 = pneg %p137
      %p493 = pneg %p134
      %p494 = pneg %p158
      %p495 = pneg %p155
      %p496 = pneg %p179
      %p497 = pneg %p176
      %p498 = pneg %p200
      %p499 = pneg %p197
      %p500 = pneg %p221
      %p501 = pneg %p218
      %p502 = pneg %p242
      %p503 = pneg %p239
      %p504 = pneg %p263
      %p505 = pneg %p260
      %p506 = pneg %p284
      %p507 = pneg %p281
      %p508 = pneg %p305
      %p509 = pneg %p302
      %p510 = pneg %p326
      %p511 = pneg %p323
      %p512 = pneg %p347
      %p513 = pneg %p344
      %p514 = pneg %p368
      %p515 = pneg %p365
      %p516 = pneg %p394
      %p517 = pneg %p391
      %p518 = scmp.lt.s32.totalorder %s27, 1
      %s519 = scalar_select %p518, %s27, 1
      %s520 = smul.addr %s519, 8
      %s521 = smul.addr %s520, 8
      %s522 = scalar_lea.vmem %s16, %s521
      %p523 = scmp.lt.s32.totalorder %s27, 1
      %s524 = scalar_select %p523, %s27, 1
      %s525 = smul.addr %s524, 16
      %s526 = smul.addr %s525, 8
      %s527 = scalar_lea.vmem %s0, %s526
      %p528 = scmp.lt.s32.totalorder %s27, 1
      %s529 = scalar_select %p528, %s27, 1
      %s530 = scalar_lea.vmem %s1, %s529
      %p531 = scmp.lt.s32.totalorder %s27, 1
      %s532 = scalar_select %p531, %s27, 1
      %s533 = smul.addr %s532, 8
      %s534 = smul.addr %s533, 8
      %s535 = scalar_lea.vmem %s16, %s534
      %v536 = vld [vmem:[%s527] sm:$0xff]
      %v537 = vld [vmem:[%s527 + $0x8] sm:$0xff]
      %v538 = vld [vmem:[%s527 + $0x10] sm:$0xff]
      %v539 = vld [vmem:[%s527 + $0x18] sm:$0xff]
      %v540 = vld [vmem:[%s527 + $0x20] sm:$0xff]
      %v541 = vld [vmem:[%s527 + $0x28] sm:$0xff]
      %v542 = vld [vmem:[%s527 + $0x30] sm:$0xff]
      %v543 = vld [vmem:[%s527 + $0x38] sm:$0xff]
      %v544 = vld [vmem:[%s527 + $0x40] sm:$0xff]
      %v545 = vld [vmem:[%s527 + $0x48] sm:$0xff]
      %v546 = vld [vmem:[%s527 + $0x50] sm:$0xff]
      %v547 = vld [vmem:[%s527 + $0x58] sm:$0xff]
      %v548 = vld [vmem:[%s527 + $0x60] sm:$0xff]
      %v549 = vld [vmem:[%s527 + $0x68] sm:$0xff]
      %v550 = vld [vmem:[%s527 + $0x70] sm:$0xff]
      %v551 = vld [vmem:[%s527 + $0x78] sm:$0xff]
      %v552 = vmax.f32 %v536, %v537
      %v553 = vmax.f32 %v538, %v539
      %v554 = vmax.f32 %v540, %v541
      %v555 = vmax.f32 %v542, %v543
      %v556 = vmax.f32 %v544, %v545
      %v557 = vmax.f32 %v546, %v547
      %v558 = vmax.f32 %v548, %v549
      %v559 = vmax.f32 %v550, %v551
      %568 = vrot.lane.b32.xlu0 %v552, 124
      %v569 = vpop.permute.xlu0 %568
      %570 = vrot.lane.b32.xlu0 %v553, 124
      %v571 = vpop.permute.xlu0 %570
      %572 = vrot.lane.b32.xlu0 %v554, 124
      %v573 = vpop.permute.xlu0 %572
      %574 = vrot.lane.b32.xlu0 %v555, 124
      %v575 = vpop.permute.xlu0 %574
      %576 = vrot.lane.b32.xlu0 %v556, 124
      %v577 = vpop.permute.xlu0 %576
      %578 = vrot.lane.b32.xlu0 %v557, 124
      %v579 = vpop.permute.xlu0 %578
      %580 = vrot.lane.b32.xlu0 %v558, 124
      %v581 = vpop.permute.xlu0 %580
      %582 = vrot.lane.b32.xlu0 %v559, 124
      %v583 = vpop.permute.xlu0 %582
      %v592 = vmax.f32 %v552, %v569
      %v593 = vmax.f32 %v553, %v571
      %v594 = vmax.f32 %v554, %v573
      %v595 = vmax.f32 %v555, %v575
      %v596 = vmax.f32 %v556, %v577
      %v597 = vmax.f32 %v557, %v579
      %v598 = vmax.f32 %v558, %v581
      %v599 = vmax.f32 %v559, %v583
      %vm600 = vcmask 64512
      %601 = vst.msk [vmem:[#allocation2] sm:$0xff] %vm600, 0.0
      %vm602 = vcmask 58368
      %603 = vst.msk [vmem:[#allocation2 + $0x8] sm:$0x3] %vm602, 0.0
      %604 = vst.msk [vmem:[#allocation2 + $0x10] sm:$0xff] %vm600, 0.0
      %605 = vst.msk [vmem:[#allocation2 + $0x18] sm:$0x3] %vm602, 0.0
      %606 = vst.msk [vmem:[#allocation2 + $0x20] sm:$0xff] %vm600, 0.0
      %607 = vst.msk [vmem:[#allocation2 + $0x28] sm:$0x3] %vm602, 0.0
      %608 = vst.msk [vmem:[#allocation2 + $0x30] sm:$0xff] %vm600, 0.0
      %609 = vst.msk [vmem:[#allocation2 + $0x38] sm:$0x3] %vm602, 0.0
      %610 = vst.msk [vmem:[#allocation2 + $0x40] sm:$0xff] %vm600, 0.0
      %611 = vst.msk [vmem:[#allocation2 + $0x48] sm:$0x3] %vm602, 0.0
      %612 = vst.msk [vmem:[#allocation2 + $0x50] sm:$0xff] %vm600, 0.0
      %613 = vst.msk [vmem:[#allocation2 + $0x58] sm:$0x3] %vm602, 0.0
      %614 = vst.msk [vmem:[#allocation2 + $0x60] sm:$0xff] %vm600, 0.0
      %615 = vst.msk [vmem:[#allocation2 + $0x68] sm:$0x3] %vm602, 0.0
      %616 = vst.msk [vmem:[#allocation2 + $0x70] sm:$0xff] %vm600, 0.0
      %617 = vst.msk [vmem:[#allocation2 + $0x78] sm:$0x3] %vm602, 0.0
      %618 = vst.msk [vmem:[#allocation2 + $0x80] sm:$0xff] %vm600, 0.0
      %619 = vst.msk [vmem:[#allocation2 + $0x88] sm:$0x3] %vm602, 0.0
      %620 = vst.msk [vmem:[#allocation2 + $0x90] sm:$0xff] %vm600, 0.0
      %621 = vst.msk [vmem:[#allocation2 + $0x98] sm:$0x3] %vm602, 0.0
      %s622 = scalar_lea.vmem [#allocation2], 16
      %vm623 = vcmask 31744
      %624 = vst.msk [vmem:[%s622 + $0x1] sm:$0xff] %vm623, %v592
      %625 = vst.msk [vmem:[%s622 + $0x11] sm:$0xff] %vm623, %v593
      %626 = vst.msk [vmem:[%s622 + $0x21] sm:$0xff] %vm623, %v594
      %627 = vst.msk [vmem:[%s622 + $0x31] sm:$0xff] %vm623, %v595
      %628 = vst.msk [vmem:[%s622 + $0x41] sm:$0xff] %vm623, %v596
      %629 = vst.msk [vmem:[%s622 + $0x51] sm:$0xff] %vm623, %v597
      %630 = vst.msk [vmem:[%s622 + $0x61] sm:$0xff] %vm623, %v598
      %631 = vst.msk [vmem:[%s622 + $0x71] sm:$0xff] %vm623, %v599
      %v632 = vld [vmem:[#allocation2] sm:$0xff]
      %v633 = vld [vmem:[#allocation2 + $0x10] sm:$0xff]
      %v634 = vld [vmem:[#allocation2 + $0x20] sm:$0xff]
      %v635 = vld [vmem:[#allocation2 + $0x30] sm:$0xff]
      %v636 = vld [vmem:[#allocation2 + $0x40] sm:$0xff]
      %v637 = vld [vmem:[#allocation2 + $0x50] sm:$0xff]
      %v638 = vld [vmem:[#allocation2 + $0x60] sm:$0xff]
      %v639 = vld [vmem:[#allocation2 + $0x70] sm:$0xff]
      %v640 = vld [vmem:[%s2] sm:$0xf]
      %v641 = vld [vmem:[#allocation2 + $0x1] sm:$0xff]
      %v642 = vld [vmem:[#allocation2 + $0x11] sm:$0xff]
      %v643 = vld [vmem:[#allocation2 + $0x21] sm:$0xff]
      %v644 = vld [vmem:[#allocation2 + $0x31] sm:$0xff]
      %v645 = vld [vmem:[#allocation2 + $0x41] sm:$0xff]
      %v646 = vld [vmem:[#allocation2 + $0x51] sm:$0xff]
      %v647 = vld [vmem:[#allocation2 + $0x61] sm:$0xff]
      %v648 = vld [vmem:[#allocation2 + $0x71] sm:$0xff]
      %s649 = scalar_lea.vmem %s2, 4
      %v650 = vld [vmem:[%s649] sm:$0xf]
      %v652 = vsel %vm623, %v641, 0
      %v655 = vsel %vm623, %v642, 0
      %v658 = vsel %vm623, %v643, 0
      %v661 = vsel %vm623, %v644, 0
      %v664 = vsel %vm623, %v645, 0
      %v667 = vsel %vm623, %v646, 0
      %v670 = vsel %vm623, %v647, 0
      %v673 = vsel %vm623, %v648, 0
      %vm675 = vcmask 1043456
      %v677 = vsel %vm675, %v650, 0
      %679 = vmatprep.subr.mxu0 0.0
      %680 = vmatpush1.msra.mxu0 %v677
      %681 = vmatprep.subr.mxu0 0.0
      %682 = vmatpush1.msra.mxu0 0.0
      %683 = vmatprep.subr.mxu0 0.0
      %684 = vmatpush1.msra.mxu0 0.0
      %685 = vmatprep.subr.mxu0 0.0
      %686 = vmatpush1.msra.mxu0 0.0
      %687 = vmatprep.subr.mxu0 0.0
      %688 = vmatpush1.msra.mxu0 0.0
      %689 = vmatprep.subr.mxu0 0.0
      %690 = vmatpush1.msra.mxu0 0.0
      %691 = vmatprep.subr.mxu0 0.0
      %692 = vmatpush1.msra.mxu0 0.0
      %693 = vmatprep.subr.mxu0 0.0
      %694 = vmatpush1.msra.mxu0 0.0
      %695 = vmatprep.subr.mxu0 0.0
      %696 = vmatpush1.msra.mxu0 0.0
      %697 = vmatprep.subr.mxu0 0.0
      %698 = vmatpush1.msra.mxu0 0.0
      %699 = vmatprep.subr.mxu0 0.0
      %700 = vmatpush1.msra.mxu0 0.0
      %701 = vmatprep.subr.mxu0 0.0
      %702 = vmatpush1.msra.mxu0 0.0
      %703 = vmatprep.subr.mxu0 0.0
      %704 = vmatpush1.msra.mxu0 0.0
      %705 = vmatprep.subr.mxu0 0.0
      %706 = vmatpush1.msra.mxu0 0.0
      %707 = vmatprep.subr.mxu0 0.0
      %708 = vmatpush1.msra.mxu0 0.0
      %709 = vmatprep.subr.mxu0 0.0
      %710 = vmatpush1.msra.mxu0 0.0
      %711 = vmatprep.subr.mxu0 0.0
      %712 = vmatpush1.msra.mxu0 0.0
      %713 = vmatprep.subr.mxu0 0.0
      %714 = vmatpush1.msra.mxu0 0.0
      %715 = vmatprep.subr.mxu0 0.0
      %716 = vmatpush1.msra.mxu0 0.0
      %717 = vmatprep.subr.mxu0 0.0
      %718 = vmatpush1.msra.mxu0 0.0
      %719 = vmatprep.subr.mxu0 0.0
      %720 = vmatpush1.msra.mxu0 0.0
      %721 = vmatprep.subr.mxu0 0.0
      %722 = vmatpush1.msra.mxu0 0.0
      %723 = vmatprep.subr.mxu0 0.0
      %724 = vmatpush1.msra.mxu0 0.0
      %725 = vmatprep.subr.mxu0 0.0
      %726 = vmatpush1.msra.mxu0 0.0
      %727 = vmatprep.subr.mxu0 0.0
      %728 = vmatpush1.msra.mxu0 0.0
      %729 = vmatprep.subr.mxu0 0.0
      %730 = vmatpush1.msra.mxu0 0.0
      %731 = vmatprep.subr.mxu0 0.0
      %732 = vmatpush1.msra.mxu0 0.0
      %733 = vmatprep.subr.mxu0 0.0
      %734 = vmatpush1.msra.mxu0 0.0
      %735 = vmatprep.subr.mxu0 0.0
      %736 = vmatpush1.msra.mxu0 0.0
      %737 = vmatprep.subr.mxu0 0.0
      %738 = vmatpush1.msra.mxu0 0.0
      %739 = vmatprep.subr.mxu0 0.0
      %740 = vmatpush1.msra.mxu0 0.0
      %741 = vmatprep.subr.mxu0 0.0
      %742 = vmatpush1.msra.mxu0 0.0
      %743 = vmatprep.mubr.f32.mxu0 0.0
      %744 = vmatmul.mubr.f32.gmra.mrb[0].mxu0 %v652
      %v745 = vpop.f32.mrb[0].mxu0
      %v746 = vadd.f32 0.0, %v745
      %v747 = vpop.f32.mrb[0].mxu0
      %748 = vmatprep.mubr.f32.mxu0 0.0
      %749 = vmatmul.mubr.f32.gmra.mrb[0].mxu0 %v655
      %v750 = vpop.f32.mrb[0].mxu0
      %v751 = vadd.f32 0.0, %v750
      %v752 = vpop.f32.mrb[0].mxu0
      %753 = vmatprep.mubr.f32.mxu0 0.0
      %754 = vmatmul.mubr.f32.gmra.mrb[0].mxu0 %v658
      %v755 = vpop.f32.mrb[0].mxu0
      %v756 = vadd.f32 0.0, %v755
      %v757 = vpop.f32.mrb[0].mxu0
      %758 = vmatprep.mubr.f32.mxu0 0.0
      %759 = vmatmul.mubr.f32.gmra.mrb[0].mxu0 %v661
      %v760 = vpop.f32.mrb[0].mxu0
      %v761 = vadd.f32 0.0, %v760
      %v762 = vpop.f32.mrb[0].mxu0
      %763 = vmatprep.mubr.f32.mxu0 0.0
      %764 = vmatmul.mubr.f32.gmra.mrb[0].mxu0 %v664
      %v765 = vpop.f32.mrb[0].mxu0
      %v766 = vadd.f32 0.0, %v765
      %v767 = vpop.f32.mrb[0].mxu0
      %768 = vmatprep.mubr.f32.mxu0 0.0
      %769 = vmatmul.mubr.f32.gmra.mrb[0].mxu0 %v667
      %v770 = vpop.f32.mrb[0].mxu0
      %v771 = vadd.f32 0.0, %v770
      %v772 = vpop.f32.mrb[0].mxu0
      %773 = vmatprep.mubr.f32.mxu0 0.0
      %774 = vmatmul.mubr.f32.gmra.mrb[0].mxu0 %v670
      %v775 = vpop.f32.mrb[0].mxu0
      %v776 = vadd.f32 0.0, %v775
      %v777 = vpop.f32.mrb[0].mxu0
      %778 = vmatprep.mubr.f32.mxu0 0.0
      %779 = vmatmul.mubr.f32.gmra.mrb[0].mxu0 %v673
      %v780 = vpop.f32.mrb[0].mxu0
      %v781 = vadd.f32 0.0, %v780
      %v782 = vpop.f32.mrb[0].mxu0
      %783 = vdwg.mxu0
      %v785 = vsel %vm623, %v632, 0
      %v788 = vsel %vm623, %v633, 0
      %v791 = vsel %vm623, %v634, 0
      %v794 = vsel %vm623, %v635, 0
      %v797 = vsel %vm623, %v636, 0
      %v800 = vsel %vm623, %v637, 0
      %v803 = vsel %vm623, %v638, 0
      %v806 = vsel %vm623, %v639, 0
      %v809 = vsel %vm675, %v640, 0
      %811 = vmatprep.subr.mxu0 0.0
      %812 = vmatpush1.msra.mxu0 %v809
      %813 = vmatprep.subr.mxu0 0.0
      %814 = vmatpush1.msra.mxu0 0.0
      %815 = vmatprep.subr.mxu0 0.0
      %816 = vmatpush1.msra.mxu0 0.0
      %817 = vmatprep.subr.mxu0 0.0
      %818 = vmatpush1.msra.mxu0 0.0
      %819 = vmatprep.subr.mxu0 0.0
      %820 = vmatpush1.msra.mxu0 0.0
      %821 = vmatprep.subr.mxu0 0.0
      %822 = vmatpush1.msra.mxu0 0.0
      %823 = vmatprep.subr.mxu0 0.0
      %824 = vmatpush1.msra.mxu0 0.0
      %825 = vmatprep.subr.mxu0 0.0
      %826 = vmatpush1.msra.mxu0 0.0
      %827 = vmatprep.subr.mxu0 0.0
      %828 = vmatpush1.msra.mxu0 0.0
      %829 = vmatprep.subr.mxu0 0.0
      %830 = vmatpush1.msra.mxu0 0.0
      %831 = vmatprep.subr.mxu0 0.0
      %832 = vmatpush1.msra.mxu0 0.0
      %833 = vmatprep.subr.mxu0 0.0
      %834 = vmatpush1.msra.mxu0 0.0
      %835 = vmatprep.subr.mxu0 0.0
      %836 = vmatpush1.msra.mxu0 0.0
      %837 = vmatprep.subr.mxu0 0.0
      %838 = vmatpush1.msra.mxu0 0.0
      %839 = vmatprep.subr.mxu0 0.0
      %840 = vmatpush1.msra.mxu0 0.0
      %841 = vmatprep.subr.mxu0 0.0
      %842 = vmatpush1.msra.mxu0 0.0
      %843 = vmatprep.subr.mxu0 0.0
      %844 = vmatpush1.msra.mxu0 0.0
      %845 = vmatprep.subr.mxu0 0.0
      %846 = vmatpush1.msra.mxu0 0.0
      %847 = vmatprep.subr.mxu0 0.0
      %848 = vmatpush1.msra.mxu0 0.0
      %849 = vmatprep.subr.mxu0 0.0
      %850 = vmatpush1.msra.mxu0 0.0
      %851 = vmatprep.subr.mxu0 0.0
      %852 = vmatpush1.msra.mxu0 0.0
      %853 = vmatprep.subr.mxu0 0.0
      %854 = vmatpush1.msra.mxu0 0.0
      %855 = vmatprep.subr.mxu0 0.0
      %856 = vmatpush1.msra.mxu0 0.0
      %857 = vmatprep.subr.mxu0 0.0
      %858 = vmatpush1.msra.mxu0 0.0
      %859 = vmatprep.subr.mxu0 0.0
      %860 = vmatpush1.msra.mxu0 0.0
      %861 = vmatprep.subr.mxu0 0.0
      %862 = vmatpush1.msra.mxu0 0.0
      %863 = vmatprep.subr.mxu0 0.0
      %864 = vmatpush1.msra.mxu0 0.0
      %865 = vmatprep.subr.mxu0 0.0
      %866 = vmatpush1.msra.mxu0 0.0
      %867 = vmatprep.subr.mxu0 0.0
      %868 = vmatpush1.msra.mxu0 0.0
      %869 = vmatprep.subr.mxu0 0.0
      %870 = vmatpush1.msra.mxu0 0.0
      %871 = vmatprep.subr.mxu0 0.0
      %872 = vmatpush1.msra.mxu0 0.0
      %873 = vmatprep.subr.mxu0 0.0
      %874 = vmatpush1.msra.mxu0 0.0
      %875 = vmatprep.mubr.f32.mxu0 0.0
      %876 = vmatmul.mubr.f32.gmra.mrb[0].mxu0 %v785
      %v877 = vpop.f32.mrb[0].mxu0
      %v878 = vadd.f32 %v746, %v877
      %v879 = vpop.f32.mrb[0].mxu0
      %880 = vmatprep.mubr.f32.mxu0 0.0
      %881 = vmatmul.mubr.f32.gmra.mrb[0].mxu0 %v788
      %v882 = vpop.f32.mrb[0].mxu0
      %v883 = vadd.f32 %v751, %v882
      %v884 = vpop.f32.mrb[0].mxu0
      %885 = vmatprep.mubr.f32.mxu0 0.0
      %886 = vmatmul.mubr.f32.gmra.mrb[0].mxu0 %v791
      %v887 = vpop.f32.mrb[0].mxu0
      %v888 = vadd.f32 %v756, %v887
      %v889 = vpop.f32.mrb[0].mxu0
      %890 = vmatprep.mubr.f32.mxu0 0.0
      %891 = vmatmul.mubr.f32.gmra.mrb[0].mxu0 %v794
      %v892 = vpop.f32.mrb[0].mxu0
      %v893 = vadd.f32 %v761, %v892
      %v894 = vpop.f32.mrb[0].mxu0
      %895 = vmatprep.mubr.f32.mxu0 0.0
      %896 = vmatmul.mubr.f32.gmra.mrb[0].mxu0 %v797
      %v897 = vpop.f32.mrb[0].mxu0
      %v898 = vadd.f32 %v766, %v897
      %v899 = vpop.f32.mrb[0].mxu0
      %900 = vmatprep.mubr.f32.mxu0 0.0
      %901 = vmatmul.mubr.f32.gmra.mrb[0].mxu0 %v800
      %v902 = vpop.f32.mrb[0].mxu0
      %v903 = vadd.f32 %v771, %v902
      %v904 = vpop.f32.mrb[0].mxu0
      %905 = vmatprep.mubr.f32.mxu0 0.0
      %906 = vmatmul.mubr.f32.gmra.mrb[0].mxu0 %v803
      %v907 = vpop.f32.mrb[0].mxu0
      %v908 = vadd.f32 %v776, %v907
      %v909 = vpop.f32.mrb[0].mxu0
      %910 = vmatprep.mubr.f32.mxu0 0.0
      %911 = vmatmul.mubr.f32.gmra.mrb[0].mxu0 %v806
      %v912 = vpop.f32.mrb[0].mxu0
      %v913 = vadd.f32 %v781, %v912
      %v914 = vpop.f32.mrb[0].mxu0
      %915 = vdwg.mxu0
      %v916 = vld [vmem:[#allocation2 + $0x2] sm:$0xff]
      %v917 = vld [vmem:[#allocation2 + $0x12] sm:$0xff]
      %v918 = vld [vmem:[#allocation2 + $0x22] sm:$0xff]
      %v919 = vld [vmem:[#allocation2 + $0x32] sm:$0xff]
      %v920 = vld [vmem:[#allocation2 + $0x42] sm:$0xff]
      %v921 = vld [vmem:[#allocation2 + $0x52] sm:$0xff]
      %v922 = vld [vmem:[#allocation2 + $0x62] sm:$0xff]
      %v923 = vld [vmem:[#allocation2 + $0x72] sm:$0xff]
      %s924 = scalar_lea.vmem %s2, 8
      %v925 = vld [vmem:[%s924] sm:$0xf]
      %v927 = vsel %vm623, %v916, 0
      %v930 = vsel %vm623, %v917, 0
      %v933 = vsel %vm623, %v918, 0
      %v936 = vsel %vm623, %v919, 0
      %v939 = vsel %vm623, %v920, 0
      %v942 = vsel %vm623, %v921, 0
      %v945 = vsel %vm623, %v922, 0
      %v948 = vsel %vm623, %v923, 0
      %v951 = vsel %vm675, %v925, 0
      %953 = vmatprep.subr.mxu0 0.0
      %954 = vmatpush1.msra.mxu0 %v951
      %955 = vmatprep.subr.mxu0 0.0
      %956 = vmatpush1.msra.mxu0 0.0
      %957 = vmatprep.subr.mxu0 0.0
      %958 = vmatpush1.msra.mxu0 0.0
      %959 = vmatprep.subr.mxu0 0.0
      %960 = vmatpush1.msra.mxu0 0.0
      %961 = vmatprep.subr.mxu0 0.0
      %962 = vmatpush1.msra.mxu0 0.0
      %963 = vmatprep.subr.mxu0 0.0
      %964 = vmatpush1.msra.mxu0 0.0
      %965 = vmatprep.subr.mxu0 0.0
      %966 = vmatpush1.msra.mxu0 0.0
      %967 = vmatprep.subr.mxu0 0.0
      %968 = vmatpush1.msra.mxu0 0.0
      %969 = vmatprep.subr.mxu0 0.0
      %970 = vmatpush1.msra.mxu0 0.0
      %971 = vmatprep.subr.mxu0 0.0
      %972 = vmatpush1.msra.mxu0 0.0
      %973 = vmatprep.subr.mxu0 0.0
      %974 = vmatpush1.msra.mxu0 0.0
      %975 = vmatprep.subr.mxu0 0.0
      %976 = vmatpush1.msra.mxu0 0.0
      %977 = vmatprep.subr.mxu0 0.0
      %978 = vmatpush1.msra.mxu0 0.0
      %979 = vmatprep.subr.mxu0 0.0
      %980 = vmatpush1.msra.mxu0 0.0
      %981 = vmatprep.subr.mxu0 0.0
      %982 = vmatpush1.msra.mxu0 0.0
      %983 = vmatprep.subr.mxu0 0.0
      %984 = vmatpush1.msra.mxu0 0.0
      %985 = vmatprep.subr.mxu0 0.0
      %986 = vmatpush1.msra.mxu0 0.0
      %987 = vmatprep.subr.mxu0 0.0
      %988 = vmatpush1.msra.mxu0 0.0
      %989 = vmatprep.subr.mxu0 0.0
      %990 = vmatpush1.msra.mxu0 0.0
      %991 = vmatprep.subr.mxu0 0.0
      %992 = vmatpush1.msra.mxu0 0.0
      %993 = vmatprep.subr.mxu0 0.0
      %994 = vmatpush1.msra.mxu0 0.0
      %995 = vmatprep.subr.mxu0 0.0
      %996 = vmatpush1.msra.mxu0 0.0
      %997 = vmatprep.subr.mxu0 0.0
      %998 = vmatpush1.msra.mxu0 0.0
      %999 = vmatprep.subr.mxu0 0.0
      %1000 = vmatpush1.msra.mxu0 0.0
      %1001 = vmatprep.subr.mxu0 0.0
      %1002 = vmatpush1.msra.mxu0 0.0
      %1003 = vmatprep.subr.mxu0 0.0
      %1004 = vmatpush1.msra.mxu0 0.0
      %1005 = vmatprep.subr.mxu0 0.0
      %1006 = vmatpush1.msra.mxu0 0.0
      %1007 = vmatprep.subr.mxu0 0.0
      %1008 = vmatpush1.msra.mxu0 0.0
      %1009 = vmatprep.subr.mxu0 0.0
      %1010 = vmatpush1.msra.mxu0 0.0
      %1011 = vmatprep.subr.mxu0 0.0
      %1012 = vmatpush1.msra.mxu0 0.0
      %1013 = vmatprep.subr.mxu0 0.0
      %1014 = vmatpush1.msra.mxu0 0.0
      %1015 = vmatprep.subr.mxu0 0.0
      %1016 = vmatpush1.msra.mxu0 0.0
      %1017 = vmatprep.mubr.f32.mxu0 0.0
      %1018 = vmatmul.mubr.f32.gmra.mrb[0].mxu0 %v927
      %v1019 = vpop.f32.mrb[0].mxu0
      %v1020 = vadd.f32 0.0, %v1019
      %v1021 = vpop.f32.mrb[0].mxu0
      %1022 = vmatprep.mubr.f32.mxu0 0.0
      %1023 = vmatmul.mubr.f32.gmra.mrb[0].mxu0 %v930
      %v1024 = vpop.f32.mrb[0].mxu0
      %v1025 = vadd.f32 0.0, %v1024
      %v1026 = vpop.f32.mrb[0].mxu0
      %1027 = vmatprep.mubr.f32.mxu0 0.0
      %1028 = vmatmul.mubr.f32.gmra.mrb[0].mxu0 %v933
      %v1029 = vpop.f32.mrb[0].mxu0
      %v1030 = vadd.f32 0.0, %v1029
      %v1031 = vpop.f32.mrb[0].mxu0
      %1032 = vmatprep.mubr.f32.mxu0 0.0
      %1033 = vmatmul.mubr.f32.gmra.mrb[0].mxu0 %v936
      %v1034 = vpop.f32.mrb[0].mxu0
      %v1035 = vadd.f32 0.0, %v1034
      %v1036 = vpop.f32.mrb[0].mxu0
      %1037 = vmatprep.mubr.f32.mxu0 0.0
      %1038 = vmatmul.mubr.f32.gmra.mrb[0].mxu0 %v939
      %v1039 = vpop.f32.mrb[0].mxu0
      %v1040 = vadd.f32 0.0, %v1039
      %v1041 = vpop.f32.mrb[0].mxu0
      %1042 = vmatprep.mubr.f32.mxu0 0.0
      %1043 = vmatmul.mubr.f32.gmra.mrb[0].mxu0 %v942
      %v1044 = vpop.f32.mrb[0].mxu0
      %v1045 = vadd.f32 0.0, %v1044
      %v1046 = vpop.f32.mrb[0].mxu0
      %1047 = vmatprep.mubr.f32.mxu0 0.0
      %1048 = vmatmul.mubr.f32.gmra.mrb[0].mxu0 %v945
      %v1049 = vpop.f32.mrb[0].mxu0
      %v1050 = vadd.f32 0.0, %v1049
      %v1051 = vpop.f32.mrb[0].mxu0
      %1052 = vmatprep.mubr.f32.mxu0 0.0
      %1053 = vmatmul.mubr.f32.gmra.mrb[0].mxu0 %v948
      %v1054 = vpop.f32.mrb[0].mxu0
      %v1055 = vadd.f32 0.0, %v1054
      %v1056 = vpop.f32.mrb[0].mxu0
      %1057 = vdwg.mxu0
      %v1058 = vadd.f32 %v878, %v1020
      %v1059 = vadd.f32 %v883, %v1025
      %v1060 = vadd.f32 %v888, %v1030
      %v1061 = vadd.f32 %v893, %v1035
      %v1062 = vadd.f32 %v898, %v1040
      %v1063 = vadd.f32 %v903, %v1045
      %v1064 = vadd.f32 %v908, %v1050
      %v1065 = vadd.f32 %v913, %v1055
      %v1066 = vld [vmem:[%s622] sm:$0xff]
      %v1067 = vld [vmem:[%s622 + $0x10] sm:$0xff]
      %v1068 = vld [vmem:[%s622 + $0x20] sm:$0xff]
      %v1069 = vld [vmem:[%s622 + $0x30] sm:$0xff]
      %v1070 = vld [vmem:[%s622 + $0x40] sm:$0xff]
      %v1071 = vld [vmem:[%s622 + $0x50] sm:$0xff]
      %v1072 = vld [vmem:[%s622 + $0x60] sm:$0xff]
      %v1073 = vld [vmem:[%s622 + $0x70] sm:$0xff]
      %s1074 = scalar_lea.vmem %s2, 12
      %v1075 = vld [vmem:[%s1074] sm:$0xf]
      %v1077 = vsel %vm623, %v1066, 0
      %v1080 = vsel %vm623, %v1067, 0
      %v1083 = vsel %vm623, %v1068, 0
      %v1086 = vsel %vm623, %v1069, 0
      %v1089 = vsel %vm623, %v1070, 0
      %v1092 = vsel %vm623, %v1071, 0
      %v1095 = vsel %vm623, %v1072, 0
      %v1098 = vsel %vm623, %v1073, 0
      %v1101 = vsel %vm675, %v1075, 0
      %1103 = vmatprep.subr.mxu0 0.0
      %1104 = vmatpush1.msra.mxu0 %v1101
      %1105 = vmatprep.subr.mxu0 0.0
      %1106 = vmatpush1.msra.mxu0 0.0
      %1107 = vmatprep.subr.mxu0 0.0
      %1108 = vmatpush1.msra.mxu0 0.0
      %1109 = vmatprep.subr.mxu0 0.0
      %1110 = vmatpush1.msra.mxu0 0.0
      %1111 = vmatprep.subr.mxu0 0.0
      %1112 = vmatpush1.msra.mxu0 0.0
      %1113 = vmatprep.subr.mxu0 0.0
      %1114 = vmatpush1.msra.mxu0 0.0
      %1115 = vmatprep.subr.mxu0 0.0
      %1116 = vmatpush1.msra.mxu0 0.0
      %1117 = vmatprep.subr.mxu0 0.0
      %1118 = vmatpush1.msra.mxu0 0.0
      %1119 = vmatprep.subr.mxu0 0.0
      %1120 = vmatpush1.msra.mxu0 0.0
      %1121 = vmatprep.subr.mxu0 0.0
      %1122 = vmatpush1.msra.mxu0 0.0
      %1123 = vmatprep.subr.mxu0 0.0
      %1124 = vmatpush1.msra.mxu0 0.0
      %1125 = vmatprep.subr.mxu0 0.0
      %1126 = vmatpush1.msra.mxu0 0.0
      %1127 = vmatprep.subr.mxu0 0.0
      %1128 = vmatpush1.msra.mxu0 0.0
      %1129 = vmatprep.subr.mxu0 0.0
      %1130 = vmatpush1.msra.mxu0 0.0
      %1131 = vmatprep.subr.mxu0 0.0
      %1132 = vmatpush1.msra.mxu0 0.0
      %1133 = vmatprep.subr.mxu0 0.0
      %1134 = vmatpush1.msra.mxu0 0.0
      %1135 = vmatprep.subr.mxu0 0.0
      %1136 = vmatpush1.msra.mxu0 0.0
      %1137 = vmatprep.subr.mxu0 0.0
      %1138 = vmatpush1.msra.mxu0 0.0
      %1139 = vmatprep.subr.mxu0 0.0
      %1140 = vmatpush1.msra.mxu0 0.0
      %1141 = vmatprep.subr.mxu0 0.0
      %1142 = vmatpush1.msra.mxu0 0.0
      %1143 = vmatprep.subr.mxu0 0.0
      %1144 = vmatpush1.msra.mxu0 0.0
      %1145 = vmatprep.subr.mxu0 0.0
      %1146 = vmatpush1.msra.mxu0 0.0
      %1147 = vmatprep.subr.mxu0 0.0
      %1148 = vmatpush1.msra.mxu0 0.0
      %1149 = vmatprep.subr.mxu0 0.0
      %1150 = vmatpush1.msra.mxu0 0.0
      %1151 = vmatprep.subr.mxu0 0.0
      %1152 = vmatpush1.msra.mxu0 0.0
      %1153 = vmatprep.subr.mxu0 0.0
      %1154 = vmatpush1.msra.mxu0 0.0
      %1155 = vmatprep.subr.mxu0 0.0
      %1156 = vmatpush1.msra.mxu0 0.0
      %1157 = vmatprep.subr.mxu0 0.0
      %1158 = vmatpush1.msra.mxu0 0.0
      %1159 = vmatprep.subr.mxu0 0.0
      %1160 = vmatpush1.msra.mxu0 0.0
      %1161 = vmatprep.subr.mxu0 0.0
      %1162 = vmatpush1.msra.mxu0 0.0
      %1163 = vmatprep.subr.mxu0 0.0
      %1164 = vmatpush1.msra.mxu0 0.0
      %1165 = vmatprep.subr.mxu0 0.0
      %1166 = vmatpush1.msra.mxu0 0.0
      %1167 = vmatprep.mubr.f32.mxu0 0.0
      %1168 = vmatmul.mubr.f32.gmra.mrb[0].mxu0 %v1077
      %v1169 = vpop.f32.mrb[0].mxu0
      %v1170 = vadd.f32 0.0, %v1169
      %v1171 = vpop.f32.mrb[0].mxu0
      %1172 = vmatprep.mubr.f32.mxu0 0.0
      %1173 = vmatmul.mubr.f32.gmra.mrb[0].mxu0 %v1080
      %v1174 = vpop.f32.mrb[0].mxu0
      %v1175 = vadd.f32 0.0, %v1174
      %v1176 = vpop.f32.mrb[0].mxu0
      %1177 = vmatprep.mubr.f32.mxu0 0.0
      %1178 = vmatmul.mubr.f32.gmra.mrb[0].mxu0 %v1083
      %v1179 = vpop.f32.mrb[0].mxu0
      %v1180 = vadd.f32 0.0, %v1179
      %v1181 = vpop.f32.mrb[0].mxu0
      %1182 = vmatprep.mubr.f32.mxu0 0.0
      %1183 = vmatmul.mubr.f32.gmra.mrb[0].mxu0 %v1086
      %v1184 = vpop.f32.mrb[0].mxu0
      %v1185 = vadd.f32 0.0, %v1184
      %v1186 = vpop.f32.mrb[0].mxu0
      %1187 = vmatprep.mubr.f32.mxu0 0.0
      %1188 = vmatmul.mubr.f32.gmra.mrb[0].mxu0 %v1089
      %v1189 = vpop.f32.mrb[0].mxu0
      %v1190 = vadd.f32 0.0, %v1189
      %v1191 = vpop.f32.mrb[0].mxu0
      %1192 = vmatprep.mubr.f32.mxu0 0.0
      %1193 = vmatmul.mubr.f32.gmra.mrb[0].mxu0 %v1092
      %v1194 = vpop.f32.mrb[0].mxu0
      %v1195 = vadd.f32 0.0, %v1194
      %v1196 = vpop.f32.mrb[0].mxu0
      %1197 = vmatprep.mubr.f32.mxu0 0.0
      %1198 = vmatmul.mubr.f32.gmra.mrb[0].mxu0 %v1095
      %v1199 = vpop.f32.mrb[0].mxu0
      %v1200 = vadd.f32 0.0, %v1199
      %v1201 = vpop.f32.mrb[0].mxu0
      %1202 = vmatprep.mubr.f32.mxu0 0.0
      %1203 = vmatmul.mubr.f32.gmra.mrb[0].mxu0 %v1098
      %v1204 = vpop.f32.mrb[0].mxu0
      %v1205 = vadd.f32 0.0, %v1204
      %v1206 = vpop.f32.mrb[0].mxu0
      %1207 = vdwg.mxu0
      %v1208 = vadd.f32 %v1058, %v1170
      %v1209 = vadd.f32 %v1059, %v1175
      %v1210 = vadd.f32 %v1060, %v1180
      %v1211 = vadd.f32 %v1061, %v1185
      %v1212 = vadd.f32 %v1062, %v1190
      %v1213 = vadd.f32 %v1063, %v1195
      %v1214 = vadd.f32 %v1064, %v1200
      %v1215 = vadd.f32 %v1065, %v1205
      %v1216 = vld [vmem:[%s622 + $0x1] sm:$0xff]
      %v1217 = vld [vmem:[%s622 + $0x11] sm:$0xff]
      %v1218 = vld [vmem:[%s622 + $0x21] sm:$0xff]
      %v1219 = vld [vmem:[%s622 + $0x31] sm:$0xff]
      %v1220 = vld [vmem:[%s622 + $0x41] sm:$0xff]
      %v1221 = vld [vmem:[%s622 + $0x51] sm:$0xff]
      %v1222 = vld [vmem:[%s622 + $0x61] sm:$0xff]
      %v1223 = vld [vmem:[%s622 + $0x71] sm:$0xff]
      %s1224 = scalar_lea.vmem %s2, 16
      %v1225 = vld [vmem:[%s1224] sm:$0xf]
      %v1227 = vsel %vm623, %v1216, 0
      %v1230 = vsel %vm623, %v1217, 0
      %v1233 = vsel %vm623, %v1218, 0
      %v1236 = vsel %vm623, %v1219, 0
      %v1239 = vsel %vm623, %v1220, 0
      %v1242 = vsel %vm623, %v1221, 0
      %v1245 = vsel %vm623, %v1222, 0
      %v1248 = vsel %vm623, %v1223, 0
      %v1251 = vsel %vm675, %v1225, 0
      %1253 = vmatprep.subr.mxu0 0.0
      %1254 = vmatpush1.msra.mxu0 %v1251
      %1255 = vmatprep.subr.mxu0 0.0
      %1256 = vmatpush1.msra.mxu0 0.0
      %1257 = vmatprep.subr.mxu0 0.0
      %1258 = vmatpush1.msra.mxu0 0.0
      %1259 = vmatprep.subr.mxu0 0.0
      %1260 = vmatpush1.msra.mxu0 0.0
      %1261 = vmatprep.subr.mxu0 0.0
      %1262 = vmatpush1.msra.mxu0 0.0
      %1263 = vmatprep.subr.mxu0 0.0
      %1264 = vmatpush1.msra.mxu0 0.0
      %1265 = vmatprep.subr.mxu0 0.0
      %1266 = vmatpush1.msra.mxu0 0.0
      %1267 = vmatprep.subr.mxu0 0.0
      %1268 = vmatpush1.msra.mxu0 0.0
      %1269 = vmatprep.subr.mxu0 0.0
      %1270 = vmatpush1.msra.mxu0 0.0
      %1271 = vmatprep.subr.mxu0 0.0
      %1272 = vmatpush1.msra.mxu0 0.0
      %1273 = vmatprep.subr.mxu0 0.0
      %1274 = vmatpush1.msra.mxu0 0.0
      %1275 = vmatprep.subr.mxu0 0.0
      %1276 = vmatpush1.msra.mxu0 0.0
      %1277 = vmatprep.subr.mxu0 0.0
      %1278 = vmatpush1.msra.mxu0 0.0
      %1279 = vmatprep.subr.mxu0 0.0
      %1280 = vmatpush1.msra.mxu0 0.0
      %1281 = vmatprep.subr.mxu0 0.0
      %1282 = vmatpush1.msra.mxu0 0.0
      %1283 = vmatprep.subr.mxu0 0.0
      %1284 = vmatpush1.msra.mxu0 0.0
      %1285 = vmatprep.subr.mxu0 0.0
      %1286 = vmatpush1.msra.mxu0 0.0
      %1287 = vmatprep.subr.mxu0 0.0
      %1288 = vmatpush1.msra.mxu0 0.0
      %1289 = vmatprep.subr.mxu0 0.0
      %1290 = vmatpush1.msra.mxu0 0.0
      %1291 = vmatprep.subr.mxu0 0.0
      %1292 = vmatpush1.msra.mxu0 0.0
      %1293 = vmatprep.subr.mxu0 0.0
      %1294 = vmatpush1.msra.mxu0 0.0
      %1295 = vmatprep.subr.mxu0 0.0
      %1296 = vmatpush1.msra.mxu0 0.0
      %1297 = vmatprep.subr.mxu0 0.0
      %1298 = vmatpush1.msra.mxu0 0.0
      %1299 = vmatprep.subr.mxu0 0.0
      %1300 = vmatpush1.msra.mxu0 0.0
      %1301 = vmatprep.subr.mxu0 0.0
      %1302 = vmatpush1.msra.mxu0 0.0
      %1303 = vmatprep.subr.mxu0 0.0
      %1304 = vmatpush1.msra.mxu0 0.0
      %1305 = vmatprep.subr.mxu0 0.0
      %1306 = vmatpush1.msra.mxu0 0.0
      %1307 = vmatprep.subr.mxu0 0.0
      %1308 = vmatpush1.msra.mxu0 0.0
      %1309 = vmatprep.subr.mxu0 0.0
      %1310 = vmatpush1.msra.mxu0 0.0
      %1311 = vmatprep.subr.mxu0 0.0
      %1312 = vmatpush1.msra.mxu0 0.0
      %1313 = vmatprep.subr.mxu0 0.0
      %1314 = vmatpush1.msra.mxu0 0.0
      %1315 = vmatprep.subr.mxu0 0.0
      %1316 = vmatpush1.msra.mxu0 0.0
      %1317 = vmatprep.mubr.f32.mxu0 0.0
      %1318 = vmatmul.mubr.f32.gmra.mrb[0].mxu0 %v1227
      %v1319 = vpop.f32.mrb[0].mxu0
      %v1320 = vadd.f32 0.0, %v1319
      %v1321 = vpop.f32.mrb[0].mxu0
      %1322 = vmatprep.mubr.f32.mxu0 0.0
      %1323 = vmatmul.mubr.f32.gmra.mrb[0].mxu0 %v1230
      %v1324 = vpop.f32.mrb[0].mxu0
      %v1325 = vadd.f32 0.0, %v1324
      %v1326 = vpop.f32.mrb[0].mxu0
      %1327 = vmatprep.mubr.f32.mxu0 0.0
      %1328 = vmatmul.mubr.f32.gmra.mrb[0].mxu0 %v1233
      %v1329 = vpop.f32.mrb[0].mxu0
      %v1330 = vadd.f32 0.0, %v1329
      %v1331 = vpop.f32.mrb[0].mxu0
      %1332 = vmatprep.mubr.f32.mxu0 0.0
      %1333 = vmatmul.mubr.f32.gmra.mrb[0].mxu0 %v1236
      %v1334 = vpop.f32.mrb[0].mxu0
      %v1335 = vadd.f32 0.0, %v1334
      %v1336 = vpop.f32.mrb[0].mxu0
      %1337 = vmatprep.mubr.f32.mxu0 0.0
      %1338 = vmatmul.mubr.f32.gmra.mrb[0].mxu0 %v1239
      %v1339 = vpop.f32.mrb[0].mxu0
      %v1340 = vadd.f32 0.0, %v1339
      %v1341 = vpop.f32.mrb[0].mxu0
      %1342 = vmatprep.mubr.f32.mxu0 0.0
      %1343 = vmatmul.mubr.f32.gmra.mrb[0].mxu0 %v1242
      %v1344 = vpop.f32.mrb[0].mxu0
      %v1345 = vadd.f32 0.0, %v1344
      %v1346 = vpop.f32.mrb[0].mxu0
      %1347 = vmatprep.mubr.f32.mxu0 0.0
      %1348 = vmatmul.mubr.f32.gmra.mrb[0].mxu0 %v1245
      %v1349 = vpop.f32.mrb[0].mxu0
      %v1350 = vadd.f32 0.0, %v1349
      %v1351 = vpop.f32.mrb[0].mxu0
      %1352 = vmatprep.mubr.f32.mxu0 0.0
      %1353 = vmatmul.mubr.f32.gmra.mrb[0].mxu0 %v1248
      %v1354 = vpop.f32.mrb[0].mxu0
      %v1355 = vadd.f32 0.0, %v1354
      %v1356 = vpop.f32.mrb[0].mxu0
      %1357 = vdwg.mxu0
      %v1358 = vadd.f32 %v1208, %v1320
      %v1359 = vadd.f32 %v1209, %v1325
      %v1360 = vadd.f32 %v1210, %v1330
      %v1361 = vadd.f32 %v1211, %v1335
      %v1362 = vadd.f32 %v1212, %v1340
      %v1363 = vadd.f32 %v1213, %v1345
      %v1364 = vadd.f32 %v1214, %v1350
      %v1365 = vadd.f32 %v1215, %v1355
      %v1366 = vld [vmem:[%s622 + $0x2] sm:$0xff]
      %v1367 = vld [vmem:[%s622 + $0x12] sm:$0xff]
      %v1368 = vld [vmem:[%s622 + $0x22] sm:$0xff]
      %v1369 = vld [vmem:[%s622 + $0x32] sm:$0xff]
      %v1370 = vld [vmem:[%s622 + $0x42] sm:$0xff]
      %v1371 = vld [vmem:[%s622 + $0x52] sm:$0xff]
      %v1372 = vld [vmem:[%s622 + $0x62] sm:$0xff]
      %v1373 = vld [vmem:[%s622 + $0x72] sm:$0xff]
      %s1374 = scalar_lea.vmem %s2, 20
      %v1375 = vld [vmem:[%s1374] sm:$0xf]
      %v1377 = vsel %vm623, %v1366, 0
      %v1380 = vsel %vm623, %v1367, 0
      %v1383 = vsel %vm623, %v1368, 0
      %v1386 = vsel %vm623, %v1369, 0
      %v1389 = vsel %vm623, %v1370, 0
      %v1392 = vsel %vm623, %v1371, 0
      %v1395 = vsel %vm623, %v1372, 0
      %v1398 = vsel %vm623, %v1373, 0
      %v1401 = vsel %vm675, %v1375, 0
      %1403 = vmatprep.subr.mxu0 0.0
      %1404 = vmatpush1.msra.mxu0 %v1401
      %1405 = vmatprep.subr.mxu0 0.0
      %1406 = vmatpush1.msra.mxu0 0.0
      %1407 = vmatprep.subr.mxu0 0.0
      %1408 = vmatpush1.msra.mxu0 0.0
      %1409 = vmatprep.subr.mxu0 0.0
      %1410 = vmatpush1.msra.mxu0 0.0
      %1411 = vmatprep.subr.mxu0 0.0
      %1412 = vmatpush1.msra.mxu0 0.0
      %1413 = vmatprep.subr.mxu0 0.0
      %1414 = vmatpush1.msra.mxu0 0.0
      %1415 = vmatprep.subr.mxu0 0.0
      %1416 = vmatpush1.msra.mxu0 0.0
      %1417 = vmatprep.subr.mxu0 0.0
      %1418 = vmatpush1.msra.mxu0 0.0
      %1419 = vmatprep.subr.mxu0 0.0
      %1420 = vmatpush1.msra.mxu0 0.0
      %1421 = vmatprep.subr.mxu0 0.0
      %1422 = vmatpush1.msra.mxu0 0.0
      %1423 = vmatprep.subr.mxu0 0.0
      %1424 = vmatpush1.msra.mxu0 0.0
      %1425 = vmatprep.subr.mxu0 0.0
      %1426 = vmatpush1.msra.mxu0 0.0
      %1427 = vmatprep.subr.mxu0 0.0
      %1428 = vmatpush1.msra.mxu0 0.0
      %1429 = vmatprep.subr.mxu0 0.0
      %1430 = vmatpush1.msra.mxu0 0.0
      %1431 = vmatprep.subr.mxu0 0.0
      %1432 = vmatpush1.msra.mxu0 0.0
      %1433 = vmatprep.subr.mxu0 0.0
      %1434 = vmatpush1.msra.mxu0 0.0
      %1435 = vmatprep.subr.mxu0 0.0
      %1436 = vmatpush1.msra.mxu0 0.0
      %1437 = vmatprep.subr.mxu0 0.0
      %1438 = vmatpush1.msra.mxu0 0.0
      %1439 = vmatprep.subr.mxu0 0.0
      %1440 = vmatpush1.msra.mxu0 0.0
      %1441 = vmatprep.subr.mxu0 0.0
      %1442 = vmatpush1.msra.mxu0 0.0
      %1443 = vmatprep.subr.mxu0 0.0
      %1444 = vmatpush1.msra.mxu0 0.0
      %1445 = vmatprep.subr.mxu0 0.0
      %1446 = vmatpush1.msra.mxu0 0.0
      %1447 = vmatprep.subr.mxu0 0.0
      %1448 = vmatpush1.msra.mxu0 0.0
      %1449 = vmatprep.subr.mxu0 0.0
      %1450 = vmatpush1.msra.mxu0 0.0
      %1451 = vmatprep.subr.mxu0 0.0
      %1452 = vmatpush1.msra.mxu0 0.0
      %1453 = vmatprep.subr.mxu0 0.0
      %1454 = vmatpush1.msra.mxu0 0.0
      %1455 = vmatprep.subr.mxu0 0.0
      %1456 = vmatpush1.msra.mxu0 0.0
      %1457 = vmatprep.subr.mxu0 0.0
      %1458 = vmatpush1.msra.mxu0 0.0
      %1459 = vmatprep.subr.mxu0 0.0
      %1460 = vmatpush1.msra.mxu0 0.0
      %1461 = vmatprep.subr.mxu0 0.0
      %1462 = vmatpush1.msra.mxu0 0.0
      %1463 = vmatprep.subr.mxu0 0.0
      %1464 = vmatpush1.msra.mxu0 0.0
      %1465 = vmatprep.subr.mxu0 0.0
      %1466 = vmatpush1.msra.mxu0 0.0
      %1467 = vmatprep.mubr.f32.mxu0 0.0
      %1468 = vmatmul.mubr.f32.gmra.mrb[0].mxu0 %v1377
      %v1469 = vpop.f32.mrb[0].mxu0
      %v1470 = vadd.f32 0.0, %v1469
      %v1471 = vpop.f32.mrb[0].mxu0
      %1472 = vmatprep.mubr.f32.mxu0 0.0
      %1473 = vmatmul.mubr.f32.gmra.mrb[0].mxu0 %v1380
      %v1474 = vpop.f32.mrb[0].mxu0
      %v1475 = vadd.f32 0.0, %v1474
      %v1476 = vpop.f32.mrb[0].mxu0
      %1477 = vmatprep.mubr.f32.mxu0 0.0
      %1478 = vmatmul.mubr.f32.gmra.mrb[0].mxu0 %v1383
      %v1479 = vpop.f32.mrb[0].mxu0
      %v1480 = vadd.f32 0.0, %v1479
      %v1481 = vpop.f32.mrb[0].mxu0
      %1482 = vmatprep.mubr.f32.mxu0 0.0
      %1483 = vmatmul.mubr.f32.gmra.mrb[0].mxu0 %v1386
      %v1484 = vpop.f32.mrb[0].mxu0
      %v1485 = vadd.f32 0.0, %v1484
      %v1486 = vpop.f32.mrb[0].mxu0
      %1487 = vmatprep.mubr.f32.mxu0 0.0
      %1488 = vmatmul.mubr.f32.gmra.mrb[0].mxu0 %v1389
      %v1489 = vpop.f32.mrb[0].mxu0
      %v1490 = vadd.f32 0.0, %v1489
      %v1491 = vpop.f32.mrb[0].mxu0
      %1492 = vmatprep.mubr.f32.mxu0 0.0
      %1493 = vmatmul.mubr.f32.gmra.mrb[0].mxu0 %v1392
      %v1494 = vpop.f32.mrb[0].mxu0
      %v1495 = vadd.f32 0.0, %v1494
      %v1496 = vpop.f32.mrb[0].mxu0
      %1497 = vmatprep.mubr.f32.mxu0 0.0
      %1498 = vmatmul.mubr.f32.gmra.mrb[0].mxu0 %v1395
      %v1499 = vpop.f32.mrb[0].mxu0
      %v1500 = vadd.f32 0.0, %v1499
      %v1501 = vpop.f32.mrb[0].mxu0
      %1502 = vmatprep.mubr.f32.mxu0 0.0
      %1503 = vmatmul.mubr.f32.gmra.mrb[0].mxu0 %v1398
      %v1504 = vpop.f32.mrb[0].mxu0
      %v1505 = vadd.f32 0.0, %v1504
      %v1506 = vpop.f32.mrb[0].mxu0
      %1507 = vdwg.mxu0
      %v1508 = vadd.f32 %v1358, %v1470
      %v1509 = vadd.f32 %v1359, %v1475
      %v1510 = vadd.f32 %v1360, %v1480
      %v1511 = vadd.f32 %v1361, %v1485
      %v1512 = vadd.f32 %v1362, %v1490
      %v1513 = vadd.f32 %v1363, %v1495
      %v1514 = vadd.f32 %v1364, %v1500
      %v1515 = vadd.f32 %v1365, %v1505
      %s1516 = scalar_lea.vmem [#allocation2], 32
      %v1517 = vld [vmem:[%s1516] sm:$0xff]
      %v1518 = vld [vmem:[%s1516 + $0x10] sm:$0xff]
      %v1519 = vld [vmem:[%s1516 + $0x20] sm:$0xff]
      %v1520 = vld [vmem:[%s1516 + $0x30] sm:$0xff]
      %v1521 = vld [vmem:[%s1516 + $0x40] sm:$0xff]
      %v1522 = vld [vmem:[%s1516 + $0x50] sm:$0xff]
      %v1523 = vld [vmem:[%s1516 + $0x60] sm:$0xff]
      %v1524 = vld [vmem:[%s1516 + $0x70] sm:$0xff]
      %s1525 = scalar_lea.vmem %s2, 24
      %v1526 = vld [vmem:[%s1525] sm:$0xf]
      %v1528 = vsel %vm623, %v1517, 0
      %v1531 = vsel %vm623, %v1518, 0
      %v1534 = vsel %vm623, %v1519, 0
      %v1537 = vsel %vm623, %v1520, 0
      %v1540 = vsel %vm623, %v1521, 0
      %v1543 = vsel %vm623, %v1522, 0
      %v1546 = vsel %vm623, %v1523, 0
      %v1549 = vsel %vm623, %v1524, 0
      %v1552 = vsel %vm675, %v1526, 0
      %1554 = vmatprep.subr.mxu0 0.0
      %1555 = vmatpush1.msra.mxu0 %v1552
      %1556 = vmatprep.subr.mxu0 0.0
      %1557 = vmatpush1.msra.mxu0 0.0
      %1558 = vmatprep.subr.mxu0 0.0
      %1559 = vmatpush1.msra.mxu0 0.0
      %1560 = vmatprep.subr.mxu0 0.0
      %1561 = vmatpush1.msra.mxu0 0.0
      %1562 = vmatprep.subr.mxu0 0.0
      %1563 = vmatpush1.msra.mxu0 0.0
      %1564 = vmatprep.subr.mxu0 0.0
      %1565 = vmatpush1.msra.mxu0 0.0
      %1566 = vmatprep.subr.mxu0 0.0
      %1567 = vmatpush1.msra.mxu0 0.0
      %1568 = vmatprep.subr.mxu0 0.0
      %1569 = vmatpush1.msra.mxu0 0.0
      %1570 = vmatprep.subr.mxu0 0.0
      %1571 = vmatpush1.msra.mxu0 0.0
      %1572 = vmatprep.subr.mxu0 0.0
      %1573 = vmatpush1.msra.mxu0 0.0
      %1574 = vmatprep.subr.mxu0 0.0
      %1575 = vmatpush1.msra.mxu0 0.0
      %1576 = vmatprep.subr.mxu0 0.0
      %1577 = vmatpush1.msra.mxu0 0.0
      %1578 = vmatprep.subr.mxu0 0.0
      %1579 = vmatpush1.msra.mxu0 0.0
      %1580 = vmatprep.subr.mxu0 0.0
      %1581 = vmatpush1.msra.mxu0 0.0
      %1582 = vmatprep.subr.mxu0 0.0
      %1583 = vmatpush1.msra.mxu0 0.0
      %1584 = vmatprep.subr.mxu0 0.0
      %1585 = vmatpush1.msra.mxu0 0.0
      %1586 = vmatprep.subr.mxu0 0.0
      %1587 = vmatpush1.msra.mxu0 0.0
      %1588 = vmatprep.subr.mxu0 0.0
      %1589 = vmatpush1.msra.mxu0 0.0
      %1590 = vmatprep.subr.mxu0 0.0
      %1591 = vmatpush1.msra.mxu0 0.0
      %1592 = vmatprep.subr.mxu0 0.0
      %1593 = vmatpush1.msra.mxu0 0.0
      %1594 = vmatprep.subr.mxu0 0.0
      %1595 = vmatpush1.msra.mxu0 0.0
      %1596 = vmatprep.subr.mxu0 0.0
      %1597 = vmatpush1.msra.mxu0 0.0
      %1598 = vmatprep.subr.mxu0 0.0
      %1599 = vmatpush1.msra.mxu0 0.0
      %1600 = vmatprep.subr.mxu0 0.0
      %1601 = vmatpush1.msra.mxu0 0.0
      %1602 = vmatprep.subr.mxu0 0.0
      %1603 = vmatpush1.msra.mxu0 0.0
      %1604 = vmatprep.subr.mxu0 0.0
      %1605 = vmatpush1.msra.mxu0 0.0
      %1606 = vmatprep.subr.mxu0 0.0
      %1607 = vmatpush1.msra.mxu0 0.0
      %1608 = vmatprep.subr.mxu0 0.0
      %1609 = vmatpush1.msra.mxu0 0.0
      %1610 = vmatprep.subr.mxu0 0.0
      %1611 = vmatpush1.msra.mxu0 0.0
      %1612 = vmatprep.subr.mxu0 0.0
      %1613 = vmatpush1.msra.mxu0 0.0
      %1614 = vmatprep.subr.mxu0 0.0
      %1615 = vmatpush1.msra.mxu0 0.0
      %1616 = vmatprep.subr.mxu0 0.0
      %1617 = vmatpush1.msra.mxu0 0.0
      %1618 = vmatprep.mubr.f32.mxu0 0.0
      %1619 = vmatmul.mubr.f32.gmra.mrb[0].mxu0 %v1528
      %v1620 = vpop.f32.mrb[0].mxu0
      %v1621 = vadd.f32 0.0, %v1620
      %v1622 = vpop.f32.mrb[0].mxu0
      %1623 = vmatprep.mubr.f32.mxu0 0.0
      %1624 = vmatmul.mubr.f32.gmra.mrb[0].mxu0 %v1531
      %v1625 = vpop.f32.mrb[0].mxu0
      %v1626 = vadd.f32 0.0, %v1625
      %v1627 = vpop.f32.mrb[0].mxu0
      %1628 = vmatprep.mubr.f32.mxu0 0.0
      %1629 = vmatmul.mubr.f32.gmra.mrb[0].mxu0 %v1534
      %v1630 = vpop.f32.mrb[0].mxu0
      %v1631 = vadd.f32 0.0, %v1630
      %v1632 = vpop.f32.mrb[0].mxu0
      %1633 = vmatprep.mubr.f32.mxu0 0.0
      %1634 = vmatmul.mubr.f32.gmra.mrb[0].mxu0 %v1537
      %v1635 = vpop.f32.mrb[0].mxu0
      %v1636 = vadd.f32 0.0, %v1635
      %v1637 = vpop.f32.mrb[0].mxu0
      %1638 = vmatprep.mubr.f32.mxu0 0.0
      %1639 = vmatmul.mubr.f32.gmra.mrb[0].mxu0 %v1540
      %v1640 = vpop.f32.mrb[0].mxu0
      %v1641 = vadd.f32 0.0, %v1640
      %v1642 = vpop.f32.mrb[0].mxu0
      %1643 = vmatprep.mubr.f32.mxu0 0.0
      %1644 = vmatmul.mubr.f32.gmra.mrb[0].mxu0 %v1543
      %v1645 = vpop.f32.mrb[0].mxu0
      %v1646 = vadd.f32 0.0, %v1645
      %v1647 = vpop.f32.mrb[0].mxu0
      %1648 = vmatprep.mubr.f32.mxu0 0.0
      %1649 = vmatmul.mubr.f32.gmra.mrb[0].mxu0 %v1546
      %v1650 = vpop.f32.mrb[0].mxu0
      %v1651 = vadd.f32 0.0, %v1650
      %v1652 = vpop.f32.mrb[0].mxu0
      %1653 = vmatprep.mubr.f32.mxu0 0.0
      %1654 = vmatmul.mubr.f32.gmra.mrb[0].mxu0 %v1549
      %v1655 = vpop.f32.mrb[0].mxu0
      %v1656 = vadd.f32 0.0, %v1655
      %v1657 = vpop.f32.mrb[0].mxu0
      %1658 = vdwg.mxu0
      %v1659 = vadd.f32 %v1508, %v1621
      %v1660 = vadd.f32 %v1509, %v1626
      %v1661 = vadd.f32 %v1510, %v1631
      %v1662 = vadd.f32 %v1511, %v1636
      %v1663 = vadd.f32 %v1512, %v1641
      %v1664 = vadd.f32 %v1513, %v1646
      %v1665 = vadd.f32 %v1514, %v1651
      %v1666 = vadd.f32 %v1515, %v1656
      %v1667 = vld [vmem:[%s1516 + $0x1] sm:$0xff]
      %v1668 = vld [vmem:[%s1516 + $0x11] sm:$0xff]
      %v1669 = vld [vmem:[%s1516 + $0x21] sm:$0xff]
      %v1670 = vld [vmem:[%s1516 + $0x31] sm:$0xff]
      %v1671 = vld [vmem:[%s1516 + $0x41] sm:$0xff]
      %v1672 = vld [vmem:[%s1516 + $0x51] sm:$0xff]
      %v1673 = vld [vmem:[%s1516 + $0x61] sm:$0xff]
      %v1674 = vld [vmem:[%s1516 + $0x71] sm:$0xff]
      %s1675 = scalar_lea.vmem %s2, 28
      %v1676 = vld [vmem:[%s1675] sm:$0xf]
      %v1678 = vsel %vm623, %v1667, 0
      %v1681 = vsel %vm623, %v1668, 0
      %v1684 = vsel %vm623, %v1669, 0
      %v1687 = vsel %vm623, %v1670, 0
      %v1690 = vsel %vm623, %v1671, 0
      %v1693 = vsel %vm623, %v1672, 0
      %v1696 = vsel %vm623, %v1673, 0
      %v1699 = vsel %vm623, %v1674, 0
      %v1702 = vsel %vm675, %v1676, 0
      %1704 = vmatprep.subr.mxu0 0.0
      %1705 = vmatpush1.msra.mxu0 %v1702
      %1706 = vmatprep.subr.mxu0 0.0
      %1707 = vmatpush1.msra.mxu0 0.0
      %1708 = vmatprep.subr.mxu0 0.0
      %1709 = vmatpush1.msra.mxu0 0.0
      %1710 = vmatprep.subr.mxu0 0.0
      %1711 = vmatpush1.msra.mxu0 0.0
      %1712 = vmatprep.subr.mxu0 0.0
      %1713 = vmatpush1.msra.mxu0 0.0
      %1714 = vmatprep.subr.mxu0 0.0
      %1715 = vmatpush1.msra.mxu0 0.0
      %1716 = vmatprep.subr.mxu0 0.0
      %1717 = vmatpush1.msra.mxu0 0.0
      %1718 = vmatprep.subr.mxu0 0.0
      %1719 = vmatpush1.msra.mxu0 0.0
      %1720 = vmatprep.subr.mxu0 0.0
      %1721 = vmatpush1.msra.mxu0 0.0
      %1722 = vmatprep.subr.mxu0 0.0
      %1723 = vmatpush1.msra.mxu0 0.0
      %1724 = vmatprep.subr.mxu0 0.0
      %1725 = vmatpush1.msra.mxu0 0.0
      %1726 = vmatprep.subr.mxu0 0.0
      %1727 = vmatpush1.msra.mxu0 0.0
      %1728 = vmatprep.subr.mxu0 0.0
      %1729 = vmatpush1.msra.mxu0 0.0
      %1730 = vmatprep.subr.mxu0 0.0
      %1731 = vmatpush1.msra.mxu0 0.0
      %1732 = vmatprep.subr.mxu0 0.0
      %1733 = vmatpush1.msra.mxu0 0.0
      %1734 = vmatprep.subr.mxu0 0.0
      %1735 = vmatpush1.msra.mxu0 0.0
      %1736 = vmatprep.subr.mxu0 0.0
      %1737 = vmatpush1.msra.mxu0 0.0
      %1738 = vmatprep.subr.mxu0 0.0
      %1739 = vmatpush1.msra.mxu0 0.0
      %1740 = vmatprep.subr.mxu0 0.0
      %1741 = vmatpush1.msra.mxu0 0.0
      %1742 = vmatprep.subr.mxu0 0.0
      %1743 = vmatpush1.msra.mxu0 0.0
      %1744 = vmatprep.subr.mxu0 0.0
      %1745 = vmatpush1.msra.mxu0 0.0
      %1746 = vmatprep.subr.mxu0 0.0
      %1747 = vmatpush1.msra.mxu0 0.0
      %1748 = vmatprep.subr.mxu0 0.0
      %1749 = vmatpush1.msra.mxu0 0.0
      %1750 = vmatprep.subr.mxu0 0.0
      %1751 = vmatpush1.msra.mxu0 0.0
      %1752 = vmatprep.subr.mxu0 0.0
      %1753 = vmatpush1.msra.mxu0 0.0
      %1754 = vmatprep.subr.mxu0 0.0
      %1755 = vmatpush1.msra.mxu0 0.0
      %1756 = vmatprep.subr.mxu0 0.0
      %1757 = vmatpush1.msra.mxu0 0.0
      %1758 = vmatprep.subr.mxu0 0.0
      %1759 = vmatpush1.msra.mxu0 0.0
      %1760 = vmatprep.subr.mxu0 0.0
      %1761 = vmatpush1.msra.mxu0 0.0
      %1762 = vmatprep.subr.mxu0 0.0
      %1763 = vmatpush1.msra.mxu0 0.0
      %1764 = vmatprep.subr.mxu0 0.0
      %1765 = vmatpush1.msra.mxu0 0.0
      %1766 = vmatprep.subr.mxu0 0.0
      %1767 = vmatpush1.msra.mxu0 0.0
      %1768 = vmatprep.mubr.f32.mxu0 0.0
      %1769 = vmatmul.mubr.f32.gmra.mrb[0].mxu0 %v1678
      %v1770 = vpop.f32.mrb[0].mxu0
      %v1771 = vadd.f32 0.0, %v1770
      %v1772 = vpop.f32.mrb[0].mxu0
      %1773 = vmatprep.mubr.f32.mxu0 0.0
      %1774 = vmatmul.mubr.f32.gmra.mrb[0].mxu0 %v1681
      %v1775 = vpop.f32.mrb[0].mxu0
      %v1776 = vadd.f32 0.0, %v1775
      %v1777 = vpop.f32.mrb[0].mxu0
      %1778 = vmatprep.mubr.f32.mxu0 0.0
      %1779 = vmatmul.mubr.f32.gmra.mrb[0].mxu0 %v1684
      %v1780 = vpop.f32.mrb[0].mxu0
      %v1781 = vadd.f32 0.0, %v1780
      %v1782 = vpop.f32.mrb[0].mxu0
      %1783 = vmatprep.mubr.f32.mxu0 0.0
      %1784 = vmatmul.mubr.f32.gmra.mrb[0].mxu0 %v1687
      %v1785 = vpop.f32.mrb[0].mxu0
      %v1786 = vadd.f32 0.0, %v1785
      %v1787 = vpop.f32.mrb[0].mxu0
      %1788 = vmatprep.mubr.f32.mxu0 0.0
      %1789 = vmatmul.mubr.f32.gmra.mrb[0].mxu0 %v1690
      %v1790 = vpop.f32.mrb[0].mxu0
      %v1791 = vadd.f32 0.0, %v1790
      %v1792 = vpop.f32.mrb[0].mxu0
      %1793 = vmatprep.mubr.f32.mxu0 0.0
      %1794 = vmatmul.mubr.f32.gmra.mrb[0].mxu0 %v1693
      %v1795 = vpop.f32.mrb[0].mxu0
      %v1796 = vadd.f32 0.0, %v1795
      %v1797 = vpop.f32.mrb[0].mxu0
      %1798 = vmatprep.mubr.f32.mxu0 0.0
      %1799 = vmatmul.mubr.f32.gmra.mrb[0].mxu0 %v1696
      %v1800 = vpop.f32.mrb[0].mxu0
      %v1801 = vadd.f32 0.0, %v1800
      %v1802 = vpop.f32.mrb[0].mxu0
      %1803 = vmatprep.mubr.f32.mxu0 0.0
      %1804 = vmatmul.mubr.f32.gmra.mrb[0].mxu0 %v1699
      %v1805 = vpop.f32.mrb[0].mxu0
      %v1806 = vadd.f32 0.0, %v1805
      %v1807 = vpop.f32.mrb[0].mxu0
      %1808 = vdwg.mxu0
      %v1809 = vadd.f32 %v1659, %v1771
      %v1810 = vadd.f32 %v1660, %v1776
      %v1811 = vadd.f32 %v1661, %v1781
      %v1812 = vadd.f32 %v1662, %v1786
      %v1813 = vadd.f32 %v1663, %v1791
      %v1814 = vadd.f32 %v1664, %v1796
      %v1815 = vadd.f32 %v1665, %v1801
      %v1816 = vadd.f32 %v1666, %v1806
      %v1817 = vld [vmem:[%s1516 + $0x2] sm:$0xff]
      %v1818 = vld [vmem:[%s1516 + $0x12] sm:$0xff]
      %v1819 = vld [vmem:[%s1516 + $0x22] sm:$0xff]
      %v1820 = vld [vmem:[%s1516 + $0x32] sm:$0xff]
      %v1821 = vld [vmem:[%s1516 + $0x42] sm:$0xff]
      %v1822 = vld [vmem:[%s1516 + $0x52] sm:$0xff]
      %v1823 = vld [vmem:[%s1516 + $0x62] sm:$0xff]
      %v1824 = vld [vmem:[%s1516 + $0x72] sm:$0xff]
      %s1825 = scalar_lea.vmem %s2, 32
      %v1826 = vld [vmem:[%s1825] sm:$0xf]
      %v1828 = vsel %vm623, %v1817, 0
      %v1831 = vsel %vm623, %v1818, 0
      %v1834 = vsel %vm623, %v1819, 0
      %v1837 = vsel %vm623, %v1820, 0
      %v1840 = vsel %vm623, %v1821, 0
      %v1843 = vsel %vm623, %v1822, 0
      %v1846 = vsel %vm623, %v1823, 0
      %v1849 = vsel %vm623, %v1824, 0
      %v1852 = vsel %vm675, %v1826, 0
      %1854 = vmatprep.subr.mxu0 0.0
      %1855 = vmatpush1.msra.mxu0 %v1852
      %1856 = vmatprep.subr.mxu0 0.0
      %1857 = vmatpush1.msra.mxu0 0.0
      %1858 = vmatprep.subr.mxu0 0.0
      %1859 = vmatpush1.msra.mxu0 0.0
      %1860 = vmatprep.subr.mxu0 0.0
      %1861 = vmatpush1.msra.mxu0 0.0
      %1862 = vmatprep.subr.mxu0 0.0
      %1863 = vmatpush1.msra.mxu0 0.0
      %1864 = vmatprep.subr.mxu0 0.0
      %1865 = vmatpush1.msra.mxu0 0.0
      %1866 = vmatprep.subr.mxu0 0.0
      %1867 = vmatpush1.msra.mxu0 0.0
      %1868 = vmatprep.subr.mxu0 0.0
      %1869 = vmatpush1.msra.mxu0 0.0
      %1870 = vmatprep.subr.mxu0 0.0
      %1871 = vmatpush1.msra.mxu0 0.0
      %1872 = vmatprep.subr.mxu0 0.0
      %1873 = vmatpush1.msra.mxu0 0.0
      %1874 = vmatprep.subr.mxu0 0.0
      %1875 = vmatpush1.msra.mxu0 0.0
      %1876 = vmatprep.subr.mxu0 0.0
      %1877 = vmatpush1.msra.mxu0 0.0
      %1878 = vmatprep.subr.mxu0 0.0
      %1879 = vmatpush1.msra.mxu0 0.0
      %1880 = vmatprep.subr.mxu0 0.0
      %1881 = vmatpush1.msra.mxu0 0.0
      %1882 = vmatprep.subr.mxu0 0.0
      %1883 = vmatpush1.msra.mxu0 0.0
      %1884 = vmatprep.subr.mxu0 0.0
      %1885 = vmatpush1.msra.mxu0 0.0
      %1886 = vmatprep.subr.mxu0 0.0
      %1887 = vmatpush1.msra.mxu0 0.0
      %1888 = vmatprep.subr.mxu0 0.0
      %1889 = vmatpush1.msra.mxu0 0.0
      %1890 = vmatprep.subr.mxu0 0.0
      %1891 = vmatpush1.msra.mxu0 0.0
      %1892 = vmatprep.subr.mxu0 0.0
      %1893 = vmatpush1.msra.mxu0 0.0
      %1894 = vmatprep.subr.mxu0 0.0
      %1895 = vmatpush1.msra.mxu0 0.0
      %1896 = vmatprep.subr.mxu0 0.0
      %1897 = vmatpush1.msra.mxu0 0.0
      %1898 = vmatprep.subr.mxu0 0.0
      %1899 = vmatpush1.msra.mxu0 0.0
      %1900 = vmatprep.subr.mxu0 0.0
      %1901 = vmatpush1.msra.mxu0 0.0
      %1902 = vmatprep.subr.mxu0 0.0
      %1903 = vmatpush1.msra.mxu0 0.0
      %1904 = vmatprep.subr.mxu0 0.0
      %1905 = vmatpush1.msra.mxu0 0.0
      %1906 = vmatprep.subr.mxu0 0.0
      %1907 = vmatpush1.msra.mxu0 0.0
      %1908 = vmatprep.subr.mxu0 0.0
      %1909 = vmatpush1.msra.mxu0 0.0
      %1910 = vmatprep.subr.mxu0 0.0
      %1911 = vmatpush1.msra.mxu0 0.0
      %1912 = vmatprep.subr.mxu0 0.0
      %1913 = vmatpush1.msra.mxu0 0.0
      %1914 = vmatprep.subr.mxu0 0.0
      %1915 = vmatpush1.msra.mxu0 0.0
      %1916 = vmatprep.subr.mxu0 0.0
      %1917 = vmatpush1.msra.mxu0 0.0
      %1918 = vmatprep.mubr.f32.mxu0 0.0
      %1919 = vmatmul.mubr.f32.gmra.mrb[0].mxu0 %v1828
      %v1920 = vpop.f32.mrb[0].mxu0
      %v1921 = vadd.f32 0.0, %v1920
      %v1922 = vpop.f32.mrb[0].mxu0
      %1923 = vmatprep.mubr.f32.mxu0 0.0
      %1924 = vmatmul.mubr.f32.gmra.mrb[0].mxu0 %v1831
      %v1925 = vpop.f32.mrb[0].mxu0
      %v1926 = vadd.f32 0.0, %v1925
      %v1927 = vpop.f32.mrb[0].mxu0
      %1928 = vmatprep.mubr.f32.mxu0 0.0
      %1929 = vmatmul.mubr.f32.gmra.mrb[0].mxu0 %v1834
      %v1930 = vpop.f32.mrb[0].mxu0
      %v1931 = vadd.f32 0.0, %v1930
      %v1932 = vpop.f32.mrb[0].mxu0
      %1933 = vmatprep.mubr.f32.mxu0 0.0
      %1934 = vmatmul.mubr.f32.gmra.mrb[0].mxu0 %v1837
      %v1935 = vpop.f32.mrb[0].mxu0
      %v1936 = vadd.f32 0.0, %v1935
      %v1937 = vpop.f32.mrb[0].mxu0
      %1938 = vmatprep.mubr.f32.mxu0 0.0
      %1939 = vmatmul.mubr.f32.gmra.mrb[0].mxu0 %v1840
      %v1940 = vpop.f32.mrb[0].mxu0
      %v1941 = vadd.f32 0.0, %v1940
      %v1942 = vpop.f32.mrb[0].mxu0
      %1943 = vmatprep.mubr.f32.mxu0 0.0
      %1944 = vmatmul.mubr.f32.gmra.mrb[0].mxu0 %v1843
      %v1945 = vpop.f32.mrb[0].mxu0
      %v1946 = vadd.f32 0.0, %v1945
      %v1947 = vpop.f32.mrb[0].mxu0
      %1948 = vmatprep.mubr.f32.mxu0 0.0
      %1949 = vmatmul.mubr.f32.gmra.mrb[0].mxu0 %v1846
      %v1950 = vpop.f32.mrb[0].mxu0
      %v1951 = vadd.f32 0.0, %v1950
      %v1952 = vpop.f32.mrb[0].mxu0
      %1953 = vmatprep.mubr.f32.mxu0 0.0
      %1954 = vmatmul.mubr.f32.gmra.mrb[0].mxu0 %v1849
      %v1955 = vpop.f32.mrb[0].mxu0
      %v1956 = vadd.f32 0.0, %v1955
      %v1957 = vpop.f32.mrb[0].mxu0
      %1958 = vdwg.mxu0
      %v1959 = vadd.f32 %v1809, %v1921
      %v1960 = vadd.f32 %v1810, %v1926
      %v1961 = vadd.f32 %v1811, %v1931
      %v1962 = vadd.f32 %v1812, %v1936
      %v1963 = vadd.f32 %v1813, %v1941
      %v1964 = vadd.f32 %v1814, %v1946
      %v1965 = vadd.f32 %v1815, %v1951
      %v1966 = vadd.f32 %v1816, %v1956
      %v1967 = vsel %vm623, %v1959, 0.0
      %v1968 = vsel %vm623, %v1960, 0.0
      %v1969 = vadd.f32 %v1967, %v1968
      %v1970 = vsel %vm623, %v1961, 0.0
      %v1971 = vadd.f32 %v1969, %v1970
      %v1972 = vsel %vm623, %v1962, 0.0
      %v1973 = vadd.f32 %v1971, %v1972
      %v1974 = vsel %vm623, %v1963, 0.0
      %v1975 = vadd.f32 %v1973, %v1974
      %v1976 = vsel %vm623, %v1964, 0.0
      %v1977 = vadd.f32 %v1975, %v1976
      %v1978 = vsel %vm623, %v1965, 0.0
      %v1979 = vadd.f32 %v1977, %v1978
      %v1980 = vsel %vm623, %v1966, 0.0
      %v1981 = vadd.f32 %v1979, %v1980
      %1982 = vadd.xlane.f32.xlu0 %v1981
      %v1983 = vpop.xlane.xlu0 %1982
      %v1984 = vrot.slane %v1983, 4
      %v1985 = vadd.f32 %v1983, %v1984
      %v1986 = vrot.slane %v1985, 2
      %v1987 = vadd.f32 %v1985, %v1986
      %v1988 = vrot.slane %v1987, 1
      %v1989 = vadd.f32 %v1987, %v1988
      %s1990 = vtos %v1989
      %v1991 = vrcp.pop 256.0
      %s1992 = vtos %v1991
      %s1993 = smul.f32 %s1990, %s1992
      %v1994 = vstv %s1993
      %v1995 = vsub.f32 %v1959, %v1994
      %v1996 = vsub.f32 %v1960, %v1994
      %v1997 = vsub.f32 %v1961, %v1994
      %v1998 = vsub.f32 %v1962, %v1994
      %v1999 = vsub.f32 %v1963, %v1994
      %v2000 = vsub.f32 %v1964, %v1994
      %v2001 = vsub.f32 %v1965, %v1994
      %v2002 = vsub.f32 %v1966, %v1994
      %v2003 = vmul.f32 %v1995, %v1995
      %v2004 = vmul.f32 %v1996, %v1996
      %v2005 = vmul.f32 %v1997, %v1997
      %v2006 = vmul.f32 %v1998, %v1998
      %v2007 = vmul.f32 %v1999, %v1999
      %v2008 = vmul.f32 %v2000, %v2000
      %v2009 = vmul.f32 %v2001, %v2001
      %v2010 = vmul.f32 %v2002, %v2002
      %v2011 = vsel %vm623, %v2003, 0.0
      %v2012 = vsel %vm623, %v2004, 0.0
      %v2013 = vadd.f32 %v2011, %v2012
      %v2014 = vsel %vm623, %v2005, 0.0
      %v2015 = vadd.f32 %v2013, %v2014
      %v2016 = vsel %vm623, %v2006, 0.0
      %v2017 = vadd.f32 %v2015, %v2016
      %v2018 = vsel %vm623, %v2007, 0.0
      %v2019 = vadd.f32 %v2017, %v2018
      %v2020 = vsel %vm623, %v2008, 0.0
      %v2021 = vadd.f32 %v2019, %v2020
      %v2022 = vsel %vm623, %v2009, 0.0
      %v2023 = vadd.f32 %v2021, %v2022
      %v2024 = vsel %vm623, %v2010, 0.0
      %v2025 = vadd.f32 %v2023, %v2024
      %2026 = vadd.xlane.f32.xlu0 %v2025
      %v2027 = vpop.xlane.xlu0 %2026
      %v2028 = vrot.slane %v2027, 4
      %v2029 = vadd.f32 %v2027, %v2028
      %v2030 = vrot.slane %v2029, 2
      %v2031 = vadd.f32 %v2029, %v2030
      %v2032 = vrot.slane %v2031, 1
      %v2033 = vadd.f32 %v2031, %v2032
      %s2034 = vtos %v2033
      %v2035 = vrcp.pop 256.0
      %s2036 = vtos %v2035
      %s2037 = smul.f32 %s2034, %s2036
      %v2038 = vld [vmem:[%s3] sm:$0x1]
      %s2039 = sadd.f32 %s2037, 1e-05
      %v2040 = vstv %s2039
      %v2041 = vrsqrt.pop %v2040
      %s2042 = vtos %v2041
      %v2043 = vstv %s2042
      %v2044 = vmul.f32 %v2038, %v2043
      %v2046 = vlaneseq
      %v2047 = vshrl.u32 %v2046, 7
      %v2048 = vsub.s32 0, %v2047
      %v2049 = vrot.slane %v2044, %v2048
      %v2051 = vmul.f32 %v1995, %v2049
      %v2052 = vmul.f32 %v1996, %v2049
      %v2053 = vmul.f32 %v1997, %v2049
      %v2054 = vmul.f32 %v1998, %v2049
      %v2055 = vmul.f32 %v1999, %v2049
      %v2056 = vmul.f32 %v2000, %v2049
      %v2057 = vmul.f32 %v2001, %v2049
      %v2058 = vmul.f32 %v2002, %v2049
      %v2059 = vld [vmem:[%s4] sm:$0x1]
      %v2061 = vlaneseq
      %v2062 = vshrl.u32 %v2061, 7
      %v2063 = vsub.s32 0, %v2062
      %v2064 = vrot.slane %v2059, %v2063
      %v2066 = vadd.f32 %v2051, %v2064
      %v2067 = vadd.f32 %v2052, %v2064
      %v2068 = vadd.f32 %v2053, %v2064
      %v2069 = vadd.f32 %v2054, %v2064
      %v2070 = vadd.f32 %v2055, %v2064
      %v2071 = vadd.f32 %v2056, %v2064
      %v2072 = vadd.f32 %v2057, %v2064
      %v2073 = vadd.f32 %v2058, %v2064
      %v2074 = vmul.f32 %v2066, 0.5
      %v2075 = vmul.f32 %v2067, 0.5
      %v2076 = vmul.f32 %v2068, 0.5
      %v2077 = vmul.f32 %v2069, 0.5
      %v2078 = vmul.f32 %v2070, 0.5
      %v2079 = vmul.f32 %v2071, 0.5
      %v2080 = vmul.f32 %v2072, 0.5
      %v2081 = vmul.f32 %v2073, 0.5
      %v2082 = vmul.f32 %v2066, 0.70710677
      %v2083 = vmul.f32 %v2067, 0.70710677
      %v2084 = vmul.f32 %v2068, 0.70710677
      %v2085 = vmul.f32 %v2069, 0.70710677
      %v2086 = vmul.f32 %v2070, 0.70710677
      %v2087 = vmul.f32 %v2071, 0.70710677
      %v2088 = vmul.f32 %v2072, 0.70710677
      %v2089 = vmul.f32 %v2073, 0.70710677
      %v2090 = verf.f32.pop %v2082
      %v2091 = verf.f32.pop %v2083
      %v2092 = verf.f32.pop %v2084
      %v2093 = verf.f32.pop %v2085
      %v2094 = verf.f32.pop %v2086
      %v2095 = verf.f32.pop %v2087
      %v2096 = verf.f32.pop %v2088
      %v2097 = verf.f32.pop %v2089
      %v2098 = vadd.f32 %v2090, 1.0
      %v2099 = vadd.f32 %v2091, 1.0
      %v2100 = vadd.f32 %v2092, 1.0
      %v2101 = vadd.f32 %v2093, 1.0
      %v2102 = vadd.f32 %v2094, 1.0
      %v2103 = vadd.f32 %v2095, 1.0
      %v2104 = vadd.f32 %v2096, 1.0
      %v2105 = vadd.f32 %v2097, 1.0
      %v2106 = vmul.f32 %v2074, %v2098
      %v2107 = vmul.f32 %v2075, %v2099
      %v2108 = vmul.f32 %v2076, %v2100
      %v2109 = vmul.f32 %v2077, %v2101
      %v2110 = vmul.f32 %v2078, %v2102
      %v2111 = vmul.f32 %v2079, %v2103
      %v2112 = vmul.f32 %v2080, %v2104
      %v2113 = vmul.f32 %v2081, %v2105
      %2114 = vst.msk [vmem:[%s622 + $0x1] sm:$0xff] %vm623, %v2106
      %2115 = vst.msk [vmem:[%s622 + $0x11] sm:$0xff] %vm623, %v2107
      %2116 = vst.msk [vmem:[%s622 + $0x21] sm:$0xff] %vm623, %v2108
      %2117 = vst.msk [vmem:[%s622 + $0x31] sm:$0xff] %vm623, %v2109
      %2118 = vst.msk [vmem:[%s622 + $0x41] sm:$0xff] %vm623, %v2110
      %2119 = vst.msk [vmem:[%s622 + $0x51] sm:$0xff] %vm623, %v2111
      %2120 = vst.msk [vmem:[%s622 + $0x61] sm:$0xff] %vm623, %v2112
      %2121 = vst.msk [vmem:[%s622 + $0x71] sm:$0xff] %vm623, %v2113
      %v2122 = vld [vmem:[#allocation2] sm:$0xff]
      %v2123 = vld [vmem:[#allocation2 + $0x10] sm:$0xff]
      %v2124 = vld [vmem:[#allocation2 + $0x20] sm:$0xff]
      %v2125 = vld [vmem:[#allocation2 + $0x30] sm:$0xff]
      %v2126 = vld [vmem:[#allocation2 + $0x40] sm:$0xff]
      %v2127 = vld [vmem:[#allocation2 + $0x50] sm:$0xff]
      %v2128 = vld [vmem:[#allocation2 + $0x60] sm:$0xff]
      %v2129 = vld [vmem:[#allocation2 + $0x70] sm:$0xff]
      %v2130 = vld [vmem:[%s5] sm:$0xf]
      %v2131 = vld [vmem:[#allocation2 + $0x1] sm:$0xff]
      %v2132 = vld [vmem:[#allocation2 + $0x11] sm:$0xff]
      %v2133 = vld [vmem:[#allocation2 + $0x21] sm:$0xff]
      %v2134 = vld [vmem:[#allocation2 + $0x31] sm:$0xff]
      %v2135 = vld [vmem:[#allocation2 + $0x41] sm:$0xff]
      %v2136 = vld [vmem:[#allocation2 + $0x51] sm:$0xff]
      %v2137 = vld [vmem:[#allocation2 + $0x61] sm:$0xff]
      %v2138 = vld [vmem:[#allocation2 + $0x71] sm:$0xff]
      %s2139 = scalar_lea.vmem %s5, 4
      %v2140 = vld [vmem:[%s2139] sm:$0xf]
      %v2142 = vsel %vm623, %v2131, 0
      %v2145 = vsel %vm623, %v2132, 0
      %v2148 = vsel %vm623, %v2133, 0
      %v2151 = vsel %vm623, %v2134, 0
      %v2154 = vsel %vm623, %v2135, 0
      %v2157 = vsel %vm623, %v2136, 0
      %v2160 = vsel %vm623, %v2137, 0
      %v2163 = vsel %vm623, %v2138, 0
      %v2166 = vsel %vm675, %v2140, 0
      %2168 = vmatprep.subr.mxu0 0.0
      %2169 = vmatpush1.msra.mxu0 %v2166
      %2170 = vmatprep.subr.mxu0 0.0
      %2171 = vmatpush1.msra.mxu0 0.0
      %2172 = vmatprep.subr.mxu0 0.0
      %2173 = vmatpush1.msra.mxu0 0.0
      %2174 = vmatprep.subr.mxu0 0.0
      %2175 = vmatpush1.msra.mxu0 0.0
      %2176 = vmatprep.subr.mxu0 0.0
      %2177 = vmatpush1.msra.mxu0 0.0
      %2178 = vmatprep.subr.mxu0 0.0
      %2179 = vmatpush1.msra.mxu0 0.0
      %2180 = vmatprep.subr.mxu0 0.0
      %2181 = vmatpush1.msra.mxu0 0.0
      %2182 = vmatprep.subr.mxu0 0.0
      %2183 = vmatpush1.msra.mxu0 0.0
      %2184 = vmatprep.subr.mxu0 0.0
      %2185 = vmatpush1.msra.mxu0 0.0
      %2186 = vmatprep.subr.mxu0 0.0
      %2187 = vmatpush1.msra.mxu0 0.0
      %2188 = vmatprep.subr.mxu0 0.0
      %2189 = vmatpush1.msra.mxu0 0.0
      %2190 = vmatprep.subr.mxu0 0.0
      %2191 = vmatpush1.msra.mxu0 0.0
      %2192 = vmatprep.subr.mxu0 0.0
      %2193 = vmatpush1.msra.mxu0 0.0
      %2194 = vmatprep.subr.mxu0 0.0
      %2195 = vmatpush1.msra.mxu0 0.0
      %2196 = vmatprep.subr.mxu0 0.0
      %2197 = vmatpush1.msra.mxu0 0.0
      %2198 = vmatprep.subr.mxu0 0.0
      %2199 = vmatpush1.msra.mxu0 0.0
      %2200 = vmatprep.subr.mxu0 0.0
      %2201 = vmatpush1.msra.mxu0 0.0
      %2202 = vmatprep.subr.mxu0 0.0
      %2203 = vmatpush1.msra.mxu0 0.0
      %2204 = vmatprep.subr.mxu0 0.0
      %2205 = vmatpush1.msra.mxu0 0.0
      %2206 = vmatprep.subr.mxu0 0.0
      %2207 = vmatpush1.msra.mxu0 0.0
      %2208 = vmatprep.subr.mxu0 0.0
      %2209 = vmatpush1.msra.mxu0 0.0
      %2210 = vmatprep.subr.mxu0 0.0
      %2211 = vmatpush1.msra.mxu0 0.0
      %2212 = vmatprep.subr.mxu0 0.0
      %2213 = vmatpush1.msra.mxu0 0.0
      %2214 = vmatprep.subr.mxu0 0.0
      %2215 = vmatpush1.msra.mxu0 0.0
      %2216 = vmatprep.subr.mxu0 0.0
      %2217 = vmatpush1.msra.mxu0 0.0
      %2218 = vmatprep.subr.mxu0 0.0
      %2219 = vmatpush1.msra.mxu0 0.0
      %2220 = vmatprep.subr.mxu0 0.0
      %2221 = vmatpush1.msra.mxu0 0.0
      %2222 = vmatprep.subr.mxu0 0.0
      %2223 = vmatpush1.msra.mxu0 0.0
      %2224 = vmatprep.subr.mxu0 0.0
      %2225 = vmatpush1.msra.mxu0 0.0
      %2226 = vmatprep.subr.mxu0 0.0
      %2227 = vmatpush1.msra.mxu0 0.0
      %2228 = vmatprep.subr.mxu0 0.0
      %2229 = vmatpush1.msra.mxu0 0.0
      %2230 = vmatprep.subr.mxu0 0.0
      %2231 = vmatpush1.msra.mxu0 0.0
      %2232 = vmatprep.mubr.f32.mxu0 0.0
      %2233 = vmatmul.mubr.f32.gmra.mrb[0].mxu0 %v2142
      %v2234 = vpop.f32.mrb[0].mxu0
      %v2235 = vadd.f32 0.0, %v2234
      %v2236 = vpop.f32.mrb[0].mxu0
      %2237 = vmatprep.mubr.f32.mxu0 0.0
      %2238 = vmatmul.mubr.f32.gmra.mrb[0].mxu0 %v2145
      %v2239 = vpop.f32.mrb[0].mxu0
      %v2240 = vadd.f32 0.0, %v2239
      %v2241 = vpop.f32.mrb[0].mxu0
      %2242 = vmatprep.mubr.f32.mxu0 0.0
      %2243 = vmatmul.mubr.f32.gmra.mrb[0].mxu0 %v2148
      %v2244 = vpop.f32.mrb[0].mxu0
      %v2245 = vadd.f32 0.0, %v2244
      %v2246 = vpop.f32.mrb[0].mxu0
      %2247 = vmatprep.mubr.f32.mxu0 0.0
      %2248 = vmatmul.mubr.f32.gmra.mrb[0].mxu0 %v2151
      %v2249 = vpop.f32.mrb[0].mxu0
      %v2250 = vadd.f32 0.0, %v2249
      %v2251 = vpop.f32.mrb[0].mxu0
      %2252 = vmatprep.mubr.f32.mxu0 0.0
      %2253 = vmatmul.mubr.f32.gmra.mrb[0].mxu0 %v2154
      %v2254 = vpop.f32.mrb[0].mxu0
      %v2255 = vadd.f32 0.0, %v2254
      %v2256 = vpop.f32.mrb[0].mxu0
      %2257 = vmatprep.mubr.f32.mxu0 0.0
      %2258 = vmatmul.mubr.f32.gmra.mrb[0].mxu0 %v2157
      %v2259 = vpop.f32.mrb[0].mxu0
      %v2260 = vadd.f32 0.0, %v2259
      %v2261 = vpop.f32.mrb[0].mxu0
      %2262 = vmatprep.mubr.f32.mxu0 0.0
      %2263 = vmatmul.mubr.f32.gmra.mrb[0].mxu0 %v2160
      %v2264 = vpop.f32.mrb[0].mxu0
      %v2265 = vadd.f32 0.0, %v2264
      %v2266 = vpop.f32.mrb[0].mxu0
      %2267 = vmatprep.mubr.f32.mxu0 0.0
      %2268 = vmatmul.mubr.f32.gmra.mrb[0].mxu0 %v2163
      %v2269 = vpop.f32.mrb[0].mxu0
      %v2270 = vadd.f32 0.0, %v2269
      %v2271 = vpop.f32.mrb[0].mxu0
      %2272 = vdwg.mxu0
      %v2274 = vsel %vm623, %v2122, 0
      %v2277 = vsel %vm623, %v2123, 0
      %v2280 = vsel %vm623, %v2124, 0
      %v2283 = vsel %vm623, %v2125, 0
      %v2286 = vsel %vm623, %v2126, 0
      %v2289 = vsel %vm623, %v2127, 0
      %v2292 = vsel %vm623, %v2128, 0
      %v2295 = vsel %vm623, %v2129, 0
      %v2298 = vsel %vm675, %v2130, 0
      %2300 = vmatprep.subr.mxu0 0.0
      %2301 = vmatpush1.msra.mxu0 %v2298
      %2302 = vmatprep.subr.mxu0 0.0
      %2303 = vmatpush1.msra.mxu0 0.0
      %2304 = vmatprep.subr.mxu0 0.0
      %2305 = vmatpush1.msra.mxu0 0.0
      %2306 = vmatprep.subr.mxu0 0.0
      %2307 = vmatpush1.msra.mxu0 0.0
      %2308 = vmatprep.subr.mxu0 0.0
      %2309 = vmatpush1.msra.mxu0 0.0
      %2310 = vmatprep.subr.mxu0 0.0
      %2311 = vmatpush1.msra.mxu0 0.0
      %2312 = vmatprep.subr.mxu0 0.0
      %2313 = vmatpush1.msra.mxu0 0.0
      %2314 = vmatprep.subr.mxu0 0.0
      %2315 = vmatpush1.msra.mxu0 0.0
      %2316 = vmatprep.subr.mxu0 0.0
      %2317 = vmatpush1.msra.mxu0 0.0
      %2318 = vmatprep.subr.mxu0 0.0
      %2319 = vmatpush1.msra.mxu0 0.0
      %2320 = vmatprep.subr.mxu0 0.0
      %2321 = vmatpush1.msra.mxu0 0.0
      %2322 = vmatprep.subr.mxu0 0.0
      %2323 = vmatpush1.msra.mxu0 0.0
      %2324 = vmatprep.subr.mxu0 0.0
      %2325 = vmatpush1.msra.mxu0 0.0
      %2326 = vmatprep.subr.mxu0 0.0
      %2327 = vmatpush1.msra.mxu0 0.0
      %2328 = vmatprep.subr.mxu0 0.0
      %2329 = vmatpush1.msra.mxu0 0.0
      %2330 = vmatprep.subr.mxu0 0.0
      %2331 = vmatpush1.msra.mxu0 0.0
      %2332 = vmatprep.subr.mxu0 0.0
      %2333 = vmatpush1.msra.mxu0 0.0
      %2334 = vmatprep.subr.mxu0 0.0
      %2335 = vmatpush1.msra.mxu0 0.0
      %2336 = vmatprep.subr.mxu0 0.0
      %2337 = vmatpush1.msra.mxu0 0.0
      %2338 = vmatprep.subr.mxu0 0.0
      %2339 = vmatpush1.msra.mxu0 0.0
      %2340 = vmatprep.subr.mxu0 0.0
      %2341 = vmatpush1.msra.mxu0 0.0
      %2342 = vmatprep.subr.mxu0 0.0
      %2343 = vmatpush1.msra.mxu0 0.0
      %2344 = vmatprep.subr.mxu0 0.0
      %2345 = vmatpush1.msra.mxu0 0.0
      %2346 = vmatprep.subr.mxu0 0.0
      %2347 = vmatpush1.msra.mxu0 0.0
      %2348 = vmatprep.subr.mxu0 0.0
      %2349 = vmatpush1.msra.mxu0 0.0
      %2350 = vmatprep.subr.mxu0 0.0
      %2351 = vmatpush1.msra.mxu0 0.0
      %2352 = vmatprep.subr.mxu0 0.0
      %2353 = vmatpush1.msra.mxu0 0.0
      %2354 = vmatprep.subr.mxu0 0.0
      %2355 = vmatpush1.msra.mxu0 0.0
      %2356 = vmatprep.subr.mxu0 0.0
      %2357 = vmatpush1.msra.mxu0 0.0
      %2358 = vmatprep.subr.mxu0 0.0
      %2359 = vmatpush1.msra.mxu0 0.0
      %2360 = vmatprep.subr.mxu0 0.0
      %2361 = vmatpush1.msra.mxu0 0.0
      %2362 = vmatprep.subr.mxu0 0.0
      %2363 = vmatpush1.msra.mxu0 0.0
      %2364 = vmatprep.mubr.f32.mxu0 0.0
      %2365 = vmatmul.mubr.f32.gmra.mrb[0].mxu0 %v2274
      %v2366 = vpop.f32.mrb[0].mxu0
      %v2367 = vadd.f32 %v2235, %v2366
      %v2368 = vpop.f32.mrb[0].mxu0
      %2369 = vmatprep.mubr.f32.mxu0 0.0
      %2370 = vmatmul.mubr.f32.gmra.mrb[0].mxu0 %v2277
      %v2371 = vpop.f32.mrb[0].mxu0
      %v2372 = vadd.f32 %v2240, %v2371
      %v2373 = vpop.f32.mrb[0].mxu0
      %2374 = vmatprep.mubr.f32.mxu0 0.0
      %2375 = vmatmul.mubr.f32.gmra.mrb[0].mxu0 %v2280
      %v2376 = vpop.f32.mrb[0].mxu0
      %v2377 = vadd.f32 %v2245, %v2376
      %v2378 = vpop.f32.mrb[0].mxu0
      %2379 = vmatprep.mubr.f32.mxu0 0.0
      %2380 = vmatmul.mubr.f32.gmra.mrb[0].mxu0 %v2283
      %v2381 = vpop.f32.mrb[0].mxu0
      %v2382 = vadd.f32 %v2250, %v2381
      %v2383 = vpop.f32.mrb[0].mxu0
      %2384 = vmatprep.mubr.f32.mxu0 0.0
      %2385 = vmatmul.mubr.f32.gmra.mrb[0].mxu0 %v2286
      %v2386 = vpop.f32.mrb[0].mxu0
      %v2387 = vadd.f32 %v2255, %v2386
      %v2388 = vpop.f32.mrb[0].mxu0
      %2389 = vmatprep.mubr.f32.mxu0 0.0
      %2390 = vmatmul.mubr.f32.gmra.mrb[0].mxu0 %v2289
      %v2391 = vpop.f32.mrb[0].mxu0
      %v2392 = vadd.f32 %v2260, %v2391
      %v2393 = vpop.f32.mrb[0].mxu0
      %2394 = vmatprep.mubr.f32.mxu0 0.0
      %2395 = vmatmul.mubr.f32.gmra.mrb[0].mxu0 %v2292
      %v2396 = vpop.f32.mrb[0].mxu0
      %v2397 = vadd.f32 %v2265, %v2396
      %v2398 = vpop.f32.mrb[0].mxu0
      %2399 = vmatprep.mubr.f32.mxu0 0.0
      %2400 = vmatmul.mubr.f32.gmra.mrb[0].mxu0 %v2295
      %v2401 = vpop.f32.mrb[0].mxu0
      %v2402 = vadd.f32 %v2270, %v2401
      %v2403 = vpop.f32.mrb[0].mxu0
      %2404 = vdwg.mxu0
      %v2405 = vld [vmem:[#allocation2 + $0x2] sm:$0xff]
      %v2406 = vld [vmem:[#allocation2 + $0x12] sm:$0xff]
      %v2407 = vld [vmem:[#allocation2 + $0x22] sm:$0xff]
      %v2408 = vld [vmem:[#allocation2 + $0x32] sm:$0xff]
      %v2409 = vld [vmem:[#allocation2 + $0x42] sm:$0xff]
      %v2410 = vld [vmem:[#allocation2 + $0x52] sm:$0xff]
      %v2411 = vld [vmem:[#allocation2 + $0x62] sm:$0xff]
      %v2412 = vld [vmem:[#allocation2 + $0x72] sm:$0xff]
      %s2413 = scalar_lea.vmem %s5, 8
      %v2414 = vld [vmem:[%s2413] sm:$0xf]
      %v2416 = vsel %vm623, %v2405, 0
      %v2419 = vsel %vm623, %v2406, 0
      %v2422 = vsel %vm623, %v2407, 0
      %v2425 = vsel %vm623, %v2408, 0
      %v2428 = vsel %vm623, %v2409, 0
      %v2431 = vsel %vm623, %v2410, 0
      %v2434 = vsel %vm623, %v2411, 0
      %v2437 = vsel %vm623, %v2412, 0
      %v2440 = vsel %vm675, %v2414, 0
      %2442 = vmatprep.subr.mxu0 0.0
      %2443 = vmatpush1.msra.mxu0 %v2440
      %2444 = vmatprep.subr.mxu0 0.0
      %2445 = vmatpush1.msra.mxu0 0.0
      %2446 = vmatprep.subr.mxu0 0.0
      %2447 = vmatpush1.msra.mxu0 0.0
      %2448 = vmatprep.subr.mxu0 0.0
      %2449 = vmatpush1.msra.mxu0 0.0
      %2450 = vmatprep.subr.mxu0 0.0
      %2451 = vmatpush1.msra.mxu0 0.0
      %2452 = vmatprep.subr.mxu0 0.0
      %2453 = vmatpush1.msra.mxu0 0.0
      %2454 = vmatprep.subr.mxu0 0.0
      %2455 = vmatpush1.msra.mxu0 0.0
      %2456 = vmatprep.subr.mxu0 0.0
      %2457 = vmatpush1.msra.mxu0 0.0
      %2458 = vmatprep.subr.mxu0 0.0
      %2459 = vmatpush1.msra.mxu0 0.0
      %2460 = vmatprep.subr.mxu0 0.0
      %2461 = vmatpush1.msra.mxu0 0.0
      %2462 = vmatprep.subr.mxu0 0.0
      %2463 = vmatpush1.msra.mxu0 0.0
      %2464 = vmatprep.subr.mxu0 0.0
      %2465 = vmatpush1.msra.mxu0 0.0
      %2466 = vmatprep.subr.mxu0 0.0
      %2467 = vmatpush1.msra.mxu0 0.0
      %2468 = vmatprep.subr.mxu0 0.0
      %2469 = vmatpush1.msra.mxu0 0.0
      %2470 = vmatprep.subr.mxu0 0.0
      %2471 = vmatpush1.msra.mxu0 0.0
      %2472 = vmatprep.subr.mxu0 0.0
      %2473 = vmatpush1.msra.mxu0 0.0
      %2474 = vmatprep.subr.mxu0 0.0
      %2475 = vmatpush1.msra.mxu0 0.0
      %2476 = vmatprep.subr.mxu0 0.0
      %2477 = vmatpush1.msra.mxu0 0.0
      %2478 = vmatprep.subr.mxu0 0.0
      %2479 = vmatpush1.msra.mxu0 0.0
      %2480 = vmatprep.subr.mxu0 0.0
      %2481 = vmatpush1.msra.mxu0 0.0
      %2482 = vmatprep.subr.mxu0 0.0
      %2483 = vmatpush1.msra.mxu0 0.0
      %2484 = vmatprep.subr.mxu0 0.0
      %2485 = vmatpush1.msra.mxu0 0.0
      %2486 = vmatprep.subr.mxu0 0.0
      %2487 = vmatpush1.msra.mxu0 0.0
      %2488 = vmatprep.subr.mxu0 0.0
      %2489 = vmatpush1.msra.mxu0 0.0
      %2490 = vmatprep.subr.mxu0 0.0
      %2491 = vmatpush1.msra.mxu0 0.0
      %2492 = vmatprep.subr.mxu0 0.0
      %2493 = vmatpush1.msra.mxu0 0.0
      %2494 = vmatprep.subr.mxu0 0.0
      %2495 = vmatpush1.msra.mxu0 0.0
      %2496 = vmatprep.subr.mxu0 0.0
      %2497 = vmatpush1.msra.mxu0 0.0
      %2498 = vmatprep.subr.mxu0 0.0
      %2499 = vmatpush1.msra.mxu0 0.0
      %2500 = vmatprep.subr.mxu0 0.0
      %2501 = vmatpush1.msra.mxu0 0.0
      %2502 = vmatprep.subr.mxu0 0.0
      %2503 = vmatpush1.msra.mxu0 0.0
      %2504 = vmatprep.subr.mxu0 0.0
      %2505 = vmatpush1.msra.mxu0 0.0
      %2506 = vmatprep.mubr.f32.mxu0 0.0
      %2507 = vmatmul.mubr.f32.gmra.mrb[0].mxu0 %v2416
      %v2508 = vpop.f32.mrb[0].mxu0
      %v2509 = vadd.f32 0.0, %v2508
      %v2510 = vpop.f32.mrb[0].mxu0
      %2511 = vmatprep.mubr.f32.mxu0 0.0
      %2512 = vmatmul.mubr.f32.gmra.mrb[0].mxu0 %v2419
      %v2513 = vpop.f32.mrb[0].mxu0
      %v2514 = vadd.f32 0.0, %v2513
      %v2515 = vpop.f32.mrb[0].mxu0
      %2516 = vmatprep.mubr.f32.mxu0 0.0
      %2517 = vmatmul.mubr.f32.gmra.mrb[0].mxu0 %v2422
      %v2518 = vpop.f32.mrb[0].mxu0
      %v2519 = vadd.f32 0.0, %v2518
      %v2520 = vpop.f32.mrb[0].mxu0
      %2521 = vmatprep.mubr.f32.mxu0 0.0
      %2522 = vmatmul.mubr.f32.gmra.mrb[0].mxu0 %v2425
      %v2523 = vpop.f32.mrb[0].mxu0
      %v2524 = vadd.f32 0.0, %v2523
      %v2525 = vpop.f32.mrb[0].mxu0
      %2526 = vmatprep.mubr.f32.mxu0 0.0
      %2527 = vmatmul.mubr.f32.gmra.mrb[0].mxu0 %v2428
      %v2528 = vpop.f32.mrb[0].mxu0
      %v2529 = vadd.f32 0.0, %v2528
      %v2530 = vpop.f32.mrb[0].mxu0
      %2531 = vmatprep.mubr.f32.mxu0 0.0
      %2532 = vmatmul.mubr.f32.gmra.mrb[0].mxu0 %v2431
      %v2533 = vpop.f32.mrb[0].mxu0
      %v2534 = vadd.f32 0.0, %v2533
      %v2535 = vpop.f32.mrb[0].mxu0
      %2536 = vmatprep.mubr.f32.mxu0 0.0
      %2537 = vmatmul.mubr.f32.gmra.mrb[0].mxu0 %v2434
      %v2538 = vpop.f32.mrb[0].mxu0
      %v2539 = vadd.f32 0.0, %v2538
      %v2540 = vpop.f32.mrb[0].mxu0
      %2541 = vmatprep.mubr.f32.mxu0 0.0
      %2542 = vmatmul.mubr.f32.gmra.mrb[0].mxu0 %v2437
      %v2543 = vpop.f32.mrb[0].mxu0
      %v2544 = vadd.f32 0.0, %v2543
      %v2545 = vpop.f32.mrb[0].mxu0
      %2546 = vdwg.mxu0
      %v2547 = vadd.f32 %v2367, %v2509
      %v2548 = vadd.f32 %v2372, %v2514
      %v2549 = vadd.f32 %v2377, %v2519
      %v2550 = vadd.f32 %v2382, %v2524
      %v2551 = vadd.f32 %v2387, %v2529
      %v2552 = vadd.f32 %v2392, %v2534
      %v2553 = vadd.f32 %v2397, %v2539
      %v2554 = vadd.f32 %v2402, %v2544
      %v2555 = vld [vmem:[%s622] sm:$0xff]
      %v2556 = vld [vmem:[%s622 + $0x10] sm:$0xff]
      %v2557 = vld [vmem:[%s622 + $0x20] sm:$0xff]
      %v2558 = vld [vmem:[%s622 + $0x30] sm:$0xff]
      %v2559 = vld [vmem:[%s622 + $0x40] sm:$0xff]
      %v2560 = vld [vmem:[%s622 + $0x50] sm:$0xff]
      %v2561 = vld [vmem:[%s622 + $0x60] sm:$0xff]
      %v2562 = vld [vmem:[%s622 + $0x70] sm:$0xff]
      %s2563 = scalar_lea.vmem %s5, 12
      %v2564 = vld [vmem:[%s2563] sm:$0xf]
      %v2566 = vsel %vm623, %v2555, 0
      %v2569 = vsel %vm623, %v2556, 0
      %v2572 = vsel %vm623, %v2557, 0
      %v2575 = vsel %vm623, %v2558, 0
      %v2578 = vsel %vm623, %v2559, 0
      %v2581 = vsel %vm623, %v2560, 0
      %v2584 = vsel %vm623, %v2561, 0
      %v2587 = vsel %vm623, %v2562, 0
      %v2590 = vsel %vm675, %v2564, 0
      %2592 = vmatprep.subr.mxu0 0.0
      %2593 = vmatpush1.msra.mxu0 %v2590
      %2594 = vmatprep.subr.mxu0 0.0
      %2595 = vmatpush1.msra.mxu0 0.0
      %2596 = vmatprep.subr.mxu0 0.0
      %2597 = vmatpush1.msra.mxu0 0.0
      %2598 = vmatprep.subr.mxu0 0.0
      %2599 = vmatpush1.msra.mxu0 0.0
      %2600 = vmatprep.subr.mxu0 0.0
      %2601 = vmatpush1.msra.mxu0 0.0
      %2602 = vmatprep.subr.mxu0 0.0
      %2603 = vmatpush1.msra.mxu0 0.0
      %2604 = vmatprep.subr.mxu0 0.0
      %2605 = vmatpush1.msra.mxu0 0.0
      %2606 = vmatprep.subr.mxu0 0.0
      %2607 = vmatpush1.msra.mxu0 0.0
      %2608 = vmatprep.subr.mxu0 0.0
      %2609 = vmatpush1.msra.mxu0 0.0
      %2610 = vmatprep.subr.mxu0 0.0
      %2611 = vmatpush1.msra.mxu0 0.0
      %2612 = vmatprep.subr.mxu0 0.0
      %2613 = vmatpush1.msra.mxu0 0.0
      %2614 = vmatprep.subr.mxu0 0.0
      %2615 = vmatpush1.msra.mxu0 0.0
      %2616 = vmatprep.subr.mxu0 0.0
      %2617 = vmatpush1.msra.mxu0 0.0
      %2618 = vmatprep.subr.mxu0 0.0
      %2619 = vmatpush1.msra.mxu0 0.0
      %2620 = vmatprep.subr.mxu0 0.0
      %2621 = vmatpush1.msra.mxu0 0.0
      %2622 = vmatprep.subr.mxu0 0.0
      %2623 = vmatpush1.msra.mxu0 0.0
      %2624 = vmatprep.subr.mxu0 0.0
      %2625 = vmatpush1.msra.mxu0 0.0
      %2626 = vmatprep.subr.mxu0 0.0
      %2627 = vmatpush1.msra.mxu0 0.0
      %2628 = vmatprep.subr.mxu0 0.0
      %2629 = vmatpush1.msra.mxu0 0.0
      %2630 = vmatprep.subr.mxu0 0.0
      %2631 = vmatpush1.msra.mxu0 0.0
      %2632 = vmatprep.subr.mxu0 0.0
      %2633 = vmatpush1.msra.mxu0 0.0
      %2634 = vmatprep.subr.mxu0 0.0
      %2635 = vmatpush1.msra.mxu0 0.0
      %2636 = vmatprep.subr.mxu0 0.0
      %2637 = vmatpush1.msra.mxu0 0.0
      %2638 = vmatprep.subr.mxu0 0.0
      %2639 = vmatpush1.msra.mxu0 0.0
      %2640 = vmatprep.subr.mxu0 0.0
      %2641 = vmatpush1.msra.mxu0 0.0
      %2642 = vmatprep.subr.mxu0 0.0
      %2643 = vmatpush1.msra.mxu0 0.0
      %2644 = vmatprep.subr.mxu0 0.0
      %2645 = vmatpush1.msra.mxu0 0.0
      %2646 = vmatprep.subr.mxu0 0.0
      %2647 = vmatpush1.msra.mxu0 0.0
      %2648 = vmatprep.subr.mxu0 0.0
      %2649 = vmatpush1.msra.mxu0 0.0
      %2650 = vmatprep.subr.mxu0 0.0
      %2651 = vmatpush1.msra.mxu0 0.0
      %2652 = vmatprep.subr.mxu0 0.0
      %2653 = vmatpush1.msra.mxu0 0.0
      %2654 = vmatprep.subr.mxu0 0.0
      %2655 = vmatpush1.msra.mxu0 0.0
      %2656 = vmatprep.mubr.f32.mxu0 0.0
      %2657 = vmatmul.mubr.f32.gmra.mrb[0].mxu0 %v2566
      %v2658 = vpop.f32.mrb[0].mxu0
      %v2659 = vadd.f32 0.0, %v2658
      %v2660 = vpop.f32.mrb[0].mxu0
      %2661 = vmatprep.mubr.f32.mxu0 0.0
      %2662 = vmatmul.mubr.f32.gmra.mrb[0].mxu0 %v2569
      %v2663 = vpop.f32.mrb[0].mxu0
      %v2664 = vadd.f32 0.0, %v2663
      %v2665 = vpop.f32.mrb[0].mxu0
      %2666 = vmatprep.mubr.f32.mxu0 0.0
      %2667 = vmatmul.mubr.f32.gmra.mrb[0].mxu0 %v2572
      %v2668 = vpop.f32.mrb[0].mxu0
      %v2669 = vadd.f32 0.0, %v2668
      %v2670 = vpop.f32.mrb[0].mxu0
      %2671 = vmatprep.mubr.f32.mxu0 0.0
      %2672 = vmatmul.mubr.f32.gmra.mrb[0].mxu0 %v2575
      %v2673 = vpop.f32.mrb[0].mxu0
      %v2674 = vadd.f32 0.0, %v2673
      %v2675 = vpop.f32.mrb[0].mxu0
      %2676 = vmatprep.mubr.f32.mxu0 0.0
      %2677 = vmatmul.mubr.f32.gmra.mrb[0].mxu0 %v2578
      %v2678 = vpop.f32.mrb[0].mxu0
      %v2679 = vadd.f32 0.0, %v2678
      %v2680 = vpop.f32.mrb[0].mxu0
      %2681 = vmatprep.mubr.f32.mxu0 0.0
      %2682 = vmatmul.mubr.f32.gmra.mrb[0].mxu0 %v2581
      %v2683 = vpop.f32.mrb[0].mxu0
      %v2684 = vadd.f32 0.0, %v2683
      %v2685 = vpop.f32.mrb[0].mxu0
      %2686 = vmatprep.mubr.f32.mxu0 0.0
      %2687 = vmatmul.mubr.f32.gmra.mrb[0].mxu0 %v2584
      %v2688 = vpop.f32.mrb[0].mxu0
      %v2689 = vadd.f32 0.0, %v2688
      %v2690 = vpop.f32.mrb[0].mxu0
      %2691 = vmatprep.mubr.f32.mxu0 0.0
      %2692 = vmatmul.mubr.f32.gmra.mrb[0].mxu0 %v2587
      %v2693 = vpop.f32.mrb[0].mxu0
      %v2694 = vadd.f32 0.0, %v2693
      %v2695 = vpop.f32.mrb[0].mxu0
      %2696 = vdwg.mxu0
      %v2697 = vadd.f32 %v2547, %v2659
      %v2698 = vadd.f32 %v2548, %v2664
      %v2699 = vadd.f32 %v2549, %v2669
      %v2700 = vadd.f32 %v2550, %v2674
      %v2701 = vadd.f32 %v2551, %v2679
      %v2702 = vadd.f32 %v2552, %v2684
      %v2703 = vadd.f32 %v2553, %v2689
      %v2704 = vadd.f32 %v2554, %v2694
      %v2705 = vld [vmem:[%s622 + $0x1] sm:$0xff]
      %v2706 = vld [vmem:[%s622 + $0x11] sm:$0xff]
      %v2707 = vld [vmem:[%s622 + $0x21] sm:$0xff]
      %v2708 = vld [vmem:[%s622 + $0x31] sm:$0xff]
      %v2709 = vld [vmem:[%s622 + $0x41] sm:$0xff]
      %v2710 = vld [vmem:[%s622 + $0x51] sm:$0xff]
      %v2711 = vld [vmem:[%s622 + $0x61] sm:$0xff]
      %v2712 = vld [vmem:[%s622 + $0x71] sm:$0xff]
      %s2713 = scalar_lea.vmem %s5, 16
      %v2714 = vld [vmem:[%s2713] sm:$0xf]
      %v2716 = vsel %vm623, %v2705, 0
      %v2719 = vsel %vm623, %v2706, 0
      %v2722 = vsel %vm623, %v2707, 0
      %v2725 = vsel %vm623, %v2708, 0
      %v2728 = vsel %vm623, %v2709, 0
      %v2731 = vsel %vm623, %v2710, 0
      %v2734 = vsel %vm623, %v2711, 0
      %v2737 = vsel %vm623, %v2712, 0
      %v2740 = vsel %vm675, %v2714, 0
      %2742 = vmatprep.subr.mxu0 0.0
      %2743 = vmatpush1.msra.mxu0 %v2740
      %2744 = vmatprep.subr.mxu0 0.0
      %2745 = vmatpush1.msra.mxu0 0.0
      %2746 = vmatprep.subr.mxu0 0.0
      %2747 = vmatpush1.msra.mxu0 0.0
      %2748 = vmatprep.subr.mxu0 0.0
      %2749 = vmatpush1.msra.mxu0 0.0
      %2750 = vmatprep.subr.mxu0 0.0
      %2751 = vmatpush1.msra.mxu0 0.0
      %2752 = vmatprep.subr.mxu0 0.0
      %2753 = vmatpush1.msra.mxu0 0.0
      %2754 = vmatprep.subr.mxu0 0.0
      %2755 = vmatpush1.msra.mxu0 0.0
      %2756 = vmatprep.subr.mxu0 0.0
      %2757 = vmatpush1.msra.mxu0 0.0
      %2758 = vmatprep.subr.mxu0 0.0
      %2759 = vmatpush1.msra.mxu0 0.0
      %2760 = vmatprep.subr.mxu0 0.0
      %2761 = vmatpush1.msra.mxu0 0.0
      %2762 = vmatprep.subr.mxu0 0.0
      %2763 = vmatpush1.msra.mxu0 0.0
      %2764 = vmatprep.subr.mxu0 0.0
      %2765 = vmatpush1.msra.mxu0 0.0
      %2766 = vmatprep.subr.mxu0 0.0
      %2767 = vmatpush1.msra.mxu0 0.0
      %2768 = vmatprep.subr.mxu0 0.0
      %2769 = vmatpush1.msra.mxu0 0.0
      %2770 = vmatprep.subr.mxu0 0.0
      %2771 = vmatpush1.msra.mxu0 0.0
      %2772 = vmatprep.subr.mxu0 0.0
      %2773 = vmatpush1.msra.mxu0 0.0
      %2774 = vmatprep.subr.mxu0 0.0
      %2775 = vmatpush1.msra.mxu0 0.0
      %2776 = vmatprep.subr.mxu0 0.0
      %2777 = vmatpush1.msra.mxu0 0.0
      %2778 = vmatprep.subr.mxu0 0.0
      %2779 = vmatpush1.msra.mxu0 0.0
      %2780 = vmatprep.subr.mxu0 0.0
      %2781 = vmatpush1.msra.mxu0 0.0
      %2782 = vmatprep.subr.mxu0 0.0
      %2783 = vmatpush1.msra.mxu0 0.0
      %2784 = vmatprep.subr.mxu0 0.0
      %2785 = vmatpush1.msra.mxu0 0.0
      %2786 = vmatprep.subr.mxu0 0.0
      %2787 = vmatpush1.msra.mxu0 0.0
      %2788 = vmatprep.subr.mxu0 0.0
      %2789 = vmatpush1.msra.mxu0 0.0
      %2790 = vmatprep.subr.mxu0 0.0
      %2791 = vmatpush1.msra.mxu0 0.0
      %2792 = vmatprep.subr.mxu0 0.0
      %2793 = vmatpush1.msra.mxu0 0.0
      %2794 = vmatprep.subr.mxu0 0.0
      %2795 = vmatpush1.msra.mxu0 0.0
      %2796 = vmatprep.subr.mxu0 0.0
      %2797 = vmatpush1.msra.mxu0 0.0
      %2798 = vmatprep.subr.mxu0 0.0
      %2799 = vmatpush1.msra.mxu0 0.0
      %2800 = vmatprep.subr.mxu0 0.0
      %2801 = vmatpush1.msra.mxu0 0.0
      %2802 = vmatprep.subr.mxu0 0.0
      %2803 = vmatpush1.msra.mxu0 0.0
      %2804 = vmatprep.subr.mxu0 0.0
      %2805 = vmatpush1.msra.mxu0 0.0
      %2806 = vmatprep.mubr.f32.mxu0 0.0
      %2807 = vmatmul.mubr.f32.gmra.mrb[0].mxu0 %v2716
      %v2808 = vpop.f32.mrb[0].mxu0
      %v2809 = vadd.f32 0.0, %v2808
      %v2810 = vpop.f32.mrb[0].mxu0
      %2811 = vmatprep.mubr.f32.mxu0 0.0
      %2812 = vmatmul.mubr.f32.gmra.mrb[0].mxu0 %v2719
      %v2813 = vpop.f32.mrb[0].mxu0
      %v2814 = vadd.f32 0.0, %v2813
      %v2815 = vpop.f32.mrb[0].mxu0
      %2816 = vmatprep.mubr.f32.mxu0 0.0
      %2817 = vmatmul.mubr.f32.gmra.mrb[0].mxu0 %v2722
      %v2818 = vpop.f32.mrb[0].mxu0
      %v2819 = vadd.f32 0.0, %v2818
      %v2820 = vpop.f32.mrb[0].mxu0
      %2821 = vmatprep.mubr.f32.mxu0 0.0
      %2822 = vmatmul.mubr.f32.gmra.mrb[0].mxu0 %v2725
      %v2823 = vpop.f32.mrb[0].mxu0
      %v2824 = vadd.f32 0.0, %v2823
      %v2825 = vpop.f32.mrb[0].mxu0
      %2826 = vmatprep.mubr.f32.mxu0 0.0
      %2827 = vmatmul.mubr.f32.gmra.mrb[0].mxu0 %v2728
      %v2828 = vpop.f32.mrb[0].mxu0
      %v2829 = vadd.f32 0.0, %v2828
      %v2830 = vpop.f32.mrb[0].mxu0
      %2831 = vmatprep.mubr.f32.mxu0 0.0
      %2832 = vmatmul.mubr.f32.gmra.mrb[0].mxu0 %v2731
      %v2833 = vpop.f32.mrb[0].mxu0
      %v2834 = vadd.f32 0.0, %v2833
      %v2835 = vpop.f32.mrb[0].mxu0
      %2836 = vmatprep.mubr.f32.mxu0 0.0
      %2837 = vmatmul.mubr.f32.gmra.mrb[0].mxu0 %v2734
      %v2838 = vpop.f32.mrb[0].mxu0
      %v2839 = vadd.f32 0.0, %v2838
      %v2840 = vpop.f32.mrb[0].mxu0
      %2841 = vmatprep.mubr.f32.mxu0 0.0
      %2842 = vmatmul.mubr.f32.gmra.mrb[0].mxu0 %v2737
      %v2843 = vpop.f32.mrb[0].mxu0
      %v2844 = vadd.f32 0.0, %v2843
      %v2845 = vpop.f32.mrb[0].mxu0
      %2846 = vdwg.mxu0
      %v2847 = vadd.f32 %v2697, %v2809
      %v2848 = vadd.f32 %v2698, %v2814
      %v2849 = vadd.f32 %v2699, %v2819
      %v2850 = vadd.f32 %v2700, %v2824
      %v2851 = vadd.f32 %v2701, %v2829
      %v2852 = vadd.f32 %v2702, %v2834
      %v2853 = vadd.f32 %v2703, %v2839
      %v2854 = vadd.f32 %v2704, %v2844
      %v2855 = vld [vmem:[%s622 + $0x2] sm:$0xff]
      %v2856 = vld [vmem:[%s622 + $0x12] sm:$0xff]
      %v2857 = vld [vmem:[%s622 + $0x22] sm:$0xff]
      %v2858 = vld [vmem:[%s622 + $0x32] sm:$0xff]
      %v2859 = vld [vmem:[%s622 + $0x42] sm:$0xff]
      %v2860 = vld [vmem:[%s622 + $0x52] sm:$0xff]
      %v2861 = vld [vmem:[%s622 + $0x62] sm:$0xff]
      %v2862 = vld [vmem:[%s622 + $0x72] sm:$0xff]
      %s2863 = scalar_lea.vmem %s5, 20
      %v2864 = vld [vmem:[%s2863] sm:$0xf]
      %v2866 = vsel %vm623, %v2855, 0
      %v2869 = vsel %vm623, %v2856, 0
      %v2872 = vsel %vm623, %v2857, 0
      %v2875 = vsel %vm623, %v2858, 0
      %v2878 = vsel %vm623, %v2859, 0
      %v2881 = vsel %vm623, %v2860, 0
      %v2884 = vsel %vm623, %v2861, 0
      %v2887 = vsel %vm623, %v2862, 0
      %v2890 = vsel %vm675, %v2864, 0
      %2892 = vmatprep.subr.mxu0 0.0
      %2893 = vmatpush1.msra.mxu0 %v2890
      %2894 = vmatprep.subr.mxu0 0.0
      %2895 = vmatpush1.msra.mxu0 0.0
      %2896 = vmatprep.subr.mxu0 0.0
      %2897 = vmatpush1.msra.mxu0 0.0
      %2898 = vmatprep.subr.mxu0 0.0
      %2899 = vmatpush1.msra.mxu0 0.0
      %2900 = vmatprep.subr.mxu0 0.0
      %2901 = vmatpush1.msra.mxu0 0.0
      %2902 = vmatprep.subr.mxu0 0.0
      %2903 = vmatpush1.msra.mxu0 0.0
      %2904 = vmatprep.subr.mxu0 0.0
      %2905 = vmatpush1.msra.mxu0 0.0
      %2906 = vmatprep.subr.mxu0 0.0
      %2907 = vmatpush1.msra.mxu0 0.0
      %2908 = vmatprep.subr.mxu0 0.0
      %2909 = vmatpush1.msra.mxu0 0.0
      %2910 = vmatprep.subr.mxu0 0.0
      %2911 = vmatpush1.msra.mxu0 0.0
      %2912 = vmatprep.subr.mxu0 0.0
      %2913 = vmatpush1.msra.mxu0 0.0
      %2914 = vmatprep.subr.mxu0 0.0
      %2915 = vmatpush1.msra.mxu0 0.0
      %2916 = vmatprep.subr.mxu0 0.0
      %2917 = vmatpush1.msra.mxu0 0.0
      %2918 = vmatprep.subr.mxu0 0.0
      %2919 = vmatpush1.msra.mxu0 0.0
      %2920 = vmatprep.subr.mxu0 0.0
      %2921 = vmatpush1.msra.mxu0 0.0
      %2922 = vmatprep.subr.mxu0 0.0
      %2923 = vmatpush1.msra.mxu0 0.0
      %2924 = vmatprep.subr.mxu0 0.0
      %2925 = vmatpush1.msra.mxu0 0.0
      %2926 = vmatprep.subr.mxu0 0.0
      %2927 = vmatpush1.msra.mxu0 0.0
      %2928 = vmatprep.subr.mxu0 0.0
      %2929 = vmatpush1.msra.mxu0 0.0
      %2930 = vmatprep.subr.mxu0 0.0
      %2931 = vmatpush1.msra.mxu0 0.0
      %2932 = vmatprep.subr.mxu0 0.0
      %2933 = vmatpush1.msra.mxu0 0.0
      %2934 = vmatprep.subr.mxu0 0.0
      %2935 = vmatpush1.msra.mxu0 0.0
      %2936 = vmatprep.subr.mxu0 0.0
      %2937 = vmatpush1.msra.mxu0 0.0
      %2938 = vmatprep.subr.mxu0 0.0
      %2939 = vmatpush1.msra.mxu0 0.0
      %2940 = vmatprep.subr.mxu0 0.0
      %2941 = vmatpush1.msra.mxu0 0.0
      %2942 = vmatprep.subr.mxu0 0.0
      %2943 = vmatpush1.msra.mxu0 0.0
      %2944 = vmatprep.subr.mxu0 0.0
      %2945 = vmatpush1.msra.mxu0 0.0
      %2946 = vmatprep.subr.mxu0 0.0
      %2947 = vmatpush1.msra.mxu0 0.0
      %2948 = vmatprep.subr.mxu0 0.0
      %2949 = vmatpush1.msra.mxu0 0.0
      %2950 = vmatprep.subr.mxu0 0.0
      %2951 = vmatpush1.msra.mxu0 0.0
      %2952 = vmatprep.subr.mxu0 0.0
      %2953 = vmatpush1.msra.mxu0 0.0
      %2954 = vmatprep.subr.mxu0 0.0
      %2955 = vmatpush1.msra.mxu0 0.0
      %2956 = vmatprep.mubr.f32.mxu0 0.0
      %2957 = vmatmul.mubr.f32.gmra.mrb[0].mxu0 %v2866
      %v2958 = vpop.f32.mrb[0].mxu0
      %v2959 = vadd.f32 0.0, %v2958
      %v2960 = vpop.f32.mrb[0].mxu0
      %2961 = vmatprep.mubr.f32.mxu0 0.0
      %2962 = vmatmul.mubr.f32.gmra.mrb[0].mxu0 %v2869
      %v2963 = vpop.f32.mrb[0].mxu0
      %v2964 = vadd.f32 0.0, %v2963
      %v2965 = vpop.f32.mrb[0].mxu0
      %2966 = vmatprep.mubr.f32.mxu0 0.0
      %2967 = vmatmul.mubr.f32.gmra.mrb[0].mxu0 %v2872
      %v2968 = vpop.f32.mrb[0].mxu0
      %v2969 = vadd.f32 0.0, %v2968
      %v2970 = vpop.f32.mrb[0].mxu0
      %2971 = vmatprep.mubr.f32.mxu0 0.0
      %2972 = vmatmul.mubr.f32.gmra.mrb[0].mxu0 %v2875
      %v2973 = vpop.f32.mrb[0].mxu0
      %v2974 = vadd.f32 0.0, %v2973
      %v2975 = vpop.f32.mrb[0].mxu0
      %2976 = vmatprep.mubr.f32.mxu0 0.0
      %2977 = vmatmul.mubr.f32.gmra.mrb[0].mxu0 %v2878
      %v2978 = vpop.f32.mrb[0].mxu0
      %v2979 = vadd.f32 0.0, %v2978
      %v2980 = vpop.f32.mrb[0].mxu0
      %2981 = vmatprep.mubr.f32.mxu0 0.0
      %2982 = vmatmul.mubr.f32.gmra.mrb[0].mxu0 %v2881
      %v2983 = vpop.f32.mrb[0].mxu0
      %v2984 = vadd.f32 0.0, %v2983
      %v2985 = vpop.f32.mrb[0].mxu0
      %2986 = vmatprep.mubr.f32.mxu0 0.0
      %2987 = vmatmul.mubr.f32.gmra.mrb[0].mxu0 %v2884
      %v2988 = vpop.f32.mrb[0].mxu0
      %v2989 = vadd.f32 0.0, %v2988
      %v2990 = vpop.f32.mrb[0].mxu0
      %2991 = vmatprep.mubr.f32.mxu0 0.0
      %2992 = vmatmul.mubr.f32.gmra.mrb[0].mxu0 %v2887
      %v2993 = vpop.f32.mrb[0].mxu0
      %v2994 = vadd.f32 0.0, %v2993
      %v2995 = vpop.f32.mrb[0].mxu0
      %2996 = vdwg.mxu0
      %v2997 = vadd.f32 %v2847, %v2959
      %v2998 = vadd.f32 %v2848, %v2964
      %v2999 = vadd.f32 %v2849, %v2969
      %v3000 = vadd.f32 %v2850, %v2974
      %v3001 = vadd.f32 %v2851, %v2979
      %v3002 = vadd.f32 %v2852, %v2984
      %v3003 = vadd.f32 %v2853, %v2989
      %v3004 = vadd.f32 %v2854, %v2994
      %v3005 = vld [vmem:[%s1516] sm:$0xff]
      %v3006 = vld [vmem:[%s1516 + $0x10] sm:$0xff]
      %v3007 = vld [vmem:[%s1516 + $0x20] sm:$0xff]
      %v3008 = vld [vmem:[%s1516 + $0x30] sm:$0xff]
      %v3009 = vld [vmem:[%s1516 + $0x40] sm:$0xff]
      %v3010 = vld [vmem:[%s1516 + $0x50] sm:$0xff]
      %v3011 = vld [vmem:[%s1516 + $0x60] sm:$0xff]
      %v3012 = vld [vmem:[%s1516 + $0x70] sm:$0xff]
      %s3013 = scalar_lea.vmem %s5, 24
      %v3014 = vld [vmem:[%s3013] sm:$0xf]
      %v3016 = vsel %vm623, %v3005, 0
      %v3019 = vsel %vm623, %v3006, 0
      %v3022 = vsel %vm623, %v3007, 0
      %v3025 = vsel %vm623, %v3008, 0
      %v3028 = vsel %vm623, %v3009, 0
      %v3031 = vsel %vm623, %v3010, 0
      %v3034 = vsel %vm623, %v3011, 0
      %v3037 = vsel %vm623, %v3012, 0
      %v3040 = vsel %vm675, %v3014, 0
      %3042 = vmatprep.subr.mxu0 0.0
      %3043 = vmatpush1.msra.mxu0 %v3040
      %3044 = vmatprep.subr.mxu0 0.0
      %3045 = vmatpush1.msra.mxu0 0.0
      %3046 = vmatprep.subr.mxu0 0.0
      %3047 = vmatpush1.msra.mxu0 0.0
      %3048 = vmatprep.subr.mxu0 0.0
      %3049 = vmatpush1.msra.mxu0 0.0
      %3050 = vmatprep.subr.mxu0 0.0
      %3051 = vmatpush1.msra.mxu0 0.0
      %3052 = vmatprep.subr.mxu0 0.0
      %3053 = vmatpush1.msra.mxu0 0.0
      %3054 = vmatprep.subr.mxu0 0.0
      %3055 = vmatpush1.msra.mxu0 0.0
      %3056 = vmatprep.subr.mxu0 0.0
      %3057 = vmatpush1.msra.mxu0 0.0
      %3058 = vmatprep.subr.mxu0 0.0
      %3059 = vmatpush1.msra.mxu0 0.0
      %3060 = vmatprep.subr.mxu0 0.0
      %3061 = vmatpush1.msra.mxu0 0.0
      %3062 = vmatprep.subr.mxu0 0.0
      %3063 = vmatpush1.msra.mxu0 0.0
      %3064 = vmatprep.subr.mxu0 0.0
      %3065 = vmatpush1.msra.mxu0 0.0
      %3066 = vmatprep.subr.mxu0 0.0
      %3067 = vmatpush1.msra.mxu0 0.0
      %3068 = vmatprep.subr.mxu0 0.0
      %3069 = vmatpush1.msra.mxu0 0.0
      %3070 = vmatprep.subr.mxu0 0.0
      %3071 = vmatpush1.msra.mxu0 0.0
      %3072 = vmatprep.subr.mxu0 0.0
      %3073 = vmatpush1.msra.mxu0 0.0
      %3074 = vmatprep.subr.mxu0 0.0
      %3075 = vmatpush1.msra.mxu0 0.0
      %3076 = vmatprep.subr.mxu0 0.0
      %3077 = vmatpush1.msra.mxu0 0.0
      %3078 = vmatprep.subr.mxu0 0.0
      %3079 = vmatpush1.msra.mxu0 0.0
      %3080 = vmatprep.subr.mxu0 0.0
      %3081 = vmatpush1.msra.mxu0 0.0
      %3082 = vmatprep.subr.mxu0 0.0
      %3083 = vmatpush1.msra.mxu0 0.0
      %3084 = vmatprep.subr.mxu0 0.0
      %3085 = vmatpush1.msra.mxu0 0.0
      %3086 = vmatprep.subr.mxu0 0.0
      %3087 = vmatpush1.msra.mxu0 0.0
      %3088 = vmatprep.subr.mxu0 0.0
      %3089 = vmatpush1.msra.mxu0 0.0
      %3090 = vmatprep.subr.mxu0 0.0
      %3091 = vmatpush1.msra.mxu0 0.0
      %3092 = vmatprep.subr.mxu0 0.0
      %3093 = vmatpush1.msra.mxu0 0.0
      %3094 = vmatprep.subr.mxu0 0.0
      %3095 = vmatpush1.msra.mxu0 0.0
      %3096 = vmatprep.subr.mxu0 0.0
      %3097 = vmatpush1.msra.mxu0 0.0
      %3098 = vmatprep.subr.mxu0 0.0
      %3099 = vmatpush1.msra.mxu0 0.0
      %3100 = vmatprep.subr.mxu0 0.0
      %3101 = vmatpush1.msra.mxu0 0.0
      %3102 = vmatprep.subr.mxu0 0.0
      %3103 = vmatpush1.msra.mxu0 0.0
      %3104 = vmatprep.subr.mxu0 0.0
      %3105 = vmatpush1.msra.mxu0 0.0
      %3106 = vmatprep.mubr.f32.mxu0 0.0
      %3107 = vmatmul.mubr.f32.gmra.mrb[0].mxu0 %v3016
      %v3108 = vpop.f32.mrb[0].mxu0
      %v3109 = vadd.f32 0.0, %v3108
      %v3110 = vpop.f32.mrb[0].mxu0
      %3111 = vmatprep.mubr.f32.mxu0 0.0
      %3112 = vmatmul.mubr.f32.gmra.mrb[0].mxu0 %v3019
      %v3113 = vpop.f32.mrb[0].mxu0
      %v3114 = vadd.f32 0.0, %v3113
      %v3115 = vpop.f32.mrb[0].mxu0
      %3116 = vmatprep.mubr.f32.mxu0 0.0
      %3117 = vmatmul.mubr.f32.gmra.mrb[0].mxu0 %v3022
      %v3118 = vpop.f32.mrb[0].mxu0
      %v3119 = vadd.f32 0.0, %v3118
      %v3120 = vpop.f32.mrb[0].mxu0
      %3121 = vmatprep.mubr.f32.mxu0 0.0
      %3122 = vmatmul.mubr.f32.gmra.mrb[0].mxu0 %v3025
      %v3123 = vpop.f32.mrb[0].mxu0
      %v3124 = vadd.f32 0.0, %v3123
      %v3125 = vpop.f32.mrb[0].mxu0
      %3126 = vmatprep.mubr.f32.mxu0 0.0
      %3127 = vmatmul.mubr.f32.gmra.mrb[0].mxu0 %v3028
      %v3128 = vpop.f32.mrb[0].mxu0
      %v3129 = vadd.f32 0.0, %v3128
      %v3130 = vpop.f32.mrb[0].mxu0
      %3131 = vmatprep.mubr.f32.mxu0 0.0
      %3132 = vmatmul.mubr.f32.gmra.mrb[0].mxu0 %v3031
      %v3133 = vpop.f32.mrb[0].mxu0
      %v3134 = vadd.f32 0.0, %v3133
      %v3135 = vpop.f32.mrb[0].mxu0
      %3136 = vmatprep.mubr.f32.mxu0 0.0
      %3137 = vmatmul.mubr.f32.gmra.mrb[0].mxu0 %v3034
      %v3138 = vpop.f32.mrb[0].mxu0
      %v3139 = vadd.f32 0.0, %v3138
      %v3140 = vpop.f32.mrb[0].mxu0
      %3141 = vmatprep.mubr.f32.mxu0 0.0
      %3142 = vmatmul.mubr.f32.gmra.mrb[0].mxu0 %v3037
      %v3143 = vpop.f32.mrb[0].mxu0
      %v3144 = vadd.f32 0.0, %v3143
      %v3145 = vpop.f32.mrb[0].mxu0
      %3146 = vdwg.mxu0
      %v3147 = vadd.f32 %v2997, %v3109
      %v3148 = vadd.f32 %v2998, %v3114
      %v3149 = vadd.f32 %v2999, %v3119
      %v3150 = vadd.f32 %v3000, %v3124
      %v3151 = vadd.f32 %v3001, %v3129
      %v3152 = vadd.f32 %v3002, %v3134
      %v3153 = vadd.f32 %v3003, %v3139
      %v3154 = vadd.f32 %v3004, %v3144
      %v3155 = vld [vmem:[%s1516 + $0x1] sm:$0xff]
      %v3156 = vld [vmem:[%s1516 + $0x11] sm:$0xff]
      %v3157 = vld [vmem:[%s1516 + $0x21] sm:$0xff]
      %v3158 = vld [vmem:[%s1516 + $0x31] sm:$0xff]
      %v3159 = vld [vmem:[%s1516 + $0x41] sm:$0xff]
      %v3160 = vld [vmem:[%s1516 + $0x51] sm:$0xff]
      %v3161 = vld [vmem:[%s1516 + $0x61] sm:$0xff]
      %v3162 = vld [vmem:[%s1516 + $0x71] sm:$0xff]
      %s3163 = scalar_lea.vmem %s5, 28
      %v3164 = vld [vmem:[%s3163] sm:$0xf]
      %v3166 = vsel %vm623, %v3155, 0
      %v3169 = vsel %vm623, %v3156, 0
      %v3172 = vsel %vm623, %v3157, 0
      %v3175 = vsel %vm623, %v3158, 0
      %v3178 = vsel %vm623, %v3159, 0
      %v3181 = vsel %vm623, %v3160, 0
      %v3184 = vsel %vm623, %v3161, 0
      %v3187 = vsel %vm623, %v3162, 0
      %v3190 = vsel %vm675, %v3164, 0
      %3192 = vmatprep.subr.mxu0 0.0
      %3193 = vmatpush1.msra.mxu0 %v3190
      %3194 = vmatprep.subr.mxu0 0.0
      %3195 = vmatpush1.msra.mxu0 0.0
      %3196 = vmatprep.subr.mxu0 0.0
      %3197 = vmatpush1.msra.mxu0 0.0
      %3198 = vmatprep.subr.mxu0 0.0
      %3199 = vmatpush1.msra.mxu0 0.0
      %3200 = vmatprep.subr.mxu0 0.0
      %3201 = vmatpush1.msra.mxu0 0.0
      %3202 = vmatprep.subr.mxu0 0.0
      %3203 = vmatpush1.msra.mxu0 0.0
      %3204 = vmatprep.subr.mxu0 0.0
      %3205 = vmatpush1.msra.mxu0 0.0
      %3206 = vmatprep.subr.mxu0 0.0
      %3207 = vmatpush1.msra.mxu0 0.0
      %3208 = vmatprep.subr.mxu0 0.0
      %3209 = vmatpush1.msra.mxu0 0.0
      %3210 = vmatprep.subr.mxu0 0.0
      %3211 = vmatpush1.msra.mxu0 0.0
      %3212 = vmatprep.subr.mxu0 0.0
      %3213 = vmatpush1.msra.mxu0 0.0
      %3214 = vmatprep.subr.mxu0 0.0
      %3215 = vmatpush1.msra.mxu0 0.0
      %3216 = vmatprep.subr.mxu0 0.0
      %3217 = vmatpush1.msra.mxu0 0.0
      %3218 = vmatprep.subr.mxu0 0.0
      %3219 = vmatpush1.msra.mxu0 0.0
      %3220 = vmatprep.subr.mxu0 0.0
      %3221 = vmatpush1.msra.mxu0 0.0
      %3222 = vmatprep.subr.mxu0 0.0
      %3223 = vmatpush1.msra.mxu0 0.0
      %3224 = vmatprep.subr.mxu0 0.0
      %3225 = vmatpush1.msra.mxu0 0.0
      %3226 = vmatprep.subr.mxu0 0.0
      %3227 = vmatpush1.msra.mxu0 0.0
      %3228 = vmatprep.subr.mxu0 0.0
      %3229 = vmatpush1.msra.mxu0 0.0
      %3230 = vmatprep.subr.mxu0 0.0
      %3231 = vmatpush1.msra.mxu0 0.0
      %3232 = vmatprep.subr.mxu0 0.0
      %3233 = vmatpush1.msra.mxu0 0.0
      %3234 = vmatprep.subr.mxu0 0.0
      %3235 = vmatpush1.msra.mxu0 0.0
      %3236 = vmatprep.subr.mxu0 0.0
      %3237 = vmatpush1.msra.mxu0 0.0
      %3238 = vmatprep.subr.mxu0 0.0
      %3239 = vmatpush1.msra.mxu0 0.0
      %3240 = vmatprep.subr.mxu0 0.0
      %3241 = vmatpush1.msra.mxu0 0.0
      %3242 = vmatprep.subr.mxu0 0.0
      %3243 = vmatpush1.msra.mxu0 0.0
      %3244 = vmatprep.subr.mxu0 0.0
      %3245 = vmatpush1.msra.mxu0 0.0
      %3246 = vmatprep.subr.mxu0 0.0
      %3247 = vmatpush1.msra.mxu0 0.0
      %3248 = vmatprep.subr.mxu0 0.0
      %3249 = vmatpush1.msra.mxu0 0.0
      %3250 = vmatprep.subr.mxu0 0.0
      %3251 = vmatpush1.msra.mxu0 0.0
      %3252 = vmatprep.subr.mxu0 0.0
      %3253 = vmatpush1.msra.mxu0 0.0
      %3254 = vmatprep.subr.mxu0 0.0
      %3255 = vmatpush1.msra.mxu0 0.0
      %3256 = vmatprep.mubr.f32.mxu0 0.0
      %3257 = vmatmul.mubr.f32.gmra.mrb[0].mxu0 %v3166
      %v3258 = vpop.f32.mrb[0].mxu0
      %v3259 = vadd.f32 0.0, %v3258
      %v3260 = vpop.f32.mrb[0].mxu0
      %3261 = vmatprep.mubr.f32.mxu0 0.0
      %3262 = vmatmul.mubr.f32.gmra.mrb[0].mxu0 %v3169
      %v3263 = vpop.f32.mrb[0].mxu0
      %v3264 = vadd.f32 0.0, %v3263
      %v3265 = vpop.f32.mrb[0].mxu0
      %3266 = vmatprep.mubr.f32.mxu0 0.0
      %3267 = vmatmul.mubr.f32.gmra.mrb[0].mxu0 %v3172
      %v3268 = vpop.f32.mrb[0].mxu0
      %v3269 = vadd.f32 0.0, %v3268
      %v3270 = vpop.f32.mrb[0].mxu0
      %3271 = vmatprep.mubr.f32.mxu0 0.0
      %3272 = vmatmul.mubr.f32.gmra.mrb[0].mxu0 %v3175
      %v3273 = vpop.f32.mrb[0].mxu0
      %v3274 = vadd.f32 0.0, %v3273
      %v3275 = vpop.f32.mrb[0].mxu0
      %3276 = vmatprep.mubr.f32.mxu0 0.0
      %3277 = vmatmul.mubr.f32.gmra.mrb[0].mxu0 %v3178
      %v3278 = vpop.f32.mrb[0].mxu0
      %v3279 = vadd.f32 0.0, %v3278
      %v3280 = vpop.f32.mrb[0].mxu0
      %3281 = vmatprep.mubr.f32.mxu0 0.0
      %3282 = vmatmul.mubr.f32.gmra.mrb[0].mxu0 %v3181
      %v3283 = vpop.f32.mrb[0].mxu0
      %v3284 = vadd.f32 0.0, %v3283
      %v3285 = vpop.f32.mrb[0].mxu0
      %3286 = vmatprep.mubr.f32.mxu0 0.0
      %3287 = vmatmul.mubr.f32.gmra.mrb[0].mxu0 %v3184
      %v3288 = vpop.f32.mrb[0].mxu0
      %v3289 = vadd.f32 0.0, %v3288
      %v3290 = vpop.f32.mrb[0].mxu0
      %3291 = vmatprep.mubr.f32.mxu0 0.0
      %3292 = vmatmul.mubr.f32.gmra.mrb[0].mxu0 %v3187
      %v3293 = vpop.f32.mrb[0].mxu0
      %v3294 = vadd.f32 0.0, %v3293
      %v3295 = vpop.f32.mrb[0].mxu0
      %3296 = vdwg.mxu0
      %v3297 = vadd.f32 %v3147, %v3259
      %v3298 = vadd.f32 %v3148, %v3264
      %v3299 = vadd.f32 %v3149, %v3269
      %v3300 = vadd.f32 %v3150, %v3274
      %v3301 = vadd.f32 %v3151, %v3279
      %v3302 = vadd.f32 %v3152, %v3284
      %v3303 = vadd.f32 %v3153, %v3289
      %v3304 = vadd.f32 %v3154, %v3294
      %v3305 = vld [vmem:[%s1516 + $0x2] sm:$0xff]
      %v3306 = vld [vmem:[%s1516 + $0x12] sm:$0xff]
      %v3307 = vld [vmem:[%s1516 + $0x22] sm:$0xff]
      %v3308 = vld [vmem:[%s1516 + $0x32] sm:$0xff]
      %v3309 = vld [vmem:[%s1516 + $0x42] sm:$0xff]
      %v3310 = vld [vmem:[%s1516 + $0x52] sm:$0xff]
      %v3311 = vld [vmem:[%s1516 + $0x62] sm:$0xff]
      %v3312 = vld [vmem:[%s1516 + $0x72] sm:$0xff]
      %s3313 = scalar_lea.vmem %s5, 32
      %v3314 = vld [vmem:[%s3313] sm:$0xf]
      %v3316 = vsel %vm623, %v3305, 0
      %v3319 = vsel %vm623, %v3306, 0
      %v3322 = vsel %vm623, %v3307, 0
      %v3325 = vsel %vm623, %v3308, 0
      %v3328 = vsel %vm623, %v3309, 0
      %v3331 = vsel %vm623, %v3310, 0
      %v3334 = vsel %vm623, %v3311, 0
      %v3337 = vsel %vm623, %v3312, 0
      %v3340 = vsel %vm675, %v3314, 0
      %3342 = vmatprep.subr.mxu0 0.0
      %3343 = vmatpush1.msra.mxu0 %v3340
      %3344 = vmatprep.subr.mxu0 0.0
      %3345 = vmatpush1.msra.mxu0 0.0
      %3346 = vmatprep.subr.mxu0 0.0
      %3347 = vmatpush1.msra.mxu0 0.0
      %3348 = vmatprep.subr.mxu0 0.0
      %3349 = vmatpush1.msra.mxu0 0.0
      %3350 = vmatprep.subr.mxu0 0.0
      %3351 = vmatpush1.msra.mxu0 0.0
      %3352 = vmatprep.subr.mxu0 0.0
      %3353 = vmatpush1.msra.mxu0 0.0
      %3354 = vmatprep.subr.mxu0 0.0
      %3355 = vmatpush1.msra.mxu0 0.0
      %3356 = vmatprep.subr.mxu0 0.0
      %3357 = vmatpush1.msra.mxu0 0.0
      %3358 = vmatprep.subr.mxu0 0.0
      %3359 = vmatpush1.msra.mxu0 0.0
      %3360 = vmatprep.subr.mxu0 0.0
      %3361 = vmatpush1.msra.mxu0 0.0
      %3362 = vmatprep.subr.mxu0 0.0
      %3363 = vmatpush1.msra.mxu0 0.0
      %3364 = vmatprep.subr.mxu0 0.0
      %3365 = vmatpush1.msra.mxu0 0.0
      %3366 = vmatprep.subr.mxu0 0.0
      %3367 = vmatpush1.msra.mxu0 0.0
      %3368 = vmatprep.subr.mxu0 0.0
      %3369 = vmatpush1.msra.mxu0 0.0
      %3370 = vmatprep.subr.mxu0 0.0
      %3371 = vmatpush1.msra.mxu0 0.0
      %3372 = vmatprep.subr.mxu0 0.0
      %3373 = vmatpush1.msra.mxu0 0.0
      %3374 = vmatprep.subr.mxu0 0.0
      %3375 = vmatpush1.msra.mxu0 0.0
      %3376 = vmatprep.subr.mxu0 0.0
      %3377 = vmatpush1.msra.mxu0 0.0
      %3378 = vmatprep.subr.mxu0 0.0
      %3379 = vmatpush1.msra.mxu0 0.0
      %3380 = vmatprep.subr.mxu0 0.0
      %3381 = vmatpush1.msra.mxu0 0.0
      %3382 = vmatprep.subr.mxu0 0.0
      %3383 = vmatpush1.msra.mxu0 0.0
      %3384 = vmatprep.subr.mxu0 0.0
      %3385 = vmatpush1.msra.mxu0 0.0
      %3386 = vmatprep.subr.mxu0 0.0
      %3387 = vmatpush1.msra.mxu0 0.0
      %3388 = vmatprep.subr.mxu0 0.0
      %3389 = vmatpush1.msra.mxu0 0.0
      %3390 = vmatprep.subr.mxu0 0.0
      %3391 = vmatpush1.msra.mxu0 0.0
      %3392 = vmatprep.subr.mxu0 0.0
      %3393 = vmatpush1.msra.mxu0 0.0
      %3394 = vmatprep.subr.mxu0 0.0
      %3395 = vmatpush1.msra.mxu0 0.0
      %3396 = vmatprep.subr.mxu0 0.0
      %3397 = vmatpush1.msra.mxu0 0.0
      %3398 = vmatprep.subr.mxu0 0.0
      %3399 = vmatpush1.msra.mxu0 0.0
      %3400 = vmatprep.subr.mxu0 0.0
      %3401 = vmatpush1.msra.mxu0 0.0
      %3402 = vmatprep.subr.mxu0 0.0
      %3403 = vmatpush1.msra.mxu0 0.0
      %3404 = vmatprep.subr.mxu0 0.0
      %3405 = vmatpush1.msra.mxu0 0.0
      %3406 = vmatprep.mubr.f32.mxu0 0.0
      %3407 = vmatmul.mubr.f32.gmra.mrb[0].mxu0 %v3316
      %v3408 = vpop.f32.mrb[0].mxu0
      %v3409 = vadd.f32 0.0, %v3408
      %v3410 = vpop.f32.mrb[0].mxu0
      %3411 = vmatprep.mubr.f32.mxu0 0.0
      %3412 = vmatmul.mubr.f32.gmra.mrb[0].mxu0 %v3319
      %v3413 = vpop.f32.mrb[0].mxu0
      %v3414 = vadd.f32 0.0, %v3413
      %v3415 = vpop.f32.mrb[0].mxu0
      %3416 = vmatprep.mubr.f32.mxu0 0.0
      %3417 = vmatmul.mubr.f32.gmra.mrb[0].mxu0 %v3322
      %v3418 = vpop.f32.mrb[0].mxu0
      %v3419 = vadd.f32 0.0, %v3418
      %v3420 = vpop.f32.mrb[0].mxu0
      %3421 = vmatprep.mubr.f32.mxu0 0.0
      %3422 = vmatmul.mubr.f32.gmra.mrb[0].mxu0 %v3325
      %v3423 = vpop.f32.mrb[0].mxu0
      %v3424 = vadd.f32 0.0, %v3423
      %v3425 = vpop.f32.mrb[0].mxu0
      %3426 = vmatprep.mubr.f32.mxu0 0.0
      %3427 = vmatmul.mubr.f32.gmra.mrb[0].mxu0 %v3328
      %v3428 = vpop.f32.mrb[0].mxu0
      %v3429 = vadd.f32 0.0, %v3428
      %v3430 = vpop.f32.mrb[0].mxu0
      %3431 = vmatprep.mubr.f32.mxu0 0.0
      %3432 = vmatmul.mubr.f32.gmra.mrb[0].mxu0 %v3331
      %v3433 = vpop.f32.mrb[0].mxu0
      %v3434 = vadd.f32 0.0, %v3433
      %v3435 = vpop.f32.mrb[0].mxu0
      %3436 = vmatprep.mubr.f32.mxu0 0.0
      %3437 = vmatmul.mubr.f32.gmra.mrb[0].mxu0 %v3334
      %v3438 = vpop.f32.mrb[0].mxu0
      %v3439 = vadd.f32 0.0, %v3438
      %v3440 = vpop.f32.mrb[0].mxu0
      %3441 = vmatprep.mubr.f32.mxu0 0.0
      %3442 = vmatmul.mubr.f32.gmra.mrb[0].mxu0 %v3337
      %v3443 = vpop.f32.mrb[0].mxu0
      %v3444 = vadd.f32 0.0, %v3443
      %v3445 = vpop.f32.mrb[0].mxu0
      %3446 = vdwg.mxu0
      %v3447 = vadd.f32 %v3297, %v3409
      %v3448 = vadd.f32 %v3298, %v3414
      %v3449 = vadd.f32 %v3299, %v3419
      %v3450 = vadd.f32 %v3300, %v3424
      %v3451 = vadd.f32 %v3301, %v3429
      %v3452 = vadd.f32 %v3302, %v3434
      %v3453 = vadd.f32 %v3303, %v3439
      %v3454 = vadd.f32 %v3304, %v3444
      %v3455 = vsel %vm623, %v3447, 0.0
      %v3456 = vsel %vm623, %v3448, 0.0
      %v3457 = vadd.f32 %v3455, %v3456
      %v3458 = vsel %vm623, %v3449, 0.0
      %v3459 = vadd.f32 %v3457, %v3458
      %v3460 = vsel %vm623, %v3450, 0.0
      %v3461 = vadd.f32 %v3459, %v3460
      %v3462 = vsel %vm623, %v3451, 0.0
      %v3463 = vadd.f32 %v3461, %v3462
      %v3464 = vsel %vm623, %v3452, 0.0
      %v3465 = vadd.f32 %v3463, %v3464
      %v3466 = vsel %vm623, %v3453, 0.0
      %v3467 = vadd.f32 %v3465, %v3466
      %v3468 = vsel %vm623, %v3454, 0.0
      %v3469 = vadd.f32 %v3467, %v3468
      %3470 = vadd.xlane.f32.xlu0 %v3469
      %v3471 = vpop.xlane.xlu0 %3470
      %v3472 = vrot.slane %v3471, 4
      %v3473 = vadd.f32 %v3471, %v3472
      %v3474 = vrot.slane %v3473, 2
      %v3475 = vadd.f32 %v3473, %v3474
      %v3476 = vrot.slane %v3475, 1
      %v3477 = vadd.f32 %v3475, %v3476
      %s3478 = vtos %v3477
      %v3479 = vrcp.pop 256.0
      %s3480 = vtos %v3479
      %s3481 = smul.f32 %s3478, %s3480
      %v3482 = vstv %s3481
      %v3483 = vsub.f32 %v3447, %v3482
      %v3484 = vsub.f32 %v3448, %v3482
      %v3485 = vsub.f32 %v3449, %v3482
      %v3486 = vsub.f32 %v3450, %v3482
      %v3487 = vsub.f32 %v3451, %v3482
      %v3488 = vsub.f32 %v3452, %v3482
      %v3489 = vsub.f32 %v3453, %v3482
      %v3490 = vsub.f32 %v3454, %v3482
      %v3491 = vmul.f32 %v3483, %v3483
      %v3492 = vmul.f32 %v3484, %v3484
      %v3493 = vmul.f32 %v3485, %v3485
      %v3494 = vmul.f32 %v3486, %v3486
      %v3495 = vmul.f32 %v3487, %v3487
      %v3496 = vmul.f32 %v3488, %v3488
      %v3497 = vmul.f32 %v3489, %v3489
      %v3498 = vmul.f32 %v3490, %v3490
      %v3499 = vsel %vm623, %v3491, 0.0
      %v3500 = vsel %vm623, %v3492, 0.0
      %v3501 = vadd.f32 %v3499, %v3500
      %v3502 = vsel %vm623, %v3493, 0.0
      %v3503 = vadd.f32 %v3501, %v3502
      %v3504 = vsel %vm623, %v3494, 0.0
      %v3505 = vadd.f32 %v3503, %v3504
      %v3506 = vsel %vm623, %v3495, 0.0
      %v3507 = vadd.f32 %v3505, %v3506
      %v3508 = vsel %vm623, %v3496, 0.0
      %v3509 = vadd.f32 %v3507, %v3508
      %v3510 = vsel %vm623, %v3497, 0.0
      %v3511 = vadd.f32 %v3509, %v3510
      %v3512 = vsel %vm623, %v3498, 0.0
      %v3513 = vadd.f32 %v3511, %v3512
      %3514 = vadd.xlane.f32.xlu0 %v3513
      %v3515 = vpop.xlane.xlu0 %3514
      %v3516 = vrot.slane %v3515, 4
      %v3517 = vadd.f32 %v3515, %v3516
      %v3518 = vrot.slane %v3517, 2
      %v3519 = vadd.f32 %v3517, %v3518
      %v3520 = vrot.slane %v3519, 1
      %v3521 = vadd.f32 %v3519, %v3520
      %s3522 = vtos %v3521
      %v3523 = vrcp.pop 256.0
      %s3524 = vtos %v3523
      %s3525 = smul.f32 %s3522, %s3524
      %v3526 = vld [vmem:[%s6] sm:$0x1]
      %s3527 = sadd.f32 %s3525, 1e-05
      %v3528 = vstv %s3527
      %v3529 = vrsqrt.pop %v3528
      %s3530 = vtos %v3529
      %v3531 = vstv %s3530
      %v3532 = vmul.f32 %v3526, %v3531
      %v3534 = vlaneseq
      %v3535 = vshrl.u32 %v3534, 7
      %v3536 = vsub.s32 0, %v3535
      %v3537 = vrot.slane %v3532, %v3536
      %v3539 = vmul.f32 %v3483, %v3537
      %v3540 = vmul.f32 %v3484, %v3537
      %v3541 = vmul.f32 %v3485, %v3537
      %v3542 = vmul.f32 %v3486, %v3537
      %v3543 = vmul.f32 %v3487, %v3537
      %v3544 = vmul.f32 %v3488, %v3537
      %v3545 = vmul.f32 %v3489, %v3537
      %v3546 = vmul.f32 %v3490, %v3537
      %v3547 = vld [vmem:[%s7] sm:$0x1]
      %v3549 = vlaneseq
      %v3550 = vshrl.u32 %v3549, 7
      %v3551 = vsub.s32 0, %v3550
      %v3552 = vrot.slane %v3547, %v3551
      %v3554 = vadd.f32 %v3539, %v3552
      %v3555 = vadd.f32 %v3540, %v3552
      %v3556 = vadd.f32 %v3541, %v3552
      %v3557 = vadd.f32 %v3542, %v3552
      %v3558 = vadd.f32 %v3543, %v3552
      %v3559 = vadd.f32 %v3544, %v3552
      %v3560 = vadd.f32 %v3545, %v3552
      %v3561 = vadd.f32 %v3546, %v3552
      %v3562 = vadd.f32 %v592, %v3554
      %v3563 = vadd.f32 %v593, %v3555
      %v3564 = vadd.f32 %v594, %v3556
      %v3565 = vadd.f32 %v595, %v3557
      %v3566 = vadd.f32 %v596, %v3558
      %v3567 = vadd.f32 %v597, %v3559
      %v3568 = vadd.f32 %v598, %v3560
      %v3569 = vadd.f32 %v599, %v3561
      %v3570 = vmul.f32 %v3562, 0.5
      %v3571 = vmul.f32 %v3563, 0.5
      %v3572 = vmul.f32 %v3564, 0.5
      %v3573 = vmul.f32 %v3565, 0.5
      %v3574 = vmul.f32 %v3566, 0.5
      %v3575 = vmul.f32 %v3567, 0.5
      %v3576 = vmul.f32 %v3568, 0.5
      %v3577 = vmul.f32 %v3569, 0.5
      %v3578 = vmul.f32 %v3562, 0.70710677
      %v3579 = vmul.f32 %v3563, 0.70710677
      %v3580 = vmul.f32 %v3564, 0.70710677
      %v3581 = vmul.f32 %v3565, 0.70710677
      %v3582 = vmul.f32 %v3566, 0.70710677
      %v3583 = vmul.f32 %v3567, 0.70710677
      %v3584 = vmul.f32 %v3568, 0.70710677
      %v3585 = vmul.f32 %v3569, 0.70710677
      %v3586 = verf.f32.pop %v3578
      %v3587 = verf.f32.pop %v3579
      %v3588 = verf.f32.pop %v3580
      %v3589 = verf.f32.pop %v3581
      %v3590 = verf.f32.pop %v3582
      %v3591 = verf.f32.pop %v3583
      %v3592 = verf.f32.pop %v3584
      %v3593 = verf.f32.pop %v3585
      %v3594 = vadd.f32 %v3586, 1.0
      %v3595 = vadd.f32 %v3587, 1.0
      %v3596 = vadd.f32 %v3588, 1.0
      %v3597 = vadd.f32 %v3589, 1.0
      %v3598 = vadd.f32 %v3590, 1.0
      %v3599 = vadd.f32 %v3591, 1.0
      %v3600 = vadd.f32 %v3592, 1.0
      %v3601 = vadd.f32 %v3593, 1.0
      %v3602 = vmul.f32 %v3570, %v3594
      %v3603 = vmul.f32 %v3571, %v3595
      %v3604 = vmul.f32 %v3572, %v3596
      %v3605 = vmul.f32 %v3573, %v3597
      %v3606 = vmul.f32 %v3574, %v3598
      %v3607 = vmul.f32 %v3575, %v3599
      %v3608 = vmul.f32 %v3576, %v3600
      %v3609 = vmul.f32 %v3577, %v3601
      %3610 = vst.msk [vmem:[%s622 + $0x1] sm:$0xff] %vm623, %v3602
      %3611 = vst.msk [vmem:[%s622 + $0x11] sm:$0xff] %vm623, %v3603
      %3612 = vst.msk [vmem:[%s622 + $0x21] sm:$0xff] %vm623, %v3604
      %3613 = vst.msk [vmem:[%s622 + $0x31] sm:$0xff] %vm623, %v3605
      %3614 = vst.msk [vmem:[%s622 + $0x41] sm:$0xff] %vm623, %v3606
      %3615 = vst.msk [vmem:[%s622 + $0x51] sm:$0xff] %vm623, %v3607
      %3616 = vst.msk [vmem:[%s622 + $0x61] sm:$0xff] %vm623, %v3608
      %3617 = vst.msk [vmem:[%s622 + $0x71] sm:$0xff] %vm623, %v3609
      %v3618 = vld [vmem:[#allocation2] sm:$0xff]
      %v3619 = vld [vmem:[#allocation2 + $0x10] sm:$0xff]
      %v3620 = vld [vmem:[#allocation2 + $0x20] sm:$0xff]
      %v3621 = vld [vmem:[#allocation2 + $0x30] sm:$0xff]
      %v3622 = vld [vmem:[#allocation2 + $0x40] sm:$0xff]
      %v3623 = vld [vmem:[#allocation2 + $0x50] sm:$0xff]
      %v3624 = vld [vmem:[#allocation2 + $0x60] sm:$0xff]
      %v3625 = vld [vmem:[#allocation2 + $0x70] sm:$0xff]
      %v3626 = vld [vmem:[%s8] sm:$0xf]
      %v3627 = vld [vmem:[#allocation2 + $0x1] sm:$0xff]
      %v3628 = vld [vmem:[#allocation2 + $0x11] sm:$0xff]
      %v3629 = vld [vmem:[#allocation2 + $0x21] sm:$0xff]
      %v3630 = vld [vmem:[#allocation2 + $0x31] sm:$0xff]
      %v3631 = vld [vmem:[#allocation2 + $0x41] sm:$0xff]
      %v3632 = vld [vmem:[#allocation2 + $0x51] sm:$0xff]
      %v3633 = vld [vmem:[#allocation2 + $0x61] sm:$0xff]
      %v3634 = vld [vmem:[#allocation2 + $0x71] sm:$0xff]
      %s3635 = scalar_lea.vmem %s8, 4
      %v3636 = vld [vmem:[%s3635] sm:$0xf]
      %v3638 = vsel %vm623, %v3627, 0
      %v3641 = vsel %vm623, %v3628, 0
      %v3644 = vsel %vm623, %v3629, 0
      %v3647 = vsel %vm623, %v3630, 0
      %v3650 = vsel %vm623, %v3631, 0
      %v3653 = vsel %vm623, %v3632, 0
      %v3656 = vsel %vm623, %v3633, 0
      %v3659 = vsel %vm623, %v3634, 0
      %v3662 = vsel %vm675, %v3636, 0
      %3664 = vmatprep.subr.mxu0 0.0
      %3665 = vmatpush1.msra.mxu0 %v3662
      %3666 = vmatprep.subr.mxu0 0.0
      %3667 = vmatpush1.msra.mxu0 0.0
      %3668 = vmatprep.subr.mxu0 0.0
      %3669 = vmatpush1.msra.mxu0 0.0
      %3670 = vmatprep.subr.mxu0 0.0
      %3671 = vmatpush1.msra.mxu0 0.0
      %3672 = vmatprep.subr.mxu0 0.0
      %3673 = vmatpush1.msra.mxu0 0.0
      %3674 = vmatprep.subr.mxu0 0.0
      %3675 = vmatpush1.msra.mxu0 0.0
      %3676 = vmatprep.subr.mxu0 0.0
      %3677 = vmatpush1.msra.mxu0 0.0
      %3678 = vmatprep.subr.mxu0 0.0
      %3679 = vmatpush1.msra.mxu0 0.0
      %3680 = vmatprep.subr.mxu0 0.0
      %3681 = vmatpush1.msra.mxu0 0.0
      %3682 = vmatprep.subr.mxu0 0.0
      %3683 = vmatpush1.msra.mxu0 0.0
      %3684 = vmatprep.subr.mxu0 0.0
      %3685 = vmatpush1.msra.mxu0 0.0
      %3686 = vmatprep.subr.mxu0 0.0
      %3687 = vmatpush1.msra.mxu0 0.0
      %3688 = vmatprep.subr.mxu0 0.0
      %3689 = vmatpush1.msra.mxu0 0.0
      %3690 = vmatprep.subr.mxu0 0.0
      %3691 = vmatpush1.msra.mxu0 0.0
      %3692 = vmatprep.subr.mxu0 0.0
      %3693 = vmatpush1.msra.mxu0 0.0
      %3694 = vmatprep.subr.mxu0 0.0
      %3695 = vmatpush1.msra.mxu0 0.0
      %3696 = vmatprep.subr.mxu0 0.0
      %3697 = vmatpush1.msra.mxu0 0.0
      %3698 = vmatprep.subr.mxu0 0.0
      %3699 = vmatpush1.msra.mxu0 0.0
      %3700 = vmatprep.subr.mxu0 0.0
      %3701 = vmatpush1.msra.mxu0 0.0
      %3702 = vmatprep.subr.mxu0 0.0
      %3703 = vmatpush1.msra.mxu0 0.0
      %3704 = vmatprep.subr.mxu0 0.0
      %3705 = vmatpush1.msra.mxu0 0.0
      %3706 = vmatprep.subr.mxu0 0.0
      %3707 = vmatpush1.msra.mxu0 0.0
      %3708 = vmatprep.subr.mxu0 0.0
      %3709 = vmatpush1.msra.mxu0 0.0
      %3710 = vmatprep.subr.mxu0 0.0
      %3711 = vmatpush1.msra.mxu0 0.0
      %3712 = vmatprep.subr.mxu0 0.0
      %3713 = vmatpush1.msra.mxu0 0.0
      %3714 = vmatprep.subr.mxu0 0.0
      %3715 = vmatpush1.msra.mxu0 0.0
      %3716 = vmatprep.subr.mxu0 0.0
      %3717 = vmatpush1.msra.mxu0 0.0
      %3718 = vmatprep.subr.mxu0 0.0
      %3719 = vmatpush1.msra.mxu0 0.0
      %3720 = vmatprep.subr.mxu0 0.0
      %3721 = vmatpush1.msra.mxu0 0.0
      %3722 = vmatprep.subr.mxu0 0.0
      %3723 = vmatpush1.msra.mxu0 0.0
      %3724 = vmatprep.subr.mxu0 0.0
      %3725 = vmatpush1.msra.mxu0 0.0
      %3726 = vmatprep.subr.mxu0 0.0
      %3727 = vmatpush1.msra.mxu0 0.0
      %3728 = vmatprep.mubr.f32.mxu0 0.0
      %3729 = vmatmul.mubr.f32.gmra.mrb[0].mxu0 %v3638
      %v3730 = vpop.f32.mrb[0].mxu0
      %v3731 = vadd.f32 0.0, %v3730
      %v3732 = vpop.f32.mrb[0].mxu0
      %3733 = vmatprep.mubr.f32.mxu0 0.0
      %3734 = vmatmul.mubr.f32.gmra.mrb[0].mxu0 %v3641
      %v3735 = vpop.f32.mrb[0].mxu0
      %v3736 = vadd.f32 0.0, %v3735
      %v3737 = vpop.f32.mrb[0].mxu0
      %3738 = vmatprep.mubr.f32.mxu0 0.0
      %3739 = vmatmul.mubr.f32.gmra.mrb[0].mxu0 %v3644
      %v3740 = vpop.f32.mrb[0].mxu0
      %v3741 = vadd.f32 0.0, %v3740
      %v3742 = vpop.f32.mrb[0].mxu0
      %3743 = vmatprep.mubr.f32.mxu0 0.0
      %3744 = vmatmul.mubr.f32.gmra.mrb[0].mxu0 %v3647
      %v3745 = vpop.f32.mrb[0].mxu0
      %v3746 = vadd.f32 0.0, %v3745
      %v3747 = vpop.f32.mrb[0].mxu0
      %3748 = vmatprep.mubr.f32.mxu0 0.0
      %3749 = vmatmul.mubr.f32.gmra.mrb[0].mxu0 %v3650
      %v3750 = vpop.f32.mrb[0].mxu0
      %v3751 = vadd.f32 0.0, %v3750
      %v3752 = vpop.f32.mrb[0].mxu0
      %3753 = vmatprep.mubr.f32.mxu0 0.0
      %3754 = vmatmul.mubr.f32.gmra.mrb[0].mxu0 %v3653
      %v3755 = vpop.f32.mrb[0].mxu0
      %v3756 = vadd.f32 0.0, %v3755
      %v3757 = vpop.f32.mrb[0].mxu0
      %3758 = vmatprep.mubr.f32.mxu0 0.0
      %3759 = vmatmul.mubr.f32.gmra.mrb[0].mxu0 %v3656
      %v3760 = vpop.f32.mrb[0].mxu0
      %v3761 = vadd.f32 0.0, %v3760
      %v3762 = vpop.f32.mrb[0].mxu0
      %3763 = vmatprep.mubr.f32.mxu0 0.0
      %3764 = vmatmul.mubr.f32.gmra.mrb[0].mxu0 %v3659
      %v3765 = vpop.f32.mrb[0].mxu0
      %v3766 = vadd.f32 0.0, %v3765
      %v3767 = vpop.f32.mrb[0].mxu0
      %3768 = vdwg.mxu0
      %v3770 = vsel %vm623, %v3618, 0
      %v3773 = vsel %vm623, %v3619, 0
      %v3776 = vsel %vm623, %v3620, 0
      %v3779 = vsel %vm623, %v3621, 0
      %v3782 = vsel %vm623, %v3622, 0
      %v3785 = vsel %vm623, %v3623, 0
      %v3788 = vsel %vm623, %v3624, 0
      %v3791 = vsel %vm623, %v3625, 0
      %v3794 = vsel %vm675, %v3626, 0
      %3796 = vmatprep.subr.mxu0 0.0
      %3797 = vmatpush1.msra.mxu0 %v3794
      %3798 = vmatprep.subr.mxu0 0.0
      %3799 = vmatpush1.msra.mxu0 0.0
      %3800 = vmatprep.subr.mxu0 0.0
      %3801 = vmatpush1.msra.mxu0 0.0
      %3802 = vmatprep.subr.mxu0 0.0
      %3803 = vmatpush1.msra.mxu0 0.0
      %3804 = vmatprep.subr.mxu0 0.0
      %3805 = vmatpush1.msra.mxu0 0.0
      %3806 = vmatprep.subr.mxu0 0.0
      %3807 = vmatpush1.msra.mxu0 0.0
      %3808 = vmatprep.subr.mxu0 0.0
      %3809 = vmatpush1.msra.mxu0 0.0
      %3810 = vmatprep.subr.mxu0 0.0
      %3811 = vmatpush1.msra.mxu0 0.0
      %3812 = vmatprep.subr.mxu0 0.0
      %3813 = vmatpush1.msra.mxu0 0.0
      %3814 = vmatprep.subr.mxu0 0.0
      %3815 = vmatpush1.msra.mxu0 0.0
      %3816 = vmatprep.subr.mxu0 0.0
      %3817 = vmatpush1.msra.mxu0 0.0
      %3818 = vmatprep.subr.mxu0 0.0
      %3819 = vmatpush1.msra.mxu0 0.0
      %3820 = vmatprep.subr.mxu0 0.0
      %3821 = vmatpush1.msra.mxu0 0.0
      %3822 = vmatprep.subr.mxu0 0.0
      %3823 = vmatpush1.msra.mxu0 0.0
      %3824 = vmatprep.subr.mxu0 0.0
      %3825 = vmatpush1.msra.mxu0 0.0
      %3826 = vmatprep.subr.mxu0 0.0
      %3827 = vmatpush1.msra.mxu0 0.0
      %3828 = vmatprep.subr.mxu0 0.0
      %3829 = vmatpush1.msra.mxu0 0.0
      %3830 = vmatprep.subr.mxu0 0.0
      %3831 = vmatpush1.msra.mxu0 0.0
      %3832 = vmatprep.subr.mxu0 0.0
      %3833 = vmatpush1.msra.mxu0 0.0
      %3834 = vmatprep.subr.mxu0 0.0
      %3835 = vmatpush1.msra.mxu0 0.0
      %3836 = vmatprep.subr.mxu0 0.0
      %3837 = vmatpush1.msra.mxu0 0.0
      %3838 = vmatprep.subr.mxu0 0.0
      %3839 = vmatpush1.msra.mxu0 0.0
      %3840 = vmatprep.subr.mxu0 0.0
      %3841 = vmatpush1.msra.mxu0 0.0
      %3842 = vmatprep.subr.mxu0 0.0
      %3843 = vmatpush1.msra.mxu0 0.0
      %3844 = vmatprep.subr.mxu0 0.0
      %3845 = vmatpush1.msra.mxu0 0.0
      %3846 = vmatprep.subr.mxu0 0.0
      %3847 = vmatpush1.msra.mxu0 0.0
      %3848 = vmatprep.subr.mxu0 0.0
      %3849 = vmatpush1.msra.mxu0 0.0
      %3850 = vmatprep.subr.mxu0 0.0
      %3851 = vmatpush1.msra.mxu0 0.0
      %3852 = vmatprep.subr.mxu0 0.0
      %3853 = vmatpush1.msra.mxu0 0.0
      %3854 = vmatprep.subr.mxu0 0.0
      %3855 = vmatpush1.msra.mxu0 0.0
      %3856 = vmatprep.subr.mxu0 0.0
      %3857 = vmatpush1.msra.mxu0 0.0
      %3858 = vmatprep.subr.mxu0 0.0
      %3859 = vmatpush1.msra.mxu0 0.0
      %3860 = vmatprep.mubr.f32.mxu0 0.0
      %3861 = vmatmul.mubr.f32.gmra.mrb[0].mxu0 %v3770
      %v3862 = vpop.f32.mrb[0].mxu0
      %v3863 = vadd.f32 %v3731, %v3862
      %v3864 = vpop.f32.mrb[0].mxu0
      %3865 = vmatprep.mubr.f32.mxu0 0.0
      %3866 = vmatmul.mubr.f32.gmra.mrb[0].mxu0 %v3773
      %v3867 = vpop.f32.mrb[0].mxu0
      %v3868 = vadd.f32 %v3736, %v3867
      %v3869 = vpop.f32.mrb[0].mxu0
      %3870 = vmatprep.mubr.f32.mxu0 0.0
      %3871 = vmatmul.mubr.f32.gmra.mrb[0].mxu0 %v3776
      %v3872 = vpop.f32.mrb[0].mxu0
      %v3873 = vadd.f32 %v3741, %v3872
      %v3874 = vpop.f32.mrb[0].mxu0
      %3875 = vmatprep.mubr.f32.mxu0 0.0
      %3876 = vmatmul.mubr.f32.gmra.mrb[0].mxu0 %v3779
      %v3877 = vpop.f32.mrb[0].mxu0
      %v3878 = vadd.f32 %v3746, %v3877
      %v3879 = vpop.f32.mrb[0].mxu0
      %3880 = vmatprep.mubr.f32.mxu0 0.0
      %3881 = vmatmul.mubr.f32.gmra.mrb[0].mxu0 %v3782
      %v3882 = vpop.f32.mrb[0].mxu0
      %v3883 = vadd.f32 %v3751, %v3882
      %v3884 = vpop.f32.mrb[0].mxu0
      %3885 = vmatprep.mubr.f32.mxu0 0.0
      %3886 = vmatmul.mubr.f32.gmra.mrb[0].mxu0 %v3785
      %v3887 = vpop.f32.mrb[0].mxu0
      %v3888 = vadd.f32 %v3756, %v3887
      %v3889 = vpop.f32.mrb[0].mxu0
      %3890 = vmatprep.mubr.f32.mxu0 0.0
      %3891 = vmatmul.mubr.f32.gmra.mrb[0].mxu0 %v3788
      %v3892 = vpop.f32.mrb[0].mxu0
      %v3893 = vadd.f32 %v3761, %v3892
      %v3894 = vpop.f32.mrb[0].mxu0
      %3895 = vmatprep.mubr.f32.mxu0 0.0
      %3896 = vmatmul.mubr.f32.gmra.mrb[0].mxu0 %v3791
      %v3897 = vpop.f32.mrb[0].mxu0
      %v3898 = vadd.f32 %v3766, %v3897
      %v3899 = vpop.f32.mrb[0].mxu0
      %3900 = vdwg.mxu0
      %v3901 = vld [vmem:[#allocation2 + $0x2] sm:$0xff]
      %v3902 = vld [vmem:[#allocation2 + $0x12] sm:$0xff]
      %v3903 = vld [vmem:[#allocation2 + $0x22] sm:$0xff]
      %v3904 = vld [vmem:[#allocation2 + $0x32] sm:$0xff]
      %v3905 = vld [vmem:[#allocation2 + $0x42] sm:$0xff]
      %v3906 = vld [vmem:[#allocation2 + $0x52] sm:$0xff]
      %v3907 = vld [vmem:[#allocation2 + $0x62] sm:$0xff]
      %v3908 = vld [vmem:[#allocation2 + $0x72] sm:$0xff]
      %s3909 = scalar_lea.vmem %s8, 8
      %v3910 = vld [vmem:[%s3909] sm:$0xf]
      %v3912 = vsel %vm623, %v3901, 0
      %v3915 = vsel %vm623, %v3902, 0
      %v3918 = vsel %vm623, %v3903, 0
      %v3921 = vsel %vm623, %v3904, 0
      %v3924 = vsel %vm623, %v3905, 0
      %v3927 = vsel %vm623, %v3906, 0
      %v3930 = vsel %vm623, %v3907, 0
      %v3933 = vsel %vm623, %v3908, 0
      %v3936 = vsel %vm675, %v3910, 0
      %3938 = vmatprep.subr.mxu0 0.0
      %3939 = vmatpush1.msra.mxu0 %v3936
      %3940 = vmatprep.subr.mxu0 0.0
      %3941 = vmatpush1.msra.mxu0 0.0
      %3942 = vmatprep.subr.mxu0 0.0
      %3943 = vmatpush1.msra.mxu0 0.0
      %3944 = vmatprep.subr.mxu0 0.0
      %3945 = vmatpush1.msra.mxu0 0.0
      %3946 = vmatprep.subr.mxu0 0.0
      %3947 = vmatpush1.msra.mxu0 0.0
      %3948 = vmatprep.subr.mxu0 0.0
      %3949 = vmatpush1.msra.mxu0 0.0
      %3950 = vmatprep.subr.mxu0 0.0
      %3951 = vmatpush1.msra.mxu0 0.0
      %3952 = vmatprep.subr.mxu0 0.0
      %3953 = vmatpush1.msra.mxu0 0.0
      %3954 = vmatprep.subr.mxu0 0.0
      %3955 = vmatpush1.msra.mxu0 0.0
      %3956 = vmatprep.subr.mxu0 0.0
      %3957 = vmatpush1.msra.mxu0 0.0
      %3958 = vmatprep.subr.mxu0 0.0
      %3959 = vmatpush1.msra.mxu0 0.0
      %3960 = vmatprep.subr.mxu0 0.0
      %3961 = vmatpush1.msra.mxu0 0.0
      %3962 = vmatprep.subr.mxu0 0.0
      %3963 = vmatpush1.msra.mxu0 0.0
      %3964 = vmatprep.subr.mxu0 0.0
      %3965 = vmatpush1.msra.mxu0 0.0
      %3966 = vmatprep.subr.mxu0 0.0
      %3967 = vmatpush1.msra.mxu0 0.0
      %3968 = vmatprep.subr.mxu0 0.0
      %3969 = vmatpush1.msra.mxu0 0.0
      %3970 = vmatprep.subr.mxu0 0.0
      %3971 = vmatpush1.msra.mxu0 0.0
      %3972 = vmatprep.subr.mxu0 0.0
      %3973 = vmatpush1.msra.mxu0 0.0
      %3974 = vmatprep.subr.mxu0 0.0
      %3975 = vmatpush1.msra.mxu0 0.0
      %3976 = vmatprep.subr.mxu0 0.0
      %3977 = vmatpush1.msra.mxu0 0.0
      %3978 = vmatprep.subr.mxu0 0.0
      %3979 = vmatpush1.msra.mxu0 0.0
      %3980 = vmatprep.subr.mxu0 0.0
      %3981 = vmatpush1.msra.mxu0 0.0
      %3982 = vmatprep.subr.mxu0 0.0
      %3983 = vmatpush1.msra.mxu0 0.0
      %3984 = vmatprep.subr.mxu0 0.0
      %3985 = vmatpush1.msra.mxu0 0.0
      %3986 = vmatprep.subr.mxu0 0.0
      %3987 = vmatpush1.msra.mxu0 0.0
      %3988 = vmatprep.subr.mxu0 0.0
      %3989 = vmatpush1.msra.mxu0 0.0
      %3990 = vmatprep.subr.mxu0 0.0
      %3991 = vmatpush1.msra.mxu0 0.0
      %3992 = vmatprep.subr.mxu0 0.0
      %3993 = vmatpush1.msra.mxu0 0.0
      %3994 = vmatprep.subr.mxu0 0.0
      %3995 = vmatpush1.msra.mxu0 0.0
      %3996 = vmatprep.subr.mxu0 0.0
      %3997 = vmatpush1.msra.mxu0 0.0
      %3998 = vmatprep.subr.mxu0 0.0
      %3999 = vmatpush1.msra.mxu0 0.0
      %4000 = vmatprep.subr.mxu0 0.0
      %4001 = vmatpush1.msra.mxu0 0.0
      %4002 = vmatprep.mubr.f32.mxu0 0.0
      %4003 = vmatmul.mubr.f32.gmra.mrb[0].mxu0 %v3912
      %v4004 = vpop.f32.mrb[0].mxu0
      %v4005 = vadd.f32 0.0, %v4004
      %v4006 = vpop.f32.mrb[0].mxu0
      %4007 = vmatprep.mubr.f32.mxu0 0.0
      %4008 = vmatmul.mubr.f32.gmra.mrb[0].mxu0 %v3915
      %v4009 = vpop.f32.mrb[0].mxu0
      %v4010 = vadd.f32 0.0, %v4009
      %v4011 = vpop.f32.mrb[0].mxu0
      %4012 = vmatprep.mubr.f32.mxu0 0.0
      %4013 = vmatmul.mubr.f32.gmra.mrb[0].mxu0 %v3918
      %v4014 = vpop.f32.mrb[0].mxu0
      %v4015 = vadd.f32 0.0, %v4014
      %v4016 = vpop.f32.mrb[0].mxu0
      %4017 = vmatprep.mubr.f32.mxu0 0.0
      %4018 = vmatmul.mubr.f32.gmra.mrb[0].mxu0 %v3921
      %v4019 = vpop.f32.mrb[0].mxu0
      %v4020 = vadd.f32 0.0, %v4019
      %v4021 = vpop.f32.mrb[0].mxu0
      %4022 = vmatprep.mubr.f32.mxu0 0.0
      %4023 = vmatmul.mubr.f32.gmra.mrb[0].mxu0 %v3924
      %v4024 = vpop.f32.mrb[0].mxu0
      %v4025 = vadd.f32 0.0, %v4024
      %v4026 = vpop.f32.mrb[0].mxu0
      %4027 = vmatprep.mubr.f32.mxu0 0.0
      %4028 = vmatmul.mubr.f32.gmra.mrb[0].mxu0 %v3927
      %v4029 = vpop.f32.mrb[0].mxu0
      %v4030 = vadd.f32 0.0, %v4029
      %v4031 = vpop.f32.mrb[0].mxu0
      %4032 = vmatprep.mubr.f32.mxu0 0.0
      %4033 = vmatmul.mubr.f32.gmra.mrb[0].mxu0 %v3930
      %v4034 = vpop.f32.mrb[0].mxu0
      %v4035 = vadd.f32 0.0, %v4034
      %v4036 = vpop.f32.mrb[0].mxu0
      %4037 = vmatprep.mubr.f32.mxu0 0.0
      %4038 = vmatmul.mubr.f32.gmra.mrb[0].mxu0 %v3933
      %v4039 = vpop.f32.mrb[0].mxu0
      %v4040 = vadd.f32 0.0, %v4039
      %v4041 = vpop.f32.mrb[0].mxu0
      %4042 = vdwg.mxu0
      %v4043 = vadd.f32 %v3863, %v4005
      %v4044 = vadd.f32 %v3868, %v4010
      %v4045 = vadd.f32 %v3873, %v4015
      %v4046 = vadd.f32 %v3878, %v4020
      %v4047 = vadd.f32 %v3883, %v4025
      %v4048 = vadd.f32 %v3888, %v4030
      %v4049 = vadd.f32 %v3893, %v4035
      %v4050 = vadd.f32 %v3898, %v4040
      %v4051 = vld [vmem:[%s622] sm:$0xff]
      %v4052 = vld [vmem:[%s622 + $0x10] sm:$0xff]
      %v4053 = vld [vmem:[%s622 + $0x20] sm:$0xff]
      %v4054 = vld [vmem:[%s622 + $0x30] sm:$0xff]
      %v4055 = vld [vmem:[%s622 + $0x40] sm:$0xff]
      %v4056 = vld [vmem:[%s622 + $0x50] sm:$0xff]
      %v4057 = vld [vmem:[%s622 + $0x60] sm:$0xff]
      %v4058 = vld [vmem:[%s622 + $0x70] sm:$0xff]
      %s4059 = scalar_lea.vmem %s8, 12
      %v4060 = vld [vmem:[%s4059] sm:$0xf]
      %v4062 = vsel %vm623, %v4051, 0
      %v4065 = vsel %vm623, %v4052, 0
      %v4068 = vsel %vm623, %v4053, 0
      %v4071 = vsel %vm623, %v4054, 0
      %v4074 = vsel %vm623, %v4055, 0
      %v4077 = vsel %vm623, %v4056, 0
      %v4080 = vsel %vm623, %v4057, 0
      %v4083 = vsel %vm623, %v4058, 0
      %v4086 = vsel %vm675, %v4060, 0
      %4088 = vmatprep.subr.mxu0 0.0
      %4089 = vmatpush1.msra.mxu0 %v4086
      %4090 = vmatprep.subr.mxu0 0.0
      %4091 = vmatpush1.msra.mxu0 0.0
      %4092 = vmatprep.subr.mxu0 0.0
      %4093 = vmatpush1.msra.mxu0 0.0
      %4094 = vmatprep.subr.mxu0 0.0
      %4095 = vmatpush1.msra.mxu0 0.0
      %4096 = vmatprep.subr.mxu0 0.0
      %4097 = vmatpush1.msra.mxu0 0.0
      %4098 = vmatprep.subr.mxu0 0.0
      %4099 = vmatpush1.msra.mxu0 0.0
      %4100 = vmatprep.subr.mxu0 0.0
      %4101 = vmatpush1.msra.mxu0 0.0
      %4102 = vmatprep.subr.mxu0 0.0
      %4103 = vmatpush1.msra.mxu0 0.0
      %4104 = vmatprep.subr.mxu0 0.0
      %4105 = vmatpush1.msra.mxu0 0.0
      %4106 = vmatprep.subr.mxu0 0.0
      %4107 = vmatpush1.msra.mxu0 0.0
      %4108 = vmatprep.subr.mxu0 0.0
      %4109 = vmatpush1.msra.mxu0 0.0
      %4110 = vmatprep.subr.mxu0 0.0
      %4111 = vmatpush1.msra.mxu0 0.0
      %4112 = vmatprep.subr.mxu0 0.0
      %4113 = vmatpush1.msra.mxu0 0.0
      %4114 = vmatprep.subr.mxu0 0.0
      %4115 = vmatpush1.msra.mxu0 0.0
      %4116 = vmatprep.subr.mxu0 0.0
      %4117 = vmatpush1.msra.mxu0 0.0
      %4118 = vmatprep.subr.mxu0 0.0
      %4119 = vmatpush1.msra.mxu0 0.0
      %4120 = vmatprep.subr.mxu0 0.0
      %4121 = vmatpush1.msra.mxu0 0.0
      %4122 = vmatprep.subr.mxu0 0.0
      %4123 = vmatpush1.msra.mxu0 0.0
      %4124 = vmatprep.subr.mxu0 0.0
      %4125 = vmatpush1.msra.mxu0 0.0
      %4126 = vmatprep.subr.mxu0 0.0
      %4127 = vmatpush1.msra.mxu0 0.0
      %4128 = vmatprep.subr.mxu0 0.0
      %4129 = vmatpush1.msra.mxu0 0.0
      %4130 = vmatprep.subr.mxu0 0.0
      %4131 = vmatpush1.msra.mxu0 0.0
      %4132 = vmatprep.subr.mxu0 0.0
      %4133 = vmatpush1.msra.mxu0 0.0
      %4134 = vmatprep.subr.mxu0 0.0
      %4135 = vmatpush1.msra.mxu0 0.0
      %4136 = vmatprep.subr.mxu0 0.0
      %4137 = vmatpush1.msra.mxu0 0.0
      %4138 = vmatprep.subr.mxu0 0.0
      %4139 = vmatpush1.msra.mxu0 0.0
      %4140 = vmatprep.subr.mxu0 0.0
      %4141 = vmatpush1.msra.mxu0 0.0
      %4142 = vmatprep.subr.mxu0 0.0
      %4143 = vmatpush1.msra.mxu0 0.0
      %4144 = vmatprep.subr.mxu0 0.0
      %4145 = vmatpush1.msra.mxu0 0.0
      %4146 = vmatprep.subr.mxu0 0.0
      %4147 = vmatpush1.msra.mxu0 0.0
      %4148 = vmatprep.subr.mxu0 0.0
      %4149 = vmatpush1.msra.mxu0 0.0
      %4150 = vmatprep.subr.mxu0 0.0
      %4151 = vmatpush1.msra.mxu0 0.0
      %4152 = vmatprep.mubr.f32.mxu0 0.0
      %4153 = vmatmul.mubr.f32.gmra.mrb[0].mxu0 %v4062
      %v4154 = vpop.f32.mrb[0].mxu0
      %v4155 = vadd.f32 0.0, %v4154
      %v4156 = vpop.f32.mrb[0].mxu0
      %4157 = vmatprep.mubr.f32.mxu0 0.0
      %4158 = vmatmul.mubr.f32.gmra.mrb[0].mxu0 %v4065
      %v4159 = vpop.f32.mrb[0].mxu0
      %v4160 = vadd.f32 0.0, %v4159
      %v4161 = vpop.f32.mrb[0].mxu0
      %4162 = vmatprep.mubr.f32.mxu0 0.0
      %4163 = vmatmul.mubr.f32.gmra.mrb[0].mxu0 %v4068
      %v4164 = vpop.f32.mrb[0].mxu0
      %v4165 = vadd.f32 0.0, %v4164
      %v4166 = vpop.f32.mrb[0].mxu0
      %4167 = vmatprep.mubr.f32.mxu0 0.0
      %4168 = vmatmul.mubr.f32.gmra.mrb[0].mxu0 %v4071
      %v4169 = vpop.f32.mrb[0].mxu0
      %v4170 = vadd.f32 0.0, %v4169
      %v4171 = vpop.f32.mrb[0].mxu0
      %4172 = vmatprep.mubr.f32.mxu0 0.0
      %4173 = vmatmul.mubr.f32.gmra.mrb[0].mxu0 %v4074
      %v4174 = vpop.f32.mrb[0].mxu0
      %v4175 = vadd.f32 0.0, %v4174
      %v4176 = vpop.f32.mrb[0].mxu0
      %4177 = vmatprep.mubr.f32.mxu0 0.0
      %4178 = vmatmul.mubr.f32.gmra.mrb[0].mxu0 %v4077
      %v4179 = vpop.f32.mrb[0].mxu0
      %v4180 = vadd.f32 0.0, %v4179
      %v4181 = vpop.f32.mrb[0].mxu0
      %4182 = vmatprep.mubr.f32.mxu0 0.0
      %4183 = vmatmul.mubr.f32.gmra.mrb[0].mxu0 %v4080
      %v4184 = vpop.f32.mrb[0].mxu0
      %v4185 = vadd.f32 0.0, %v4184
      %v4186 = vpop.f32.mrb[0].mxu0
      %4187 = vmatprep.mubr.f32.mxu0 0.0
      %4188 = vmatmul.mubr.f32.gmra.mrb[0].mxu0 %v4083
      %v4189 = vpop.f32.mrb[0].mxu0
      %v4190 = vadd.f32 0.0, %v4189
      %v4191 = vpop.f32.mrb[0].mxu0
      %4192 = vdwg.mxu0
      %v4193 = vadd.f32 %v4043, %v4155
      %v4194 = vadd.f32 %v4044, %v4160
      %v4195 = vadd.f32 %v4045, %v4165
      %v4196 = vadd.f32 %v4046, %v4170
      %v4197 = vadd.f32 %v4047, %v4175
      %v4198 = vadd.f32 %v4048, %v4180
      %v4199 = vadd.f32 %v4049, %v4185
      %v4200 = vadd.f32 %v4050, %v4190
      %v4201 = vld [vmem:[%s622 + $0x1] sm:$0xff]
      %v4202 = vld [vmem:[%s622 + $0x11] sm:$0xff]
      %v4203 = vld [vmem:[%s622 + $0x21] sm:$0xff]
      %v4204 = vld [vmem:[%s622 + $0x31] sm:$0xff]
      %v4205 = vld [vmem:[%s622 + $0x41] sm:$0xff]
      %v4206 = vld [vmem:[%s622 + $0x51] sm:$0xff]
      %v4207 = vld [vmem:[%s622 + $0x61] sm:$0xff]
      %v4208 = vld [vmem:[%s622 + $0x71] sm:$0xff]
      %s4209 = scalar_lea.vmem %s8, 16
      %v4210 = vld [vmem:[%s4209] sm:$0xf]
      %v4212 = vsel %vm623, %v4201, 0
      %v4215 = vsel %vm623, %v4202, 0
      %v4218 = vsel %vm623, %v4203, 0
      %v4221 = vsel %vm623, %v4204, 0
      %v4224 = vsel %vm623, %v4205, 0
      %v4227 = vsel %vm623, %v4206, 0
      %v4230 = vsel %vm623, %v4207, 0
      %v4233 = vsel %vm623, %v4208, 0
      %v4236 = vsel %vm675, %v4210, 0
      %4238 = vmatprep.subr.mxu0 0.0
      %4239 = vmatpush1.msra.mxu0 %v4236
      %4240 = vmatprep.subr.mxu0 0.0
      %4241 = vmatpush1.msra.mxu0 0.0
      %4242 = vmatprep.subr.mxu0 0.0
      %4243 = vmatpush1.msra.mxu0 0.0
      %4244 = vmatprep.subr.mxu0 0.0
      %4245 = vmatpush1.msra.mxu0 0.0
      %4246 = vmatprep.subr.mxu0 0.0
      %4247 = vmatpush1.msra.mxu0 0.0
      %4248 = vmatprep.subr.mxu0 0.0
      %4249 = vmatpush1.msra.mxu0 0.0
      %4250 = vmatprep.subr.mxu0 0.0
      %4251 = vmatpush1.msra.mxu0 0.0
      %4252 = vmatprep.subr.mxu0 0.0
      %4253 = vmatpush1.msra.mxu0 0.0
      %4254 = vmatprep.subr.mxu0 0.0
      %4255 = vmatpush1.msra.mxu0 0.0
      %4256 = vmatprep.subr.mxu0 0.0
      %4257 = vmatpush1.msra.mxu0 0.0
      %4258 = vmatprep.subr.mxu0 0.0
      %4259 = vmatpush1.msra.mxu0 0.0
      %4260 = vmatprep.subr.mxu0 0.0
      %4261 = vmatpush1.msra.mxu0 0.0
      %4262 = vmatprep.subr.mxu0 0.0
      %4263 = vmatpush1.msra.mxu0 0.0
      %4264 = vmatprep.subr.mxu0 0.0
      %4265 = vmatpush1.msra.mxu0 0.0
      %4266 = vmatprep.subr.mxu0 0.0
      %4267 = vmatpush1.msra.mxu0 0.0
      %4268 = vmatprep.subr.mxu0 0.0
      %4269 = vmatpush1.msra.mxu0 0.0
      %4270 = vmatprep.subr.mxu0 0.0
      %4271 = vmatpush1.msra.mxu0 0.0
      %4272 = vmatprep.subr.mxu0 0.0
      %4273 = vmatpush1.msra.mxu0 0.0
      %4274 = vmatprep.subr.mxu0 0.0
      %4275 = vmatpush1.msra.mxu0 0.0
      %4276 = vmatprep.subr.mxu0 0.0
      %4277 = vmatpush1.msra.mxu0 0.0
      %4278 = vmatprep.subr.mxu0 0.0
      %4279 = vmatpush1.msra.mxu0 0.0
      %4280 = vmatprep.subr.mxu0 0.0
      %4281 = vmatpush1.msra.mxu0 0.0
      %4282 = vmatprep.subr.mxu0 0.0
      %4283 = vmatpush1.msra.mxu0 0.0
      %4284 = vmatprep.subr.mxu0 0.0
      %4285 = vmatpush1.msra.mxu0 0.0
      %4286 = vmatprep.subr.mxu0 0.0
      %4287 = vmatpush1.msra.mxu0 0.0
      %4288 = vmatprep.subr.mxu0 0.0
      %4289 = vmatpush1.msra.mxu0 0.0
      %4290 = vmatprep.subr.mxu0 0.0
      %4291 = vmatpush1.msra.mxu0 0.0
      %4292 = vmatprep.subr.mxu0 0.0
      %4293 = vmatpush1.msra.mxu0 0.0
      %4294 = vmatprep.subr.mxu0 0.0
      %4295 = vmatpush1.msra.mxu0 0.0
      %4296 = vmatprep.subr.mxu0 0.0
      %4297 = vmatpush1.msra.mxu0 0.0
      %4298 = vmatprep.subr.mxu0 0.0
      %4299 = vmatpush1.msra.mxu0 0.0
      %4300 = vmatprep.subr.mxu0 0.0
      %4301 = vmatpush1.msra.mxu0 0.0
      %4302 = vmatprep.mubr.f32.mxu0 0.0
      %4303 = vmatmul.mubr.f32.gmra.mrb[0].mxu0 %v4212
      %v4304 = vpop.f32.mrb[0].mxu0
      %v4305 = vadd.f32 0.0, %v4304
      %v4306 = vpop.f32.mrb[0].mxu0
      %4307 = vmatprep.mubr.f32.mxu0 0.0
      %4308 = vmatmul.mubr.f32.gmra.mrb[0].mxu0 %v4215
      %v4309 = vpop.f32.mrb[0].mxu0
      %v4310 = vadd.f32 0.0, %v4309
      %v4311 = vpop.f32.mrb[0].mxu0
      %4312 = vmatprep.mubr.f32.mxu0 0.0
      %4313 = vmatmul.mubr.f32.gmra.mrb[0].mxu0 %v4218
      %v4314 = vpop.f32.mrb[0].mxu0
      %v4315 = vadd.f32 0.0, %v4314
      %v4316 = vpop.f32.mrb[0].mxu0
      %4317 = vmatprep.mubr.f32.mxu0 0.0
      %4318 = vmatmul.mubr.f32.gmra.mrb[0].mxu0 %v4221
      %v4319 = vpop.f32.mrb[0].mxu0
      %v4320 = vadd.f32 0.0, %v4319
      %v4321 = vpop.f32.mrb[0].mxu0
      %4322 = vmatprep.mubr.f32.mxu0 0.0
      %4323 = vmatmul.mubr.f32.gmra.mrb[0].mxu0 %v4224
      %v4324 = vpop.f32.mrb[0].mxu0
      %v4325 = vadd.f32 0.0, %v4324
      %v4326 = vpop.f32.mrb[0].mxu0
      %4327 = vmatprep.mubr.f32.mxu0 0.0
      %4328 = vmatmul.mubr.f32.gmra.mrb[0].mxu0 %v4227
      %v4329 = vpop.f32.mrb[0].mxu0
      %v4330 = vadd.f32 0.0, %v4329
      %v4331 = vpop.f32.mrb[0].mxu0
      %4332 = vmatprep.mubr.f32.mxu0 0.0
      %4333 = vmatmul.mubr.f32.gmra.mrb[0].mxu0 %v4230
      %v4334 = vpop.f32.mrb[0].mxu0
      %v4335 = vadd.f32 0.0, %v4334
      %v4336 = vpop.f32.mrb[0].mxu0
      %4337 = vmatprep.mubr.f32.mxu0 0.0
      %4338 = vmatmul.mubr.f32.gmra.mrb[0].mxu0 %v4233
      %v4339 = vpop.f32.mrb[0].mxu0
      %v4340 = vadd.f32 0.0, %v4339
      %v4341 = vpop.f32.mrb[0].mxu0
      %4342 = vdwg.mxu0
      %v4343 = vadd.f32 %v4193, %v4305
      %v4344 = vadd.f32 %v4194, %v4310
      %v4345 = vadd.f32 %v4195, %v4315
      %v4346 = vadd.f32 %v4196, %v4320
      %v4347 = vadd.f32 %v4197, %v4325
      %v4348 = vadd.f32 %v4198, %v4330
      %v4349 = vadd.f32 %v4199, %v4335
      %v4350 = vadd.f32 %v4200, %v4340
      %v4351 = vld [vmem:[%s622 + $0x2] sm:$0xff]
      %v4352 = vld [vmem:[%s622 + $0x12] sm:$0xff]
      %v4353 = vld [vmem:[%s622 + $0x22] sm:$0xff]
      %v4354 = vld [vmem:[%s622 + $0x32] sm:$0xff]
      %v4355 = vld [vmem:[%s622 + $0x42] sm:$0xff]
      %v4356 = vld [vmem:[%s622 + $0x52] sm:$0xff]
      %v4357 = vld [vmem:[%s622 + $0x62] sm:$0xff]
      %v4358 = vld [vmem:[%s622 + $0x72] sm:$0xff]
      %s4359 = scalar_lea.vmem %s8, 20
      %v4360 = vld [vmem:[%s4359] sm:$0xf]
      %v4362 = vsel %vm623, %v4351, 0
      %v4365 = vsel %vm623, %v4352, 0
      %v4368 = vsel %vm623, %v4353, 0
      %v4371 = vsel %vm623, %v4354, 0
      %v4374 = vsel %vm623, %v4355, 0
      %v4377 = vsel %vm623, %v4356, 0
      %v4380 = vsel %vm623, %v4357, 0
      %v4383 = vsel %vm623, %v4358, 0
      %v4386 = vsel %vm675, %v4360, 0
      %4388 = vmatprep.subr.mxu0 0.0
      %4389 = vmatpush1.msra.mxu0 %v4386
      %4390 = vmatprep.subr.mxu0 0.0
      %4391 = vmatpush1.msra.mxu0 0.0
      %4392 = vmatprep.subr.mxu0 0.0
      %4393 = vmatpush1.msra.mxu0 0.0
      %4394 = vmatprep.subr.mxu0 0.0
      %4395 = vmatpush1.msra.mxu0 0.0
      %4396 = vmatprep.subr.mxu0 0.0
      %4397 = vmatpush1.msra.mxu0 0.0
      %4398 = vmatprep.subr.mxu0 0.0
      %4399 = vmatpush1.msra.mxu0 0.0
      %4400 = vmatprep.subr.mxu0 0.0
      %4401 = vmatpush1.msra.mxu0 0.0
      %4402 = vmatprep.subr.mxu0 0.0
      %4403 = vmatpush1.msra.mxu0 0.0
      %4404 = vmatprep.subr.mxu0 0.0
      %4405 = vmatpush1.msra.mxu0 0.0
      %4406 = vmatprep.subr.mxu0 0.0
      %4407 = vmatpush1.msra.mxu0 0.0
      %4408 = vmatprep.subr.mxu0 0.0
      %4409 = vmatpush1.msra.mxu0 0.0
      %4410 = vmatprep.subr.mxu0 0.0
      %4411 = vmatpush1.msra.mxu0 0.0
      %4412 = vmatprep.subr.mxu0 0.0
      %4413 = vmatpush1.msra.mxu0 0.0
      %4414 = vmatprep.subr.mxu0 0.0
      %4415 = vmatpush1.msra.mxu0 0.0
      %4416 = vmatprep.subr.mxu0 0.0
      %4417 = vmatpush1.msra.mxu0 0.0
      %4418 = vmatprep.subr.mxu0 0.0
      %4419 = vmatpush1.msra.mxu0 0.0
      %4420 = vmatprep.subr.mxu0 0.0
      %4421 = vmatpush1.msra.mxu0 0.0
      %4422 = vmatprep.subr.mxu0 0.0
      %4423 = vmatpush1.msra.mxu0 0.0
      %4424 = vmatprep.subr.mxu0 0.0
      %4425 = vmatpush1.msra.mxu0 0.0
      %4426 = vmatprep.subr.mxu0 0.0
      %4427 = vmatpush1.msra.mxu0 0.0
      %4428 = vmatprep.subr.mxu0 0.0
      %4429 = vmatpush1.msra.mxu0 0.0
      %4430 = vmatprep.subr.mxu0 0.0
      %4431 = vmatpush1.msra.mxu0 0.0
      %4432 = vmatprep.subr.mxu0 0.0
      %4433 = vmatpush1.msra.mxu0 0.0
      %4434 = vmatprep.subr.mxu0 0.0
      %4435 = vmatpush1.msra.mxu0 0.0
      %4436 = vmatprep.subr.mxu0 0.0
      %4437 = vmatpush1.msra.mxu0 0.0
      %4438 = vmatprep.subr.mxu0 0.0
      %4439 = vmatpush1.msra.mxu0 0.0
      %4440 = vmatprep.subr.mxu0 0.0
      %4441 = vmatpush1.msra.mxu0 0.0
      %4442 = vmatprep.subr.mxu0 0.0
      %4443 = vmatpush1.msra.mxu0 0.0
      %4444 = vmatprep.subr.mxu0 0.0
      %4445 = vmatpush1.msra.mxu0 0.0
      %4446 = vmatprep.subr.mxu0 0.0
      %4447 = vmatpush1.msra.mxu0 0.0
      %4448 = vmatprep.subr.mxu0 0.0
      %4449 = vmatpush1.msra.mxu0 0.0
      %4450 = vmatprep.subr.mxu0 0.0
      %4451 = vmatpush1.msra.mxu0 0.0
      %4452 = vmatprep.mubr.f32.mxu0 0.0
      %4453 = vmatmul.mubr.f32.gmra.mrb[0].mxu0 %v4362
      %v4454 = vpop.f32.mrb[0].mxu0
      %v4455 = vadd.f32 0.0, %v4454
      %v4456 = vpop.f32.mrb[0].mxu0
      %4457 = vmatprep.mubr.f32.mxu0 0.0
      %4458 = vmatmul.mubr.f32.gmra.mrb[0].mxu0 %v4365
      %v4459 = vpop.f32.mrb[0].mxu0
      %v4460 = vadd.f32 0.0, %v4459
      %v4461 = vpop.f32.mrb[0].mxu0
      %4462 = vmatprep.mubr.f32.mxu0 0.0
      %4463 = vmatmul.mubr.f32.gmra.mrb[0].mxu0 %v4368
      %v4464 = vpop.f32.mrb[0].mxu0
      %v4465 = vadd.f32 0.0, %v4464
      %v4466 = vpop.f32.mrb[0].mxu0
      %4467 = vmatprep.mubr.f32.mxu0 0.0
      %4468 = vmatmul.mubr.f32.gmra.mrb[0].mxu0 %v4371
      %v4469 = vpop.f32.mrb[0].mxu0
      %v4470 = vadd.f32 0.0, %v4469
      %v4471 = vpop.f32.mrb[0].mxu0
      %4472 = vmatprep.mubr.f32.mxu0 0.0
      %4473 = vmatmul.mubr.f32.gmra.mrb[0].mxu0 %v4374
      %v4474 = vpop.f32.mrb[0].mxu0
      %v4475 = vadd.f32 0.0, %v4474
      %v4476 = vpop.f32.mrb[0].mxu0
      %4477 = vmatprep.mubr.f32.mxu0 0.0
      %4478 = vmatmul.mubr.f32.gmra.mrb[0].mxu0 %v4377
      %v4479 = vpop.f32.mrb[0].mxu0
      %v4480 = vadd.f32 0.0, %v4479
      %v4481 = vpop.f32.mrb[0].mxu0
      %4482 = vmatprep.mubr.f32.mxu0 0.0
      %4483 = vmatmul.mubr.f32.gmra.mrb[0].mxu0 %v4380
      %v4484 = vpop.f32.mrb[0].mxu0
      %v4485 = vadd.f32 0.0, %v4484
      %v4486 = vpop.f32.mrb[0].mxu0
      %4487 = vmatprep.mubr.f32.mxu0 0.0
      %4488 = vmatmul.mubr.f32.gmra.mrb[0].mxu0 %v4383
      %v4489 = vpop.f32.mrb[0].mxu0
      %v4490 = vadd.f32 0.0, %v4489
      %v4491 = vpop.f32.mrb[0].mxu0
      %4492 = vdwg.mxu0
      %v4493 = vadd.f32 %v4343, %v4455
      %v4494 = vadd.f32 %v4344, %v4460
      %v4495 = vadd.f32 %v4345, %v4465
      %v4496 = vadd.f32 %v4346, %v4470
      %v4497 = vadd.f32 %v4347, %v4475
      %v4498 = vadd.f32 %v4348, %v4480
      %v4499 = vadd.f32 %v4349, %v4485
      %v4500 = vadd.f32 %v4350, %v4490
      %v4501 = vld [vmem:[%s1516] sm:$0xff]
      %v4502 = vld [vmem:[%s1516 + $0x10] sm:$0xff]
      %v4503 = vld [vmem:[%s1516 + $0x20] sm:$0xff]
      %v4504 = vld [vmem:[%s1516 + $0x30] sm:$0xff]
      %v4505 = vld [vmem:[%s1516 + $0x40] sm:$0xff]
      %v4506 = vld [vmem:[%s1516 + $0x50] sm:$0xff]
      %v4507 = vld [vmem:[%s1516 + $0x60] sm:$0xff]
      %v4508 = vld [vmem:[%s1516 + $0x70] sm:$0xff]
      %s4509 = scalar_lea.vmem %s8, 24
      %v4510 = vld [vmem:[%s4509] sm:$0xf]
      %v4512 = vsel %vm623, %v4501, 0
      %v4515 = vsel %vm623, %v4502, 0
      %v4518 = vsel %vm623, %v4503, 0
      %v4521 = vsel %vm623, %v4504, 0
      %v4524 = vsel %vm623, %v4505, 0
      %v4527 = vsel %vm623, %v4506, 0
      %v4530 = vsel %vm623, %v4507, 0
      %v4533 = vsel %vm623, %v4508, 0
      %v4536 = vsel %vm675, %v4510, 0
      %4538 = vmatprep.subr.mxu0 0.0
      %4539 = vmatpush1.msra.mxu0 %v4536
      %4540 = vmatprep.subr.mxu0 0.0
      %4541 = vmatpush1.msra.mxu0 0.0
      %4542 = vmatprep.subr.mxu0 0.0
      %4543 = vmatpush1.msra.mxu0 0.0
      %4544 = vmatprep.subr.mxu0 0.0
      %4545 = vmatpush1.msra.mxu0 0.0
      %4546 = vmatprep.subr.mxu0 0.0
      %4547 = vmatpush1.msra.mxu0 0.0
      %4548 = vmatprep.subr.mxu0 0.0
      %4549 = vmatpush1.msra.mxu0 0.0
      %4550 = vmatprep.subr.mxu0 0.0
      %4551 = vmatpush1.msra.mxu0 0.0
      %4552 = vmatprep.subr.mxu0 0.0
      %4553 = vmatpush1.msra.mxu0 0.0
      %4554 = vmatprep.subr.mxu0 0.0
      %4555 = vmatpush1.msra.mxu0 0.0
      %4556 = vmatprep.subr.mxu0 0.0
      %4557 = vmatpush1.msra.mxu0 0.0
      %4558 = vmatprep.subr.mxu0 0.0
      %4559 = vmatpush1.msra.mxu0 0.0
      %4560 = vmatprep.subr.mxu0 0.0
      %4561 = vmatpush1.msra.mxu0 0.0
      %4562 = vmatprep.subr.mxu0 0.0
      %4563 = vmatpush1.msra.mxu0 0.0
      %4564 = vmatprep.subr.mxu0 0.0
      %4565 = vmatpush1.msra.mxu0 0.0
      %4566 = vmatprep.subr.mxu0 0.0
      %4567 = vmatpush1.msra.mxu0 0.0
      %4568 = vmatprep.subr.mxu0 0.0
      %4569 = vmatpush1.msra.mxu0 0.0
      %4570 = vmatprep.subr.mxu0 0.0
      %4571 = vmatpush1.msra.mxu0 0.0
      %4572 = vmatprep.subr.mxu0 0.0
      %4573 = vmatpush1.msra.mxu0 0.0
      %4574 = vmatprep.subr.mxu0 0.0
      %4575 = vmatpush1.msra.mxu0 0.0
      %4576 = vmatprep.subr.mxu0 0.0
      %4577 = vmatpush1.msra.mxu0 0.0
      %4578 = vmatprep.subr.mxu0 0.0
      %4579 = vmatpush1.msra.mxu0 0.0
      %4580 = vmatprep.subr.mxu0 0.0
      %4581 = vmatpush1.msra.mxu0 0.0
      %4582 = vmatprep.subr.mxu0 0.0
      %4583 = vmatpush1.msra.mxu0 0.0
      %4584 = vmatprep.subr.mxu0 0.0
      %4585 = vmatpush1.msra.mxu0 0.0
      %4586 = vmatprep.subr.mxu0 0.0
      %4587 = vmatpush1.msra.mxu0 0.0
      %4588 = vmatprep.subr.mxu0 0.0
      %4589 = vmatpush1.msra.mxu0 0.0
      %4590 = vmatprep.subr.mxu0 0.0
      %4591 = vmatpush1.msra.mxu0 0.0
      %4592 = vmatprep.subr.mxu0 0.0
      %4593 = vmatpush1.msra.mxu0 0.0
      %4594 = vmatprep.subr.mxu0 0.0
      %4595 = vmatpush1.msra.mxu0 0.0
      %4596 = vmatprep.subr.mxu0 0.0
      %4597 = vmatpush1.msra.mxu0 0.0
      %4598 = vmatprep.subr.mxu0 0.0
      %4599 = vmatpush1.msra.mxu0 0.0
      %4600 = vmatprep.subr.mxu0 0.0
      %4601 = vmatpush1.msra.mxu0 0.0
      %4602 = vmatprep.mubr.f32.mxu0 0.0
      %4603 = vmatmul.mubr.f32.gmra.mrb[0].mxu0 %v4512
      %v4604 = vpop.f32.mrb[0].mxu0
      %v4605 = vadd.f32 0.0, %v4604
      %v4606 = vpop.f32.mrb[0].mxu0
      %4607 = vmatprep.mubr.f32.mxu0 0.0
      %4608 = vmatmul.mubr.f32.gmra.mrb[0].mxu0 %v4515
      %v4609 = vpop.f32.mrb[0].mxu0
      %v4610 = vadd.f32 0.0, %v4609
      %v4611 = vpop.f32.mrb[0].mxu0
      %4612 = vmatprep.mubr.f32.mxu0 0.0
      %4613 = vmatmul.mubr.f32.gmra.mrb[0].mxu0 %v4518
      %v4614 = vpop.f32.mrb[0].mxu0
      %v4615 = vadd.f32 0.0, %v4614
      %v4616 = vpop.f32.mrb[0].mxu0
      %4617 = vmatprep.mubr.f32.mxu0 0.0
      %4618 = vmatmul.mubr.f32.gmra.mrb[0].mxu0 %v4521
      %v4619 = vpop.f32.mrb[0].mxu0
      %v4620 = vadd.f32 0.0, %v4619
      %v4621 = vpop.f32.mrb[0].mxu0
      %4622 = vmatprep.mubr.f32.mxu0 0.0
      %4623 = vmatmul.mubr.f32.gmra.mrb[0].mxu0 %v4524
      %v4624 = vpop.f32.mrb[0].mxu0
      %v4625 = vadd.f32 0.0, %v4624
      %v4626 = vpop.f32.mrb[0].mxu0
      %4627 = vmatprep.mubr.f32.mxu0 0.0
      %4628 = vmatmul.mubr.f32.gmra.mrb[0].mxu0 %v4527
      %v4629 = vpop.f32.mrb[0].mxu0
      %v4630 = vadd.f32 0.0, %v4629
      %v4631 = vpop.f32.mrb[0].mxu0
      %4632 = vmatprep.mubr.f32.mxu0 0.0
      %4633 = vmatmul.mubr.f32.gmra.mrb[0].mxu0 %v4530
      %v4634 = vpop.f32.mrb[0].mxu0
      %v4635 = vadd.f32 0.0, %v4634
      %v4636 = vpop.f32.mrb[0].mxu0
      %4637 = vmatprep.mubr.f32.mxu0 0.0
      %4638 = vmatmul.mubr.f32.gmra.mrb[0].mxu0 %v4533
      %v4639 = vpop.f32.mrb[0].mxu0
      %v4640 = vadd.f32 0.0, %v4639
      %v4641 = vpop.f32.mrb[0].mxu0
      %4642 = vdwg.mxu0
      %v4643 = vadd.f32 %v4493, %v4605
      %v4644 = vadd.f32 %v4494, %v4610
      %v4645 = vadd.f32 %v4495, %v4615
      %v4646 = vadd.f32 %v4496, %v4620
      %v4647 = vadd.f32 %v4497, %v4625
      %v4648 = vadd.f32 %v4498, %v4630
      %v4649 = vadd.f32 %v4499, %v4635
      %v4650 = vadd.f32 %v4500, %v4640
      %v4651 = vld [vmem:[%s1516 + $0x1] sm:$0xff]
      %v4652 = vld [vmem:[%s1516 + $0x11] sm:$0xff]
      %v4653 = vld [vmem:[%s1516 + $0x21] sm:$0xff]
      %v4654 = vld [vmem:[%s1516 + $0x31] sm:$0xff]
      %v4655 = vld [vmem:[%s1516 + $0x41] sm:$0xff]
      %v4656 = vld [vmem:[%s1516 + $0x51] sm:$0xff]
      %v4657 = vld [vmem:[%s1516 + $0x61] sm:$0xff]
      %v4658 = vld [vmem:[%s1516 + $0x71] sm:$0xff]
      %s4659 = scalar_lea.vmem %s8, 28
      %v4660 = vld [vmem:[%s4659] sm:$0xf]
      %v4662 = vsel %vm623, %v4651, 0
      %v4665 = vsel %vm623, %v4652, 0
      %v4668 = vsel %vm623, %v4653, 0
      %v4671 = vsel %vm623, %v4654, 0
      %v4674 = vsel %vm623, %v4655, 0
      %v4677 = vsel %vm623, %v4656, 0
      %v4680 = vsel %vm623, %v4657, 0
      %v4683 = vsel %vm623, %v4658, 0
      %v4686 = vsel %vm675, %v4660, 0
      %4688 = vmatprep.subr.mxu0 0.0
      %4689 = vmatpush1.msra.mxu0 %v4686
      %4690 = vmatprep.subr.mxu0 0.0
      %4691 = vmatpush1.msra.mxu0 0.0
      %4692 = vmatprep.subr.mxu0 0.0
      %4693 = vmatpush1.msra.mxu0 0.0
      %4694 = vmatprep.subr.mxu0 0.0
      %4695 = vmatpush1.msra.mxu0 0.0
      %4696 = vmatprep.subr.mxu0 0.0
      %4697 = vmatpush1.msra.mxu0 0.0
      %4698 = vmatprep.subr.mxu0 0.0
      %4699 = vmatpush1.msra.mxu0 0.0
      %4700 = vmatprep.subr.mxu0 0.0
      %4701 = vmatpush1.msra.mxu0 0.0
      %4702 = vmatprep.subr.mxu0 0.0
      %4703 = vmatpush1.msra.mxu0 0.0
      %4704 = vmatprep.subr.mxu0 0.0
      %4705 = vmatpush1.msra.mxu0 0.0
      %4706 = vmatprep.subr.mxu0 0.0
      %4707 = vmatpush1.msra.mxu0 0.0
      %4708 = vmatprep.subr.mxu0 0.0
      %4709 = vmatpush1.msra.mxu0 0.0
      %4710 = vmatprep.subr.mxu0 0.0
      %4711 = vmatpush1.msra.mxu0 0.0
      %4712 = vmatprep.subr.mxu0 0.0
      %4713 = vmatpush1.msra.mxu0 0.0
      %4714 = vmatprep.subr.mxu0 0.0
      %4715 = vmatpush1.msra.mxu0 0.0
      %4716 = vmatprep.subr.mxu0 0.0
      %4717 = vmatpush1.msra.mxu0 0.0
      %4718 = vmatprep.subr.mxu0 0.0
      %4719 = vmatpush1.msra.mxu0 0.0
      %4720 = vmatprep.subr.mxu0 0.0
      %4721 = vmatpush1.msra.mxu0 0.0
      %4722 = vmatprep.subr.mxu0 0.0
      %4723 = vmatpush1.msra.mxu0 0.0
      %4724 = vmatprep.subr.mxu0 0.0
      %4725 = vmatpush1.msra.mxu0 0.0
      %4726 = vmatprep.subr.mxu0 0.0
      %4727 = vmatpush1.msra.mxu0 0.0
      %4728 = vmatprep.subr.mxu0 0.0
      %4729 = vmatpush1.msra.mxu0 0.0
      %4730 = vmatprep.subr.mxu0 0.0
      %4731 = vmatpush1.msra.mxu0 0.0
      %4732 = vmatprep.subr.mxu0 0.0
      %4733 = vmatpush1.msra.mxu0 0.0
      %4734 = vmatprep.subr.mxu0 0.0
      %4735 = vmatpush1.msra.mxu0 0.0
      %4736 = vmatprep.subr.mxu0 0.0
      %4737 = vmatpush1.msra.mxu0 0.0
      %4738 = vmatprep.subr.mxu0 0.0
      %4739 = vmatpush1.msra.mxu0 0.0
      %4740 = vmatprep.subr.mxu0 0.0
      %4741 = vmatpush1.msra.mxu0 0.0
      %4742 = vmatprep.subr.mxu0 0.0
      %4743 = vmatpush1.msra.mxu0 0.0
      %4744 = vmatprep.subr.mxu0 0.0
      %4745 = vmatpush1.msra.mxu0 0.0
      %4746 = vmatprep.subr.mxu0 0.0
      %4747 = vmatpush1.msra.mxu0 0.0
      %4748 = vmatprep.subr.mxu0 0.0
      %4749 = vmatpush1.msra.mxu0 0.0
      %4750 = vmatprep.subr.mxu0 0.0
      %4751 = vmatpush1.msra.mxu0 0.0
      %4752 = vmatprep.mubr.f32.mxu0 0.0
      %4753 = vmatmul.mubr.f32.gmra.mrb[0].mxu0 %v4662
      %v4754 = vpop.f32.mrb[0].mxu0
      %v4755 = vadd.f32 0.0, %v4754
      %v4756 = vpop.f32.mrb[0].mxu0
      %4757 = vmatprep.mubr.f32.mxu0 0.0
      %4758 = vmatmul.mubr.f32.gmra.mrb[0].mxu0 %v4665
      %v4759 = vpop.f32.mrb[0].mxu0
      %v4760 = vadd.f32 0.0, %v4759
      %v4761 = vpop.f32.mrb[0].mxu0
      %4762 = vmatprep.mubr.f32.mxu0 0.0
      %4763 = vmatmul.mubr.f32.gmra.mrb[0].mxu0 %v4668
      %v4764 = vpop.f32.mrb[0].mxu0
      %v4765 = vadd.f32 0.0, %v4764
      %v4766 = vpop.f32.mrb[0].mxu0
      %4767 = vmatprep.mubr.f32.mxu0 0.0
      %4768 = vmatmul.mubr.f32.gmra.mrb[0].mxu0 %v4671
      %v4769 = vpop.f32.mrb[0].mxu0
      %v4770 = vadd.f32 0.0, %v4769
      %v4771 = vpop.f32.mrb[0].mxu0
      %4772 = vmatprep.mubr.f32.mxu0 0.0
      %4773 = vmatmul.mubr.f32.gmra.mrb[0].mxu0 %v4674
      %v4774 = vpop.f32.mrb[0].mxu0
      %v4775 = vadd.f32 0.0, %v4774
      %v4776 = vpop.f32.mrb[0].mxu0
      %4777 = vmatprep.mubr.f32.mxu0 0.0
      %4778 = vmatmul.mubr.f32.gmra.mrb[0].mxu0 %v4677
      %v4779 = vpop.f32.mrb[0].mxu0
      %v4780 = vadd.f32 0.0, %v4779
      %v4781 = vpop.f32.mrb[0].mxu0
      %4782 = vmatprep.mubr.f32.mxu0 0.0
      %4783 = vmatmul.mubr.f32.gmra.mrb[0].mxu0 %v4680
      %v4784 = vpop.f32.mrb[0].mxu0
      %v4785 = vadd.f32 0.0, %v4784
      %v4786 = vpop.f32.mrb[0].mxu0
      %4787 = vmatprep.mubr.f32.mxu0 0.0
      %4788 = vmatmul.mubr.f32.gmra.mrb[0].mxu0 %v4683
      %v4789 = vpop.f32.mrb[0].mxu0
      %v4790 = vadd.f32 0.0, %v4789
      %v4791 = vpop.f32.mrb[0].mxu0
      %4792 = vdwg.mxu0
      %v4793 = vadd.f32 %v4643, %v4755
      %v4794 = vadd.f32 %v4644, %v4760
      %v4795 = vadd.f32 %v4645, %v4765
      %v4796 = vadd.f32 %v4646, %v4770
      %v4797 = vadd.f32 %v4647, %v4775
      %v4798 = vadd.f32 %v4648, %v4780
      %v4799 = vadd.f32 %v4649, %v4785
      %v4800 = vadd.f32 %v4650, %v4790
      %v4801 = vld [vmem:[%s1516 + $0x2] sm:$0xff]
      %v4802 = vld [vmem:[%s1516 + $0x12] sm:$0xff]
      %v4803 = vld [vmem:[%s1516 + $0x22] sm:$0xff]
      %v4804 = vld [vmem:[%s1516 + $0x32] sm:$0xff]
      %v4805 = vld [vmem:[%s1516 + $0x42] sm:$0xff]
      %v4806 = vld [vmem:[%s1516 + $0x52] sm:$0xff]
      %v4807 = vld [vmem:[%s1516 + $0x62] sm:$0xff]
      %v4808 = vld [vmem:[%s1516 + $0x72] sm:$0xff]
      %s4809 = scalar_lea.vmem %s8, 32
      %v4810 = vld [vmem:[%s4809] sm:$0xf]
      %v4812 = vsel %vm623, %v4801, 0
      %v4815 = vsel %vm623, %v4802, 0
      %v4818 = vsel %vm623, %v4803, 0
      %v4821 = vsel %vm623, %v4804, 0
      %v4824 = vsel %vm623, %v4805, 0
      %v4827 = vsel %vm623, %v4806, 0
      %v4830 = vsel %vm623, %v4807, 0
      %v4833 = vsel %vm623, %v4808, 0
      %v4836 = vsel %vm675, %v4810, 0
      %4838 = vmatprep.subr.mxu0 0.0
      %4839 = vmatpush1.msra.mxu0 %v4836
      %4840 = vmatprep.subr.mxu0 0.0
      %4841 = vmatpush1.msra.mxu0 0.0
      %4842 = vmatprep.subr.mxu0 0.0
      %4843 = vmatpush1.msra.mxu0 0.0
      %4844 = vmatprep.subr.mxu0 0.0
      %4845 = vmatpush1.msra.mxu0 0.0
      %4846 = vmatprep.subr.mxu0 0.0
      %4847 = vmatpush1.msra.mxu0 0.0
      %4848 = vmatprep.subr.mxu0 0.0
      %4849 = vmatpush1.msra.mxu0 0.0
      %4850 = vmatprep.subr.mxu0 0.0
      %4851 = vmatpush1.msra.mxu0 0.0
      %4852 = vmatprep.subr.mxu0 0.0
      %4853 = vmatpush1.msra.mxu0 0.0
      %4854 = vmatprep.subr.mxu0 0.0
      %4855 = vmatpush1.msra.mxu0 0.0
      %4856 = vmatprep.subr.mxu0 0.0
      %4857 = vmatpush1.msra.mxu0 0.0
      %4858 = vmatprep.subr.mxu0 0.0
      %4859 = vmatpush1.msra.mxu0 0.0
      %4860 = vmatprep.subr.mxu0 0.0
      %4861 = vmatpush1.msra.mxu0 0.0
      %4862 = vmatprep.subr.mxu0 0.0
      %4863 = vmatpush1.msra.mxu0 0.0
      %4864 = vmatprep.subr.mxu0 0.0
      %4865 = vmatpush1.msra.mxu0 0.0
      %4866 = vmatprep.subr.mxu0 0.0
      %4867 = vmatpush1.msra.mxu0 0.0
      %4868 = vmatprep.subr.mxu0 0.0
      %4869 = vmatpush1.msra.mxu0 0.0
      %4870 = vmatprep.subr.mxu0 0.0
      %4871 = vmatpush1.msra.mxu0 0.0
      %4872 = vmatprep.subr.mxu0 0.0
      %4873 = vmatpush1.msra.mxu0 0.0
      %4874 = vmatprep.subr.mxu0 0.0
      %4875 = vmatpush1.msra.mxu0 0.0
      %4876 = vmatprep.subr.mxu0 0.0
      %4877 = vmatpush1.msra.mxu0 0.0
      %4878 = vmatprep.subr.mxu0 0.0
      %4879 = vmatpush1.msra.mxu0 0.0
      %4880 = vmatprep.subr.mxu0 0.0
      %4881 = vmatpush1.msra.mxu0 0.0
      %4882 = vmatprep.subr.mxu0 0.0
      %4883 = vmatpush1.msra.mxu0 0.0
      %4884 = vmatprep.subr.mxu0 0.0
      %4885 = vmatpush1.msra.mxu0 0.0
      %4886 = vmatprep.subr.mxu0 0.0
      %4887 = vmatpush1.msra.mxu0 0.0
      %4888 = vmatprep.subr.mxu0 0.0
      %4889 = vmatpush1.msra.mxu0 0.0
      %4890 = vmatprep.subr.mxu0 0.0
      %4891 = vmatpush1.msra.mxu0 0.0
      %4892 = vmatprep.subr.mxu0 0.0
      %4893 = vmatpush1.msra.mxu0 0.0
      %4894 = vmatprep.subr.mxu0 0.0
      %4895 = vmatpush1.msra.mxu0 0.0
      %4896 = vmatprep.subr.mxu0 0.0
      %4897 = vmatpush1.msra.mxu0 0.0
      %4898 = vmatprep.subr.mxu0 0.0
      %4899 = vmatpush1.msra.mxu0 0.0
      %4900 = vmatprep.subr.mxu0 0.0
      %4901 = vmatpush1.msra.mxu0 0.0
      %4902 = vmatprep.mubr.f32.mxu0 0.0
      %4903 = vmatmul.mubr.f32.gmra.mrb[0].mxu0 %v4812
      %v4904 = vpop.f32.mrb[0].mxu0
      %v4905 = vadd.f32 0.0, %v4904
      %v4906 = vpop.f32.mrb[0].mxu0
      %4907 = vmatprep.mubr.f32.mxu0 0.0
      %4908 = vmatmul.mubr.f32.gmra.mrb[0].mxu0 %v4815
      %v4909 = vpop.f32.mrb[0].mxu0
      %v4910 = vadd.f32 0.0, %v4909
      %v4911 = vpop.f32.mrb[0].mxu0
      %4912 = vmatprep.mubr.f32.mxu0 0.0
      %4913 = vmatmul.mubr.f32.gmra.mrb[0].mxu0 %v4818
      %v4914 = vpop.f32.mrb[0].mxu0
      %v4915 = vadd.f32 0.0, %v4914
      %v4916 = vpop.f32.mrb[0].mxu0
      %4917 = vmatprep.mubr.f32.mxu0 0.0
      %4918 = vmatmul.mubr.f32.gmra.mrb[0].mxu0 %v4821
      %v4919 = vpop.f32.mrb[0].mxu0
      %v4920 = vadd.f32 0.0, %v4919
      %v4921 = vpop.f32.mrb[0].mxu0
      %4922 = vmatprep.mubr.f32.mxu0 0.0
      %4923 = vmatmul.mubr.f32.gmra.mrb[0].mxu0 %v4824
      %v4924 = vpop.f32.mrb[0].mxu0
      %v4925 = vadd.f32 0.0, %v4924
      %v4926 = vpop.f32.mrb[0].mxu0
      %4927 = vmatprep.mubr.f32.mxu0 0.0
      %4928 = vmatmul.mubr.f32.gmra.mrb[0].mxu0 %v4827
      %v4929 = vpop.f32.mrb[0].mxu0
      %v4930 = vadd.f32 0.0, %v4929
      %v4931 = vpop.f32.mrb[0].mxu0
      %4932 = vmatprep.mubr.f32.mxu0 0.0
      %4933 = vmatmul.mubr.f32.gmra.mrb[0].mxu0 %v4830
      %v4934 = vpop.f32.mrb[0].mxu0
      %v4935 = vadd.f32 0.0, %v4934
      %v4936 = vpop.f32.mrb[0].mxu0
      %4937 = vmatprep.mubr.f32.mxu0 0.0
      %4938 = vmatmul.mubr.f32.gmra.mrb[0].mxu0 %v4833
      %v4939 = vpop.f32.mrb[0].mxu0
      %v4940 = vadd.f32 0.0, %v4939
      %v4941 = vpop.f32.mrb[0].mxu0
      %4942 = vdwg.mxu0
      %v4943 = vadd.f32 %v4793, %v4905
      %v4944 = vadd.f32 %v4794, %v4910
      %v4945 = vadd.f32 %v4795, %v4915
      %v4946 = vadd.f32 %v4796, %v4920
      %v4947 = vadd.f32 %v4797, %v4925
      %v4948 = vadd.f32 %v4798, %v4930
      %v4949 = vadd.f32 %v4799, %v4935
      %v4950 = vadd.f32 %v4800, %v4940
      %v4951 = vsel %vm600, %v4943, 0.0
      %v4952 = vsel %vm600, %v4944, 0.0
      %v4953 = vadd.f32 %v4951, %v4952
      %v4954 = vsel %vm600, %v4945, 0.0
      %v4955 = vadd.f32 %v4953, %v4954
      %v4956 = vsel %vm600, %v4946, 0.0
      %v4957 = vadd.f32 %v4955, %v4956
      %v4958 = vsel %vm600, %v4947, 0.0
      %v4959 = vadd.f32 %v4957, %v4958
      %v4960 = vsel %vm600, %v4948, 0.0
      %v4961 = vadd.f32 %v4959, %v4960
      %v4962 = vsel %vm600, %v4949, 0.0
      %v4963 = vadd.f32 %v4961, %v4962
      %v4964 = vsel %vm600, %v4950, 0.0
      %v4965 = vadd.f32 %v4963, %v4964
      %4966 = vadd.xlane.f32.xlu0 %v4965
      %v4967 = vpop.xlane.xlu0 %4966
      %v4968 = vrot.slane %v4967, 4
      %v4969 = vadd.f32 %v4967, %v4968
      %v4970 = vrot.slane %v4969, 2
      %v4971 = vadd.f32 %v4969, %v4970
      %v4972 = vrot.slane %v4971, 1
      %v4973 = vadd.f32 %v4971, %v4972
      %s4974 = vtos %v4973
      %v4975 = vrcp.pop 512.0
      %s4976 = vtos %v4975
      %s4977 = smul.f32 %s4974, %s4976
      %v4978 = vstv %s4977
      %v4979 = vsub.f32 %v4943, %v4978
      %v4980 = vsub.f32 %v4944, %v4978
      %v4981 = vsub.f32 %v4945, %v4978
      %v4982 = vsub.f32 %v4946, %v4978
      %v4983 = vsub.f32 %v4947, %v4978
      %v4984 = vsub.f32 %v4948, %v4978
      %v4985 = vsub.f32 %v4949, %v4978
      %v4986 = vsub.f32 %v4950, %v4978
      %v4987 = vmul.f32 %v4979, %v4979
      %v4988 = vmul.f32 %v4980, %v4980
      %v4989 = vmul.f32 %v4981, %v4981
      %v4990 = vmul.f32 %v4982, %v4982
      %v4991 = vmul.f32 %v4983, %v4983
      %v4992 = vmul.f32 %v4984, %v4984
      %v4993 = vmul.f32 %v4985, %v4985
      %v4994 = vmul.f32 %v4986, %v4986
      %v4995 = vsel %vm600, %v4987, 0.0
      %v4996 = vsel %vm600, %v4988, 0.0
      %v4997 = vadd.f32 %v4995, %v4996
      %v4998 = vsel %vm600, %v4989, 0.0
      %v4999 = vadd.f32 %v4997, %v4998
      %v5000 = vsel %vm600, %v4990, 0.0
      %v5001 = vadd.f32 %v4999, %v5000
      %v5002 = vsel %vm600, %v4991, 0.0
      %v5003 = vadd.f32 %v5001, %v5002
      %v5004 = vsel %vm600, %v4992, 0.0
      %v5005 = vadd.f32 %v5003, %v5004
      %v5006 = vsel %vm600, %v4993, 0.0
      %v5007 = vadd.f32 %v5005, %v5006
      %v5008 = vsel %vm600, %v4994, 0.0
      %v5009 = vadd.f32 %v5007, %v5008
      %5010 = vadd.xlane.f32.xlu0 %v5009
      %v5011 = vpop.xlane.xlu0 %5010
      %v5012 = vrot.slane %v5011, 4
      %v5013 = vadd.f32 %v5011, %v5012
      %v5014 = vrot.slane %v5013, 2
      %v5015 = vadd.f32 %v5013, %v5014
      %v5016 = vrot.slane %v5015, 1
      %v5017 = vadd.f32 %v5015, %v5016
      %s5018 = vtos %v5017
      %v5019 = vrcp.pop 512.0
      %s5020 = vtos %v5019
      %s5021 = smul.f32 %s5018, %s5020
      %v5022 = vld [vmem:[%s9] sm:$0x1]
      %s5023 = sadd.f32 %s5021, 1e-05
      %v5024 = vstv %s5023
      %v5025 = vrsqrt.pop %v5024
      %s5026 = vtos %v5025
      %v5027 = vstv %s5026
      %v5028 = vmul.f32 %v5022, %v5027
      %v5030 = vlaneseq
      %v5031 = vshrl.u32 %v5030, 7
      %v5032 = vsub.s32 0, %v5031
      %v5033 = vrot.slane %v5028, %v5032
      %v5035 = vmul.f32 %v4979, %v5033
      %v5036 = vmul.f32 %v4980, %v5033
      %v5037 = vmul.f32 %v4981, %v5033
      %v5038 = vmul.f32 %v4982, %v5033
      %v5039 = vmul.f32 %v4983, %v5033
      %v5040 = vmul.f32 %v4984, %v5033
      %v5041 = vmul.f32 %v4985, %v5033
      %v5042 = vmul.f32 %v4986, %v5033
      %v5043 = vld [vmem:[%s10] sm:$0x1]
      %v5045 = vlaneseq
      %v5046 = vshrl.u32 %v5045, 7
      %v5047 = vsub.s32 0, %v5046
      %v5048 = vrot.slane %v5043, %v5047
      %v5050 = vadd.f32 %v5035, %v5048
      %v5051 = vadd.f32 %v5036, %v5048
      %v5052 = vadd.f32 %v5037, %v5048
      %v5053 = vadd.f32 %v5038, %v5048
      %v5054 = vadd.f32 %v5039, %v5048
      %v5055 = vadd.f32 %v5040, %v5048
      %v5056 = vadd.f32 %v5041, %v5048
      %v5057 = vadd.f32 %v5042, %v5048
      %v5058 = vmul.f32 %v5050, 0.5
      %v5059 = vmul.f32 %v5051, 0.5
      %v5060 = vmul.f32 %v5052, 0.5
      %v5061 = vmul.f32 %v5053, 0.5
      %v5062 = vmul.f32 %v5054, 0.5
      %v5063 = vmul.f32 %v5055, 0.5
      %v5064 = vmul.f32 %v5056, 0.5
      %v5065 = vmul.f32 %v5057, 0.5
      %v5066 = vmul.f32 %v5050, 0.70710677
      %v5067 = vmul.f32 %v5051, 0.70710677
      %v5068 = vmul.f32 %v5052, 0.70710677
      %v5069 = vmul.f32 %v5053, 0.70710677
      %v5070 = vmul.f32 %v5054, 0.70710677
      %v5071 = vmul.f32 %v5055, 0.70710677
      %v5072 = vmul.f32 %v5056, 0.70710677
      %v5073 = vmul.f32 %v5057, 0.70710677
      %v5074 = verf.f32.pop %v5066
      %v5075 = verf.f32.pop %v5067
      %v5076 = verf.f32.pop %v5068
      %v5077 = verf.f32.pop %v5069
      %v5078 = verf.f32.pop %v5070
      %v5079 = verf.f32.pop %v5071
      %v5080 = verf.f32.pop %v5072
      %v5081 = verf.f32.pop %v5073
      %v5082 = vadd.f32 %v5074, 1.0
      %v5083 = vadd.f32 %v5075, 1.0
      %v5084 = vadd.f32 %v5076, 1.0
      %v5085 = vadd.f32 %v5077, 1.0
      %v5086 = vadd.f32 %v5078, 1.0
      %v5087 = vadd.f32 %v5079, 1.0
      %v5088 = vadd.f32 %v5080, 1.0
      %v5089 = vadd.f32 %v5081, 1.0
      %v5090 = vmul.f32 %v5058, %v5082
      %v5091 = vmul.f32 %v5059, %v5083
      %v5092 = vmul.f32 %v5060, %v5084
      %v5093 = vmul.f32 %v5061, %v5085
      %v5094 = vmul.f32 %v5062, %v5086
      %v5095 = vmul.f32 %v5063, %v5087
      %v5096 = vmul.f32 %v5064, %v5088
      %v5097 = vmul.f32 %v5065, %v5089
      %5098 = vst.msk [vmem:[%s622 + $0x1] sm:$0xff] %vm600, %v5090
      %5099 = vst.msk [vmem:[%s622 + $0x11] sm:$0xff] %vm600, %v5091
      %5100 = vst.msk [vmem:[%s622 + $0x21] sm:$0xff] %vm600, %v5092
      %5101 = vst.msk [vmem:[%s622 + $0x31] sm:$0xff] %vm600, %v5093
      %5102 = vst.msk [vmem:[%s622 + $0x41] sm:$0xff] %vm600, %v5094
      %5103 = vst.msk [vmem:[%s622 + $0x51] sm:$0xff] %vm600, %v5095
      %5104 = vst.msk [vmem:[%s622 + $0x61] sm:$0xff] %vm600, %v5096
      %5105 = vst.msk [vmem:[%s622 + $0x71] sm:$0xff] %vm600, %v5097
      %v5106 = vld [vmem:[#allocation2] sm:$0xff]
      %v5107 = vld [vmem:[#allocation2 + $0x10] sm:$0xff]
      %v5108 = vld [vmem:[#allocation2 + $0x20] sm:$0xff]
      %v5109 = vld [vmem:[#allocation2 + $0x30] sm:$0xff]
      %v5110 = vld [vmem:[#allocation2 + $0x40] sm:$0xff]
      %v5111 = vld [vmem:[#allocation2 + $0x50] sm:$0xff]
      %v5112 = vld [vmem:[#allocation2 + $0x60] sm:$0xff]
      %v5113 = vld [vmem:[#allocation2 + $0x70] sm:$0xff]
      %v5114 = vld [vmem:[%s11] sm:$0xff]
      %v5115 = vld [vmem:[#allocation2 + $0x1] sm:$0xff]
      %v5116 = vld [vmem:[#allocation2 + $0x11] sm:$0xff]
      %v5117 = vld [vmem:[#allocation2 + $0x21] sm:$0xff]
      %v5118 = vld [vmem:[#allocation2 + $0x31] sm:$0xff]
      %v5119 = vld [vmem:[#allocation2 + $0x41] sm:$0xff]
      %v5120 = vld [vmem:[#allocation2 + $0x51] sm:$0xff]
      %v5121 = vld [vmem:[#allocation2 + $0x61] sm:$0xff]
      %v5122 = vld [vmem:[#allocation2 + $0x71] sm:$0xff]
      %s5123 = scalar_lea.vmem %s11, 8
      %v5124 = vld [vmem:[%s5123] sm:$0xff]
      %v5126 = vsel %vm600, %v5115, 0
      %v5129 = vsel %vm600, %v5116, 0
      %v5132 = vsel %vm600, %v5117, 0
      %v5135 = vsel %vm600, %v5118, 0
      %v5138 = vsel %vm600, %v5119, 0
      %v5141 = vsel %vm600, %v5120, 0
      %v5144 = vsel %vm600, %v5121, 0
      %v5147 = vsel %vm600, %v5122, 0
      %5149 = vmatprep.subr.mxu0 0.0
      %5150 = vmatpush1.msra.mxu0 %v5124
      %5151 = vmatprep.subr.mxu0 0.0
      %5152 = vmatpush1.msra.mxu0 0.0
      %5153 = vmatprep.subr.mxu0 0.0
      %5154 = vmatpush1.msra.mxu0 0.0
      %5155 = vmatprep.subr.mxu0 0.0
      %5156 = vmatpush1.msra.mxu0 0.0
      %5157 = vmatprep.subr.mxu0 0.0
      %5158 = vmatpush1.msra.mxu0 0.0
      %5159 = vmatprep.subr.mxu0 0.0
      %5160 = vmatpush1.msra.mxu0 0.0
      %5161 = vmatprep.subr.mxu0 0.0
      %5162 = vmatpush1.msra.mxu0 0.0
      %5163 = vmatprep.subr.mxu0 0.0
      %5164 = vmatpush1.msra.mxu0 0.0
      %5165 = vmatprep.subr.mxu0 0.0
      %5166 = vmatpush1.msra.mxu0 0.0
      %5167 = vmatprep.subr.mxu0 0.0
      %5168 = vmatpush1.msra.mxu0 0.0
      %5169 = vmatprep.subr.mxu0 0.0
      %5170 = vmatpush1.msra.mxu0 0.0
      %5171 = vmatprep.subr.mxu0 0.0
      %5172 = vmatpush1.msra.mxu0 0.0
      %5173 = vmatprep.subr.mxu0 0.0
      %5174 = vmatpush1.msra.mxu0 0.0
      %5175 = vmatprep.subr.mxu0 0.0
      %5176 = vmatpush1.msra.mxu0 0.0
      %5177 = vmatprep.subr.mxu0 0.0
      %5178 = vmatpush1.msra.mxu0 0.0
      %5179 = vmatprep.subr.mxu0 0.0
      %5180 = vmatpush1.msra.mxu0 0.0
      %5181 = vmatprep.subr.mxu0 0.0
      %5182 = vmatpush1.msra.mxu0 0.0
      %5183 = vmatprep.subr.mxu0 0.0
      %5184 = vmatpush1.msra.mxu0 0.0
      %5185 = vmatprep.subr.mxu0 0.0
      %5186 = vmatpush1.msra.mxu0 0.0
      %5187 = vmatprep.subr.mxu0 0.0
      %5188 = vmatpush1.msra.mxu0 0.0
      %5189 = vmatprep.subr.mxu0 0.0
      %5190 = vmatpush1.msra.mxu0 0.0
      %5191 = vmatprep.subr.mxu0 0.0
      %5192 = vmatpush1.msra.mxu0 0.0
      %5193 = vmatprep.subr.mxu0 0.0
      %5194 = vmatpush1.msra.mxu0 0.0
      %5195 = vmatprep.subr.mxu0 0.0
      %5196 = vmatpush1.msra.mxu0 0.0
      %5197 = vmatprep.subr.mxu0 0.0
      %5198 = vmatpush1.msra.mxu0 0.0
      %5199 = vmatprep.subr.mxu0 0.0
      %5200 = vmatpush1.msra.mxu0 0.0
      %5201 = vmatprep.subr.mxu0 0.0
      %5202 = vmatpush1.msra.mxu0 0.0
      %5203 = vmatprep.subr.mxu0 0.0
      %5204 = vmatpush1.msra.mxu0 0.0
      %5205 = vmatprep.subr.mxu0 0.0
      %5206 = vmatpush1.msra.mxu0 0.0
      %5207 = vmatprep.subr.mxu0 0.0
      %5208 = vmatpush1.msra.mxu0 0.0
      %5209 = vmatprep.subr.mxu0 0.0
      %5210 = vmatpush1.msra.mxu0 0.0
      %5211 = vmatprep.subr.mxu0 0.0
      %5212 = vmatpush1.msra.mxu0 0.0
      %5213 = vmatprep.mubr.f32.mxu0 0.0
      %5214 = vmatmul.mubr.f32.gmra.mrb[0].mxu0 %v5126
      %v5215 = vpop.f32.mrb[0].mxu0
      %v5216 = vadd.f32 0.0, %v5215
      %v5217 = vpop.f32.mrb[0].mxu0
      %5218 = vmatprep.mubr.f32.mxu0 0.0
      %5219 = vmatmul.mubr.f32.gmra.mrb[0].mxu0 %v5129
      %v5220 = vpop.f32.mrb[0].mxu0
      %v5221 = vadd.f32 0.0, %v5220
      %v5222 = vpop.f32.mrb[0].mxu0
      %5223 = vmatprep.mubr.f32.mxu0 0.0
      %5224 = vmatmul.mubr.f32.gmra.mrb[0].mxu0 %v5132
      %v5225 = vpop.f32.mrb[0].mxu0
      %v5226 = vadd.f32 0.0, %v5225
      %v5227 = vpop.f32.mrb[0].mxu0
      %5228 = vmatprep.mubr.f32.mxu0 0.0
      %5229 = vmatmul.mubr.f32.gmra.mrb[0].mxu0 %v5135
      %v5230 = vpop.f32.mrb[0].mxu0
      %v5231 = vadd.f32 0.0, %v5230
      %v5232 = vpop.f32.mrb[0].mxu0
      %5233 = vmatprep.mubr.f32.mxu0 0.0
      %5234 = vmatmul.mubr.f32.gmra.mrb[0].mxu0 %v5138
      %v5235 = vpop.f32.mrb[0].mxu0
      %v5236 = vadd.f32 0.0, %v5235
      %v5237 = vpop.f32.mrb[0].mxu0
      %5238 = vmatprep.mubr.f32.mxu0 0.0
      %5239 = vmatmul.mubr.f32.gmra.mrb[0].mxu0 %v5141
      %v5240 = vpop.f32.mrb[0].mxu0
      %v5241 = vadd.f32 0.0, %v5240
      %v5242 = vpop.f32.mrb[0].mxu0
      %5243 = vmatprep.mubr.f32.mxu0 0.0
      %5244 = vmatmul.mubr.f32.gmra.mrb[0].mxu0 %v5144
      %v5245 = vpop.f32.mrb[0].mxu0
      %v5246 = vadd.f32 0.0, %v5245
      %v5247 = vpop.f32.mrb[0].mxu0
      %5248 = vmatprep.mubr.f32.mxu0 0.0
      %5249 = vmatmul.mubr.f32.gmra.mrb[0].mxu0 %v5147
      %v5250 = vpop.f32.mrb[0].mxu0
      %v5251 = vadd.f32 0.0, %v5250
      %v5252 = vpop.f32.mrb[0].mxu0
      %5253 = vdwg.mxu0
      %v5255 = vsel %vm600, %v5106, 0
      %v5258 = vsel %vm600, %v5107, 0
      %v5261 = vsel %vm600, %v5108, 0
      %v5264 = vsel %vm600, %v5109, 0
      %v5267 = vsel %vm600, %v5110, 0
      %v5270 = vsel %vm600, %v5111, 0
      %v5273 = vsel %vm600, %v5112, 0
      %v5276 = vsel %vm600, %v5113, 0
      %5278 = vmatprep.subr.mxu0 0.0
      %5279 = vmatpush1.msra.mxu0 %v5114
      %5280 = vmatprep.subr.mxu0 0.0
      %5281 = vmatpush1.msra.mxu0 0.0
      %5282 = vmatprep.subr.mxu0 0.0
      %5283 = vmatpush1.msra.mxu0 0.0
      %5284 = vmatprep.subr.mxu0 0.0
      %5285 = vmatpush1.msra.mxu0 0.0
      %5286 = vmatprep.subr.mxu0 0.0
      %5287 = vmatpush1.msra.mxu0 0.0
      %5288 = vmatprep.subr.mxu0 0.0
      %5289 = vmatpush1.msra.mxu0 0.0
      %5290 = vmatprep.subr.mxu0 0.0
      %5291 = vmatpush1.msra.mxu0 0.0
      %5292 = vmatprep.subr.mxu0 0.0
      %5293 = vmatpush1.msra.mxu0 0.0
      %5294 = vmatprep.subr.mxu0 0.0
      %5295 = vmatpush1.msra.mxu0 0.0
      %5296 = vmatprep.subr.mxu0 0.0
      %5297 = vmatpush1.msra.mxu0 0.0
      %5298 = vmatprep.subr.mxu0 0.0
      %5299 = vmatpush1.msra.mxu0 0.0
      %5300 = vmatprep.subr.mxu0 0.0
      %5301 = vmatpush1.msra.mxu0 0.0
      %5302 = vmatprep.subr.mxu0 0.0
      %5303 = vmatpush1.msra.mxu0 0.0
      %5304 = vmatprep.subr.mxu0 0.0
      %5305 = vmatpush1.msra.mxu0 0.0
      %5306 = vmatprep.subr.mxu0 0.0
      %5307 = vmatpush1.msra.mxu0 0.0
      %5308 = vmatprep.subr.mxu0 0.0
      %5309 = vmatpush1.msra.mxu0 0.0
      %5310 = vmatprep.subr.mxu0 0.0
      %5311 = vmatpush1.msra.mxu0 0.0
      %5312 = vmatprep.subr.mxu0 0.0
      %5313 = vmatpush1.msra.mxu0 0.0
      %5314 = vmatprep.subr.mxu0 0.0
      %5315 = vmatpush1.msra.mxu0 0.0
      %5316 = vmatprep.subr.mxu0 0.0
      %5317 = vmatpush1.msra.mxu0 0.0
      %5318 = vmatprep.subr.mxu0 0.0
      %5319 = vmatpush1.msra.mxu0 0.0
      %5320 = vmatprep.subr.mxu0 0.0
      %5321 = vmatpush1.msra.mxu0 0.0
      %5322 = vmatprep.subr.mxu0 0.0
      %5323 = vmatpush1.msra.mxu0 0.0
      %5324 = vmatprep.subr.mxu0 0.0
      %5325 = vmatpush1.msra.mxu0 0.0
      %5326 = vmatprep.subr.mxu0 0.0
      %5327 = vmatpush1.msra.mxu0 0.0
      %5328 = vmatprep.subr.mxu0 0.0
      %5329 = vmatpush1.msra.mxu0 0.0
      %5330 = vmatprep.subr.mxu0 0.0
      %5331 = vmatpush1.msra.mxu0 0.0
      %5332 = vmatprep.subr.mxu0 0.0
      %5333 = vmatpush1.msra.mxu0 0.0
      %5334 = vmatprep.subr.mxu0 0.0
      %5335 = vmatpush1.msra.mxu0 0.0
      %5336 = vmatprep.subr.mxu0 0.0
      %5337 = vmatpush1.msra.mxu0 0.0
      %5338 = vmatprep.subr.mxu0 0.0
      %5339 = vmatpush1.msra.mxu0 0.0
      %5340 = vmatprep.subr.mxu0 0.0
      %5341 = vmatpush1.msra.mxu0 0.0
      %5342 = vmatprep.mubr.f32.mxu0 0.0
      %5343 = vmatmul.mubr.f32.gmra.mrb[0].mxu0 %v5255
      %v5344 = vpop.f32.mrb[0].mxu0
      %v5345 = vadd.f32 %v5216, %v5344
      %v5346 = vpop.f32.mrb[0].mxu0
      %5347 = vmatprep.mubr.f32.mxu0 0.0
      %5348 = vmatmul.mubr.f32.gmra.mrb[0].mxu0 %v5258
      %v5349 = vpop.f32.mrb[0].mxu0
      %v5350 = vadd.f32 %v5221, %v5349
      %v5351 = vpop.f32.mrb[0].mxu0
      %5352 = vmatprep.mubr.f32.mxu0 0.0
      %5353 = vmatmul.mubr.f32.gmra.mrb[0].mxu0 %v5261
      %v5354 = vpop.f32.mrb[0].mxu0
      %v5355 = vadd.f32 %v5226, %v5354
      %v5356 = vpop.f32.mrb[0].mxu0
      %5357 = vmatprep.mubr.f32.mxu0 0.0
      %5358 = vmatmul.mubr.f32.gmra.mrb[0].mxu0 %v5264
      %v5359 = vpop.f32.mrb[0].mxu0
      %v5360 = vadd.f32 %v5231, %v5359
      %v5361 = vpop.f32.mrb[0].mxu0
      %5362 = vmatprep.mubr.f32.mxu0 0.0
      %5363 = vmatmul.mubr.f32.gmra.mrb[0].mxu0 %v5267
      %v5364 = vpop.f32.mrb[0].mxu0
      %v5365 = vadd.f32 %v5236, %v5364
      %v5366 = vpop.f32.mrb[0].mxu0
      %5367 = vmatprep.mubr.f32.mxu0 0.0
      %5368 = vmatmul.mubr.f32.gmra.mrb[0].mxu0 %v5270
      %v5369 = vpop.f32.mrb[0].mxu0
      %v5370 = vadd.f32 %v5241, %v5369
      %v5371 = vpop.f32.mrb[0].mxu0
      %5372 = vmatprep.mubr.f32.mxu0 0.0
      %5373 = vmatmul.mubr.f32.gmra.mrb[0].mxu0 %v5273
      %v5374 = vpop.f32.mrb[0].mxu0
      %v5375 = vadd.f32 %v5246, %v5374
      %v5376 = vpop.f32.mrb[0].mxu0
      %5377 = vmatprep.mubr.f32.mxu0 0.0
      %5378 = vmatmul.mubr.f32.gmra.mrb[0].mxu0 %v5276
      %v5379 = vpop.f32.mrb[0].mxu0
      %v5380 = vadd.f32 %v5251, %v5379
      %v5381 = vpop.f32.mrb[0].mxu0
      %5382 = vdwg.mxu0
      %v5383 = vld [vmem:[#allocation2 + $0x2] sm:$0xff]
      %v5384 = vld [vmem:[#allocation2 + $0x12] sm:$0xff]
      %v5385 = vld [vmem:[#allocation2 + $0x22] sm:$0xff]
      %v5386 = vld [vmem:[#allocation2 + $0x32] sm:$0xff]
      %v5387 = vld [vmem:[#allocation2 + $0x42] sm:$0xff]
      %v5388 = vld [vmem:[#allocation2 + $0x52] sm:$0xff]
      %v5389 = vld [vmem:[#allocation2 + $0x62] sm:$0xff]
      %v5390 = vld [vmem:[#allocation2 + $0x72] sm:$0xff]
      %s5391 = scalar_lea.vmem %s11, 16
      %v5392 = vld [vmem:[%s5391] sm:$0xff]
      %v5394 = vsel %vm600, %v5383, 0
      %v5397 = vsel %vm600, %v5384, 0
      %v5400 = vsel %vm600, %v5385, 0
      %v5403 = vsel %vm600, %v5386, 0
      %v5406 = vsel %vm600, %v5387, 0
      %v5409 = vsel %vm600, %v5388, 0
      %v5412 = vsel %vm600, %v5389, 0
      %v5415 = vsel %vm600, %v5390, 0
      %5417 = vmatprep.subr.mxu0 0.0
      %5418 = vmatpush1.msra.mxu0 %v5392
      %5419 = vmatprep.subr.mxu0 0.0
      %5420 = vmatpush1.msra.mxu0 0.0
      %5421 = vmatprep.subr.mxu0 0.0
      %5422 = vmatpush1.msra.mxu0 0.0
      %5423 = vmatprep.subr.mxu0 0.0
      %5424 = vmatpush1.msra.mxu0 0.0
      %5425 = vmatprep.subr.mxu0 0.0
      %5426 = vmatpush1.msra.mxu0 0.0
      %5427 = vmatprep.subr.mxu0 0.0
      %5428 = vmatpush1.msra.mxu0 0.0
      %5429 = vmatprep.subr.mxu0 0.0
      %5430 = vmatpush1.msra.mxu0 0.0
      %5431 = vmatprep.subr.mxu0 0.0
      %5432 = vmatpush1.msra.mxu0 0.0
      %5433 = vmatprep.subr.mxu0 0.0
      %5434 = vmatpush1.msra.mxu0 0.0
      %5435 = vmatprep.subr.mxu0 0.0
      %5436 = vmatpush1.msra.mxu0 0.0
      %5437 = vmatprep.subr.mxu0 0.0
      %5438 = vmatpush1.msra.mxu0 0.0
      %5439 = vmatprep.subr.mxu0 0.0
      %5440 = vmatpush1.msra.mxu0 0.0
      %5441 = vmatprep.subr.mxu0 0.0
      %5442 = vmatpush1.msra.mxu0 0.0
      %5443 = vmatprep.subr.mxu0 0.0
      %5444 = vmatpush1.msra.mxu0 0.0
      %5445 = vmatprep.subr.mxu0 0.0
      %5446 = vmatpush1.msra.mxu0 0.0
      %5447 = vmatprep.subr.mxu0 0.0
      %5448 = vmatpush1.msra.mxu0 0.0
      %5449 = vmatprep.subr.mxu0 0.0
      %5450 = vmatpush1.msra.mxu0 0.0
      %5451 = vmatprep.subr.mxu0 0.0
      %5452 = vmatpush1.msra.mxu0 0.0
      %5453 = vmatprep.subr.mxu0 0.0
      %5454 = vmatpush1.msra.mxu0 0.0
      %5455 = vmatprep.subr.mxu0 0.0
      %5456 = vmatpush1.msra.mxu0 0.0
      %5457 = vmatprep.subr.mxu0 0.0
      %5458 = vmatpush1.msra.mxu0 0.0
      %5459 = vmatprep.subr.mxu0 0.0
      %5460 = vmatpush1.msra.mxu0 0.0
      %5461 = vmatprep.subr.mxu0 0.0
      %5462 = vmatpush1.msra.mxu0 0.0
      %5463 = vmatprep.subr.mxu0 0.0
      %5464 = vmatpush1.msra.mxu0 0.0
      %5465 = vmatprep.subr.mxu0 0.0
      %5466 = vmatpush1.msra.mxu0 0.0
      %5467 = vmatprep.subr.mxu0 0.0
      %5468 = vmatpush1.msra.mxu0 0.0
      %5469 = vmatprep.subr.mxu0 0.0
      %5470 = vmatpush1.msra.mxu0 0.0
      %5471 = vmatprep.subr.mxu0 0.0
      %5472 = vmatpush1.msra.mxu0 0.0
      %5473 = vmatprep.subr.mxu0 0.0
      %5474 = vmatpush1.msra.mxu0 0.0
      %5475 = vmatprep.subr.mxu0 0.0
      %5476 = vmatpush1.msra.mxu0 0.0
      %5477 = vmatprep.subr.mxu0 0.0
      %5478 = vmatpush1.msra.mxu0 0.0
      %5479 = vmatprep.subr.mxu0 0.0
      %5480 = vmatpush1.msra.mxu0 0.0
      %5481 = vmatprep.mubr.f32.mxu0 0.0
      %5482 = vmatmul.mubr.f32.gmra.mrb[0].mxu0 %v5394
      %v5483 = vpop.f32.mrb[0].mxu0
      %v5484 = vadd.f32 0.0, %v5483
      %v5485 = vpop.f32.mrb[0].mxu0
      %5486 = vmatprep.mubr.f32.mxu0 0.0
      %5487 = vmatmul.mubr.f32.gmra.mrb[0].mxu0 %v5397
      %v5488 = vpop.f32.mrb[0].mxu0
      %v5489 = vadd.f32 0.0, %v5488
      %v5490 = vpop.f32.mrb[0].mxu0
      %5491 = vmatprep.mubr.f32.mxu0 0.0
      %5492 = vmatmul.mubr.f32.gmra.mrb[0].mxu0 %v5400
      %v5493 = vpop.f32.mrb[0].mxu0
      %v5494 = vadd.f32 0.0, %v5493
      %v5495 = vpop.f32.mrb[0].mxu0
      %5496 = vmatprep.mubr.f32.mxu0 0.0
      %5497 = vmatmul.mubr.f32.gmra.mrb[0].mxu0 %v5403
      %v5498 = vpop.f32.mrb[0].mxu0
      %v5499 = vadd.f32 0.0, %v5498
      %v5500 = vpop.f32.mrb[0].mxu0
      %5501 = vmatprep.mubr.f32.mxu0 0.0
      %5502 = vmatmul.mubr.f32.gmra.mrb[0].mxu0 %v5406
      %v5503 = vpop.f32.mrb[0].mxu0
      %v5504 = vadd.f32 0.0, %v5503
      %v5505 = vpop.f32.mrb[0].mxu0
      %5506 = vmatprep.mubr.f32.mxu0 0.0
      %5507 = vmatmul.mubr.f32.gmra.mrb[0].mxu0 %v5409
      %v5508 = vpop.f32.mrb[0].mxu0
      %v5509 = vadd.f32 0.0, %v5508
      %v5510 = vpop.f32.mrb[0].mxu0
      %5511 = vmatprep.mubr.f32.mxu0 0.0
      %5512 = vmatmul.mubr.f32.gmra.mrb[0].mxu0 %v5412
      %v5513 = vpop.f32.mrb[0].mxu0
      %v5514 = vadd.f32 0.0, %v5513
      %v5515 = vpop.f32.mrb[0].mxu0
      %5516 = vmatprep.mubr.f32.mxu0 0.0
      %5517 = vmatmul.mubr.f32.gmra.mrb[0].mxu0 %v5415
      %v5518 = vpop.f32.mrb[0].mxu0
      %v5519 = vadd.f32 0.0, %v5518
      %v5520 = vpop.f32.mrb[0].mxu0
      %5521 = vdwg.mxu0
      %v5522 = vadd.f32 %v5345, %v5484
      %v5523 = vadd.f32 %v5350, %v5489
      %v5524 = vadd.f32 %v5355, %v5494
      %v5525 = vadd.f32 %v5360, %v5499
      %v5526 = vadd.f32 %v5365, %v5504
      %v5527 = vadd.f32 %v5370, %v5509
      %v5528 = vadd.f32 %v5375, %v5514
      %v5529 = vadd.f32 %v5380, %v5519
      %v5530 = vld [vmem:[%s622] sm:$0xff]
      %v5531 = vld [vmem:[%s622 + $0x10] sm:$0xff]
      %v5532 = vld [vmem:[%s622 + $0x20] sm:$0xff]
      %v5533 = vld [vmem:[%s622 + $0x30] sm:$0xff]
      %v5534 = vld [vmem:[%s622 + $0x40] sm:$0xff]
      %v5535 = vld [vmem:[%s622 + $0x50] sm:$0xff]
      %v5536 = vld [vmem:[%s622 + $0x60] sm:$0xff]
      %v5537 = vld [vmem:[%s622 + $0x70] sm:$0xff]
      %s5538 = scalar_lea.vmem %s11, 24
      %v5539 = vld [vmem:[%s5538] sm:$0xff]
      %v5541 = vsel %vm600, %v5530, 0
      %v5544 = vsel %vm600, %v5531, 0
      %v5547 = vsel %vm600, %v5532, 0
      %v5550 = vsel %vm600, %v5533, 0
      %v5553 = vsel %vm600, %v5534, 0
      %v5556 = vsel %vm600, %v5535, 0
      %v5559 = vsel %vm600, %v5536, 0
      %v5562 = vsel %vm600, %v5537, 0
      %5564 = vmatprep.subr.mxu0 0.0
      %5565 = vmatpush1.msra.mxu0 %v5539
      %5566 = vmatprep.subr.mxu0 0.0
      %5567 = vmatpush1.msra.mxu0 0.0
      %5568 = vmatprep.subr.mxu0 0.0
      %5569 = vmatpush1.msra.mxu0 0.0
      %5570 = vmatprep.subr.mxu0 0.0
      %5571 = vmatpush1.msra.mxu0 0.0
      %5572 = vmatprep.subr.mxu0 0.0
      %5573 = vmatpush1.msra.mxu0 0.0
      %5574 = vmatprep.subr.mxu0 0.0
      %5575 = vmatpush1.msra.mxu0 0.0
      %5576 = vmatprep.subr.mxu0 0.0
      %5577 = vmatpush1.msra.mxu0 0.0
      %5578 = vmatprep.subr.mxu0 0.0
      %5579 = vmatpush1.msra.mxu0 0.0
      %5580 = vmatprep.subr.mxu0 0.0
      %5581 = vmatpush1.msra.mxu0 0.0
      %5582 = vmatprep.subr.mxu0 0.0
      %5583 = vmatpush1.msra.mxu0 0.0
      %5584 = vmatprep.subr.mxu0 0.0
      %5585 = vmatpush1.msra.mxu0 0.0
      %5586 = vmatprep.subr.mxu0 0.0
      %5587 = vmatpush1.msra.mxu0 0.0
      %5588 = vmatprep.subr.mxu0 0.0
      %5589 = vmatpush1.msra.mxu0 0.0
      %5590 = vmatprep.subr.mxu0 0.0
      %5591 = vmatpush1.msra.mxu0 0.0
      %5592 = vmatprep.subr.mxu0 0.0
      %5593 = vmatpush1.msra.mxu0 0.0
      %5594 = vmatprep.subr.mxu0 0.0
      %5595 = vmatpush1.msra.mxu0 0.0
      %5596 = vmatprep.subr.mxu0 0.0
      %5597 = vmatpush1.msra.mxu0 0.0
      %5598 = vmatprep.subr.mxu0 0.0
      %5599 = vmatpush1.msra.mxu0 0.0
      %5600 = vmatprep.subr.mxu0 0.0
      %5601 = vmatpush1.msra.mxu0 0.0
      %5602 = vmatprep.subr.mxu0 0.0
      %5603 = vmatpush1.msra.mxu0 0.0
      %5604 = vmatprep.subr.mxu0 0.0
      %5605 = vmatpush1.msra.mxu0 0.0
      %5606 = vmatprep.subr.mxu0 0.0
      %5607 = vmatpush1.msra.mxu0 0.0
      %5608 = vmatprep.subr.mxu0 0.0
      %5609 = vmatpush1.msra.mxu0 0.0
      %5610 = vmatprep.subr.mxu0 0.0
      %5611 = vmatpush1.msra.mxu0 0.0
      %5612 = vmatprep.subr.mxu0 0.0
      %5613 = vmatpush1.msra.mxu0 0.0
      %5614 = vmatprep.subr.mxu0 0.0
      %5615 = vmatpush1.msra.mxu0 0.0
      %5616 = vmatprep.subr.mxu0 0.0
      %5617 = vmatpush1.msra.mxu0 0.0
      %5618 = vmatprep.subr.mxu0 0.0
      %5619 = vmatpush1.msra.mxu0 0.0
      %5620 = vmatprep.subr.mxu0 0.0
      %5621 = vmatpush1.msra.mxu0 0.0
      %5622 = vmatprep.subr.mxu0 0.0
      %5623 = vmatpush1.msra.mxu0 0.0
      %5624 = vmatprep.subr.mxu0 0.0
      %5625 = vmatpush1.msra.mxu0 0.0
      %5626 = vmatprep.subr.mxu0 0.0
      %5627 = vmatpush1.msra.mxu0 0.0
      %5628 = vmatprep.mubr.f32.mxu0 0.0
      %5629 = vmatmul.mubr.f32.gmra.mrb[0].mxu0 %v5541
      %v5630 = vpop.f32.mrb[0].mxu0
      %v5631 = vadd.f32 0.0, %v5630
      %v5632 = vpop.f32.mrb[0].mxu0
      %5633 = vmatprep.mubr.f32.mxu0 0.0
      %5634 = vmatmul.mubr.f32.gmra.mrb[0].mxu0 %v5544
      %v5635 = vpop.f32.mrb[0].mxu0
      %v5636 = vadd.f32 0.0, %v5635
      %v5637 = vpop.f32.mrb[0].mxu0
      %5638 = vmatprep.mubr.f32.mxu0 0.0
      %5639 = vmatmul.mubr.f32.gmra.mrb[0].mxu0 %v5547
      %v5640 = vpop.f32.mrb[0].mxu0
      %v5641 = vadd.f32 0.0, %v5640
      %v5642 = vpop.f32.mrb[0].mxu0
      %5643 = vmatprep.mubr.f32.mxu0 0.0
      %5644 = vmatmul.mubr.f32.gmra.mrb[0].mxu0 %v5550
      %v5645 = vpop.f32.mrb[0].mxu0
      %v5646 = vadd.f32 0.0, %v5645
      %v5647 = vpop.f32.mrb[0].mxu0
      %5648 = vmatprep.mubr.f32.mxu0 0.0
      %5649 = vmatmul.mubr.f32.gmra.mrb[0].mxu0 %v5553
      %v5650 = vpop.f32.mrb[0].mxu0
      %v5651 = vadd.f32 0.0, %v5650
      %v5652 = vpop.f32.mrb[0].mxu0
      %5653 = vmatprep.mubr.f32.mxu0 0.0
      %5654 = vmatmul.mubr.f32.gmra.mrb[0].mxu0 %v5556
      %v5655 = vpop.f32.mrb[0].mxu0
      %v5656 = vadd.f32 0.0, %v5655
      %v5657 = vpop.f32.mrb[0].mxu0
      %5658 = vmatprep.mubr.f32.mxu0 0.0
      %5659 = vmatmul.mubr.f32.gmra.mrb[0].mxu0 %v5559
      %v5660 = vpop.f32.mrb[0].mxu0
      %v5661 = vadd.f32 0.0, %v5660
      %v5662 = vpop.f32.mrb[0].mxu0
      %5663 = vmatprep.mubr.f32.mxu0 0.0
      %5664 = vmatmul.mubr.f32.gmra.mrb[0].mxu0 %v5562
      %v5665 = vpop.f32.mrb[0].mxu0
      %v5666 = vadd.f32 0.0, %v5665
      %v5667 = vpop.f32.mrb[0].mxu0
      %5668 = vdwg.mxu0
      %v5669 = vadd.f32 %v5522, %v5631
      %v5670 = vadd.f32 %v5523, %v5636
      %v5671 = vadd.f32 %v5524, %v5641
      %v5672 = vadd.f32 %v5525, %v5646
      %v5673 = vadd.f32 %v5526, %v5651
      %v5674 = vadd.f32 %v5527, %v5656
      %v5675 = vadd.f32 %v5528, %v5661
      %v5676 = vadd.f32 %v5529, %v5666
      %v5677 = vld [vmem:[%s622 + $0x1] sm:$0xff]
      %v5678 = vld [vmem:[%s622 + $0x11] sm:$0xff]
      %v5679 = vld [vmem:[%s622 + $0x21] sm:$0xff]
      %v5680 = vld [vmem:[%s622 + $0x31] sm:$0xff]
      %v5681 = vld [vmem:[%s622 + $0x41] sm:$0xff]
      %v5682 = vld [vmem:[%s622 + $0x51] sm:$0xff]
      %v5683 = vld [vmem:[%s622 + $0x61] sm:$0xff]
      %v5684 = vld [vmem:[%s622 + $0x71] sm:$0xff]
      %s5685 = scalar_lea.vmem %s11, 32
      %v5686 = vld [vmem:[%s5685] sm:$0xff]
      %v5688 = vsel %vm600, %v5677, 0
      %v5691 = vsel %vm600, %v5678, 0
      %v5694 = vsel %vm600, %v5679, 0
      %v5697 = vsel %vm600, %v5680, 0
      %v5700 = vsel %vm600, %v5681, 0
      %v5703 = vsel %vm600, %v5682, 0
      %v5706 = vsel %vm600, %v5683, 0
      %v5709 = vsel %vm600, %v5684, 0
      %5711 = vmatprep.subr.mxu0 0.0
      %5712 = vmatpush1.msra.mxu0 %v5686
      %5713 = vmatprep.subr.mxu0 0.0
      %5714 = vmatpush1.msra.mxu0 0.0
      %5715 = vmatprep.subr.mxu0 0.0
      %5716 = vmatpush1.msra.mxu0 0.0
      %5717 = vmatprep.subr.mxu0 0.0
      %5718 = vmatpush1.msra.mxu0 0.0
      %5719 = vmatprep.subr.mxu0 0.0
      %5720 = vmatpush1.msra.mxu0 0.0
      %5721 = vmatprep.subr.mxu0 0.0
      %5722 = vmatpush1.msra.mxu0 0.0
      %5723 = vmatprep.subr.mxu0 0.0
      %5724 = vmatpush1.msra.mxu0 0.0
      %5725 = vmatprep.subr.mxu0 0.0
      %5726 = vmatpush1.msra.mxu0 0.0
      %5727 = vmatprep.subr.mxu0 0.0
      %5728 = vmatpush1.msra.mxu0 0.0
      %5729 = vmatprep.subr.mxu0 0.0
      %5730 = vmatpush1.msra.mxu0 0.0
      %5731 = vmatprep.subr.mxu0 0.0
      %5732 = vmatpush1.msra.mxu0 0.0
      %5733 = vmatprep.subr.mxu0 0.0
      %5734 = vmatpush1.msra.mxu0 0.0
      %5735 = vmatprep.subr.mxu0 0.0
      %5736 = vmatpush1.msra.mxu0 0.0
      %5737 = vmatprep.subr.mxu0 0.0
      %5738 = vmatpush1.msra.mxu0 0.0
      %5739 = vmatprep.subr.mxu0 0.0
      %5740 = vmatpush1.msra.mxu0 0.0
      %5741 = vmatprep.subr.mxu0 0.0
      %5742 = vmatpush1.msra.mxu0 0.0
      %5743 = vmatprep.subr.mxu0 0.0
      %5744 = vmatpush1.msra.mxu0 0.0
      %5745 = vmatprep.subr.mxu0 0.0
      %5746 = vmatpush1.msra.mxu0 0.0
      %5747 = vmatprep.subr.mxu0 0.0
      %5748 = vmatpush1.msra.mxu0 0.0
      %5749 = vmatprep.subr.mxu0 0.0
      %5750 = vmatpush1.msra.mxu0 0.0
      %5751 = vmatprep.subr.mxu0 0.0
      %5752 = vmatpush1.msra.mxu0 0.0
      %5753 = vmatprep.subr.mxu0 0.0
      %5754 = vmatpush1.msra.mxu0 0.0
      %5755 = vmatprep.subr.mxu0 0.0
      %5756 = vmatpush1.msra.mxu0 0.0
      %5757 = vmatprep.subr.mxu0 0.0
      %5758 = vmatpush1.msra.mxu0 0.0
      %5759 = vmatprep.subr.mxu0 0.0
      %5760 = vmatpush1.msra.mxu0 0.0
      %5761 = vmatprep.subr.mxu0 0.0
      %5762 = vmatpush1.msra.mxu0 0.0
      %5763 = vmatprep.subr.mxu0 0.0
      %5764 = vmatpush1.msra.mxu0 0.0
      %5765 = vmatprep.subr.mxu0 0.0
      %5766 = vmatpush1.msra.mxu0 0.0
      %5767 = vmatprep.subr.mxu0 0.0
      %5768 = vmatpush1.msra.mxu0 0.0
      %5769 = vmatprep.subr.mxu0 0.0
      %5770 = vmatpush1.msra.mxu0 0.0
      %5771 = vmatprep.subr.mxu0 0.0
      %5772 = vmatpush1.msra.mxu0 0.0
      %5773 = vmatprep.subr.mxu0 0.0
      %5774 = vmatpush1.msra.mxu0 0.0
      %5775 = vmatprep.mubr.f32.mxu0 0.0
      %5776 = vmatmul.mubr.f32.gmra.mrb[0].mxu0 %v5688
      %v5777 = vpop.f32.mrb[0].mxu0
      %v5778 = vadd.f32 0.0, %v5777
      %v5779 = vpop.f32.mrb[0].mxu0
      %5780 = vmatprep.mubr.f32.mxu0 0.0
      %5781 = vmatmul.mubr.f32.gmra.mrb[0].mxu0 %v5691
      %v5782 = vpop.f32.mrb[0].mxu0
      %v5783 = vadd.f32 0.0, %v5782
      %v5784 = vpop.f32.mrb[0].mxu0
      %5785 = vmatprep.mubr.f32.mxu0 0.0
      %5786 = vmatmul.mubr.f32.gmra.mrb[0].mxu0 %v5694
      %v5787 = vpop.f32.mrb[0].mxu0
      %v5788 = vadd.f32 0.0, %v5787
      %v5789 = vpop.f32.mrb[0].mxu0
      %5790 = vmatprep.mubr.f32.mxu0 0.0
      %5791 = vmatmul.mubr.f32.gmra.mrb[0].mxu0 %v5697
      %v5792 = vpop.f32.mrb[0].mxu0
      %v5793 = vadd.f32 0.0, %v5792
      %v5794 = vpop.f32.mrb[0].mxu0
      %5795 = vmatprep.mubr.f32.mxu0 0.0
      %5796 = vmatmul.mubr.f32.gmra.mrb[0].mxu0 %v5700
      %v5797 = vpop.f32.mrb[0].mxu0
      %v5798 = vadd.f32 0.0, %v5797
      %v5799 = vpop.f32.mrb[0].mxu0
      %5800 = vmatprep.mubr.f32.mxu0 0.0
      %5801 = vmatmul.mubr.f32.gmra.mrb[0].mxu0 %v5703
      %v5802 = vpop.f32.mrb[0].mxu0
      %v5803 = vadd.f32 0.0, %v5802
      %v5804 = vpop.f32.mrb[0].mxu0
      %5805 = vmatprep.mubr.f32.mxu0 0.0
      %5806 = vmatmul.mubr.f32.gmra.mrb[0].mxu0 %v5706
      %v5807 = vpop.f32.mrb[0].mxu0
      %v5808 = vadd.f32 0.0, %v5807
      %v5809 = vpop.f32.mrb[0].mxu0
      %5810 = vmatprep.mubr.f32.mxu0 0.0
      %5811 = vmatmul.mubr.f32.gmra.mrb[0].mxu0 %v5709
      %v5812 = vpop.f32.mrb[0].mxu0
      %v5813 = vadd.f32 0.0, %v5812
      %v5814 = vpop.f32.mrb[0].mxu0
      %5815 = vdwg.mxu0
      %v5816 = vadd.f32 %v5669, %v5778
      %v5817 = vadd.f32 %v5670, %v5783
      %v5818 = vadd.f32 %v5671, %v5788
      %v5819 = vadd.f32 %v5672, %v5793
      %v5820 = vadd.f32 %v5673, %v5798
      %v5821 = vadd.f32 %v5674, %v5803
      %v5822 = vadd.f32 %v5675, %v5808
      %v5823 = vadd.f32 %v5676, %v5813
      %v5824 = vld [vmem:[%s622 + $0x2] sm:$0xff]
      %v5825 = vld [vmem:[%s622 + $0x12] sm:$0xff]
      %v5826 = vld [vmem:[%s622 + $0x22] sm:$0xff]
      %v5827 = vld [vmem:[%s622 + $0x32] sm:$0xff]
      %v5828 = vld [vmem:[%s622 + $0x42] sm:$0xff]
      %v5829 = vld [vmem:[%s622 + $0x52] sm:$0xff]
      %v5830 = vld [vmem:[%s622 + $0x62] sm:$0xff]
      %v5831 = vld [vmem:[%s622 + $0x72] sm:$0xff]
      %s5832 = scalar_lea.vmem %s11, 40
      %v5833 = vld [vmem:[%s5832] sm:$0xff]
      %v5835 = vsel %vm600, %v5824, 0
      %v5838 = vsel %vm600, %v5825, 0
      %v5841 = vsel %vm600, %v5826, 0
      %v5844 = vsel %vm600, %v5827, 0
      %v5847 = vsel %vm600, %v5828, 0
      %v5850 = vsel %vm600, %v5829, 0
      %v5853 = vsel %vm600, %v5830, 0
      %v5856 = vsel %vm600, %v5831, 0
      %5858 = vmatprep.subr.mxu0 0.0
      %5859 = vmatpush1.msra.mxu0 %v5833
      %5860 = vmatprep.subr.mxu0 0.0
      %5861 = vmatpush1.msra.mxu0 0.0
      %5862 = vmatprep.subr.mxu0 0.0
      %5863 = vmatpush1.msra.mxu0 0.0
      %5864 = vmatprep.subr.mxu0 0.0
      %5865 = vmatpush1.msra.mxu0 0.0
      %5866 = vmatprep.subr.mxu0 0.0
      %5867 = vmatpush1.msra.mxu0 0.0
      %5868 = vmatprep.subr.mxu0 0.0
      %5869 = vmatpush1.msra.mxu0 0.0
      %5870 = vmatprep.subr.mxu0 0.0
      %5871 = vmatpush1.msra.mxu0 0.0
      %5872 = vmatprep.subr.mxu0 0.0
      %5873 = vmatpush1.msra.mxu0 0.0
      %5874 = vmatprep.subr.mxu0 0.0
      %5875 = vmatpush1.msra.mxu0 0.0
      %5876 = vmatprep.subr.mxu0 0.0
      %5877 = vmatpush1.msra.mxu0 0.0
      %5878 = vmatprep.subr.mxu0 0.0
      %5879 = vmatpush1.msra.mxu0 0.0
      %5880 = vmatprep.subr.mxu0 0.0
      %5881 = vmatpush1.msra.mxu0 0.0
      %5882 = vmatprep.subr.mxu0 0.0
      %5883 = vmatpush1.msra.mxu0 0.0
      %5884 = vmatprep.subr.mxu0 0.0
      %5885 = vmatpush1.msra.mxu0 0.0
      %5886 = vmatprep.subr.mxu0 0.0
      %5887 = vmatpush1.msra.mxu0 0.0
      %5888 = vmatprep.subr.mxu0 0.0
      %5889 = vmatpush1.msra.mxu0 0.0
      %5890 = vmatprep.subr.mxu0 0.0
      %5891 = vmatpush1.msra.mxu0 0.0
      %5892 = vmatprep.subr.mxu0 0.0
      %5893 = vmatpush1.msra.mxu0 0.0
      %5894 = vmatprep.subr.mxu0 0.0
      %5895 = vmatpush1.msra.mxu0 0.0
      %5896 = vmatprep.subr.mxu0 0.0
      %5897 = vmatpush1.msra.mxu0 0.0
      %5898 = vmatprep.subr.mxu0 0.0
      %5899 = vmatpush1.msra.mxu0 0.0
      %5900 = vmatprep.subr.mxu0 0.0
      %5901 = vmatpush1.msra.mxu0 0.0
      %5902 = vmatprep.subr.mxu0 0.0
      %5903 = vmatpush1.msra.mxu0 0.0
      %5904 = vmatprep.subr.mxu0 0.0
      %5905 = vmatpush1.msra.mxu0 0.0
      %5906 = vmatprep.subr.mxu0 0.0
      %5907 = vmatpush1.msra.mxu0 0.0
      %5908 = vmatprep.subr.mxu0 0.0
      %5909 = vmatpush1.msra.mxu0 0.0
      %5910 = vmatprep.subr.mxu0 0.0
      %5911 = vmatpush1.msra.mxu0 0.0
      %5912 = vmatprep.subr.mxu0 0.0
      %5913 = vmatpush1.msra.mxu0 0.0
      %5914 = vmatprep.subr.mxu0 0.0
      %5915 = vmatpush1.msra.mxu0 0.0
      %5916 = vmatprep.subr.mxu0 0.0
      %5917 = vmatpush1.msra.mxu0 0.0
      %5918 = vmatprep.subr.mxu0 0.0
      %5919 = vmatpush1.msra.mxu0 0.0
      %5920 = vmatprep.subr.mxu0 0.0
      %5921 = vmatpush1.msra.mxu0 0.0
      %5922 = vmatprep.mubr.f32.mxu0 0.0
      %5923 = vmatmul.mubr.f32.gmra.mrb[0].mxu0 %v5835
      %v5924 = vpop.f32.mrb[0].mxu0
      %v5925 = vadd.f32 0.0, %v5924
      %v5926 = vpop.f32.mrb[0].mxu0
      %5927 = vmatprep.mubr.f32.mxu0 0.0
      %5928 = vmatmul.mubr.f32.gmra.mrb[0].mxu0 %v5838
      %v5929 = vpop.f32.mrb[0].mxu0
      %v5930 = vadd.f32 0.0, %v5929
      %v5931 = vpop.f32.mrb[0].mxu0
      %5932 = vmatprep.mubr.f32.mxu0 0.0
      %5933 = vmatmul.mubr.f32.gmra.mrb[0].mxu0 %v5841
      %v5934 = vpop.f32.mrb[0].mxu0
      %v5935 = vadd.f32 0.0, %v5934
      %v5936 = vpop.f32.mrb[0].mxu0
      %5937 = vmatprep.mubr.f32.mxu0 0.0
      %5938 = vmatmul.mubr.f32.gmra.mrb[0].mxu0 %v5844
      %v5939 = vpop.f32.mrb[0].mxu0
      %v5940 = vadd.f32 0.0, %v5939
      %v5941 = vpop.f32.mrb[0].mxu0
      %5942 = vmatprep.mubr.f32.mxu0 0.0
      %5943 = vmatmul.mubr.f32.gmra.mrb[0].mxu0 %v5847
      %v5944 = vpop.f32.mrb[0].mxu0
      %v5945 = vadd.f32 0.0, %v5944
      %v5946 = vpop.f32.mrb[0].mxu0
      %5947 = vmatprep.mubr.f32.mxu0 0.0
      %5948 = vmatmul.mubr.f32.gmra.mrb[0].mxu0 %v5850
      %v5949 = vpop.f32.mrb[0].mxu0
      %v5950 = vadd.f32 0.0, %v5949
      %v5951 = vpop.f32.mrb[0].mxu0
      %5952 = vmatprep.mubr.f32.mxu0 0.0
      %5953 = vmatmul.mubr.f32.gmra.mrb[0].mxu0 %v5853
      %v5954 = vpop.f32.mrb[0].mxu0
      %v5955 = vadd.f32 0.0, %v5954
      %v5956 = vpop.f32.mrb[0].mxu0
      %5957 = vmatprep.mubr.f32.mxu0 0.0
      %5958 = vmatmul.mubr.f32.gmra.mrb[0].mxu0 %v5856
      %v5959 = vpop.f32.mrb[0].mxu0
      %v5960 = vadd.f32 0.0, %v5959
      %v5961 = vpop.f32.mrb[0].mxu0
      %5962 = vdwg.mxu0
      %v5963 = vadd.f32 %v5816, %v5925
      %v5964 = vadd.f32 %v5817, %v5930
      %v5965 = vadd.f32 %v5818, %v5935
      %v5966 = vadd.f32 %v5819, %v5940
      %v5967 = vadd.f32 %v5820, %v5945
      %v5968 = vadd.f32 %v5821, %v5950
      %v5969 = vadd.f32 %v5822, %v5955
      %v5970 = vadd.f32 %v5823, %v5960
      %v5971 = vld [vmem:[%s1516] sm:$0xff]
      %v5972 = vld [vmem:[%s1516 + $0x10] sm:$0xff]
      %v5973 = vld [vmem:[%s1516 + $0x20] sm:$0xff]
      %v5974 = vld [vmem:[%s1516 + $0x30] sm:$0xff]
      %v5975 = vld [vmem:[%s1516 + $0x40] sm:$0xff]
      %v5976 = vld [vmem:[%s1516 + $0x50] sm:$0xff]
      %v5977 = vld [vmem:[%s1516 + $0x60] sm:$0xff]
      %v5978 = vld [vmem:[%s1516 + $0x70] sm:$0xff]
      %s5979 = scalar_lea.vmem %s11, 48
      %v5980 = vld [vmem:[%s5979] sm:$0xff]
      %v5982 = vsel %vm600, %v5971, 0
      %v5985 = vsel %vm600, %v5972, 0
      %v5988 = vsel %vm600, %v5973, 0
      %v5991 = vsel %vm600, %v5974, 0
      %v5994 = vsel %vm600, %v5975, 0
      %v5997 = vsel %vm600, %v5976, 0
      %v6000 = vsel %vm600, %v5977, 0
      %v6003 = vsel %vm600, %v5978, 0
      %6005 = vmatprep.subr.mxu0 0.0
      %6006 = vmatpush1.msra.mxu0 %v5980
      %6007 = vmatprep.subr.mxu0 0.0
      %6008 = vmatpush1.msra.mxu0 0.0
      %6009 = vmatprep.subr.mxu0 0.0
      %6010 = vmatpush1.msra.mxu0 0.0
      %6011 = vmatprep.subr.mxu0 0.0
      %6012 = vmatpush1.msra.mxu0 0.0
      %6013 = vmatprep.subr.mxu0 0.0
      %6014 = vmatpush1.msra.mxu0 0.0
      %6015 = vmatprep.subr.mxu0 0.0
      %6016 = vmatpush1.msra.mxu0 0.0
      %6017 = vmatprep.subr.mxu0 0.0
      %6018 = vmatpush1.msra.mxu0 0.0
      %6019 = vmatprep.subr.mxu0 0.0
      %6020 = vmatpush1.msra.mxu0 0.0
      %6021 = vmatprep.subr.mxu0 0.0
      %6022 = vmatpush1.msra.mxu0 0.0
      %6023 = vmatprep.subr.mxu0 0.0
      %6024 = vmatpush1.msra.mxu0 0.0
      %6025 = vmatprep.subr.mxu0 0.0
      %6026 = vmatpush1.msra.mxu0 0.0
      %6027 = vmatprep.subr.mxu0 0.0
      %6028 = vmatpush1.msra.mxu0 0.0
      %6029 = vmatprep.subr.mxu0 0.0
      %6030 = vmatpush1.msra.mxu0 0.0
      %6031 = vmatprep.subr.mxu0 0.0
      %6032 = vmatpush1.msra.mxu0 0.0
      %6033 = vmatprep.subr.mxu0 0.0
      %6034 = vmatpush1.msra.mxu0 0.0
      %6035 = vmatprep.subr.mxu0 0.0
      %6036 = vmatpush1.msra.mxu0 0.0
      %6037 = vmatprep.subr.mxu0 0.0
      %6038 = vmatpush1.msra.mxu0 0.0
      %6039 = vmatprep.subr.mxu0 0.0
      %6040 = vmatpush1.msra.mxu0 0.0
      %6041 = vmatprep.subr.mxu0 0.0
      %6042 = vmatpush1.msra.mxu0 0.0
      %6043 = vmatprep.subr.mxu0 0.0
      %6044 = vmatpush1.msra.mxu0 0.0
      %6045 = vmatprep.subr.mxu0 0.0
      %6046 = vmatpush1.msra.mxu0 0.0
      %6047 = vmatprep.subr.mxu0 0.0
      %6048 = vmatpush1.msra.mxu0 0.0
      %6049 = vmatprep.subr.mxu0 0.0
      %6050 = vmatpush1.msra.mxu0 0.0
      %6051 = vmatprep.subr.mxu0 0.0
      %6052 = vmatpush1.msra.mxu0 0.0
      %6053 = vmatprep.subr.mxu0 0.0
      %6054 = vmatpush1.msra.mxu0 0.0
      %6055 = vmatprep.subr.mxu0 0.0
      %6056 = vmatpush1.msra.mxu0 0.0
      %6057 = vmatprep.subr.mxu0 0.0
      %6058 = vmatpush1.msra.mxu0 0.0
      %6059 = vmatprep.subr.mxu0 0.0
      %6060 = vmatpush1.msra.mxu0 0.0
      %6061 = vmatprep.subr.mxu0 0.0
      %6062 = vmatpush1.msra.mxu0 0.0
      %6063 = vmatprep.subr.mxu0 0.0
      %6064 = vmatpush1.msra.mxu0 0.0
      %6065 = vmatprep.subr.mxu0 0.0
      %6066 = vmatpush1.msra.mxu0 0.0
      %6067 = vmatprep.subr.mxu0 0.0
      %6068 = vmatpush1.msra.mxu0 0.0
      %6069 = vmatprep.mubr.f32.mxu0 0.0
      %6070 = vmatmul.mubr.f32.gmra.mrb[0].mxu0 %v5982
      %v6071 = vpop.f32.mrb[0].mxu0
      %v6072 = vadd.f32 0.0, %v6071
      %v6073 = vpop.f32.mrb[0].mxu0
      %6074 = vmatprep.mubr.f32.mxu0 0.0
      %6075 = vmatmul.mubr.f32.gmra.mrb[0].mxu0 %v5985
      %v6076 = vpop.f32.mrb[0].mxu0
      %v6077 = vadd.f32 0.0, %v6076
      %v6078 = vpop.f32.mrb[0].mxu0
      %6079 = vmatprep.mubr.f32.mxu0 0.0
      %6080 = vmatmul.mubr.f32.gmra.mrb[0].mxu0 %v5988
      %v6081 = vpop.f32.mrb[0].mxu0
      %v6082 = vadd.f32 0.0, %v6081
      %v6083 = vpop.f32.mrb[0].mxu0
      %6084 = vmatprep.mubr.f32.mxu0 0.0
      %6085 = vmatmul.mubr.f32.gmra.mrb[0].mxu0 %v5991
      %v6086 = vpop.f32.mrb[0].mxu0
      %v6087 = vadd.f32 0.0, %v6086
      %v6088 = vpop.f32.mrb[0].mxu0
      %6089 = vmatprep.mubr.f32.mxu0 0.0
      %6090 = vmatmul.mubr.f32.gmra.mrb[0].mxu0 %v5994
      %v6091 = vpop.f32.mrb[0].mxu0
      %v6092 = vadd.f32 0.0, %v6091
      %v6093 = vpop.f32.mrb[0].mxu0
      %6094 = vmatprep.mubr.f32.mxu0 0.0
      %6095 = vmatmul.mubr.f32.gmra.mrb[0].mxu0 %v5997
      %v6096 = vpop.f32.mrb[0].mxu0
      %v6097 = vadd.f32 0.0, %v6096
      %v6098 = vpop.f32.mrb[0].mxu0
      %6099 = vmatprep.mubr.f32.mxu0 0.0
      %6100 = vmatmul.mubr.f32.gmra.mrb[0].mxu0 %v6000
      %v6101 = vpop.f32.mrb[0].mxu0
      %v6102 = vadd.f32 0.0, %v6101
      %v6103 = vpop.f32.mrb[0].mxu0
      %6104 = vmatprep.mubr.f32.mxu0 0.0
      %6105 = vmatmul.mubr.f32.gmra.mrb[0].mxu0 %v6003
      %v6106 = vpop.f32.mrb[0].mxu0
      %v6107 = vadd.f32 0.0, %v6106
      %v6108 = vpop.f32.mrb[0].mxu0
      %6109 = vdwg.mxu0
      %v6110 = vadd.f32 %v5963, %v6072
      %v6111 = vadd.f32 %v5964, %v6077
      %v6112 = vadd.f32 %v5965, %v6082
      %v6113 = vadd.f32 %v5966, %v6087
      %v6114 = vadd.f32 %v5967, %v6092
      %v6115 = vadd.f32 %v5968, %v6097
      %v6116 = vadd.f32 %v5969, %v6102
      %v6117 = vadd.f32 %v5970, %v6107
      %v6118 = vld [vmem:[%s1516 + $0x1] sm:$0xff]
      %v6119 = vld [vmem:[%s1516 + $0x11] sm:$0xff]
      %v6120 = vld [vmem:[%s1516 + $0x21] sm:$0xff]
      %v6121 = vld [vmem:[%s1516 + $0x31] sm:$0xff]
      %v6122 = vld [vmem:[%s1516 + $0x41] sm:$0xff]
      %v6123 = vld [vmem:[%s1516 + $0x51] sm:$0xff]
      %v6124 = vld [vmem:[%s1516 + $0x61] sm:$0xff]
      %v6125 = vld [vmem:[%s1516 + $0x71] sm:$0xff]
      %s6126 = scalar_lea.vmem %s11, 56
      %v6127 = vld [vmem:[%s6126] sm:$0xff]
      %v6129 = vsel %vm600, %v6118, 0
      %v6132 = vsel %vm600, %v6119, 0
      %v6135 = vsel %vm600, %v6120, 0
      %v6138 = vsel %vm600, %v6121, 0
      %v6141 = vsel %vm600, %v6122, 0
      %v6144 = vsel %vm600, %v6123, 0
      %v6147 = vsel %vm600, %v6124, 0
      %v6150 = vsel %vm600, %v6125, 0
      %6152 = vmatprep.subr.mxu0 0.0
      %6153 = vmatpush1.msra.mxu0 %v6127
      %6154 = vmatprep.subr.mxu0 0.0
      %6155 = vmatpush1.msra.mxu0 0.0
      %6156 = vmatprep.subr.mxu0 0.0
      %6157 = vmatpush1.msra.mxu0 0.0
      %6158 = vmatprep.subr.mxu0 0.0
      %6159 = vmatpush1.msra.mxu0 0.0
      %6160 = vmatprep.subr.mxu0 0.0
      %6161 = vmatpush1.msra.mxu0 0.0
      %6162 = vmatprep.subr.mxu0 0.0
      %6163 = vmatpush1.msra.mxu0 0.0
      %6164 = vmatprep.subr.mxu0 0.0
      %6165 = vmatpush1.msra.mxu0 0.0
      %6166 = vmatprep.subr.mxu0 0.0
      %6167 = vmatpush1.msra.mxu0 0.0
      %6168 = vmatprep.subr.mxu0 0.0
      %6169 = vmatpush1.msra.mxu0 0.0
      %6170 = vmatprep.subr.mxu0 0.0
      %6171 = vmatpush1.msra.mxu0 0.0
      %6172 = vmatprep.subr.mxu0 0.0
      %6173 = vmatpush1.msra.mxu0 0.0
      %6174 = vmatprep.subr.mxu0 0.0
      %6175 = vmatpush1.msra.mxu0 0.0
      %6176 = vmatprep.subr.mxu0 0.0
      %6177 = vmatpush1.msra.mxu0 0.0
      %6178 = vmatprep.subr.mxu0 0.0
      %6179 = vmatpush1.msra.mxu0 0.0
      %6180 = vmatprep.subr.mxu0 0.0
      %6181 = vmatpush1.msra.mxu0 0.0
      %6182 = vmatprep.subr.mxu0 0.0
      %6183 = vmatpush1.msra.mxu0 0.0
      %6184 = vmatprep.subr.mxu0 0.0
      %6185 = vmatpush1.msra.mxu0 0.0
      %6186 = vmatprep.subr.mxu0 0.0
      %6187 = vmatpush1.msra.mxu0 0.0
      %6188 = vmatprep.subr.mxu0 0.0
      %6189 = vmatpush1.msra.mxu0 0.0
      %6190 = vmatprep.subr.mxu0 0.0
      %6191 = vmatpush1.msra.mxu0 0.0
      %6192 = vmatprep.subr.mxu0 0.0
      %6193 = vmatpush1.msra.mxu0 0.0
      %6194 = vmatprep.subr.mxu0 0.0
      %6195 = vmatpush1.msra.mxu0 0.0
      %6196 = vmatprep.subr.mxu0 0.0
      %6197 = vmatpush1.msra.mxu0 0.0
      %6198 = vmatprep.subr.mxu0 0.0
      %6199 = vmatpush1.msra.mxu0 0.0
      %6200 = vmatprep.subr.mxu0 0.0
      %6201 = vmatpush1.msra.mxu0 0.0
      %6202 = vmatprep.subr.mxu0 0.0
      %6203 = vmatpush1.msra.mxu0 0.0
      %6204 = vmatprep.subr.mxu0 0.0
      %6205 = vmatpush1.msra.mxu0 0.0
      %6206 = vmatprep.subr.mxu0 0.0
      %6207 = vmatpush1.msra.mxu0 0.0
      %6208 = vmatprep.subr.mxu0 0.0
      %6209 = vmatpush1.msra.mxu0 0.0
      %6210 = vmatprep.subr.mxu0 0.0
      %6211 = vmatpush1.msra.mxu0 0.0
      %6212 = vmatprep.subr.mxu0 0.0
      %6213 = vmatpush1.msra.mxu0 0.0
      %6214 = vmatprep.subr.mxu0 0.0
      %6215 = vmatpush1.msra.mxu0 0.0
      %6216 = vmatprep.mubr.f32.mxu0 0.0
      %6217 = vmatmul.mubr.f32.gmra.mrb[0].mxu0 %v6129
      %v6218 = vpop.f32.mrb[0].mxu0
      %v6219 = vadd.f32 0.0, %v6218
      %v6220 = vpop.f32.mrb[0].mxu0
      %6221 = vmatprep.mubr.f32.mxu0 0.0
      %6222 = vmatmul.mubr.f32.gmra.mrb[0].mxu0 %v6132
      %v6223 = vpop.f32.mrb[0].mxu0
      %v6224 = vadd.f32 0.0, %v6223
      %v6225 = vpop.f32.mrb[0].mxu0
      %6226 = vmatprep.mubr.f32.mxu0 0.0
      %6227 = vmatmul.mubr.f32.gmra.mrb[0].mxu0 %v6135
      %v6228 = vpop.f32.mrb[0].mxu0
      %v6229 = vadd.f32 0.0, %v6228
      %v6230 = vpop.f32.mrb[0].mxu0
      %6231 = vmatprep.mubr.f32.mxu0 0.0
      %6232 = vmatmul.mubr.f32.gmra.mrb[0].mxu0 %v6138
      %v6233 = vpop.f32.mrb[0].mxu0
      %v6234 = vadd.f32 0.0, %v6233
      %v6235 = vpop.f32.mrb[0].mxu0
      %6236 = vmatprep.mubr.f32.mxu0 0.0
      %6237 = vmatmul.mubr.f32.gmra.mrb[0].mxu0 %v6141
      %v6238 = vpop.f32.mrb[0].mxu0
      %v6239 = vadd.f32 0.0, %v6238
      %v6240 = vpop.f32.mrb[0].mxu0
      %6241 = vmatprep.mubr.f32.mxu0 0.0
      %6242 = vmatmul.mubr.f32.gmra.mrb[0].mxu0 %v6144
      %v6243 = vpop.f32.mrb[0].mxu0
      %v6244 = vadd.f32 0.0, %v6243
      %v6245 = vpop.f32.mrb[0].mxu0
      %6246 = vmatprep.mubr.f32.mxu0 0.0
      %6247 = vmatmul.mubr.f32.gmra.mrb[0].mxu0 %v6147
      %v6248 = vpop.f32.mrb[0].mxu0
      %v6249 = vadd.f32 0.0, %v6248
      %v6250 = vpop.f32.mrb[0].mxu0
      %6251 = vmatprep.mubr.f32.mxu0 0.0
      %6252 = vmatmul.mubr.f32.gmra.mrb[0].mxu0 %v6150
      %v6253 = vpop.f32.mrb[0].mxu0
      %v6254 = vadd.f32 0.0, %v6253
      %v6255 = vpop.f32.mrb[0].mxu0
      %6256 = vdwg.mxu0
      %v6257 = vadd.f32 %v6110, %v6219
      %v6258 = vadd.f32 %v6111, %v6224
      %v6259 = vadd.f32 %v6112, %v6229
      %v6260 = vadd.f32 %v6113, %v6234
      %v6261 = vadd.f32 %v6114, %v6239
      %v6262 = vadd.f32 %v6115, %v6244
      %v6263 = vadd.f32 %v6116, %v6249
      %v6264 = vadd.f32 %v6117, %v6254
      %v6265 = vld [vmem:[%s1516 + $0x2] sm:$0xff]
      %v6266 = vld [vmem:[%s1516 + $0x12] sm:$0xff]
      %v6267 = vld [vmem:[%s1516 + $0x22] sm:$0xff]
      %v6268 = vld [vmem:[%s1516 + $0x32] sm:$0xff]
      %v6269 = vld [vmem:[%s1516 + $0x42] sm:$0xff]
      %v6270 = vld [vmem:[%s1516 + $0x52] sm:$0xff]
      %v6271 = vld [vmem:[%s1516 + $0x62] sm:$0xff]
      %v6272 = vld [vmem:[%s1516 + $0x72] sm:$0xff]
      %s6273 = scalar_lea.vmem %s11, 64
      %v6274 = vld [vmem:[%s6273] sm:$0xff]
      %v6276 = vsel %vm600, %v6265, 0
      %v6279 = vsel %vm600, %v6266, 0
      %v6282 = vsel %vm600, %v6267, 0
      %v6285 = vsel %vm600, %v6268, 0
      %v6288 = vsel %vm600, %v6269, 0
      %v6291 = vsel %vm600, %v6270, 0
      %v6294 = vsel %vm600, %v6271, 0
      %v6297 = vsel %vm600, %v6272, 0
      %6299 = vmatprep.subr.mxu0 0.0
      %6300 = vmatpush1.msra.mxu0 %v6274
      %6301 = vmatprep.subr.mxu0 0.0
      %6302 = vmatpush1.msra.mxu0 0.0
      %6303 = vmatprep.subr.mxu0 0.0
      %6304 = vmatpush1.msra.mxu0 0.0
      %6305 = vmatprep.subr.mxu0 0.0
      %6306 = vmatpush1.msra.mxu0 0.0
      %6307 = vmatprep.subr.mxu0 0.0
      %6308 = vmatpush1.msra.mxu0 0.0
      %6309 = vmatprep.subr.mxu0 0.0
      %6310 = vmatpush1.msra.mxu0 0.0
      %6311 = vmatprep.subr.mxu0 0.0
      %6312 = vmatpush1.msra.mxu0 0.0
      %6313 = vmatprep.subr.mxu0 0.0
      %6314 = vmatpush1.msra.mxu0 0.0
      %6315 = vmatprep.subr.mxu0 0.0
      %6316 = vmatpush1.msra.mxu0 0.0
      %6317 = vmatprep.subr.mxu0 0.0
      %6318 = vmatpush1.msra.mxu0 0.0
      %6319 = vmatprep.subr.mxu0 0.0
      %6320 = vmatpush1.msra.mxu0 0.0
      %6321 = vmatprep.subr.mxu0 0.0
      %6322 = vmatpush1.msra.mxu0 0.0
      %6323 = vmatprep.subr.mxu0 0.0
      %6324 = vmatpush1.msra.mxu0 0.0
      %6325 = vmatprep.subr.mxu0 0.0
      %6326 = vmatpush1.msra.mxu0 0.0
      %6327 = vmatprep.subr.mxu0 0.0
      %6328 = vmatpush1.msra.mxu0 0.0
      %6329 = vmatprep.subr.mxu0 0.0
      %6330 = vmatpush1.msra.mxu0 0.0
      %6331 = vmatprep.subr.mxu0 0.0
      %6332 = vmatpush1.msra.mxu0 0.0
      %6333 = vmatprep.subr.mxu0 0.0
      %6334 = vmatpush1.msra.mxu0 0.0
      %6335 = vmatprep.subr.mxu0 0.0
      %6336 = vmatpush1.msra.mxu0 0.0
      %6337 = vmatprep.subr.mxu0 0.0
      %6338 = vmatpush1.msra.mxu0 0.0
      %6339 = vmatprep.subr.mxu0 0.0
      %6340 = vmatpush1.msra.mxu0 0.0
      %6341 = vmatprep.subr.mxu0 0.0
      %6342 = vmatpush1.msra.mxu0 0.0
      %6343 = vmatprep.subr.mxu0 0.0
      %6344 = vmatpush1.msra.mxu0 0.0
      %6345 = vmatprep.subr.mxu0 0.0
      %6346 = vmatpush1.msra.mxu0 0.0
      %6347 = vmatprep.subr.mxu0 0.0
      %6348 = vmatpush1.msra.mxu0 0.0
      %6349 = vmatprep.subr.mxu0 0.0
      %6350 = vmatpush1.msra.mxu0 0.0
      %6351 = vmatprep.subr.mxu0 0.0
      %6352 = vmatpush1.msra.mxu0 0.0
      %6353 = vmatprep.subr.mxu0 0.0
      %6354 = vmatpush1.msra.mxu0 0.0
      %6355 = vmatprep.subr.mxu0 0.0
      %6356 = vmatpush1.msra.mxu0 0.0
      %6357 = vmatprep.subr.mxu0 0.0
      %6358 = vmatpush1.msra.mxu0 0.0
      %6359 = vmatprep.subr.mxu0 0.0
      %6360 = vmatpush1.msra.mxu0 0.0
      %6361 = vmatprep.subr.mxu0 0.0
      %6362 = vmatpush1.msra.mxu0 0.0
      %6363 = vmatprep.mubr.f32.mxu0 0.0
      %6364 = vmatmul.mubr.f32.gmra.mrb[0].mxu0 %v6276
      %v6365 = vpop.f32.mrb[0].mxu0
      %v6366 = vadd.f32 0.0, %v6365
      %v6367 = vpop.f32.mrb[0].mxu0
      %6368 = vmatprep.mubr.f32.mxu0 0.0
      %6369 = vmatmul.mubr.f32.gmra.mrb[0].mxu0 %v6279
      %v6370 = vpop.f32.mrb[0].mxu0
      %v6371 = vadd.f32 0.0, %v6370
      %v6372 = vpop.f32.mrb[0].mxu0
      %6373 = vmatprep.mubr.f32.mxu0 0.0
      %6374 = vmatmul.mubr.f32.gmra.mrb[0].mxu0 %v6282
      %v6375 = vpop.f32.mrb[0].mxu0
      %v6376 = vadd.f32 0.0, %v6375
      %v6377 = vpop.f32.mrb[0].mxu0
      %6378 = vmatprep.mubr.f32.mxu0 0.0
      %6379 = vmatmul.mubr.f32.gmra.mrb[0].mxu0 %v6285
      %v6380 = vpop.f32.mrb[0].mxu0
      %v6381 = vadd.f32 0.0, %v6380
      %v6382 = vpop.f32.mrb[0].mxu0
      %6383 = vmatprep.mubr.f32.mxu0 0.0
      %6384 = vmatmul.mubr.f32.gmra.mrb[0].mxu0 %v6288
      %v6385 = vpop.f32.mrb[0].mxu0
      %v6386 = vadd.f32 0.0, %v6385
      %v6387 = vpop.f32.mrb[0].mxu0
      %6388 = vmatprep.mubr.f32.mxu0 0.0
      %6389 = vmatmul.mubr.f32.gmra.mrb[0].mxu0 %v6291
      %v6390 = vpop.f32.mrb[0].mxu0
      %v6391 = vadd.f32 0.0, %v6390
      %v6392 = vpop.f32.mrb[0].mxu0
      %6393 = vmatprep.mubr.f32.mxu0 0.0
      %6394 = vmatmul.mubr.f32.gmra.mrb[0].mxu0 %v6294
      %v6395 = vpop.f32.mrb[0].mxu0
      %v6396 = vadd.f32 0.0, %v6395
      %v6397 = vpop.f32.mrb[0].mxu0
      %6398 = vmatprep.mubr.f32.mxu0 0.0
      %6399 = vmatmul.mubr.f32.gmra.mrb[0].mxu0 %v6297
      %v6400 = vpop.f32.mrb[0].mxu0
      %v6401 = vadd.f32 0.0, %v6400
      %v6402 = vpop.f32.mrb[0].mxu0
      %6403 = vdwg.mxu0
      %v6404 = vadd.f32 %v6257, %v6366
      %v6405 = vadd.f32 %v6258, %v6371
      %v6406 = vadd.f32 %v6259, %v6376
      %v6407 = vadd.f32 %v6260, %v6381
      %v6408 = vadd.f32 %v6261, %v6386
      %v6409 = vadd.f32 %v6262, %v6391
      %v6410 = vadd.f32 %v6263, %v6396
      %v6411 = vadd.f32 %v6264, %v6401
      %v6412 = vsel %vm600, %v6404, 0.0
      %v6413 = vsel %vm600, %v6405, 0.0
      %v6414 = vadd.f32 %v6412, %v6413
      %v6415 = vsel %vm600, %v6406, 0.0
      %v6416 = vadd.f32 %v6414, %v6415
      %v6417 = vsel %vm600, %v6407, 0.0
      %v6418 = vadd.f32 %v6416, %v6417
      %v6419 = vsel %vm600, %v6408, 0.0
      %v6420 = vadd.f32 %v6418, %v6419
      %v6421 = vsel %vm600, %v6409, 0.0
      %v6422 = vadd.f32 %v6420, %v6421
      %v6423 = vsel %vm600, %v6410, 0.0
      %v6424 = vadd.f32 %v6422, %v6423
      %v6425 = vsel %vm600, %v6411, 0.0
      %v6426 = vadd.f32 %v6424, %v6425
      %6427 = vadd.xlane.f32.xlu0 %v6426
      %v6428 = vpop.xlane.xlu0 %6427
      %v6429 = vrot.slane %v6428, 4
      %v6430 = vadd.f32 %v6428, %v6429
      %v6431 = vrot.slane %v6430, 2
      %v6432 = vadd.f32 %v6430, %v6431
      %v6433 = vrot.slane %v6432, 1
      %v6434 = vadd.f32 %v6432, %v6433
      %s6435 = vtos %v6434
      %v6436 = vrcp.pop 512.0
      %s6437 = vtos %v6436
      %s6438 = smul.f32 %s6435, %s6437
      %v6439 = vstv %s6438
      %v6440 = vsub.f32 %v6404, %v6439
      %v6441 = vsub.f32 %v6405, %v6439
      %v6442 = vsub.f32 %v6406, %v6439
      %v6443 = vsub.f32 %v6407, %v6439
      %v6444 = vsub.f32 %v6408, %v6439
      %v6445 = vsub.f32 %v6409, %v6439
      %v6446 = vsub.f32 %v6410, %v6439
      %v6447 = vsub.f32 %v6411, %v6439
      %v6448 = vmul.f32 %v6440, %v6440
      %v6449 = vmul.f32 %v6441, %v6441
      %v6450 = vmul.f32 %v6442, %v6442
      %v6451 = vmul.f32 %v6443, %v6443
      %v6452 = vmul.f32 %v6444, %v6444
      %v6453 = vmul.f32 %v6445, %v6445
      %v6454 = vmul.f32 %v6446, %v6446
      %v6455 = vmul.f32 %v6447, %v6447
      %v6456 = vsel %vm600, %v6448, 0.0
      %v6457 = vsel %vm600, %v6449, 0.0
      %v6458 = vadd.f32 %v6456, %v6457
      %v6459 = vsel %vm600, %v6450, 0.0
      %v6460 = vadd.f32 %v6458, %v6459
      %v6461 = vsel %vm600, %v6451, 0.0
      %v6462 = vadd.f32 %v6460, %v6461
      %v6463 = vsel %vm600, %v6452, 0.0
      %v6464 = vadd.f32 %v6462, %v6463
      %v6465 = vsel %vm600, %v6453, 0.0
      %v6466 = vadd.f32 %v6464, %v6465
      %v6467 = vsel %vm600, %v6454, 0.0
      %v6468 = vadd.f32 %v6466, %v6467
      %v6469 = vsel %vm600, %v6455, 0.0
      %v6470 = vadd.f32 %v6468, %v6469
      %6471 = vadd.xlane.f32.xlu0 %v6470
      %v6472 = vpop.xlane.xlu0 %6471
      %v6473 = vrot.slane %v6472, 4
      %v6474 = vadd.f32 %v6472, %v6473
      %v6475 = vrot.slane %v6474, 2
      %v6476 = vadd.f32 %v6474, %v6475
      %v6477 = vrot.slane %v6476, 1
      %v6478 = vadd.f32 %v6476, %v6477
      %s6479 = vtos %v6478
      %v6480 = vrcp.pop 512.0
      %s6481 = vtos %v6480
      %s6482 = smul.f32 %s6479, %s6481
      %v6483 = vld [vmem:[%s12] sm:$0x1]
      %s6484 = sadd.f32 %s6482, 1e-05
      %v6485 = vstv %s6484
      %v6486 = vrsqrt.pop %v6485
      %s6487 = vtos %v6486
      %v6488 = vstv %s6487
      %v6489 = vmul.f32 %v6483, %v6488
      %v6491 = vlaneseq
      %v6492 = vshrl.u32 %v6491, 7
      %v6493 = vsub.s32 0, %v6492
      %v6494 = vrot.slane %v6489, %v6493
      %v6496 = vmul.f32 %v6440, %v6494
      %v6497 = vmul.f32 %v6441, %v6494
      %v6498 = vmul.f32 %v6442, %v6494
      %v6499 = vmul.f32 %v6443, %v6494
      %v6500 = vmul.f32 %v6444, %v6494
      %v6501 = vmul.f32 %v6445, %v6494
      %v6502 = vmul.f32 %v6446, %v6494
      %v6503 = vmul.f32 %v6447, %v6494
      %v6504 = vld [vmem:[%s13] sm:$0x1]
      %v6506 = vlaneseq
      %v6507 = vshrl.u32 %v6506, 7
      %v6508 = vsub.s32 0, %v6507
      %v6509 = vrot.slane %v6504, %v6508
      %v6511 = vadd.f32 %v6496, %v6509
      %v6512 = vadd.f32 %v6497, %v6509
      %v6513 = vadd.f32 %v6498, %v6509
      %v6514 = vadd.f32 %v6499, %v6509
      %v6515 = vadd.f32 %v6500, %v6509
      %v6516 = vadd.f32 %v6501, %v6509
      %v6517 = vadd.f32 %v6502, %v6509
      %v6518 = vadd.f32 %v6503, %v6509
      %v6519 = vld [vmem:[%s530] sm:$0x1]
      %v6520 = vxor.u32 %v6519, 2147483648
      %v6521 = vmul.f32 %v6520, 1.442695
      %v6522 = vpow.pop %v6521
      %v6523 = vadd.f32 %v6522, 1.0
      %v6524 = vrcp.pop %v6523
      %v6525 = vmul.f32 1.0, %v6524
      %v6526 = vmul.f32 %v6519, %v6525
      %v6527 = vld [vmem:[%s14] sm:$0xff]
      %v6528 = vld [vmem:[%s14 + $0x8] sm:$0xff]
      %v6529 = vld [vmem:[%s14 + $0x10] sm:$0xff]
      %v6530 = vld [vmem:[%s14 + $0x18] sm:$0xff]
      %v6531 = vld [vmem:[%s15] sm:$0x1]
      %vm6532 = vcmask 261120
      %v6534 = vsel %vm6532, %v6526, 0
      %6536 = vmatprep.subr.mxu0 0.0
      %6537 = vmatpush1.msra.mxu0 %v6527
      %6538 = vmatprep.subr.mxu0 0.0
      %6539 = vmatpush1.msra.mxu0 %v6528
      %6540 = vmatprep.subr.mxu0 0.0
      %6541 = vmatpush1.msra.mxu0 %v6529
      %6542 = vmatprep.subr.mxu0 0.0
      %6543 = vmatpush1.msra.mxu0 %v6530
      %6544 = vmatprep.subr.mxu0 0.0
      %6545 = vmatpush1.msra.mxu0 0.0
      %6546 = vmatprep.subr.mxu0 0.0
      %6547 = vmatpush1.msra.mxu0 0.0
      %6548 = vmatprep.subr.mxu0 0.0
      %6549 = vmatpush1.msra.mxu0 0.0
      %6550 = vmatprep.subr.mxu0 0.0
      %6551 = vmatpush1.msra.mxu0 0.0
      %6552 = vmatprep.subr.mxu0 0.0
      %6553 = vmatpush1.msra.mxu0 0.0
      %6554 = vmatprep.subr.mxu0 0.0
      %6555 = vmatpush1.msra.mxu0 0.0
      %6556 = vmatprep.subr.mxu0 0.0
      %6557 = vmatpush1.msra.mxu0 0.0
      %6558 = vmatprep.subr.mxu0 0.0
      %6559 = vmatpush1.msra.mxu0 0.0
      %6560 = vmatprep.subr.mxu0 0.0
      %6561 = vmatpush1.msra.mxu0 0.0
      %6562 = vmatprep.subr.mxu0 0.0
      %6563 = vmatpush1.msra.mxu0 0.0
      %6564 = vmatprep.subr.mxu0 0.0
      %6565 = vmatpush1.msra.mxu0 0.0
      %6566 = vmatprep.subr.mxu0 0.0
      %6567 = vmatpush1.msra.mxu0 0.0
      %6568 = vmatprep.subr.mxu0 0.0
      %6569 = vmatpush1.msra.mxu0 0.0
      %6570 = vmatprep.subr.mxu0 0.0
      %6571 = vmatpush1.msra.mxu0 0.0
      %6572 = vmatprep.subr.mxu0 0.0
      %6573 = vmatpush1.msra.mxu0 0.0
      %6574 = vmatprep.subr.mxu0 0.0
      %6575 = vmatpush1.msra.mxu0 0.0
      %6576 = vmatprep.subr.mxu0 0.0
      %6577 = vmatpush1.msra.mxu0 0.0
      %6578 = vmatprep.subr.mxu0 0.0
      %6579 = vmatpush1.msra.mxu0 0.0
      %6580 = vmatprep.subr.mxu0 0.0
      %6581 = vmatpush1.msra.mxu0 0.0
      %6582 = vmatprep.subr.mxu0 0.0
      %6583 = vmatpush1.msra.mxu0 0.0
      %6584 = vmatprep.subr.mxu0 0.0
      %6585 = vmatpush1.msra.mxu0 0.0
      %6586 = vmatprep.subr.mxu0 0.0
      %6587 = vmatpush1.msra.mxu0 0.0
      %6588 = vmatprep.subr.mxu0 0.0
      %6589 = vmatpush1.msra.mxu0 0.0
      %6590 = vmatprep.subr.mxu0 0.0
      %6591 = vmatpush1.msra.mxu0 0.0
      %6592 = vmatprep.subr.mxu0 0.0
      %6593 = vmatpush1.msra.mxu0 0.0
      %6594 = vmatprep.subr.mxu0 0.0
      %6595 = vmatpush1.msra.mxu0 0.0
      %6596 = vmatprep.subr.mxu0 0.0
      %6597 = vmatpush1.msra.mxu0 0.0
      %6598 = vmatprep.subr.mxu0 0.0
      %6599 = vmatpush1.msra.mxu0 0.0
      %6600 = vmatprep.mubr.f32.mxu0 0.0
      %6601 = vmatmul.mubr.f32.gmra.mrb[0].mxu0 %v6534
      %v6602 = vpop.f32.mrb[0].mxu0
      %v6603 = vadd.f32 %v6531, %v6602
      %v6604 = vpop.f32.mrb[0].mxu0
      %6605 = vdwg.mxu0
      %v6606 = vlaneseq
      %v6607 = vshrl.u32 %v6606, 7
      %v6608 = vsub.s32 0, %v6607
      %v6609 = vrot.slane %v6603, %v6608
      %v6610 = vadd.f32 %v6511, %v6609
      %v6611 = vadd.f32 %v6512, %v6609
      %v6612 = vadd.f32 %v6513, %v6609
      %v6613 = vadd.f32 %v6514, %v6609
      %v6614 = vadd.f32 %v6515, %v6609
      %v6615 = vadd.f32 %v6516, %v6609
      %v6616 = vadd.f32 %v6517, %v6609
      %v6617 = vadd.f32 %v6518, %v6609
      %6618 = vst.msk [vmem:[%s535] sm:$0xff] %vm600, %v6610
      %6619 = vst.msk [vmem:[%s535 + $0x8] sm:$0xff] %vm600, %v6611
      %6620 = vst.msk [vmem:[%s535 + $0x10] sm:$0xff] %vm600, %v6612
      %6621 = vst.msk [vmem:[%s535 + $0x18] sm:$0xff] %vm600, %v6613
      %6622 = vst.msk [vmem:[%s535 + $0x20] sm:$0xff] %vm600, %v6614
      %6623 = vst.msk [vmem:[%s535 + $0x28] sm:$0xff] %vm600, %v6615
      %6624 = vst.msk [vmem:[%s535 + $0x30] sm:$0xff] %vm600, %v6616
      %6625 = vst.msk [vmem:[%s535 + $0x38] sm:$0xff] %vm600, %v6617
      %p6626 = scmp.lt.s32.totalorder %s27, 1
      %s6627 = scalar_select %p6626, %s27, 1
      %s6628 = smul.addr %s6627, 8
      %s6629 = smul.addr %s6628, 8
      %s6630 = scalar_lea.vmem %s16, %s6629
      // Predicated region
      $region85: #{downscaler_forward.1} parent=83 // pred_check
        %p6631 = pneg %p391
      $region86: #{downscaler_forward.1} parent=83 // pred_check_branch
        %6633 = sbr.rel (%p6631) target = $region88
      $region87: #{downscaler_forward.1} parent=83 // pred_region
        _
      $region88: #{downscaler_forward.1} parent=83 // pred_fallthru
        _
    $region84: #{downscaler_forward.1} parent=5 // pred_fallthru
      _
    %p6634 = scmp.le.s32.totalorder 2, %s22
    // Predicated region
    $region89: #{downscaler_forward.1} parent=5 // pred_check
      %p6635 = pneg %p6634
    $region90: #{downscaler_forward.1} parent=5 // pred_check_branch
      %6637 = sbr.rel (%p6635) target = $region92
    $region91: #{downscaler_forward.1} parent=5 // pred_region
      %s6638 = ssub.s32 %s22, 2
      // Predicated region
      $region93: #{downscaler_forward.1} parent=91 // pred_check
        %p6639 = pneg %p397
      $region94: #{downscaler_forward.1} parent=91 // pred_check_branch
        %6641 = sbr.rel (%p6639) target = $region96
      $region95: #{downscaler_forward.1} parent=91 // pred_region
        %p6642 = scmp.lt.s32.totalorder %s28, 1
        %s6643 = scalar_select %p6642, %s28, 1
        %s6644 = smul.addr %s6643, 8
        %s6645 = smul.addr %s6644, 8
        %s6646 = scalar_lea.vmem %s16, %s6645
      $region96: #{downscaler_forward.1} parent=91 // pred_fallthru
        _
    $region92: #{downscaler_forward.1} parent=5 // pred_fallthru
      _
  $region6: #{downscaler_forward.1} parent=0 // loop_footer
    %s26 = sadd.s32 1, %s22
  $region7: #{downscaler_forward.1} parent=0 // loop_footer_branch
    %21 = sbr.rel target = $region3
  $region8: #{downscaler_forward.1} parent=0 // loop_exit
    _

</llo_original>
